<compile_context>
chip_gen: v6e
topology: v6e:2x2x1
jax: 0.10.0
libtpu: 0.0.40
codegen_flags: <defaults>
</compile_context>

<pallas_src>
import functools

import jax
import jax.numpy as jnp
from jax import lax
from jax.experimental import pallas as pl
from jax.experimental.pallas import tpu as pltpu


# ------------------------- decoder structure (static) ------------------------

# (Cin, Cout) of the decoder convs, in application order.
CONV_SPECS = [(256, 256), (256, 256), (256, 256), (256, 128),
              (128, 128), (128, 64), (64, 64), (64, 3)]
# Convs preceded by an UpsamplingNearest2d(2) in the mirrored layer list.
UP_BEFORE = (0, 4, 6)
LANE = 128


def _round_up(x, m):
    return (x + m - 1) // m * m


# ------------------------------ Pallas kernel --------------------------------

def _conv_block_kernel(p_ref, w_ref, b_ref, gb_ref, o_ref, *,
                       apply_adain, apply_relu, eps):
    """Fused ReflectionPad+Conv3x3 (as im2col matmul) + bias + AdaIN + ReLU.

    One grid step = one batch element.
      p_ref : (1, H*W, 9*Cin)   bf16  im2col rows of the (up+)padded input
      w_ref : (9*Cin, Coutp)    bf16  conv weight, Cout zero-padded to 128 lanes
      b_ref : (1, Coutp)        f32   bias (zero in padded lanes)
      gb_ref: (1, 2, Coutp)     f32   [gamma; beta] from the style head
      o_ref : (1, H*W, Coutp)   f32
    """
    # Single MXU matmul, f32 accumulation; the (H*W, Coutp) tile stays resident
    # in VMEM for the whole epilogue (no scratch accumulator, no extra stores).
    y = jnp.dot(p_ref[0], w_ref[...], preferred_element_type=jnp.float32)
    y = y + b_ref[...]                                       # (H*W, Coutp)

    if apply_adain:
        # TODO(synk): blocks.AdaInBlock source not provided; assuming standard
        # AdaIN: gamma * instance_norm(conv(x)) + beta, (gamma, beta) produced
        # by a Linear(style_dim, 2*Cout).
        mean = jnp.mean(y, axis=0, keepdims=True)            # (1, Coutp)
        var = jnp.mean(jnp.square(y - mean), axis=0, keepdims=True)
        xn = (y - mean) * lax.rsqrt(var + eps)               # f32 epilogue math
        gb = gb_ref[0]                                       # (2, Coutp)
        y = gb[0:1, :] * xn + gb[1:2, :]

    if apply_relu:                                           # fused trailing ReLU
        y = jnp.maximum(y, 0.0)

    o_ref[0] = y


# ------------------------------ Pallas wrapper --------------------------------

def _reflect_idx(n):
    """ReflectionPad2d(1) source indices for a length-n axis."""
    return jnp.asarray([1] + list(range(n)) + [n - 2], dtype=jnp.int32)


def _up2_reflect_idx(n):
    """UpsamplingNearest2d(2) followed by ReflectionPad2d(1) as source indices."""
    up = [i // 2 for i in range(2 * n)]
    return jnp.asarray([up[1]] + up + [up[-2]], dtype=jnp.int32)


def conv_block(x, w, b, gb, *, upsample, apply_adain, apply_relu, eps=1e-5):
    """x: (B, H0, W0, Cin) f32 NHWC -> (B, H, W, Coutp) f32 (H=2*H0 if upsample)."""
    B, H0, W0, Cin = x.shape
    H, W = (2 * H0, 2 * W0) if upsample else (H0, W0)
    ih = _up2_reflect_idx(H0) if upsample else _reflect_idx(H0)
    iw = _up2_reflect_idx(W0) if upsample else _reflect_idx(W0)
    # Upsample + reflection pad folded into one gather (layout glue, ~1x bytes).
    xp = jnp.take(jnp.take(x, ih, axis=1), iw, axis=2)       # (B, H+2, W+2, Cin)
    # im2col rows; column index = (kh*3+kw)*Cin + ci, matching the weight layout.
    patches = jnp.stack(
        [xp[:, kh:kh + H, kw:kw + W, :] for kh in range(3) for kw in range(3)],
        axis=3)                                              # (B, H, W, 9, Cin)
    p = patches.reshape(B, H * W, 9 * Cin).astype(jnp.bfloat16)

    K, Coutp = w.shape
    kernel = functools.partial(_conv_block_kernel, apply_adain=apply_adain,
                               apply_relu=apply_relu, eps=eps)
    y = pl.pallas_call(
        kernel,
        out_shape=jax.ShapeDtypeStruct((B, H * W, Coutp), jnp.float32),
        grid_spec=pltpu.PrefetchScalarGridSpec(
            num_scalar_prefetch=0,
            grid=(B,),                                       # one batch element / step
            in_specs=[
                pl.BlockSpec((1, H * W, K), lambda bb: (bb, 0, 0)),
                pl.BlockSpec((K, Coutp), lambda bb: (0, 0)),   # weight stays resident
                pl.BlockSpec((1, Coutp), lambda bb: (0, 0)),   # bias stays resident
                pl.BlockSpec((1, 2, Coutp), lambda bb: (bb, 0, 0)),
            ],
            out_specs=pl.BlockSpec((1, H * W, Coutp), lambda bb: (bb, 0, 0)),
        ),
        # "parallel" batch axis -> both v7x TensorCores get work; no-op on v5e/v6e.
        compiler_params=pltpu.CompilerParams(dimension_semantics=("parallel",)),
    )(p, w, b, gb)
    # TODO(synk): if image_dim is ever scaled up, additionally tile H*W (two-pass
    # AdaIN stats) so the per-step block stays inside v7x's 64 MiB VMEM.
    return y.reshape(B, H, W, Coutp)


# -------------------------------- parameters ----------------------------------

def _init_linear(key, fan_in, fan_out):
    k1, k2 = jax.random.split(key)
    bound = 1.0 / float(fan_in) ** 0.5
    w = jax.random.uniform(k1, (fan_in, fan_out), jnp.float32, -bound, bound)
    b = jax.random.uniform(k2, (fan_out,), jnp.float32, -bound, bound)
    return w, b


def init_params(key, content_dim, style_dim, input_dim):
    C_in, H_in, W_in = input_dim
    params = {}
    key, k = jax.random.split(key)
    params["fc1"] = _init_linear(k, content_dim, 4096)
    key, k = jax.random.split(key)
    params["fc2"] = _init_linear(k, 4096, C_in * H_in * W_in)

    convs, adain_w, adain_b = [], [], []
    for cin, cout in CONV_SPECS:
        coutp = _round_up(cout, LANE)
        key, k = jax.random.split(key)
        w, b = _init_linear(k, 9 * cin, cout)   # conv stored as (9*Cin, Cout) matmul
        wp = jnp.zeros((9 * cin, coutp), jnp.float32).at[:, :cout].set(w)
        bp = jnp.zeros((1, coutp), jnp.float32).at[0, :cout].set(b)
        convs.append((wp.astype(jnp.bfloat16), bp))          # bf16 weights for MXU

        key, k = jax.random.split(key)
        aw, ab = _init_linear(k, style_dim, 2 * cout)        # AdaIN head [gamma|beta]
        awp = jnp.zeros((style_dim, 2 * coutp), jnp.float32)
        awp = awp.at[:, :cout].set(aw[:, :cout])
        awp = awp.at[:, coutp:coutp + cout].set(aw[:, cout:])
        abp = jnp.zeros((2 * coutp,), jnp.float32)
        abp = abp.at[:cout].set(ab[:cout]).at[coutp:coutp + cout].set(ab[cout:])
        adain_w.append(awp)
        adain_b.append(abp)
    params["convs"] = convs
    # All 8 AdaIN affine heads folded into a single gemm (perf review).
    params["adain_w"] = jnp.concatenate(adain_w, axis=1)
    params["adain_b"] = jnp.concatenate(adain_b, axis=0)
    return params


# ------------------------------- forward pass ----------------------------------

def vgg_decoder_forward(params, content, style=None, *, input_dim=(256, 2, 2)):
    """content: (B, content_dim); style: (B, style_dim) or None.
    Returns NCHW images (B, 3, 8*H_in, 8*W_in), matching the PyTorch module."""
    C_in, H_in, W_in = input_dim
    # Tiny FCs (M = batch): plain XLA gemms -- a custom kernel is pure overhead.
    h = content @ params["fc1"][0] + params["fc1"][1]
    h = h @ params["fc2"][0] + params["fc2"][1]
    x = h.reshape(-1, C_in, H_in, W_in)                      # .view(-1,C,H,W), NCHW
    x = jnp.transpose(x, (0, 2, 3, 1))                       # NHWC for the kernels
    B = x.shape[0]

    if style is not None:
        # One gemm for all 8 AdaIN heads instead of 8 tiny matmuls.
        gb_all = style @ params["adain_w"] + params["adain_b"]   # (B, sum 2*Coutp)

    off = 0
    n_convs = len(CONV_SPECS)
    for i, (cin, cout) in enumerate(CONV_SPECS):
        coutp = _round_up(cout, LANE)
        if style is not None:
            gb = gb_all[:, off:off + 2 * coutp].reshape(B, 2, coutp)
        else:
            gb = jnp.zeros((B, 2, coutp), jnp.float32)       # unused (apply_adain=False)
        off += 2 * coutp
        w, b = params["convs"][i]
        # ReLU of the mirrored layer list is fused into this conv's epilogue; the
        # ReLUs that appear after an Upsample commute with it (relu.up == up.relu).
        x = conv_block(x, w, b, gb,
                       upsample=(i in UP_BEFORE),
                       apply_adain=(style is not None),
                       apply_relu=(i < n_convs - 1))
        if coutp != cout:
            x = x[..., :cout]                                # drop lane padding
    return jnp.transpose(x, (0, 3, 1, 2))                    # back to NCHW


# ----------------------------------- main --------------------------------------

if __name__ == "__main__":
    image_dim = (3, 16, 16)                                   # decoded image (C,H,W)
    input_dim = (256, image_dim[1] // 8, image_dim[2] // 8)   # vgg_get_output_dim
    batch, content_dim, style_dim = 2, 32, 8

    key = jax.random.PRNGKey(0)
    kp, kc, ks = jax.random.split(key, 3)
    params = init_params(kp, content_dim, style_dim, input_dim)
    content = jax.random.normal(kc, (batch, content_dim), jnp.float32)
    style = jax.random.normal(ks, (batch, style_dim), jnp.float32)

    fwd = jax.jit(functools.partial(vgg_decoder_forward, input_dim=input_dim))

    out = jax.block_until_ready(fwd(params, content, style))        # with AdaIN
    out_nostyle = jax.block_until_ready(fwd(params, content, None))  # AdaIN skipped

    assert out.shape == (batch, 3, image_dim[1], image_dim[2]), out.shape
    assert out_nostyle.shape == (batch, 3, image_dim[1], image_dim[2])
    assert jnp.all(jnp.isfinite(out)) and jnp.all(jnp.isfinite(out_nostyle))
    print("KERNEL_OK")
</pallas_src>

<mosaic_0001>
module attributes {stable_mosaic.version = 11 : i64} {
  func.func @_conv_block_kernel(%arg0: i32, %arg1: memref<1x16x2304xbf16, #tpu.memory_space<vmem>>, %arg2: memref<2304x256xbf16, #tpu.memory_space<vmem>>, %arg3: memref<1x256xf32, #tpu.memory_space<vmem>>, %arg4: memref<1x2x256xf32, #tpu.memory_space<vmem>>, %arg5: memref<1x16x256xf32, #tpu.memory_space<vmem>>) attributes {dimension_semantics = [#tpu.dimension_semantics<parallel>], iteration_bounds = array<i64: 2>, scalar_prefetch = 0 : i64, scratch_operands = 0 : i64, tpu.core_type = #tpu.core_type<tc>, window_params = [{transform_indices = @transform_0, window_bounds = array<i64: 1, 16, 2304>}, {pipeline_mode = #tpu.pipeline_mode<synchronous>, transform_indices = @transform_1, window_bounds = array<i64: 2304, 256>}, {pipeline_mode = #tpu.pipeline_mode<synchronous>, transform_indices = @transform_2, window_bounds = array<i64: 1, 256>}, {transform_indices = @transform_3, window_bounds = array<i64: 1, 2, 256>}, {transform_indices = @transform_4, window_bounds = array<i64: 1, 16, 256>}]} {
    %c0 = arith.constant 0 : index
    %c0_0 = arith.constant 0 : index
    %c0_1 = arith.constant 0 : index
    %0 = vector.load %arg1[%c0, %c0_0, %c0_1] : memref<1x16x2304xbf16, #tpu.memory_space<vmem>>, vector<1x16x2304xbf16>
    %1 = vector.shape_cast %0 : vector<1x16x2304xbf16> to vector<16x2304xbf16>
    %c0_2 = arith.constant 0 : index
    %c0_3 = arith.constant 0 : index
    %2 = vector.load %arg2[%c0_2, %c0_3] : memref<2304x256xbf16, #tpu.memory_space<vmem>>, vector<2304x256xbf16>
    %cst = arith.constant dense<0.000000e+00> : vector<16x256xf32>
    %3 = tpu.matmul %1, %2, %cst {dimension_numbers = #tpu.dot_dimension_numbers<[1], [0], [0], [1], [0, 0, 1, 1], [], []>} : vector<16x2304xbf16>, vector<2304x256xbf16>, vector<16x256xf32> -> vector<16x256xf32>
    %c0_4 = arith.constant 0 : index
    %c0_5 = arith.constant 0 : index
    %4 = vector.load %arg3[%c0_4, %c0_5] : memref<1x256xf32, #tpu.memory_space<vmem>>, vector<1x256xf32>
    %5 = vector.broadcast %4 : vector<1x256xf32> to vector<16x256xf32>
    %6 = arith.addf %3, %5 : vector<16x256xf32>
    %cst_6 = arith.constant dense<0.000000e+00> : vector<256xf32>
    %7 = vector.multi_reduction <add>, %6, %cst_6 [0] : vector<16x256xf32> to vector<256xf32>
    %8 = vector.shape_cast %7 : vector<256xf32> to vector<1x256xf32>
    %cst_7 = arith.constant 1.600000e+01 : f32
    %9 = vector.broadcast %cst_7 : f32 to vector<1x256xf32>
    %10 = arith.divf %8, %9 : vector<1x256xf32>
    %11 = vector.broadcast %10 : vector<1x256xf32> to vector<16x256xf32>
    %12 = arith.subf %6, %11 : vector<16x256xf32>
    %13 = arith.mulf %12, %12 : vector<16x256xf32>
    %cst_8 = arith.constant dense<0.000000e+00> : vector<256xf32>
    %14 = vector.multi_reduction <add>, %13, %cst_8 [0] : vector<16x256xf32> to vector<256xf32>
    %15 = vector.shape_cast %14 : vector<256xf32> to vector<1x256xf32>
    %cst_9 = arith.constant 1.600000e+01 : f32
    %16 = vector.broadcast %cst_9 : f32 to vector<1x256xf32>
    %17 = arith.divf %15, %16 : vector<1x256xf32>
    %18 = vector.broadcast %10 : vector<1x256xf32> to vector<16x256xf32>
    %19 = arith.subf %6, %18 : vector<16x256xf32>
    %cst_10 = arith.constant 9.99999974E-6 : f32
    %20 = vector.broadcast %cst_10 : f32 to vector<1x256xf32>
    %21 = arith.addf %17, %20 : vector<1x256xf32>
    %22 = math.rsqrt %21 : vector<1x256xf32>
    %23 = vector.broadcast %22 : vector<1x256xf32> to vector<16x256xf32>
    %24 = arith.mulf %19, %23 : vector<16x256xf32>
    %c0_11 = arith.constant 0 : index
    %c0_12 = arith.constant 0 : index
    %c0_13 = arith.constant 0 : index
    %25 = vector.load %arg4[%c0_11, %c0_12, %c0_13] : memref<1x2x256xf32, #tpu.memory_space<vmem>>, vector<1x2x256xf32>
    %26 = vector.shape_cast %25 : vector<1x2x256xf32> to vector<2x256xf32>
    %27 = vector.extract_strided_slice %26 {offsets = [0, 0], sizes = [1, 256], strides = [1, 1]} : vector<2x256xf32> to vector<1x256xf32>
    %28 = vector.broadcast %27 : vector<1x256xf32> to vector<16x256xf32>
    %29 = arith.mulf %28, %24 : vector<16x256xf32>
    %30 = vector.extract_strided_slice %26 {offsets = [1, 0], sizes = [1, 256], strides = [1, 1]} : vector<2x256xf32> to vector<1x256xf32>
    %31 = vector.broadcast %30 : vector<1x256xf32> to vector<16x256xf32>
    %32 = arith.addf %29, %31 : vector<16x256xf32>
    %cst_14 = arith.constant 0.000000e+00 : f32
    %33 = vector.broadcast %cst_14 : f32 to vector<16x256xf32>
    %34 = arith.maximumf %32, %33 : vector<16x256xf32>
    %c0_15 = arith.constant 0 : index
    %c0_16 = arith.constant 0 : index
    %c0_17 = arith.constant 0 : index
    %35 = vector.load %arg5[%c0_15, %c0_16, %c0_17] : memref<1x16x256xf32, #tpu.memory_space<vmem>>, vector<1x16x256xf32>
    %36 = vector.shape_cast %35 : vector<1x16x256xf32> to vector<16x256xf32>
    %37 = vector.shape_cast %34 : vector<16x256xf32> to vector<1x16x256xf32>
    tpu.vector_store %arg5[%c0_15, %c0_16, %c0_17], %37 {strides = array<i32>} : memref<1x16x256xf32, #tpu.memory_space<vmem>>, vector<1x16x256xf32>,
    return
  }
  func.func @transform_0(%arg0: i32) -> (i32, i32, i32) {
    %c0_i32 = arith.constant 0 : i32
    %c0_i32_0 = arith.constant 0 : i32
    %c0_i32_1 = arith.constant 0 : i32
    return %arg0, %c0_i32, %c0_i32_0 : i32, i32, i32
  }
  func.func @transform_1(%arg0: i32) -> (i32, i32) {
    %c0_i32 = arith.constant 0 : i32
    %c0_i32_0 = arith.constant 0 : i32
    %c0_i32_1 = arith.constant 0 : i32
    return %c0_i32, %c0_i32_0 : i32, i32
  }
  func.func @transform_2(%arg0: i32) -> (i32, i32) {
    %c0_i32 = arith.constant 0 : i32
    %c0_i32_0 = arith.constant 0 : i32
    %c0_i32_1 = arith.constant 0 : i32
    return %c0_i32, %c0_i32_0 : i32, i32
  }
  func.func @transform_3(%arg0: i32) -> (i32, i32, i32) {
    %c0_i32 = arith.constant 0 : i32
    %c0_i32_0 = arith.constant 0 : i32
    %c0_i32_1 = arith.constant 0 : i32
    return %arg0, %c0_i32, %c0_i32_0 : i32, i32, i32
  }
  func.func @transform_4(%arg0: i32) -> (i32, i32, i32) {
    %c0_i32 = arith.constant 0 : i32
    %c0_i32_0 = arith.constant 0 : i32
    %c0_i32_1 = arith.constant 0 : i32
    return %arg0, %c0_i32, %c0_i32_0 : i32, i32, i32
  }
}

module attributes {stable_mosaic.version = 11 : i64} {
  func.func @_conv_block_kernel(%arg0: i32, %arg1: memref<1x16x2304xbf16, #tpu.memory_space<vmem>>, %arg2: memref<2304x128xbf16, #tpu.memory_space<vmem>>, %arg3: memref<1x128xf32, #tpu.memory_space<vmem>>, %arg4: memref<1x2x128xf32, #tpu.memory_space<vmem>>, %arg5: memref<1x16x128xf32, #tpu.memory_space<vmem>>) attributes {dimension_semantics = [#tpu.dimension_semantics<parallel>], iteration_bounds = array<i64: 2>, scalar_prefetch = 0 : i64, scratch_operands = 0 : i64, tpu.core_type = #tpu.core_type<tc>, window_params = [{transform_indices = @transform_0, window_bounds = array<i64: 1, 16, 2304>}, {pipeline_mode = #tpu.pipeline_mode<synchronous>, transform_indices = @transform_1, window_bounds = array<i64: 2304, 128>}, {pipeline_mode = #tpu.pipeline_mode<synchronous>, transform_indices = @transform_2, window_bounds = array<i64: 1, 128>}, {transform_indices = @transform_3, window_bounds = array<i64: 1, 2, 128>}, {transform_indices = @transform_4, window_bounds = array<i64: 1, 16, 128>}]} {
    %c0 = arith.constant 0 : index
    %c0_0 = arith.constant 0 : index
    %c0_1 = arith.constant 0 : index
    %0 = vector.load %arg1[%c0, %c0_0, %c0_1] : memref<1x16x2304xbf16, #tpu.memory_space<vmem>>, vector<1x16x2304xbf16>
    %1 = vector.shape_cast %0 : vector<1x16x2304xbf16> to vector<16x2304xbf16>
    %c0_2 = arith.constant 0 : index
    %c0_3 = arith.constant 0 : index
    %2 = vector.load %arg2[%c0_2, %c0_3] : memref<2304x128xbf16, #tpu.memory_space<vmem>>, vector<2304x128xbf16>
    %cst = arith.constant dense<0.000000e+00> : vector<16x128xf32>
    %3 = tpu.matmul %1, %2, %cst {dimension_numbers = #tpu.dot_dimension_numbers<[1], [0], [0], [1], [0, 0, 1, 1], [], []>} : vector<16x2304xbf16>, vector<2304x128xbf16>, vector<16x128xf32> -> vector<16x128xf32>
    %c0_4 = arith.constant 0 : index
    %c0_5 = arith.constant 0 : index
    %4 = vector.load %arg3[%c0_4, %c0_5] : memref<1x128xf32, #tpu.memory_space<vmem>>, vector<1x128xf32>
    %5 = vector.broadcast %4 : vector<1x128xf32> to vector<16x128xf32>
    %6 = arith.addf %3, %5 : vector<16x128xf32>
    %cst_6 = arith.constant dense<0.000000e+00> : vector<128xf32>
    %7 = vector.multi_reduction <add>, %6, %cst_6 [0] : vector<16x128xf32> to vector<128xf32>
    %8 = vector.shape_cast %7 : vector<128xf32> to vector<1x128xf32>
    %cst_7 = arith.constant 1.600000e+01 : f32
    %9 = vector.broadcast %cst_7 : f32 to vector<1x128xf32>
    %10 = arith.divf %8, %9 : vector<1x128xf32>
    %11 = vector.broadcast %10 : vector<1x128xf32> to vector<16x128xf32>
    %12 = arith.subf %6, %11 : vector<16x128xf32>
    %13 = arith.mulf %12, %12 : vector<16x128xf32>
    %cst_8 = arith.constant dense<0.000000e+00> : vector<128xf32>
    %14 = vector.multi_reduction <add>, %13, %cst_8 [0] : vector<16x128xf32> to vector<128xf32>
    %15 = vector.shape_cast %14 : vector<128xf32> to vector<1x128xf32>
    %cst_9 = arith.constant 1.600000e+01 : f32
    %16 = vector.broadcast %cst_9 : f32 to vector<1x128xf32>
    %17 = arith.divf %15, %16 : vector<1x128xf32>
    %18 = vector.broadcast %10 : vector<1x128xf32> to vector<16x128xf32>
    %19 = arith.subf %6, %18 : vector<16x128xf32>
    %cst_10 = arith.constant 9.99999974E-6 : f32
    %20 = vector.broadcast %cst_10 : f32 to vector<1x128xf32>
    %21 = arith.addf %17, %20 : vector<1x128xf32>
    %22 = math.rsqrt %21 : vector<1x128xf32>
    %23 = vector.broadcast %22 : vector<1x128xf32> to vector<16x128xf32>
    %24 = arith.mulf %19, %23 : vector<16x128xf32>
    %c0_11 = arith.constant 0 : index
    %c0_12 = arith.constant 0 : index
    %c0_13 = arith.constant 0 : index
    %25 = vector.load %arg4[%c0_11, %c0_12, %c0_13] : memref<1x2x128xf32, #tpu.memory_space<vmem>>, vector<1x2x128xf32>
    %26 = vector.shape_cast %25 : vector<1x2x128xf32> to vector<2x128xf32>
    %27 = vector.extract_strided_slice %26 {offsets = [0, 0], sizes = [1, 128], strides = [1, 1]} : vector<2x128xf32> to vector<1x128xf32>
    %28 = vector.broadcast %27 : vector<1x128xf32> to vector<16x128xf32>
    %29 = arith.mulf %28, %24 : vector<16x128xf32>
    %30 = vector.extract_strided_slice %26 {offsets = [1, 0], sizes = [1, 128], strides = [1, 1]} : vector<2x128xf32> to vector<1x128xf32>
    %31 = vector.broadcast %30 : vector<1x128xf32> to vector<16x128xf32>
    %32 = arith.addf %29, %31 : vector<16x128xf32>
    %cst_14 = arith.constant 0.000000e+00 : f32
    %33 = vector.broadcast %cst_14 : f32 to vector<16x128xf32>
    %34 = arith.maximumf %32, %33 : vector<16x128xf32>
    %c0_15 = arith.constant 0 : index
    %c0_16 = arith.constant 0 : index
    %c0_17 = arith.constant 0 : index
    %35 = vector.load %arg5[%c0_15, %c0_16, %c0_17] : memref<1x16x128xf32, #tpu.memory_space<vmem>>, vector<1x16x128xf32>
    %36 = vector.shape_cast %35 : vector<1x16x128xf32> to vector<16x128xf32>
    %37 = vector.shape_cast %34 : vector<16x128xf32> to vector<1x16x128xf32>
    tpu.vector_store %arg5[%c0_15, %c0_16, %c0_17], %37 {strides = array<i32>} : memref<1x16x128xf32, #tpu.memory_space<vmem>>, vector<1x16x128xf32>,
    return
  }
  func.func @transform_0(%arg0: i32) -> (i32, i32, i32) {
    %c0_i32 = arith.constant 0 : i32
    %c0_i32_0 = arith.constant 0 : i32
    %c0_i32_1 = arith.constant 0 : i32
    return %arg0, %c0_i32, %c0_i32_0 : i32, i32, i32
  }
  func.func @transform_1(%arg0: i32) -> (i32, i32) {
    %c0_i32 = arith.constant 0 : i32
    %c0_i32_0 = arith.constant 0 : i32
    %c0_i32_1 = arith.constant 0 : i32
    return %c0_i32, %c0_i32_0 : i32, i32
  }
  func.func @transform_2(%arg0: i32) -> (i32, i32) {
    %c0_i32 = arith.constant 0 : i32
    %c0_i32_0 = arith.constant 0 : i32
    %c0_i32_1 = arith.constant 0 : i32
    return %c0_i32, %c0_i32_0 : i32, i32
  }
  func.func @transform_3(%arg0: i32) -> (i32, i32, i32) {
    %c0_i32 = arith.constant 0 : i32
    %c0_i32_0 = arith.constant 0 : i32
    %c0_i32_1 = arith.constant 0 : i32
    return %arg0, %c0_i32, %c0_i32_0 : i32, i32, i32
  }
  func.func @transform_4(%arg0: i32) -> (i32, i32, i32) {
    %c0_i32 = arith.constant 0 : i32
    %c0_i32_0 = arith.constant 0 : i32
    %c0_i32_1 = arith.constant 0 : i32
    return %arg0, %c0_i32, %c0_i32_0 : i32, i32, i32
  }
}

module attributes {stable_mosaic.version = 11 : i64} {
  func.func @_conv_block_kernel(%arg0: i32, %arg1: memref<1x64x1152xbf16, #tpu.memory_space<vmem>>, %arg2: memref<1152x128xbf16, #tpu.memory_space<vmem>>, %arg3: memref<1x128xf32, #tpu.memory_space<vmem>>, %arg4: memref<1x2x128xf32, #tpu.memory_space<vmem>>, %arg5: memref<1x64x128xf32, #tpu.memory_space<vmem>>) attributes {dimension_semantics = [#tpu.dimension_semantics<parallel>], iteration_bounds = array<i64: 2>, scalar_prefetch = 0 : i64, scratch_operands = 0 : i64, tpu.core_type = #tpu.core_type<tc>, window_params = [{transform_indices = @transform_0, window_bounds = array<i64: 1, 64, 1152>}, {pipeline_mode = #tpu.pipeline_mode<synchronous>, transform_indices = @transform_1, window_bounds = array<i64: 1152, 128>}, {pipeline_mode = #tpu.pipeline_mode<synchronous>, transform_indices = @transform_2, window_bounds = array<i64: 1, 128>}, {transform_indices = @transform_3, window_bounds = array<i64: 1, 2, 128>}, {transform_indices = @transform_4, window_bounds = array<i64: 1, 64, 128>}]} {
    %c0 = arith.constant 0 : index
    %c0_0 = arith.constant 0 : index
    %c0_1 = arith.constant 0 : index
    %0 = vector.load %arg1[%c0, %c0_0, %c0_1] : memref<1x64x1152xbf16, #tpu.memory_space<vmem>>, vector<1x64x1152xbf16>
    %1 = vector.shape_cast %0 : vector<1x64x1152xbf16> to vector<64x1152xbf16>
    %c0_2 = arith.constant 0 : index
    %c0_3 = arith.constant 0 : index
    %2 = vector.load %arg2[%c0_2, %c0_3] : memref<1152x128xbf16, #tpu.memory_space<vmem>>, vector<1152x128xbf16>
    %cst = arith.constant dense<0.000000e+00> : vector<64x128xf32>
    %3 = tpu.matmul %1, %2, %cst {dimension_numbers = #tpu.dot_dimension_numbers<[1], [0], [0], [1], [0, 0, 1, 1], [], []>} : vector<64x1152xbf16>, vector<1152x128xbf16>, vector<64x128xf32> -> vector<64x128xf32>
    %c0_4 = arith.constant 0 : index
    %c0_5 = arith.constant 0 : index
    %4 = vector.load %arg3[%c0_4, %c0_5] : memref<1x128xf32, #tpu.memory_space<vmem>>, vector<1x128xf32>
    %5 = vector.broadcast %4 : vector<1x128xf32> to vector<64x128xf32>
    %6 = arith.addf %3, %5 : vector<64x128xf32>
    %cst_6 = arith.constant dense<0.000000e+00> : vector<128xf32>
    %7 = vector.multi_reduction <add>, %6, %cst_6 [0] : vector<64x128xf32> to vector<128xf32>
    %8 = vector.shape_cast %7 : vector<128xf32> to vector<1x128xf32>
    %cst_7 = arith.constant 6.400000e+01 : f32
    %9 = vector.broadcast %cst_7 : f32 to vector<1x128xf32>
    %10 = arith.divf %8, %9 : vector<1x128xf32>
    %11 = vector.broadcast %10 : vector<1x128xf32> to vector<64x128xf32>
    %12 = arith.subf %6, %11 : vector<64x128xf32>
    %13 = arith.mulf %12, %12 : vector<64x128xf32>
    %cst_8 = arith.constant dense<0.000000e+00> : vector<128xf32>
    %14 = vector.multi_reduction <add>, %13, %cst_8 [0] : vector<64x128xf32> to vector<128xf32>
    %15 = vector.shape_cast %14 : vector<128xf32> to vector<1x128xf32>
    %cst_9 = arith.constant 6.400000e+01 : f32
    %16 = vector.broadcast %cst_9 : f32 to vector<1x128xf32>
    %17 = arith.divf %15, %16 : vector<1x128xf32>
    %18 = vector.broadcast %10 : vector<1x128xf32> to vector<64x128xf32>
    %19 = arith.subf %6, %18 : vector<64x128xf32>
    %cst_10 = arith.constant 9.99999974E-6 : f32
    %20 = vector.broadcast %cst_10 : f32 to vector<1x128xf32>
    %21 = arith.addf %17, %20 : vector<1x128xf32>
    %22 = math.rsqrt %21 : vector<1x128xf32>
    %23 = vector.broadcast %22 : vector<1x128xf32> to vector<64x128xf32>
    %24 = arith.mulf %19, %23 : vector<64x128xf32>
    %c0_11 = arith.constant 0 : index
    %c0_12 = arith.constant 0 : index
    %c0_13 = arith.constant 0 : index
    %25 = vector.load %arg4[%c0_11, %c0_12, %c0_13] : memref<1x2x128xf32, #tpu.memory_space<vmem>>, vector<1x2x128xf32>
    %26 = vector.shape_cast %25 : vector<1x2x128xf32> to vector<2x128xf32>
    %27 = vector.extract_strided_slice %26 {offsets = [0, 0], sizes = [1, 128], strides = [1, 1]} : vector<2x128xf32> to vector<1x128xf32>
    %28 = vector.broadcast %27 : vector<1x128xf32> to vector<64x128xf32>
    %29 = arith.mulf %28, %24 : vector<64x128xf32>
    %30 = vector.extract_strided_slice %26 {offsets = [1, 0], sizes = [1, 128], strides = [1, 1]} : vector<2x128xf32> to vector<1x128xf32>
    %31 = vector.broadcast %30 : vector<1x128xf32> to vector<64x128xf32>
    %32 = arith.addf %29, %31 : vector<64x128xf32>
    %cst_14 = arith.constant 0.000000e+00 : f32
    %33 = vector.broadcast %cst_14 : f32 to vector<64x128xf32>
    %34 = arith.maximumf %32, %33 : vector<64x128xf32>
    %c0_15 = arith.constant 0 : index
    %c0_16 = arith.constant 0 : index
    %c0_17 = arith.constant 0 : index
    %35 = vector.load %arg5[%c0_15, %c0_16, %c0_17] : memref<1x64x128xf32, #tpu.memory_space<vmem>>, vector<1x64x128xf32>
    %36 = vector.shape_cast %35 : vector<1x64x128xf32> to vector<64x128xf32>
    %37 = vector.shape_cast %34 : vector<64x128xf32> to vector<1x64x128xf32>
    tpu.vector_store %arg5[%c0_15, %c0_16, %c0_17], %37 {strides = array<i32>} : memref<1x64x128xf32, #tpu.memory_space<vmem>>, vector<1x64x128xf32>,
    return
  }
  func.func @transform_0(%arg0: i32) -> (i32, i32, i32) {
    %c0_i32 = arith.constant 0 : i32
    %c0_i32_0 = arith.constant 0 : i32
    %c0_i32_1 = arith.constant 0 : i32
    return %arg0, %c0_i32, %c0_i32_0 : i32, i32, i32
  }
  func.func @transform_1(%arg0: i32) -> (i32, i32) {
    %c0_i32 = arith.constant 0 : i32
    %c0_i32_0 = arith.constant 0 : i32
    %c0_i32_1 = arith.constant 0 : i32
    return %c0_i32, %c0_i32_0 : i32, i32
  }
  func.func @transform_2(%arg0: i32) -> (i32, i32) {
    %c0_i32 = arith.constant 0 : i32
    %c0_i32_0 = arith.constant 0 : i32
    %c0_i32_1 = arith.constant 0 : i32
    return %c0_i32, %c0_i32_0 : i32, i32
  }
  func.func @transform_3(%arg0: i32) -> (i32, i32, i32) {
    %c0_i32 = arith.constant 0 : i32
    %c0_i32_0 = arith.constant 0 : i32
    %c0_i32_1 = arith.constant 0 : i32
    return %arg0, %c0_i32, %c0_i32_0 : i32, i32, i32
  }
  func.func @transform_4(%arg0: i32) -> (i32, i32, i32) {
    %c0_i32 = arith.constant 0 : i32
    %c0_i32_0 = arith.constant 0 : i32
    %c0_i32_1 = arith.constant 0 : i32
    return %arg0, %c0_i32, %c0_i32_0 : i32, i32, i32
  }
}

module attributes {stable_mosaic.version = 11 : i64} {
  func.func @_conv_block_kernel(%arg0: i32, %arg1: memref<1x256x576xbf16, #tpu.memory_space<vmem>>, %arg2: memref<576x128xbf16, #tpu.memory_space<vmem>>, %arg3: memref<1x128xf32, #tpu.memory_space<vmem>>, %arg4: memref<1x2x128xf32, #tpu.memory_space<vmem>>, %arg5: memref<1x256x128xf32, #tpu.memory_space<vmem>>) attributes {dimension_semantics = [#tpu.dimension_semantics<parallel>], iteration_bounds = array<i64: 2>, scalar_prefetch = 0 : i64, scratch_operands = 0 : i64, tpu.core_type = #tpu.core_type<tc>, window_params = [{transform_indices = @transform_0, window_bounds = array<i64: 1, 256, 576>}, {pipeline_mode = #tpu.pipeline_mode<synchronous>, transform_indices = @transform_1, window_bounds = array<i64: 576, 128>}, {pipeline_mode = #tpu.pipeline_mode<synchronous>, transform_indices = @transform_2, window_bounds = array<i64: 1, 128>}, {transform_indices = @transform_3, window_bounds = array<i64: 1, 2, 128>}, {transform_indices = @transform_4, window_bounds = array<i64: 1, 256, 128>}]} {
    %c0 = arith.constant 0 : index
    %c0_0 = arith.constant 0 : index
    %c0_1 = arith.constant 0 : index
    %0 = vector.load %arg1[%c0, %c0_0, %c0_1] : memref<1x256x576xbf16, #tpu.memory_space<vmem>>, vector<1x256x576xbf16>
    %1 = vector.shape_cast %0 : vector<1x256x576xbf16> to vector<256x576xbf16>
    %c0_2 = arith.constant 0 : index
    %c0_3 = arith.constant 0 : index
    %2 = vector.load %arg2[%c0_2, %c0_3] : memref<576x128xbf16, #tpu.memory_space<vmem>>, vector<576x128xbf16>
    %cst = arith.constant dense<0.000000e+00> : vector<256x128xf32>
    %3 = tpu.matmul %1, %2, %cst {dimension_numbers = #tpu.dot_dimension_numbers<[1], [0], [0], [1], [0, 0, 1, 1], [], []>} : vector<256x576xbf16>, vector<576x128xbf16>, vector<256x128xf32> -> vector<256x128xf32>
    %c0_4 = arith.constant 0 : index
    %c0_5 = arith.constant 0 : index
    %4 = vector.load %arg3[%c0_4, %c0_5] : memref<1x128xf32, #tpu.memory_space<vmem>>, vector<1x128xf32>
    %5 = vector.broadcast %4 : vector<1x128xf32> to vector<256x128xf32>
    %6 = arith.addf %3, %5 : vector<256x128xf32>
    %cst_6 = arith.constant dense<0.000000e+00> : vector<128xf32>
    %7 = vector.multi_reduction <add>, %6, %cst_6 [0] : vector<256x128xf32> to vector<128xf32>
    %8 = vector.shape_cast %7 : vector<128xf32> to vector<1x128xf32>
    %cst_7 = arith.constant 2.560000e+02 : f32
    %9 = vector.broadcast %cst_7 : f32 to vector<1x128xf32>
    %10 = arith.divf %8, %9 : vector<1x128xf32>
    %11 = vector.broadcast %10 : vector<1x128xf32> to vector<256x128xf32>
    %12 = arith.subf %6, %11 : vector<256x128xf32>
    %13 = arith.mulf %12, %12 : vector<256x128xf32>
    %cst_8 = arith.constant dense<0.000000e+00> : vector<128xf32>
    %14 = vector.multi_reduction <add>, %13, %cst_8 [0] : vector<256x128xf32> to vector<128xf32>
    %15 = vector.shape_cast %14 : vector<128xf32> to vector<1x128xf32>
    %cst_9 = arith.constant 2.560000e+02 : f32
    %16 = vector.broadcast %cst_9 : f32 to vector<1x128xf32>
    %17 = arith.divf %15, %16 : vector<1x128xf32>
    %18 = vector.broadcast %10 : vector<1x128xf32> to vector<256x128xf32>
    %19 = arith.subf %6, %18 : vector<256x128xf32>
    %cst_10 = arith.constant 9.99999974E-6 : f32
    %20 = vector.broadcast %cst_10 : f32 to vector<1x128xf32>
    %21 = arith.addf %17, %20 : vector<1x128xf32>
    %22 = math.rsqrt %21 : vector<1x128xf32>
    %23 = vector.broadcast %22 : vector<1x128xf32> to vector<256x128xf32>
    %24 = arith.mulf %19, %23 : vector<256x128xf32>
    %c0_11 = arith.constant 0 : index
    %c0_12 = arith.constant 0 : index
    %c0_13 = arith.constant 0 : index
    %25 = vector.load %arg4[%c0_11, %c0_12, %c0_13] : memref<1x2x128xf32, #tpu.memory_space<vmem>>, vector<1x2x128xf32>
    %26 = vector.shape_cast %25 : vector<1x2x128xf32> to vector<2x128xf32>
    %27 = vector.extract_strided_slice %26 {offsets = [0, 0], sizes = [1, 128], strides = [1, 1]} : vector<2x128xf32> to vector<1x128xf32>
    %28 = vector.broadcast %27 : vector<1x128xf32> to vector<256x128xf32>
    %29 = arith.mulf %28, %24 : vector<256x128xf32>
    %30 = vector.extract_strided_slice %26 {offsets = [1, 0], sizes = [1, 128], strides = [1, 1]} : vector<2x128xf32> to vector<1x128xf32>
    %31 = vector.broadcast %30 : vector<1x128xf32> to vector<256x128xf32>
    %32 = arith.addf %29, %31 : vector<256x128xf32>
    %cst_14 = arith.constant 0.000000e+00 : f32
    %33 = vector.broadcast %cst_14 : f32 to vector<256x128xf32>
    %34 = arith.maximumf %32, %33 : vector<256x128xf32>
    %c0_15 = arith.constant 0 : index
    %c0_16 = arith.constant 0 : index
    %c0_17 = arith.constant 0 : index
    %35 = vector.load %arg5[%c0_15, %c0_16, %c0_17] : memref<1x256x128xf32, #tpu.memory_space<vmem>>, vector<1x256x128xf32>
    %36 = vector.shape_cast %35 : vector<1x256x128xf32> to vector<256x128xf32>
    %37 = vector.shape_cast %34 : vector<256x128xf32> to vector<1x256x128xf32>
    tpu.vector_store %arg5[%c0_15, %c0_16, %c0_17], %37 {strides = array<i32>} : memref<1x256x128xf32, #tpu.memory_space<vmem>>, vector<1x256x128xf32>,
    return
  }
  func.func @transform_0(%arg0: i32) -> (i32, i32, i32) {
    %c0_i32 = arith.constant 0 : i32
    %c0_i32_0 = arith.constant 0 : i32
    %c0_i32_1 = arith.constant 0 : i32
    return %arg0, %c0_i32, %c0_i32_0 : i32, i32, i32
  }
  func.func @transform_1(%arg0: i32) -> (i32, i32) {
    %c0_i32 = arith.constant 0 : i32
    %c0_i32_0 = arith.constant 0 : i32
    %c0_i32_1 = arith.constant 0 : i32
    return %c0_i32, %c0_i32_0 : i32, i32
  }
  func.func @transform_2(%arg0: i32) -> (i32, i32) {
    %c0_i32 = arith.constant 0 : i32
    %c0_i32_0 = arith.constant 0 : i32
    %c0_i32_1 = arith.constant 0 : i32
    return %c0_i32, %c0_i32_0 : i32, i32
  }
  func.func @transform_3(%arg0: i32) -> (i32, i32, i32) {
    %c0_i32 = arith.constant 0 : i32
    %c0_i32_0 = arith.constant 0 : i32
    %c0_i32_1 = arith.constant 0 : i32
    return %arg0, %c0_i32, %c0_i32_0 : i32, i32, i32
  }
  func.func @transform_4(%arg0: i32) -> (i32, i32, i32) {
    %c0_i32 = arith.constant 0 : i32
    %c0_i32_0 = arith.constant 0 : i32
    %c0_i32_1 = arith.constant 0 : i32
    return %arg0, %c0_i32, %c0_i32_0 : i32, i32, i32
  }
}

module attributes {stable_mosaic.version = 11 : i64} {
  func.func @_conv_block_kernel(%arg0: i32, %arg1: memref<1x256x576xbf16, #tpu.memory_space<vmem>>, %arg2: memref<576x128xbf16, #tpu.memory_space<vmem>>, %arg3: memref<1x128xf32, #tpu.memory_space<vmem>>, %arg4: memref<1x2x128xf32, #tpu.memory_space<vmem>>, %arg5: memref<1x256x128xf32, #tpu.memory_space<vmem>>) attributes {dimension_semantics = [#tpu.dimension_semantics<parallel>], iteration_bounds = array<i64: 2>, scalar_prefetch = 0 : i64, scratch_operands = 0 : i64, tpu.core_type = #tpu.core_type<tc>, window_params = [{transform_indices = @transform_0, window_bounds = array<i64: 1, 256, 576>}, {pipeline_mode = #tpu.pipeline_mode<synchronous>, transform_indices = @transform_1, window_bounds = array<i64: 576, 128>}, {pipeline_mode = #tpu.pipeline_mode<synchronous>, transform_indices = @transform_2, window_bounds = array<i64: 1, 128>}, {transform_indices = @transform_3, window_bounds = array<i64: 1, 2, 128>}, {transform_indices = @transform_4, window_bounds = array<i64: 1, 256, 128>}]} {
    %c0 = arith.constant 0 : index
    %c0_0 = arith.constant 0 : index
    %c0_1 = arith.constant 0 : index
    %0 = vector.load %arg1[%c0, %c0_0, %c0_1] : memref<1x256x576xbf16, #tpu.memory_space<vmem>>, vector<1x256x576xbf16>
    %1 = vector.shape_cast %0 : vector<1x256x576xbf16> to vector<256x576xbf16>
    %c0_2 = arith.constant 0 : index
    %c0_3 = arith.constant 0 : index
    %2 = vector.load %arg2[%c0_2, %c0_3] : memref<576x128xbf16, #tpu.memory_space<vmem>>, vector<576x128xbf16>
    %cst = arith.constant dense<0.000000e+00> : vector<256x128xf32>
    %3 = tpu.matmul %1, %2, %cst {dimension_numbers = #tpu.dot_dimension_numbers<[1], [0], [0], [1], [0, 0, 1, 1], [], []>} : vector<256x576xbf16>, vector<576x128xbf16>, vector<256x128xf32> -> vector<256x128xf32>
    %c0_4 = arith.constant 0 : index
    %c0_5 = arith.constant 0 : index
    %4 = vector.load %arg3[%c0_4, %c0_5] : memref<1x128xf32, #tpu.memory_space<vmem>>, vector<1x128xf32>
    %5 = vector.broadcast %4 : vector<1x128xf32> to vector<256x128xf32>
    %6 = arith.addf %3, %5 : vector<256x128xf32>
    %cst_6 = arith.constant dense<0.000000e+00> : vector<128xf32>
    %7 = vector.multi_reduction <add>, %6, %cst_6 [0] : vector<256x128xf32> to vector<128xf32>
    %8 = vector.shape_cast %7 : vector<128xf32> to vector<1x128xf32>
    %cst_7 = arith.constant 2.560000e+02 : f32
    %9 = vector.broadcast %cst_7 : f32 to vector<1x128xf32>
    %10 = arith.divf %8, %9 : vector<1x128xf32>
    %11 = vector.broadcast %10 : vector<1x128xf32> to vector<256x128xf32>
    %12 = arith.subf %6, %11 : vector<256x128xf32>
    %13 = arith.mulf %12, %12 : vector<256x128xf32>
    %cst_8 = arith.constant dense<0.000000e+00> : vector<128xf32>
    %14 = vector.multi_reduction <add>, %13, %cst_8 [0] : vector<256x128xf32> to vector<128xf32>
    %15 = vector.shape_cast %14 : vector<128xf32> to vector<1x128xf32>
    %cst_9 = arith.constant 2.560000e+02 : f32
    %16 = vector.broadcast %cst_9 : f32 to vector<1x128xf32>
    %17 = arith.divf %15, %16 : vector<1x128xf32>
    %18 = vector.broadcast %10 : vector<1x128xf32> to vector<256x128xf32>
    %19 = arith.subf %6, %18 : vector<256x128xf32>
    %cst_10 = arith.constant 9.99999974E-6 : f32
    %20 = vector.broadcast %cst_10 : f32 to vector<1x128xf32>
    %21 = arith.addf %17, %20 : vector<1x128xf32>
    %22 = math.rsqrt %21 : vector<1x128xf32>
    %23 = vector.broadcast %22 : vector<1x128xf32> to vector<256x128xf32>
    %24 = arith.mulf %19, %23 : vector<256x128xf32>
    %c0_11 = arith.constant 0 : index
    %c0_12 = arith.constant 0 : index
    %c0_13 = arith.constant 0 : index
    %25 = vector.load %arg4[%c0_11, %c0_12, %c0_13] : memref<1x2x128xf32, #tpu.memory_space<vmem>>, vector<1x2x128xf32>
    %26 = vector.shape_cast %25 : vector<1x2x128xf32> to vector<2x128xf32>
    %27 = vector.extract_strided_slice %26 {offsets = [0, 0], sizes = [1, 128], strides = [1, 1]} : vector<2x128xf32> to vector<1x128xf32>
    %28 = vector.broadcast %27 : vector<1x128xf32> to vector<256x128xf32>
    %29 = arith.mulf %28, %24 : vector<256x128xf32>
    %30 = vector.extract_strided_slice %26 {offsets = [1, 0], sizes = [1, 128], strides = [1, 1]} : vector<2x128xf32> to vector<1x128xf32>
    %31 = vector.broadcast %30 : vector<1x128xf32> to vector<256x128xf32>
    %32 = arith.addf %29, %31 : vector<256x128xf32>
    %c0_14 = arith.constant 0 : index
    %c0_15 = arith.constant 0 : index
    %c0_16 = arith.constant 0 : index
    %33 = vector.load %arg5[%c0_14, %c0_15, %c0_16] : memref<1x256x128xf32, #tpu.memory_space<vmem>>, vector<1x256x128xf32>
    %34 = vector.shape_cast %33 : vector<1x256x128xf32> to vector<256x128xf32>
    %35 = vector.shape_cast %32 : vector<256x128xf32> to vector<1x256x128xf32>
    tpu.vector_store %arg5[%c0_14, %c0_15, %c0_16], %35 {strides = array<i32>} : memref<1x256x128xf32, #tpu.memory_space<vmem>>, vector<1x256x128xf32>,
    return
  }
  func.func @transform_0(%arg0: i32) -> (i32, i32, i32) {
    %c0_i32 = arith.constant 0 : i32
    %c0_i32_0 = arith.constant 0 : i32
    %c0_i32_1 = arith.constant 0 : i32
    return %arg0, %c0_i32, %c0_i32_0 : i32, i32, i32
  }
  func.func @transform_1(%arg0: i32) -> (i32, i32) {
    %c0_i32 = arith.constant 0 : i32
    %c0_i32_0 = arith.constant 0 : i32
    %c0_i32_1 = arith.constant 0 : i32
    return %c0_i32, %c0_i32_0 : i32, i32
  }
  func.func @transform_2(%arg0: i32) -> (i32, i32) {
    %c0_i32 = arith.constant 0 : i32
    %c0_i32_0 = arith.constant 0 : i32
    %c0_i32_1 = arith.constant 0 : i32
    return %c0_i32, %c0_i32_0 : i32, i32
  }
  func.func @transform_3(%arg0: i32) -> (i32, i32, i32) {
    %c0_i32 = arith.constant 0 : i32
    %c0_i32_0 = arith.constant 0 : i32
    %c0_i32_1 = arith.constant 0 : i32
    return %arg0, %c0_i32, %c0_i32_0 : i32, i32, i32
  }
  func.func @transform_4(%arg0: i32) -> (i32, i32, i32) {
    %c0_i32 = arith.constant 0 : i32
    %c0_i32_0 = arith.constant 0 : i32
    %c0_i32_1 = arith.constant 0 : i32
    return %arg0, %c0_i32, %c0_i32_0 : i32, i32, i32
  }
}

</mosaic_0001>

<llo_original>
// kernel: vgg_decoder_forward.8
$region0: #{vgg_decoder_forward.8}
  #allocation0 [shape = 'u32[]', space=smem, size = 0x4, offset = 0x4, fixed_abs, tag = 'smem constant byte address 0x4 - core index']
  #allocation1 [shape = 'u32[144,128]{1,0:T(1,128)}', space=vmem, size = 0x12000, scoped, tag = 'internal scratch']
  %s0 = inlined_call_operand.vmem [shape: bf16[2,16,2304], index: 0, kind: input, shape index: {}]
  %s1 = inlined_call_operand.vmem [shape: bf16[2304,256], index: 1, kind: input, shape index: {}]
  %s2 = inlined_call_operand.vmem [shape: f32[1,256], index: 2, kind: input, shape index: {}]
  %s3 = inlined_call_operand.vmem [shape: f32[2,2,256], index: 3, kind: input, shape index: {}]
  %s4 = inlined_call_operand.vmem [shape: f32[2,16,256], index: 4, kind: output, shape index: {}]
  %s5 = sld [smem:[#allocation0]]
  $region49: #{vgg_decoder_forward.8} parent=0
    _
  %s7 = ssub.s32 1, %s5
  %s8 = scalar_select 0, %s7, %s5
  loop: start=0, step=1, limit=4
  $region2: #{vgg_decoder_forward.8} parent=0 // loop_pre_header
    _
  $region3: #{vgg_decoder_forward.8} parent=0 // loop_header
    %s10 = sphi 0, %s14
    %p11 = scmp.ge.s32.totalorder %s10, 4
    %s20 = sphi 0, %s22
    %s23 = sphi 0, %s20
    %s24 = sphi 0, %s23
    %s40 = sphi 0, %s24
    %s44 = sphi 0, %s44
    %s46 = sphi 0, %s44
    %s47 = sphi 0, %s46
    %s61 = sphi 0, %s47
    %s65 = sphi 0, %s65
    %s67 = sphi 0, %s65
    %s68 = sphi 0, %s67
    %s82 = sphi 0, %s68
    %s88 = sphi 0, %s90
    %s91 = sphi 0, %s88
    %s92 = sphi 0, %s91
    %s108 = sphi 0, %s92
    %s114 = sphi 0, %s116
    %s117 = sphi 0, %s114
    %s118 = sphi 0, %s117
    %s134 = sphi 0, %s118
  $region4: #{vgg_decoder_forward.8} parent=0 // loop_header_branch
    %13 = sbr.rel (%p11) target = $region8
  $region5: #{vgg_decoder_forward.8} parent=0 // loop_body
    %s15 = ssub.s32 %s10, 1
    %s16 = ssub.s32 %s10, 2
    %s17 = sadd.s32 %s10, 1
    %s18 = ssub.s32 %s10, %s17
    %p19 = scmp.eq.s32.totalorder %s18, 0
    %s21 = sadd.s32 %s20, 1
    %s22 = scalar_select %p19, %s20, %s21
    %p25 = pneg %p19
    %p26 = scmp.eq.s32.totalorder %s10, 1
    %p27 = por %p25, %p26
    %p28 = scmp.ne.s32.totalorder %s20, %s23
    %p29 = scmp.eq.s32.totalorder %s10, 0
    %p30 = por %p28, %p29
    %p31 = scmp.ne.s32.totalorder %s20, %s23
    %p32 = scmp.eq.s32.totalorder %s15, 1
    %p33 = por %p31, %p32
    %p34 = scmp.ne.s32.totalorder %s23, %s24
    %p35 = scmp.eq.s32.totalorder %s15, 0
    %p36 = por %p34, %p35
    %p37 = scmp.ne.s32.totalorder %s23, %s24
    %p38 = scmp.eq.s32.totalorder %s16, 1
    %p39 = por %p37, %p38
    %p41 = scmp.ne.s32.totalorder %s24, %s40
    %p42 = scmp.eq.s32.totalorder %s16, 0
    %p43 = por %p41, %p42
    %s45 = sadd.s32 %s44, 1
    %p48 = scmp.eq.s32.totalorder %s10, 1
    %p49 = scmp.ne.s32.totalorder %s44, %s46
    %p50 = scmp.eq.s32.totalorder %s10, 0
    %p51 = por %p49, %p50
    %p52 = scmp.ne.s32.totalorder %s44, %s46
    %p53 = scmp.eq.s32.totalorder %s15, 1
    %p54 = por %p52, %p53
    %p55 = scmp.ne.s32.totalorder %s46, %s47
    %p56 = scmp.eq.s32.totalorder %s15, 0
    %p57 = por %p55, %p56
    %p58 = scmp.ne.s32.totalorder %s46, %s47
    %p59 = scmp.eq.s32.totalorder %s16, 1
    %p60 = por %p58, %p59
    %p62 = scmp.ne.s32.totalorder %s47, %s61
    %p63 = scmp.eq.s32.totalorder %s16, 0
    %p64 = por %p62, %p63
    %s66 = sadd.s32 %s65, 1
    %p69 = scmp.eq.s32.totalorder %s10, 1
    %p70 = scmp.ne.s32.totalorder %s65, %s67
    %p71 = scmp.eq.s32.totalorder %s10, 0
    %p72 = por %p70, %p71
    %p73 = scmp.ne.s32.totalorder %s65, %s67
    %p74 = scmp.eq.s32.totalorder %s15, 1
    %p75 = por %p73, %p74
    %p76 = scmp.ne.s32.totalorder %s67, %s68
    %p77 = scmp.eq.s32.totalorder %s15, 0
    %p78 = por %p76, %p77
    %p79 = scmp.ne.s32.totalorder %s67, %s68
    %p80 = scmp.eq.s32.totalorder %s16, 1
    %p81 = por %p79, %p80
    %p83 = scmp.ne.s32.totalorder %s68, %s82
    %p84 = scmp.eq.s32.totalorder %s16, 0
    %p85 = por %p83, %p84
    %s86 = ssub.s32 %s10, %s17
    %p87 = scmp.eq.s32.totalorder %s86, 0
    %s89 = sadd.s32 %s88, 1
    %s90 = scalar_select %p87, %s88, %s89
    %p93 = pneg %p87
    %p94 = scmp.eq.s32.totalorder %s10, 1
    %p95 = por %p93, %p94
    %p96 = scmp.ne.s32.totalorder %s88, %s91
    %p97 = scmp.eq.s32.totalorder %s10, 0
    %p98 = por %p96, %p97
    %p99 = scmp.ne.s32.totalorder %s88, %s91
    %p100 = scmp.eq.s32.totalorder %s15, 1
    %p101 = por %p99, %p100
    %p102 = scmp.ne.s32.totalorder %s91, %s92
    %p103 = scmp.eq.s32.totalorder %s15, 0
    %p104 = por %p102, %p103
    %p105 = scmp.ne.s32.totalorder %s91, %s92
    %p106 = scmp.eq.s32.totalorder %s16, 1
    %p107 = por %p105, %p106
    %p109 = scmp.ne.s32.totalorder %s92, %s108
    %p110 = scmp.eq.s32.totalorder %s16, 0
    %p111 = por %p109, %p110
    %s112 = ssub.s32 %s10, %s17
    %p113 = scmp.eq.s32.totalorder %s112, 0
    %s115 = sadd.s32 %s114, 1
    %s116 = scalar_select %p113, %s114, %s115
    %p119 = pneg %p113
    %p120 = scmp.eq.s32.totalorder %s10, 1
    %p121 = por %p119, %p120
    %p122 = scmp.ne.s32.totalorder %s114, %s117
    %p123 = scmp.eq.s32.totalorder %s10, 0
    %p124 = por %p122, %p123
    %p125 = scmp.ne.s32.totalorder %s114, %s117
    %p126 = scmp.eq.s32.totalorder %s15, 1
    %p127 = por %p125, %p126
    %p128 = scmp.ne.s32.totalorder %s117, %s118
    %p129 = scmp.eq.s32.totalorder %s15, 0
    %p130 = por %p128, %p129
    %p131 = scmp.ne.s32.totalorder %s117, %s118
    %p132 = scmp.eq.s32.totalorder %s16, 1
    %p133 = por %p131, %p132
    %p135 = scmp.ne.s32.totalorder %s118, %s134
    %p136 = scmp.eq.s32.totalorder %s16, 0
    %p137 = por %p135, %p136
    %p138 = scmp.le.s32.totalorder 1, %s10
    %p139 = scmp.lt.s32.totalorder %s10, 3
    %p140 = pnand %p138, %p139
    %p141 = pneg %p140
    // Predicated region
    $region9: #{vgg_decoder_forward.8} parent=5 // pred_check
      _
    $region10: #{vgg_decoder_forward.8} parent=5 // pred_check_branch
      %143 = sbr.rel (%p140) target = $region12
    $region11: #{vgg_decoder_forward.8} parent=5 // pred_region
      %s144 = ssub.s32 %s10, 1
      // Predicated region
      $region13: #{vgg_decoder_forward.8} parent=11 // pred_check
        %p145 = pneg %p57
      $region14: #{vgg_decoder_forward.8} parent=11 // pred_check_branch
        %147 = sbr.rel (%p145) target = $region16
      $region15: #{vgg_decoder_forward.8} parent=11 // pred_region
        _
      $region16: #{vgg_decoder_forward.8} parent=11 // pred_fallthru
        _
      // Predicated region
      $region17: #{vgg_decoder_forward.8} parent=11 // pred_check
        %p148 = pneg %p78
      $region18: #{vgg_decoder_forward.8} parent=11 // pred_check_branch
        %150 = sbr.rel (%p148) target = $region20
      $region19: #{vgg_decoder_forward.8} parent=11 // pred_region
        _
      $region20: #{vgg_decoder_forward.8} parent=11 // pred_fallthru
        _
    $region12: #{vgg_decoder_forward.8} parent=5 // pred_fallthru
      _
    %p151 = scmp.lt.s32.totalorder %s10, 2
    // Predicated region
    $region21: #{vgg_decoder_forward.8} parent=5 // pred_check
      %p152 = pneg %p151
    $region22: #{vgg_decoder_forward.8} parent=5 // pred_check_branch
      %154 = sbr.rel (%p152) target = $region24
    $region23: #{vgg_decoder_forward.8} parent=5 // pred_region
      // Predicated region
      $region25: #{vgg_decoder_forward.8} parent=23 // pred_check
        %p155 = pneg %p30
      $region26: #{vgg_decoder_forward.8} parent=23 // pred_check_branch
        %157 = sbr.rel (%p155) target = $region28
      $region27: #{vgg_decoder_forward.8} parent=23 // pred_region
        %p158 = scmp.lt.s32.totalorder %s10, 1
        %s159 = scalar_select %p158, %s10, 1
        %s160 = smul.addr %s159, 36
        %s161 = smul.addr %s160, 4
        %s162 = scalar_lea.vmem %s0, %s161
      $region28: #{vgg_decoder_forward.8} parent=23 // pred_fallthru
        _
      // Predicated region
      $region29: #{vgg_decoder_forward.8} parent=23 // pred_check
        %p163 = pneg %p98
      $region30: #{vgg_decoder_forward.8} parent=23 // pred_check_branch
        %165 = sbr.rel (%p163) target = $region32
      $region31: #{vgg_decoder_forward.8} parent=23 // pred_region
        %p166 = scmp.lt.s32.totalorder %s10, 1
        %s167 = scalar_select %p166, %s10, 1
        %s168 = smul.addr %s167, 2
        %s169 = smul.addr %s168, 2
        %s170 = scalar_lea.vmem %s3, %s169
      $region32: #{vgg_decoder_forward.8} parent=23 // pred_fallthru
        _
    $region24: #{vgg_decoder_forward.8} parent=5 // pred_fallthru
      _
    %p171 = scmp.le.s32.totalorder 1, %s10
    %p172 = scmp.lt.s32.totalorder %s10, 3
    %p173 = pnand %p171, %p172
    %p174 = pneg %p173
    // Predicated region
    $region33: #{vgg_decoder_forward.8} parent=5 // pred_check
      _
    $region34: #{vgg_decoder_forward.8} parent=5 // pred_check_branch
      %176 = sbr.rel (%p173) target = $region36
    $region35: #{vgg_decoder_forward.8} parent=5 // pred_region
      %s177 = ssub.s32 %s10, 1
      %p178 = scmp.lt.s32.totalorder %s15, 1
      %s179 = scalar_select %p178, %s15, 1
      %s180 = smul.addr %s179, 36
      %s181 = smul.addr %s180, 4
      %s182 = scalar_lea.vmem %s0, %s181
      %p183 = pneg %p36
      %p184 = pneg %p33
      %p185 = pneg %p57
      %p186 = pneg %p54
      %p187 = pneg %p78
      %p188 = pneg %p75
      %p189 = scmp.lt.s32.totalorder %s15, 1
      %s190 = scalar_select %p189, %s15, 1
      %s191 = smul.addr %s190, 2
      %s192 = smul.addr %s191, 2
      %s193 = scalar_lea.vmem %s3, %s192
      %p194 = pneg %p104
      %p195 = pneg %p101
      %p196 = pneg %p130
      %p197 = pneg %p127
      %p198 = scmp.lt.s32.totalorder %s15, 1
      %s199 = scalar_select %p198, %s15, 1
      %s200 = smul.addr %s199, 4
      %s201 = smul.addr %s200, 8
      %s202 = scalar_lea.vmem %s4, %s201
      %p203 = scmp.lt.s32.totalorder %s15, 1
      %s204 = scalar_select %p203, %s15, 1
      %s205 = smul.addr %s204, 36
      %s206 = smul.addr %s205, 4
      %s207 = scalar_lea.vmem %s0, %s206
      %p208 = scmp.lt.s32.totalorder %s15, 1
      %s209 = scalar_select %p208, %s15, 1
      %s210 = smul.addr %s209, 2
      %s211 = smul.addr %s210, 2
      %s212 = scalar_lea.vmem %s3, %s211
      %p213 = scmp.lt.s32.totalorder %s15, 1
      %s214 = scalar_select %p213, %s15, 1
      %s215 = smul.addr %s214, 4
      %s216 = smul.addr %s215, 8
      %s217 = scalar_lea.vmem %s4, %s216
      %v218 = vld [vmem:[%s207] sm:$0xff]
      %v219 = vld [vmem:[%s207 + $0x8] sm:$0xff]
      %v220 = vld [vmem:[%s207 + $0x10] sm:$0xff]
      %v221 = vld [vmem:[%s207 + $0x18] sm:$0xff]
      %v222 = vld [vmem:[%s207 + $0x20] sm:$0xff]
      %v223 = vld [vmem:[%s207 + $0x28] sm:$0xff]
      %v224 = vld [vmem:[%s207 + $0x30] sm:$0xff]
      %v225 = vld [vmem:[%s207 + $0x38] sm:$0xff]
      %v226 = vld [vmem:[%s207 + $0x40] sm:$0xff]
      %v227 = vld [vmem:[%s207 + $0x48] sm:$0xff]
      %v228 = vld [vmem:[%s207 + $0x50] sm:$0xff]
      %v229 = vld [vmem:[%s207 + $0x58] sm:$0xff]
      %v230 = vld [vmem:[%s207 + $0x60] sm:$0xff]
      %v231 = vld [vmem:[%s207 + $0x68] sm:$0xff]
      %v232 = vld [vmem:[%s207 + $0x70] sm:$0xff]
      %v233 = vld [vmem:[%s207 + $0x78] sm:$0xff]
      %v234 = vld [vmem:[%s207 + $0x80] sm:$0xff]
      %v235 = vld [vmem:[%s207 + $0x88] sm:$0xff]
      %v236 = vld [vmem:[%s1] sm:$0xff]
      %v237 = vld [vmem:[%s1 + $0x8] sm:$0xff]
      %v238 = vld [vmem:[%s1 + $0x10] sm:$0xff]
      %v239 = vld [vmem:[%s1 + $0x18] sm:$0xff]
      %v240 = vld [vmem:[%s1 + $0x20] sm:$0xff]
      %v241 = vld [vmem:[%s1 + $0x28] sm:$0xff]
      %v242 = vld [vmem:[%s1 + $0x30] sm:$0xff]
      %v243 = vld [vmem:[%s1 + $0x38] sm:$0xff]
      %v244 = vld [vmem:[%s1 + $0x40] sm:$0xff]
      %v245 = vld [vmem:[%s1 + $0x48] sm:$0xff]
      %v246 = vld [vmem:[%s1 + $0x50] sm:$0xff]
      %v247 = vld [vmem:[%s1 + $0x58] sm:$0xff]
      %v248 = vld [vmem:[%s1 + $0x60] sm:$0xff]
      %v249 = vld [vmem:[%s1 + $0x68] sm:$0xff]
      %v250 = vld [vmem:[%s1 + $0x70] sm:$0xff]
      %v251 = vld [vmem:[%s1 + $0x78] sm:$0xff]
      %v252 = vld [vmem:[%s1 + $0x80] sm:$0xff]
      %v253 = vld [vmem:[%s1 + $0x88] sm:$0xff]
      %v254 = vld [vmem:[%s1 + $0x90] sm:$0xff]
      %v255 = vld [vmem:[%s1 + $0x98] sm:$0xff]
      %v256 = vld [vmem:[%s1 + $0xa0] sm:$0xff]
      %v257 = vld [vmem:[%s1 + $0xa8] sm:$0xff]
      %v258 = vld [vmem:[%s1 + $0xb0] sm:$0xff]
      %v259 = vld [vmem:[%s1 + $0xb8] sm:$0xff]
      %v260 = vld [vmem:[%s1 + $0xc0] sm:$0xff]
      %v261 = vld [vmem:[%s1 + $0xc8] sm:$0xff]
      %v262 = vld [vmem:[%s1 + $0xd0] sm:$0xff]
      %v263 = vld [vmem:[%s1 + $0xd8] sm:$0xff]
      %v264 = vld [vmem:[%s1 + $0xe0] sm:$0xff]
      %v265 = vld [vmem:[%s1 + $0xe8] sm:$0xff]
      %v266 = vld [vmem:[%s1 + $0xf0] sm:$0xff]
      %v267 = vld [vmem:[%s1 + $0xf8] sm:$0xff]
      %v268 = vld [vmem:[%s1 + $0x100] sm:$0xff]
      %v269 = vld [vmem:[%s1 + $0x108] sm:$0xff]
      %v270 = vld [vmem:[%s1 + $0x110] sm:$0xff]
      %v271 = vld [vmem:[%s1 + $0x118] sm:$0xff]
      %v272 = vld [vmem:[%s1 + $0x120] sm:$0xff]
      %v273 = vld [vmem:[%s1 + $0x128] sm:$0xff]
      %v274 = vld [vmem:[%s1 + $0x130] sm:$0xff]
      %v275 = vld [vmem:[%s1 + $0x138] sm:$0xff]
      %v276 = vld [vmem:[%s1 + $0x140] sm:$0xff]
      %v277 = vld [vmem:[%s1 + $0x148] sm:$0xff]
      %v278 = vld [vmem:[%s1 + $0x150] sm:$0xff]
      %v279 = vld [vmem:[%s1 + $0x158] sm:$0xff]
      %v280 = vld [vmem:[%s1 + $0x160] sm:$0xff]
      %v281 = vld [vmem:[%s1 + $0x168] sm:$0xff]
      %v282 = vld [vmem:[%s1 + $0x170] sm:$0xff]
      %v283 = vld [vmem:[%s1 + $0x178] sm:$0xff]
      %v284 = vld [vmem:[%s1 + $0x180] sm:$0xff]
      %v285 = vld [vmem:[%s1 + $0x188] sm:$0xff]
      %v286 = vld [vmem:[%s1 + $0x190] sm:$0xff]
      %v287 = vld [vmem:[%s1 + $0x198] sm:$0xff]
      %v288 = vld [vmem:[%s1 + $0x1a0] sm:$0xff]
      %v289 = vld [vmem:[%s1 + $0x1a8] sm:$0xff]
      %v290 = vld [vmem:[%s1 + $0x1b0] sm:$0xff]
      %v291 = vld [vmem:[%s1 + $0x1b8] sm:$0xff]
      %v292 = vld [vmem:[%s1 + $0x1c0] sm:$0xff]
      %v293 = vld [vmem:[%s1 + $0x1c8] sm:$0xff]
      %v294 = vld [vmem:[%s1 + $0x1d0] sm:$0xff]
      %v295 = vld [vmem:[%s1 + $0x1d8] sm:$0xff]
      %v296 = vld [vmem:[%s1 + $0x1e0] sm:$0xff]
      %v297 = vld [vmem:[%s1 + $0x1e8] sm:$0xff]
      %v298 = vld [vmem:[%s1 + $0x1f0] sm:$0xff]
      %v299 = vld [vmem:[%s1 + $0x1f8] sm:$0xff]
      %v300 = vld [vmem:[%s1 + $0x200] sm:$0xff]
      %v301 = vld [vmem:[%s1 + $0x208] sm:$0xff]
      %v302 = vld [vmem:[%s1 + $0x210] sm:$0xff]
      %v303 = vld [vmem:[%s1 + $0x218] sm:$0xff]
      %v304 = vld [vmem:[%s1 + $0x220] sm:$0xff]
      %v305 = vld [vmem:[%s1 + $0x228] sm:$0xff]
      %v306 = vld [vmem:[%s1 + $0x230] sm:$0xff]
      %v307 = vld [vmem:[%s1 + $0x238] sm:$0xff]
      %v308 = vld [vmem:[%s1 + $0x240] sm:$0xff]
      %v309 = vld [vmem:[%s1 + $0x248] sm:$0xff]
      %v310 = vld [vmem:[%s1 + $0x250] sm:$0xff]
      %v311 = vld [vmem:[%s1 + $0x258] sm:$0xff]
      %v312 = vld [vmem:[%s1 + $0x260] sm:$0xff]
      %v313 = vld [vmem:[%s1 + $0x268] sm:$0xff]
      %v314 = vld [vmem:[%s1 + $0x270] sm:$0xff]
      %v315 = vld [vmem:[%s1 + $0x278] sm:$0xff]
      %v316 = vld [vmem:[%s1 + $0x280] sm:$0xff]
      %v317 = vld [vmem:[%s1 + $0x288] sm:$0xff]
      %v318 = vld [vmem:[%s1 + $0x290] sm:$0xff]
      %v319 = vld [vmem:[%s1 + $0x298] sm:$0xff]
      %v320 = vld [vmem:[%s1 + $0x2a0] sm:$0xff]
      %v321 = vld [vmem:[%s1 + $0x2a8] sm:$0xff]
      %v322 = vld [vmem:[%s1 + $0x2b0] sm:$0xff]
      %v323 = vld [vmem:[%s1 + $0x2b8] sm:$0xff]
      %v324 = vld [vmem:[%s1 + $0x2c0] sm:$0xff]
      %v325 = vld [vmem:[%s1 + $0x2c8] sm:$0xff]
      %v326 = vld [vmem:[%s1 + $0x2d0] sm:$0xff]
      %v327 = vld [vmem:[%s1 + $0x2d8] sm:$0xff]
      %v328 = vld [vmem:[%s1 + $0x2e0] sm:$0xff]
      %v329 = vld [vmem:[%s1 + $0x2e8] sm:$0xff]
      %v330 = vld [vmem:[%s1 + $0x2f0] sm:$0xff]
      %v331 = vld [vmem:[%s1 + $0x2f8] sm:$0xff]
      %v332 = vld [vmem:[%s1 + $0x300] sm:$0xff]
      %v333 = vld [vmem:[%s1 + $0x308] sm:$0xff]
      %v334 = vld [vmem:[%s1 + $0x310] sm:$0xff]
      %v335 = vld [vmem:[%s1 + $0x318] sm:$0xff]
      %v336 = vld [vmem:[%s1 + $0x320] sm:$0xff]
      %v337 = vld [vmem:[%s1 + $0x328] sm:$0xff]
      %v338 = vld [vmem:[%s1 + $0x330] sm:$0xff]
      %v339 = vld [vmem:[%s1 + $0x338] sm:$0xff]
      %v340 = vld [vmem:[%s1 + $0x340] sm:$0xff]
      %v341 = vld [vmem:[%s1 + $0x348] sm:$0xff]
      %v342 = vld [vmem:[%s1 + $0x350] sm:$0xff]
      %v343 = vld [vmem:[%s1 + $0x358] sm:$0xff]
      %v344 = vld [vmem:[%s1 + $0x360] sm:$0xff]
      %v345 = vld [vmem:[%s1 + $0x368] sm:$0xff]
      %v346 = vld [vmem:[%s1 + $0x370] sm:$0xff]
      %v347 = vld [vmem:[%s1 + $0x378] sm:$0xff]
      %v348 = vld [vmem:[%s1 + $0x380] sm:$0xff]
      %v349 = vld [vmem:[%s1 + $0x388] sm:$0xff]
      %v350 = vld [vmem:[%s1 + $0x390] sm:$0xff]
      %v351 = vld [vmem:[%s1 + $0x398] sm:$0xff]
      %v352 = vld [vmem:[%s1 + $0x3a0] sm:$0xff]
      %v353 = vld [vmem:[%s1 + $0x3a8] sm:$0xff]
      %v354 = vld [vmem:[%s1 + $0x3b0] sm:$0xff]
      %v355 = vld [vmem:[%s1 + $0x3b8] sm:$0xff]
      %v356 = vld [vmem:[%s1 + $0x3c0] sm:$0xff]
      %v357 = vld [vmem:[%s1 + $0x3c8] sm:$0xff]
      %v358 = vld [vmem:[%s1 + $0x3d0] sm:$0xff]
      %v359 = vld [vmem:[%s1 + $0x3d8] sm:$0xff]
      %v360 = vld [vmem:[%s1 + $0x3e0] sm:$0xff]
      %v361 = vld [vmem:[%s1 + $0x3e8] sm:$0xff]
      %v362 = vld [vmem:[%s1 + $0x3f0] sm:$0xff]
      %v363 = vld [vmem:[%s1 + $0x3f8] sm:$0xff]
      %v364 = vld [vmem:[%s1 + $0x400] sm:$0xff]
      %v365 = vld [vmem:[%s1 + $0x408] sm:$0xff]
      %v366 = vld [vmem:[%s1 + $0x410] sm:$0xff]
      %v367 = vld [vmem:[%s1 + $0x418] sm:$0xff]
      %v368 = vld [vmem:[%s1 + $0x420] sm:$0xff]
      %v369 = vld [vmem:[%s1 + $0x428] sm:$0xff]
      %v370 = vld [vmem:[%s1 + $0x430] sm:$0xff]
      %v371 = vld [vmem:[%s1 + $0x438] sm:$0xff]
      %v372 = vld [vmem:[%s1 + $0x440] sm:$0xff]
      %v373 = vld [vmem:[%s1 + $0x448] sm:$0xff]
      %v374 = vld [vmem:[%s1 + $0x450] sm:$0xff]
      %v375 = vld [vmem:[%s1 + $0x458] sm:$0xff]
      %v376 = vld [vmem:[%s1 + $0x460] sm:$0xff]
      %v377 = vld [vmem:[%s1 + $0x468] sm:$0xff]
      %v378 = vld [vmem:[%s1 + $0x470] sm:$0xff]
      %v379 = vld [vmem:[%s1 + $0x478] sm:$0xff]
      %v380 = vld [vmem:[%s1 + $0x480] sm:$0xff]
      %v381 = vld [vmem:[%s1 + $0x488] sm:$0xff]
      %v382 = vld [vmem:[%s1 + $0x490] sm:$0xff]
      %v383 = vld [vmem:[%s1 + $0x498] sm:$0xff]
      %v384 = vld [vmem:[%s1 + $0x4a0] sm:$0xff]
      %v385 = vld [vmem:[%s1 + $0x4a8] sm:$0xff]
      %v386 = vld [vmem:[%s1 + $0x4b0] sm:$0xff]
      %v387 = vld [vmem:[%s1 + $0x4b8] sm:$0xff]
      %v388 = vld [vmem:[%s1 + $0x4c0] sm:$0xff]
      %v389 = vld [vmem:[%s1 + $0x4c8] sm:$0xff]
      %v390 = vld [vmem:[%s1 + $0x4d0] sm:$0xff]
      %v391 = vld [vmem:[%s1 + $0x4d8] sm:$0xff]
      %v392 = vld [vmem:[%s1 + $0x4e0] sm:$0xff]
      %v393 = vld [vmem:[%s1 + $0x4e8] sm:$0xff]
      %v394 = vld [vmem:[%s1 + $0x4f0] sm:$0xff]
      %v395 = vld [vmem:[%s1 + $0x4f8] sm:$0xff]
      %v396 = vld [vmem:[%s1 + $0x500] sm:$0xff]
      %v397 = vld [vmem:[%s1 + $0x508] sm:$0xff]
      %v398 = vld [vmem:[%s1 + $0x510] sm:$0xff]
      %v399 = vld [vmem:[%s1 + $0x518] sm:$0xff]
      %v400 = vld [vmem:[%s1 + $0x520] sm:$0xff]
      %v401 = vld [vmem:[%s1 + $0x528] sm:$0xff]
      %v402 = vld [vmem:[%s1 + $0x530] sm:$0xff]
      %v403 = vld [vmem:[%s1 + $0x538] sm:$0xff]
      %v404 = vld [vmem:[%s1 + $0x540] sm:$0xff]
      %v405 = vld [vmem:[%s1 + $0x548] sm:$0xff]
      %v406 = vld [vmem:[%s1 + $0x550] sm:$0xff]
      %v407 = vld [vmem:[%s1 + $0x558] sm:$0xff]
      %v408 = vld [vmem:[%s1 + $0x560] sm:$0xff]
      %v409 = vld [vmem:[%s1 + $0x568] sm:$0xff]
      %v410 = vld [vmem:[%s1 + $0x570] sm:$0xff]
      %v411 = vld [vmem:[%s1 + $0x578] sm:$0xff]
      %v412 = vld [vmem:[%s1 + $0x580] sm:$0xff]
      %v413 = vld [vmem:[%s1 + $0x588] sm:$0xff]
      %v414 = vld [vmem:[%s1 + $0x590] sm:$0xff]
      %v415 = vld [vmem:[%s1 + $0x598] sm:$0xff]
      %v416 = vld [vmem:[%s1 + $0x5a0] sm:$0xff]
      %v417 = vld [vmem:[%s1 + $0x5a8] sm:$0xff]
      %v418 = vld [vmem:[%s1 + $0x5b0] sm:$0xff]
      %v419 = vld [vmem:[%s1 + $0x5b8] sm:$0xff]
      %v420 = vld [vmem:[%s1 + $0x5c0] sm:$0xff]
      %v421 = vld [vmem:[%s1 + $0x5c8] sm:$0xff]
      %v422 = vld [vmem:[%s1 + $0x5d0] sm:$0xff]
      %v423 = vld [vmem:[%s1 + $0x5d8] sm:$0xff]
      %v424 = vld [vmem:[%s1 + $0x5e0] sm:$0xff]
      %v425 = vld [vmem:[%s1 + $0x5e8] sm:$0xff]
      %v426 = vld [vmem:[%s1 + $0x5f0] sm:$0xff]
      %v427 = vld [vmem:[%s1 + $0x5f8] sm:$0xff]
      %v428 = vld [vmem:[%s1 + $0x600] sm:$0xff]
      %v429 = vld [vmem:[%s1 + $0x608] sm:$0xff]
      %v430 = vld [vmem:[%s1 + $0x610] sm:$0xff]
      %v431 = vld [vmem:[%s1 + $0x618] sm:$0xff]
      %v432 = vld [vmem:[%s1 + $0x620] sm:$0xff]
      %v433 = vld [vmem:[%s1 + $0x628] sm:$0xff]
      %v434 = vld [vmem:[%s1 + $0x630] sm:$0xff]
      %v435 = vld [vmem:[%s1 + $0x638] sm:$0xff]
      %v436 = vld [vmem:[%s1 + $0x640] sm:$0xff]
      %v437 = vld [vmem:[%s1 + $0x648] sm:$0xff]
      %v438 = vld [vmem:[%s1 + $0x650] sm:$0xff]
      %v439 = vld [vmem:[%s1 + $0x658] sm:$0xff]
      %v440 = vld [vmem:[%s1 + $0x660] sm:$0xff]
      %v441 = vld [vmem:[%s1 + $0x668] sm:$0xff]
      %v442 = vld [vmem:[%s1 + $0x670] sm:$0xff]
      %v443 = vld [vmem:[%s1 + $0x678] sm:$0xff]
      %v444 = vld [vmem:[%s1 + $0x680] sm:$0xff]
      %v445 = vld [vmem:[%s1 + $0x688] sm:$0xff]
      %v446 = vld [vmem:[%s1 + $0x690] sm:$0xff]
      %v447 = vld [vmem:[%s1 + $0x698] sm:$0xff]
      %v448 = vld [vmem:[%s1 + $0x6a0] sm:$0xff]
      %v449 = vld [vmem:[%s1 + $0x6a8] sm:$0xff]
      %v450 = vld [vmem:[%s1 + $0x6b0] sm:$0xff]
      %v451 = vld [vmem:[%s1 + $0x6b8] sm:$0xff]
      %v452 = vld [vmem:[%s1 + $0x6c0] sm:$0xff]
      %v453 = vld [vmem:[%s1 + $0x6c8] sm:$0xff]
      %v454 = vld [vmem:[%s1 + $0x6d0] sm:$0xff]
      %v455 = vld [vmem:[%s1 + $0x6d8] sm:$0xff]
      %v456 = vld [vmem:[%s1 + $0x6e0] sm:$0xff]
      %v457 = vld [vmem:[%s1 + $0x6e8] sm:$0xff]
      %v458 = vld [vmem:[%s1 + $0x6f0] sm:$0xff]
      %v459 = vld [vmem:[%s1 + $0x6f8] sm:$0xff]
      %v460 = vld [vmem:[%s1 + $0x700] sm:$0xff]
      %v461 = vld [vmem:[%s1 + $0x708] sm:$0xff]
      %v462 = vld [vmem:[%s1 + $0x710] sm:$0xff]
      %v463 = vld [vmem:[%s1 + $0x718] sm:$0xff]
      %v464 = vld [vmem:[%s1 + $0x720] sm:$0xff]
      %v465 = vld [vmem:[%s1 + $0x728] sm:$0xff]
      %v466 = vld [vmem:[%s1 + $0x730] sm:$0xff]
      %v467 = vld [vmem:[%s1 + $0x738] sm:$0xff]
      %v468 = vld [vmem:[%s1 + $0x740] sm:$0xff]
      %v469 = vld [vmem:[%s1 + $0x748] sm:$0xff]
      %v470 = vld [vmem:[%s1 + $0x750] sm:$0xff]
      %v471 = vld [vmem:[%s1 + $0x758] sm:$0xff]
      %v472 = vld [vmem:[%s1 + $0x760] sm:$0xff]
      %v473 = vld [vmem:[%s1 + $0x768] sm:$0xff]
      %v474 = vld [vmem:[%s1 + $0x770] sm:$0xff]
      %v475 = vld [vmem:[%s1 + $0x778] sm:$0xff]
      %v476 = vld [vmem:[%s1 + $0x780] sm:$0xff]
      %v477 = vld [vmem:[%s1 + $0x788] sm:$0xff]
      %v478 = vld [vmem:[%s1 + $0x790] sm:$0xff]
      %v479 = vld [vmem:[%s1 + $0x798] sm:$0xff]
      %v480 = vld [vmem:[%s1 + $0x7a0] sm:$0xff]
      %v481 = vld [vmem:[%s1 + $0x7a8] sm:$0xff]
      %v482 = vld [vmem:[%s1 + $0x7b0] sm:$0xff]
      %v483 = vld [vmem:[%s1 + $0x7b8] sm:$0xff]
      %v484 = vld [vmem:[%s1 + $0x7c0] sm:$0xff]
      %v485 = vld [vmem:[%s1 + $0x7c8] sm:$0xff]
      %v486 = vld [vmem:[%s1 + $0x7d0] sm:$0xff]
      %v487 = vld [vmem:[%s1 + $0x7d8] sm:$0xff]
      %v488 = vld [vmem:[%s1 + $0x7e0] sm:$0xff]
      %v489 = vld [vmem:[%s1 + $0x7e8] sm:$0xff]
      %v490 = vld [vmem:[%s1 + $0x7f0] sm:$0xff]
      %v491 = vld [vmem:[%s1 + $0x7f8] sm:$0xff]
      %v492 = vld [vmem:[%s1 + $0x800] sm:$0xff]
      %v493 = vld [vmem:[%s1 + $0x808] sm:$0xff]
      %v494 = vld [vmem:[%s1 + $0x810] sm:$0xff]
      %v495 = vld [vmem:[%s1 + $0x818] sm:$0xff]
      %v496 = vld [vmem:[%s1 + $0x820] sm:$0xff]
      %v497 = vld [vmem:[%s1 + $0x828] sm:$0xff]
      %v498 = vld [vmem:[%s1 + $0x830] sm:$0xff]
      %v499 = vld [vmem:[%s1 + $0x838] sm:$0xff]
      %v500 = vld [vmem:[%s1 + $0x840] sm:$0xff]
      %v501 = vld [vmem:[%s1 + $0x848] sm:$0xff]
      %v502 = vld [vmem:[%s1 + $0x850] sm:$0xff]
      %v503 = vld [vmem:[%s1 + $0x858] sm:$0xff]
      %v504 = vld [vmem:[%s1 + $0x860] sm:$0xff]
      %v505 = vld [vmem:[%s1 + $0x868] sm:$0xff]
      %v506 = vld [vmem:[%s1 + $0x870] sm:$0xff]
      %v507 = vld [vmem:[%s1 + $0x878] sm:$0xff]
      %v508 = vld [vmem:[%s1 + $0x880] sm:$0xff]
      %v509 = vld [vmem:[%s1 + $0x888] sm:$0xff]
      %v510 = vld [vmem:[%s1 + $0x890] sm:$0xff]
      %v511 = vld [vmem:[%s1 + $0x898] sm:$0xff]
      %v512 = vld [vmem:[%s1 + $0x8a0] sm:$0xff]
      %v513 = vld [vmem:[%s1 + $0x8a8] sm:$0xff]
      %v514 = vld [vmem:[%s1 + $0x8b0] sm:$0xff]
      %v515 = vld [vmem:[%s1 + $0x8b8] sm:$0xff]
      %v516 = vld [vmem:[%s1 + $0x8c0] sm:$0xff]
      %v517 = vld [vmem:[%s1 + $0x8c8] sm:$0xff]
      %v518 = vld [vmem:[%s1 + $0x8d0] sm:$0xff]
      %v519 = vld [vmem:[%s1 + $0x8d8] sm:$0xff]
      %v520 = vld [vmem:[%s1 + $0x8e0] sm:$0xff]
      %v521 = vld [vmem:[%s1 + $0x8e8] sm:$0xff]
      %v522 = vld [vmem:[%s1 + $0x8f0] sm:$0xff]
      %v523 = vld [vmem:[%s1 + $0x8f8] sm:$0xff]
      %v524 = vld [vmem:[%s2] sm:$0x3]
      %v526 = vlaneseq
      %v527 = vshrl.u32 %v526, 7
      %v528 = vsub.s32 0, %v527
      %v529 = vrot.slane %v524, %v528
      %v530 = vlaneseq
      %v531 = vshrl.u32 %v530, 7
      %v532 = vsub.s32 1, %v531
      %v533 = vrot.slane %v524, %v532
      %v554 = vunpack.c.l.b16 %v218
      %v555 = vunpack.c.h.b16 %v218
      %v556 = vunpack.c.l.b16 %v219
      %v557 = vunpack.c.h.b16 %v219
      %v558 = vunpack.c.l.b16 %v220
      %v559 = vunpack.c.h.b16 %v220
      %v560 = vunpack.c.l.b16 %v221
      %v561 = vunpack.c.h.b16 %v221
      %v562 = vunpack.c.l.b16 %v222
      %v563 = vunpack.c.h.b16 %v222
      %v564 = vunpack.c.l.b16 %v223
      %v565 = vunpack.c.h.b16 %v223
      %v566 = vunpack.c.l.b16 %v224
      %v567 = vunpack.c.h.b16 %v224
      %v568 = vunpack.c.l.b16 %v225
      %v569 = vunpack.c.h.b16 %v225
      %v570 = vunpack.c.l.b16 %v226
      %v571 = vunpack.c.h.b16 %v226
      %v572 = vunpack.c.l.b16 %v227
      %v573 = vunpack.c.h.b16 %v227
      %v574 = vunpack.c.l.b16 %v228
      %v575 = vunpack.c.h.b16 %v228
      %v576 = vunpack.c.l.b16 %v229
      %v577 = vunpack.c.h.b16 %v229
      %v578 = vunpack.c.l.b16 %v230
      %v579 = vunpack.c.h.b16 %v230
      %v580 = vunpack.c.l.b16 %v231
      %v581 = vunpack.c.h.b16 %v231
      %v582 = vunpack.c.l.b16 %v232
      %v583 = vunpack.c.h.b16 %v232
      %v584 = vunpack.c.l.b16 %v233
      %v585 = vunpack.c.h.b16 %v233
      %v586 = vunpack.c.l.b16 %v234
      %v587 = vunpack.c.h.b16 %v234
      %v588 = vunpack.c.l.b16 %v235
      %v589 = vunpack.c.h.b16 %v235
      %v590 = vpack.c.b16 %v572, %v554
      %v591 = vpack.c.b16 %v573, %v555
      %v592 = vpack.c.b16 %v574, %v556
      %v593 = vpack.c.b16 %v575, %v557
      %v594 = vpack.c.b16 %v576, %v558
      %v595 = vpack.c.b16 %v577, %v559
      %v596 = vpack.c.b16 %v578, %v560
      %v597 = vpack.c.b16 %v579, %v561
      %v598 = vpack.c.b16 %v580, %v562
      %v599 = vpack.c.b16 %v581, %v563
      %v600 = vpack.c.b16 %v582, %v564
      %v601 = vpack.c.b16 %v583, %v565
      %v602 = vpack.c.b16 %v584, %v566
      %v603 = vpack.c.b16 %v585, %v567
      %v604 = vpack.c.b16 %v586, %v568
      %v605 = vpack.c.b16 %v587, %v569
      %v606 = vpack.c.b16 %v588, %v570
      %v607 = vpack.c.b16 %v589, %v571
      %v914 = vunpack.c.l.b16 %v236
      %v915 = vunpack.c.h.b16 %v236
      %v916 = vunpack.c.l.b16 %v237
      %v917 = vunpack.c.h.b16 %v237
      %v918 = vunpack.c.l.b16 %v238
      %v919 = vunpack.c.h.b16 %v238
      %v920 = vunpack.c.l.b16 %v239
      %v921 = vunpack.c.h.b16 %v239
      %v922 = vunpack.c.l.b16 %v240
      %v923 = vunpack.c.h.b16 %v240
      %v924 = vunpack.c.l.b16 %v241
      %v925 = vunpack.c.h.b16 %v241
      %v926 = vunpack.c.l.b16 %v242
      %v927 = vunpack.c.h.b16 %v242
      %v928 = vunpack.c.l.b16 %v243
      %v929 = vunpack.c.h.b16 %v243
      %v930 = vunpack.c.l.b16 %v244
      %v931 = vunpack.c.h.b16 %v244
      %v932 = vunpack.c.l.b16 %v245
      %v933 = vunpack.c.h.b16 %v245
      %v934 = vunpack.c.l.b16 %v246
      %v935 = vunpack.c.h.b16 %v246
      %v936 = vunpack.c.l.b16 %v247
      %v937 = vunpack.c.h.b16 %v247
      %v938 = vunpack.c.l.b16 %v248
      %v939 = vunpack.c.h.b16 %v248
      %v940 = vunpack.c.l.b16 %v249
      %v941 = vunpack.c.h.b16 %v249
      %v942 = vunpack.c.l.b16 %v250
      %v943 = vunpack.c.h.b16 %v250
      %v944 = vunpack.c.l.b16 %v251
      %v945 = vunpack.c.h.b16 %v251
      %v946 = vunpack.c.l.b16 %v252
      %v947 = vunpack.c.h.b16 %v252
      %v948 = vunpack.c.l.b16 %v253
      %v949 = vunpack.c.h.b16 %v253
      %v950 = vunpack.c.l.b16 %v254
      %v951 = vunpack.c.h.b16 %v254
      %v952 = vunpack.c.l.b16 %v255
      %v953 = vunpack.c.h.b16 %v255
      %v954 = vunpack.c.l.b16 %v256
      %v955 = vunpack.c.h.b16 %v256
      %v956 = vunpack.c.l.b16 %v257
      %v957 = vunpack.c.h.b16 %v257
      %v958 = vunpack.c.l.b16 %v258
      %v959 = vunpack.c.h.b16 %v258
      %v960 = vunpack.c.l.b16 %v259
      %v961 = vunpack.c.h.b16 %v259
      %v962 = vunpack.c.l.b16 %v260
      %v963 = vunpack.c.h.b16 %v260
      %v964 = vunpack.c.l.b16 %v261
      %v965 = vunpack.c.h.b16 %v261
      %v966 = vunpack.c.l.b16 %v262
      %v967 = vunpack.c.h.b16 %v262
      %v968 = vunpack.c.l.b16 %v263
      %v969 = vunpack.c.h.b16 %v263
      %v970 = vunpack.c.l.b16 %v264
      %v971 = vunpack.c.h.b16 %v264
      %v972 = vunpack.c.l.b16 %v265
      %v973 = vunpack.c.h.b16 %v265
      %v974 = vunpack.c.l.b16 %v266
      %v975 = vunpack.c.h.b16 %v266
      %v976 = vunpack.c.l.b16 %v267
      %v977 = vunpack.c.h.b16 %v267
      %v978 = vunpack.c.l.b16 %v268
      %v979 = vunpack.c.h.b16 %v268
      %v980 = vunpack.c.l.b16 %v269
      %v981 = vunpack.c.h.b16 %v269
      %v982 = vunpack.c.l.b16 %v270
      %v983 = vunpack.c.h.b16 %v270
      %v984 = vunpack.c.l.b16 %v271
      %v985 = vunpack.c.h.b16 %v271
      %v986 = vunpack.c.l.b16 %v272
      %v987 = vunpack.c.h.b16 %v272
      %v988 = vunpack.c.l.b16 %v273
      %v989 = vunpack.c.h.b16 %v273
      %v990 = vunpack.c.l.b16 %v274
      %v991 = vunpack.c.h.b16 %v274
      %v992 = vunpack.c.l.b16 %v275
      %v993 = vunpack.c.h.b16 %v275
      %v994 = vunpack.c.l.b16 %v276
      %v995 = vunpack.c.h.b16 %v276
      %v996 = vunpack.c.l.b16 %v277
      %v997 = vunpack.c.h.b16 %v277
      %v998 = vunpack.c.l.b16 %v278
      %v999 = vunpack.c.h.b16 %v278
      %v1000 = vunpack.c.l.b16 %v279
      %v1001 = vunpack.c.h.b16 %v279
      %v1002 = vunpack.c.l.b16 %v280
      %v1003 = vunpack.c.h.b16 %v280
      %v1004 = vunpack.c.l.b16 %v281
      %v1005 = vunpack.c.h.b16 %v281
      %v1006 = vunpack.c.l.b16 %v282
      %v1007 = vunpack.c.h.b16 %v282
      %v1008 = vunpack.c.l.b16 %v283
      %v1009 = vunpack.c.h.b16 %v283
      %v1010 = vunpack.c.l.b16 %v284
      %v1011 = vunpack.c.h.b16 %v284
      %v1012 = vunpack.c.l.b16 %v285
      %v1013 = vunpack.c.h.b16 %v285
      %v1014 = vunpack.c.l.b16 %v286
      %v1015 = vunpack.c.h.b16 %v286
      %v1016 = vunpack.c.l.b16 %v287
      %v1017 = vunpack.c.h.b16 %v287
      %v1018 = vunpack.c.l.b16 %v288
      %v1019 = vunpack.c.h.b16 %v288
      %v1020 = vunpack.c.l.b16 %v289
      %v1021 = vunpack.c.h.b16 %v289
      %v1022 = vunpack.c.l.b16 %v290
      %v1023 = vunpack.c.h.b16 %v290
      %v1024 = vunpack.c.l.b16 %v291
      %v1025 = vunpack.c.h.b16 %v291
      %v1026 = vunpack.c.l.b16 %v292
      %v1027 = vunpack.c.h.b16 %v292
      %v1028 = vunpack.c.l.b16 %v293
      %v1029 = vunpack.c.h.b16 %v293
      %v1030 = vunpack.c.l.b16 %v294
      %v1031 = vunpack.c.h.b16 %v294
      %v1032 = vunpack.c.l.b16 %v295
      %v1033 = vunpack.c.h.b16 %v295
      %v1034 = vunpack.c.l.b16 %v296
      %v1035 = vunpack.c.h.b16 %v296
      %v1036 = vunpack.c.l.b16 %v297
      %v1037 = vunpack.c.h.b16 %v297
      %v1038 = vunpack.c.l.b16 %v298
      %v1039 = vunpack.c.h.b16 %v298
      %v1040 = vunpack.c.l.b16 %v299
      %v1041 = vunpack.c.h.b16 %v299
      %v1042 = vunpack.c.l.b16 %v300
      %v1043 = vunpack.c.h.b16 %v300
      %v1044 = vunpack.c.l.b16 %v301
      %v1045 = vunpack.c.h.b16 %v301
      %v1046 = vunpack.c.l.b16 %v302
      %v1047 = vunpack.c.h.b16 %v302
      %v1048 = vunpack.c.l.b16 %v303
      %v1049 = vunpack.c.h.b16 %v303
      %v1050 = vunpack.c.l.b16 %v304
      %v1051 = vunpack.c.h.b16 %v304
      %v1052 = vunpack.c.l.b16 %v305
      %v1053 = vunpack.c.h.b16 %v305
      %v1054 = vunpack.c.l.b16 %v306
      %v1055 = vunpack.c.h.b16 %v306
      %v1056 = vunpack.c.l.b16 %v307
      %v1057 = vunpack.c.h.b16 %v307
      %v1058 = vunpack.c.l.b16 %v308
      %v1059 = vunpack.c.h.b16 %v308
      %v1060 = vunpack.c.l.b16 %v309
      %v1061 = vunpack.c.h.b16 %v309
      %v1062 = vunpack.c.l.b16 %v310
      %v1063 = vunpack.c.h.b16 %v310
      %v1064 = vunpack.c.l.b16 %v311
      %v1065 = vunpack.c.h.b16 %v311
      %v1066 = vunpack.c.l.b16 %v312
      %v1067 = vunpack.c.h.b16 %v312
      %v1068 = vunpack.c.l.b16 %v313
      %v1069 = vunpack.c.h.b16 %v313
      %v1070 = vunpack.c.l.b16 %v314
      %v1071 = vunpack.c.h.b16 %v314
      %v1072 = vunpack.c.l.b16 %v315
      %v1073 = vunpack.c.h.b16 %v315
      %v1074 = vunpack.c.l.b16 %v316
      %v1075 = vunpack.c.h.b16 %v316
      %v1076 = vunpack.c.l.b16 %v317
      %v1077 = vunpack.c.h.b16 %v317
      %v1078 = vunpack.c.l.b16 %v318
      %v1079 = vunpack.c.h.b16 %v318
      %v1080 = vunpack.c.l.b16 %v319
      %v1081 = vunpack.c.h.b16 %v319
      %v1082 = vunpack.c.l.b16 %v320
      %v1083 = vunpack.c.h.b16 %v320
      %v1084 = vunpack.c.l.b16 %v321
      %v1085 = vunpack.c.h.b16 %v321
      %v1086 = vunpack.c.l.b16 %v322
      %v1087 = vunpack.c.h.b16 %v322
      %v1088 = vunpack.c.l.b16 %v323
      %v1089 = vunpack.c.h.b16 %v323
      %v1090 = vunpack.c.l.b16 %v324
      %v1091 = vunpack.c.h.b16 %v324
      %v1092 = vunpack.c.l.b16 %v325
      %v1093 = vunpack.c.h.b16 %v325
      %v1094 = vunpack.c.l.b16 %v326
      %v1095 = vunpack.c.h.b16 %v326
      %v1096 = vunpack.c.l.b16 %v327
      %v1097 = vunpack.c.h.b16 %v327
      %v1098 = vunpack.c.l.b16 %v328
      %v1099 = vunpack.c.h.b16 %v328
      %v1100 = vunpack.c.l.b16 %v329
      %v1101 = vunpack.c.h.b16 %v329
      %v1102 = vunpack.c.l.b16 %v330
      %v1103 = vunpack.c.h.b16 %v330
      %v1104 = vunpack.c.l.b16 %v331
      %v1105 = vunpack.c.h.b16 %v331
      %v1106 = vunpack.c.l.b16 %v332
      %v1107 = vunpack.c.h.b16 %v332
      %v1108 = vunpack.c.l.b16 %v333
      %v1109 = vunpack.c.h.b16 %v333
      %v1110 = vunpack.c.l.b16 %v334
      %v1111 = vunpack.c.h.b16 %v334
      %v1112 = vunpack.c.l.b16 %v335
      %v1113 = vunpack.c.h.b16 %v335
      %v1114 = vunpack.c.l.b16 %v336
      %v1115 = vunpack.c.h.b16 %v336
      %v1116 = vunpack.c.l.b16 %v337
      %v1117 = vunpack.c.h.b16 %v337
      %v1118 = vunpack.c.l.b16 %v338
      %v1119 = vunpack.c.h.b16 %v338
      %v1120 = vunpack.c.l.b16 %v339
      %v1121 = vunpack.c.h.b16 %v339
      %v1122 = vunpack.c.l.b16 %v340
      %v1123 = vunpack.c.h.b16 %v340
      %v1124 = vunpack.c.l.b16 %v341
      %v1125 = vunpack.c.h.b16 %v341
      %v1126 = vunpack.c.l.b16 %v342
      %v1127 = vunpack.c.h.b16 %v342
      %v1128 = vunpack.c.l.b16 %v343
      %v1129 = vunpack.c.h.b16 %v343
      %v1130 = vunpack.c.l.b16 %v344
      %v1131 = vunpack.c.h.b16 %v344
      %v1132 = vunpack.c.l.b16 %v345
      %v1133 = vunpack.c.h.b16 %v345
      %v1134 = vunpack.c.l.b16 %v346
      %v1135 = vunpack.c.h.b16 %v346
      %v1136 = vunpack.c.l.b16 %v347
      %v1137 = vunpack.c.h.b16 %v347
      %v1138 = vunpack.c.l.b16 %v348
      %v1139 = vunpack.c.h.b16 %v348
      %v1140 = vunpack.c.l.b16 %v349
      %v1141 = vunpack.c.h.b16 %v349
      %v1142 = vunpack.c.l.b16 %v350
      %v1143 = vunpack.c.h.b16 %v350
      %v1144 = vunpack.c.l.b16 %v351
      %v1145 = vunpack.c.h.b16 %v351
      %v1146 = vunpack.c.l.b16 %v352
      %v1147 = vunpack.c.h.b16 %v352
      %v1148 = vunpack.c.l.b16 %v353
      %v1149 = vunpack.c.h.b16 %v353
      %v1150 = vunpack.c.l.b16 %v354
      %v1151 = vunpack.c.h.b16 %v354
      %v1152 = vunpack.c.l.b16 %v355
      %v1153 = vunpack.c.h.b16 %v355
      %v1154 = vunpack.c.l.b16 %v356
      %v1155 = vunpack.c.h.b16 %v356
      %v1156 = vunpack.c.l.b16 %v357
      %v1157 = vunpack.c.h.b16 %v357
      %v1158 = vunpack.c.l.b16 %v358
      %v1159 = vunpack.c.h.b16 %v358
      %v1160 = vunpack.c.l.b16 %v359
      %v1161 = vunpack.c.h.b16 %v359
      %v1162 = vunpack.c.l.b16 %v360
      %v1163 = vunpack.c.h.b16 %v360
      %v1164 = vunpack.c.l.b16 %v361
      %v1165 = vunpack.c.h.b16 %v361
      %v1166 = vunpack.c.l.b16 %v362
      %v1167 = vunpack.c.h.b16 %v362
      %v1168 = vunpack.c.l.b16 %v363
      %v1169 = vunpack.c.h.b16 %v363
      %v1170 = vunpack.c.l.b16 %v364
      %v1171 = vunpack.c.h.b16 %v364
      %v1172 = vunpack.c.l.b16 %v365
      %v1173 = vunpack.c.h.b16 %v365
      %v1174 = vunpack.c.l.b16 %v366
      %v1175 = vunpack.c.h.b16 %v366
      %v1176 = vunpack.c.l.b16 %v367
      %v1177 = vunpack.c.h.b16 %v367
      %v1178 = vunpack.c.l.b16 %v368
      %v1179 = vunpack.c.h.b16 %v368
      %v1180 = vunpack.c.l.b16 %v369
      %v1181 = vunpack.c.h.b16 %v369
      %v1182 = vunpack.c.l.b16 %v370
      %v1183 = vunpack.c.h.b16 %v370
      %v1184 = vunpack.c.l.b16 %v371
      %v1185 = vunpack.c.h.b16 %v371
      %v1186 = vunpack.c.l.b16 %v372
      %v1187 = vunpack.c.h.b16 %v372
      %v1188 = vunpack.c.l.b16 %v373
      %v1189 = vunpack.c.h.b16 %v373
      %v1190 = vunpack.c.l.b16 %v374
      %v1191 = vunpack.c.h.b16 %v374
      %v1192 = vunpack.c.l.b16 %v375
      %v1193 = vunpack.c.h.b16 %v375
      %v1194 = vunpack.c.l.b16 %v376
      %v1195 = vunpack.c.h.b16 %v376
      %v1196 = vunpack.c.l.b16 %v377
      %v1197 = vunpack.c.h.b16 %v377
      %v1198 = vunpack.c.l.b16 %v378
      %v1199 = vunpack.c.h.b16 %v378
      %v1200 = vunpack.c.l.b16 %v379
      %v1201 = vunpack.c.h.b16 %v379
      %v1202 = vunpack.c.l.b16 %v380
      %v1203 = vunpack.c.h.b16 %v380
      %v1204 = vunpack.c.l.b16 %v381
      %v1205 = vunpack.c.h.b16 %v381
      %v1206 = vunpack.c.l.b16 %v382
      %v1207 = vunpack.c.h.b16 %v382
      %v1208 = vunpack.c.l.b16 %v383
      %v1209 = vunpack.c.h.b16 %v383
      %v1210 = vunpack.c.l.b16 %v384
      %v1211 = vunpack.c.h.b16 %v384
      %v1212 = vunpack.c.l.b16 %v385
      %v1213 = vunpack.c.h.b16 %v385
      %v1214 = vunpack.c.l.b16 %v386
      %v1215 = vunpack.c.h.b16 %v386
      %v1216 = vunpack.c.l.b16 %v387
      %v1217 = vunpack.c.h.b16 %v387
      %v1218 = vunpack.c.l.b16 %v388
      %v1219 = vunpack.c.h.b16 %v388
      %v1220 = vunpack.c.l.b16 %v389
      %v1221 = vunpack.c.h.b16 %v389
      %v1222 = vunpack.c.l.b16 %v390
      %v1223 = vunpack.c.h.b16 %v390
      %v1224 = vunpack.c.l.b16 %v391
      %v1225 = vunpack.c.h.b16 %v391
      %v1226 = vunpack.c.l.b16 %v392
      %v1227 = vunpack.c.h.b16 %v392
      %v1228 = vunpack.c.l.b16 %v393
      %v1229 = vunpack.c.h.b16 %v393
      %v1230 = vunpack.c.l.b16 %v394
      %v1231 = vunpack.c.h.b16 %v394
      %v1232 = vunpack.c.l.b16 %v395
      %v1233 = vunpack.c.h.b16 %v395
      %v1234 = vunpack.c.l.b16 %v396
      %v1235 = vunpack.c.h.b16 %v396
      %v1236 = vunpack.c.l.b16 %v397
      %v1237 = vunpack.c.h.b16 %v397
      %v1238 = vunpack.c.l.b16 %v398
      %v1239 = vunpack.c.h.b16 %v398
      %v1240 = vunpack.c.l.b16 %v399
      %v1241 = vunpack.c.h.b16 %v399
      %v1242 = vunpack.c.l.b16 %v400
      %v1243 = vunpack.c.h.b16 %v400
      %v1244 = vunpack.c.l.b16 %v401
      %v1245 = vunpack.c.h.b16 %v401
      %v1246 = vunpack.c.l.b16 %v402
      %v1247 = vunpack.c.h.b16 %v402
      %v1248 = vunpack.c.l.b16 %v403
      %v1249 = vunpack.c.h.b16 %v403
      %v1250 = vunpack.c.l.b16 %v404
      %v1251 = vunpack.c.h.b16 %v404
      %v1252 = vunpack.c.l.b16 %v405
      %v1253 = vunpack.c.h.b16 %v405
      %v1254 = vunpack.c.l.b16 %v406
      %v1255 = vunpack.c.h.b16 %v406
      %v1256 = vunpack.c.l.b16 %v407
      %v1257 = vunpack.c.h.b16 %v407
      %v1258 = vunpack.c.l.b16 %v408
      %v1259 = vunpack.c.h.b16 %v408
      %v1260 = vunpack.c.l.b16 %v409
      %v1261 = vunpack.c.h.b16 %v409
      %v1262 = vunpack.c.l.b16 %v410
      %v1263 = vunpack.c.h.b16 %v410
      %v1264 = vunpack.c.l.b16 %v411
      %v1265 = vunpack.c.h.b16 %v411
      %v1266 = vunpack.c.l.b16 %v412
      %v1267 = vunpack.c.h.b16 %v412
      %v1268 = vunpack.c.l.b16 %v413
      %v1269 = vunpack.c.h.b16 %v413
      %v1270 = vunpack.c.l.b16 %v414
      %v1271 = vunpack.c.h.b16 %v414
      %v1272 = vunpack.c.l.b16 %v415
      %v1273 = vunpack.c.h.b16 %v415
      %v1274 = vunpack.c.l.b16 %v416
      %v1275 = vunpack.c.h.b16 %v416
      %v1276 = vunpack.c.l.b16 %v417
      %v1277 = vunpack.c.h.b16 %v417
      %v1278 = vunpack.c.l.b16 %v418
      %v1279 = vunpack.c.h.b16 %v418
      %v1280 = vunpack.c.l.b16 %v419
      %v1281 = vunpack.c.h.b16 %v419
      %v1282 = vunpack.c.l.b16 %v420
      %v1283 = vunpack.c.h.b16 %v420
      %v1284 = vunpack.c.l.b16 %v421
      %v1285 = vunpack.c.h.b16 %v421
      %v1286 = vunpack.c.l.b16 %v422
      %v1287 = vunpack.c.h.b16 %v422
      %v1288 = vunpack.c.l.b16 %v423
      %v1289 = vunpack.c.h.b16 %v423
      %v1290 = vunpack.c.l.b16 %v424
      %v1291 = vunpack.c.h.b16 %v424
      %v1292 = vunpack.c.l.b16 %v425
      %v1293 = vunpack.c.h.b16 %v425
      %v1294 = vunpack.c.l.b16 %v426
      %v1295 = vunpack.c.h.b16 %v426
      %v1296 = vunpack.c.l.b16 %v427
      %v1297 = vunpack.c.h.b16 %v427
      %v1298 = vunpack.c.l.b16 %v428
      %v1299 = vunpack.c.h.b16 %v428
      %v1300 = vunpack.c.l.b16 %v429
      %v1301 = vunpack.c.h.b16 %v429
      %v1302 = vunpack.c.l.b16 %v430
      %v1303 = vunpack.c.h.b16 %v430
      %v1304 = vunpack.c.l.b16 %v431
      %v1305 = vunpack.c.h.b16 %v431
      %v1306 = vunpack.c.l.b16 %v432
      %v1307 = vunpack.c.h.b16 %v432
      %v1308 = vunpack.c.l.b16 %v433
      %v1309 = vunpack.c.h.b16 %v433
      %v1310 = vunpack.c.l.b16 %v434
      %v1311 = vunpack.c.h.b16 %v434
      %v1312 = vunpack.c.l.b16 %v435
      %v1313 = vunpack.c.h.b16 %v435
      %v1314 = vunpack.c.l.b16 %v436
      %v1315 = vunpack.c.h.b16 %v436
      %v1316 = vunpack.c.l.b16 %v437
      %v1317 = vunpack.c.h.b16 %v437
      %v1318 = vunpack.c.l.b16 %v438
      %v1319 = vunpack.c.h.b16 %v438
      %v1320 = vunpack.c.l.b16 %v439
      %v1321 = vunpack.c.h.b16 %v439
      %v1322 = vunpack.c.l.b16 %v440
      %v1323 = vunpack.c.h.b16 %v440
      %v1324 = vunpack.c.l.b16 %v441
      %v1325 = vunpack.c.h.b16 %v441
      %v1326 = vunpack.c.l.b16 %v442
      %v1327 = vunpack.c.h.b16 %v442
      %v1328 = vunpack.c.l.b16 %v443
      %v1329 = vunpack.c.h.b16 %v443
      %v1330 = vunpack.c.l.b16 %v444
      %v1331 = vunpack.c.h.b16 %v444
      %v1332 = vunpack.c.l.b16 %v445
      %v1333 = vunpack.c.h.b16 %v445
      %v1334 = vunpack.c.l.b16 %v446
      %v1335 = vunpack.c.h.b16 %v446
      %v1336 = vunpack.c.l.b16 %v447
      %v1337 = vunpack.c.h.b16 %v447
      %v1338 = vunpack.c.l.b16 %v448
      %v1339 = vunpack.c.h.b16 %v448
      %v1340 = vunpack.c.l.b16 %v449
      %v1341 = vunpack.c.h.b16 %v449
      %v1342 = vunpack.c.l.b16 %v450
      %v1343 = vunpack.c.h.b16 %v450
      %v1344 = vunpack.c.l.b16 %v451
      %v1345 = vunpack.c.h.b16 %v451
      %v1346 = vunpack.c.l.b16 %v452
      %v1347 = vunpack.c.h.b16 %v452
      %v1348 = vunpack.c.l.b16 %v453
      %v1349 = vunpack.c.h.b16 %v453
      %v1350 = vunpack.c.l.b16 %v454
      %v1351 = vunpack.c.h.b16 %v454
      %v1352 = vunpack.c.l.b16 %v455
      %v1353 = vunpack.c.h.b16 %v455
      %v1354 = vunpack.c.l.b16 %v456
      %v1355 = vunpack.c.h.b16 %v456
      %v1356 = vunpack.c.l.b16 %v457
      %v1357 = vunpack.c.h.b16 %v457
      %v1358 = vunpack.c.l.b16 %v458
      %v1359 = vunpack.c.h.b16 %v458
      %v1360 = vunpack.c.l.b16 %v459
      %v1361 = vunpack.c.h.b16 %v459
      %v1362 = vunpack.c.l.b16 %v460
      %v1363 = vunpack.c.h.b16 %v460
      %v1364 = vunpack.c.l.b16 %v461
      %v1365 = vunpack.c.h.b16 %v461
      %v1366 = vunpack.c.l.b16 %v462
      %v1367 = vunpack.c.h.b16 %v462
      %v1368 = vunpack.c.l.b16 %v463
      %v1369 = vunpack.c.h.b16 %v463
      %v1370 = vunpack.c.l.b16 %v464
      %v1371 = vunpack.c.h.b16 %v464
      %v1372 = vunpack.c.l.b16 %v465
      %v1373 = vunpack.c.h.b16 %v465
      %v1374 = vunpack.c.l.b16 %v466
      %v1375 = vunpack.c.h.b16 %v466
      %v1376 = vunpack.c.l.b16 %v467
      %v1377 = vunpack.c.h.b16 %v467
      %v1378 = vunpack.c.l.b16 %v468
      %v1379 = vunpack.c.h.b16 %v468
      %v1380 = vunpack.c.l.b16 %v469
      %v1381 = vunpack.c.h.b16 %v469
      %v1382 = vunpack.c.l.b16 %v470
      %v1383 = vunpack.c.h.b16 %v470
      %v1384 = vunpack.c.l.b16 %v471
      %v1385 = vunpack.c.h.b16 %v471
      %v1386 = vunpack.c.l.b16 %v472
      %v1387 = vunpack.c.h.b16 %v472
      %v1388 = vunpack.c.l.b16 %v473
      %v1389 = vunpack.c.h.b16 %v473
      %v1390 = vunpack.c.l.b16 %v474
      %v1391 = vunpack.c.h.b16 %v474
      %v1392 = vunpack.c.l.b16 %v475
      %v1393 = vunpack.c.h.b16 %v475
      %v1394 = vunpack.c.l.b16 %v476
      %v1395 = vunpack.c.h.b16 %v476
      %v1396 = vunpack.c.l.b16 %v477
      %v1397 = vunpack.c.h.b16 %v477
      %v1398 = vunpack.c.l.b16 %v478
      %v1399 = vunpack.c.h.b16 %v478
      %v1400 = vunpack.c.l.b16 %v479
      %v1401 = vunpack.c.h.b16 %v479
      %v1402 = vunpack.c.l.b16 %v480
      %v1403 = vunpack.c.h.b16 %v480
      %v1404 = vunpack.c.l.b16 %v481
      %v1405 = vunpack.c.h.b16 %v481
      %v1406 = vunpack.c.l.b16 %v482
      %v1407 = vunpack.c.h.b16 %v482
      %v1408 = vunpack.c.l.b16 %v483
      %v1409 = vunpack.c.h.b16 %v483
      %v1410 = vunpack.c.l.b16 %v484
      %v1411 = vunpack.c.h.b16 %v484
      %v1412 = vunpack.c.l.b16 %v485
      %v1413 = vunpack.c.h.b16 %v485
      %v1414 = vunpack.c.l.b16 %v486
      %v1415 = vunpack.c.h.b16 %v486
      %v1416 = vunpack.c.l.b16 %v487
      %v1417 = vunpack.c.h.b16 %v487
      %v1418 = vunpack.c.l.b16 %v488
      %v1419 = vunpack.c.h.b16 %v488
      %v1420 = vunpack.c.l.b16 %v489
      %v1421 = vunpack.c.h.b16 %v489
      %v1422 = vunpack.c.l.b16 %v490
      %v1423 = vunpack.c.h.b16 %v490
      %v1424 = vunpack.c.l.b16 %v491
      %v1425 = vunpack.c.h.b16 %v491
      %v1426 = vunpack.c.l.b16 %v492
      %v1427 = vunpack.c.h.b16 %v492
      %v1428 = vunpack.c.l.b16 %v493
      %v1429 = vunpack.c.h.b16 %v493
      %v1430 = vunpack.c.l.b16 %v494
      %v1431 = vunpack.c.h.b16 %v494
      %v1432 = vunpack.c.l.b16 %v495
      %v1433 = vunpack.c.h.b16 %v495
      %v1434 = vunpack.c.l.b16 %v496
      %v1435 = vunpack.c.h.b16 %v496
      %v1436 = vunpack.c.l.b16 %v497
      %v1437 = vunpack.c.h.b16 %v497
      %v1438 = vunpack.c.l.b16 %v498
      %v1439 = vunpack.c.h.b16 %v498
      %v1440 = vunpack.c.l.b16 %v499
      %v1441 = vunpack.c.h.b16 %v499
      %v1442 = vunpack.c.l.b16 %v500
      %v1443 = vunpack.c.h.b16 %v500
      %v1444 = vunpack.c.l.b16 %v501
      %v1445 = vunpack.c.h.b16 %v501
      %v1446 = vunpack.c.l.b16 %v502
      %v1447 = vunpack.c.h.b16 %v502
      %v1448 = vunpack.c.l.b16 %v503
      %v1449 = vunpack.c.h.b16 %v503
      %v1450 = vunpack.c.l.b16 %v504
      %v1451 = vunpack.c.h.b16 %v504
      %v1452 = vunpack.c.l.b16 %v505
      %v1453 = vunpack.c.h.b16 %v505
      %v1454 = vunpack.c.l.b16 %v506
      %v1455 = vunpack.c.h.b16 %v506
      %v1456 = vunpack.c.l.b16 %v507
      %v1457 = vunpack.c.h.b16 %v507
      %v1458 = vunpack.c.l.b16 %v508
      %v1459 = vunpack.c.h.b16 %v508
      %v1460 = vunpack.c.l.b16 %v509
      %v1461 = vunpack.c.h.b16 %v509
      %v1462 = vunpack.c.l.b16 %v510
      %v1463 = vunpack.c.h.b16 %v510
      %v1464 = vunpack.c.l.b16 %v511
      %v1465 = vunpack.c.h.b16 %v511
      %v1466 = vunpack.c.l.b16 %v512
      %v1467 = vunpack.c.h.b16 %v512
      %v1468 = vunpack.c.l.b16 %v513
      %v1469 = vunpack.c.h.b16 %v513
      %v1470 = vunpack.c.l.b16 %v514
      %v1471 = vunpack.c.h.b16 %v514
      %v1472 = vunpack.c.l.b16 %v515
      %v1473 = vunpack.c.h.b16 %v515
      %v1474 = vunpack.c.l.b16 %v516
      %v1475 = vunpack.c.h.b16 %v516
      %v1476 = vunpack.c.l.b16 %v517
      %v1477 = vunpack.c.h.b16 %v517
      %v1478 = vunpack.c.l.b16 %v518
      %v1479 = vunpack.c.h.b16 %v518
      %v1480 = vunpack.c.l.b16 %v519
      %v1481 = vunpack.c.h.b16 %v519
      %v1482 = vunpack.c.l.b16 %v520
      %v1483 = vunpack.c.h.b16 %v520
      %v1484 = vunpack.c.l.b16 %v521
      %v1485 = vunpack.c.h.b16 %v521
      %v1486 = vunpack.c.l.b16 %v522
      %v1487 = vunpack.c.h.b16 %v522
      %v1488 = vunpack.c.l.b16 %v523
      %v1489 = vunpack.c.h.b16 %v523
      %v1490 = vpack.c.b16 %v916, %v914
      %v1491 = vpack.c.b16 %v917, %v915
      %v1492 = vpack.c.b16 %v920, %v918
      %v1493 = vpack.c.b16 %v921, %v919
      %v1494 = vpack.c.b16 %v924, %v922
      %v1495 = vpack.c.b16 %v925, %v923
      %v1496 = vpack.c.b16 %v928, %v926
      %v1497 = vpack.c.b16 %v929, %v927
      %v1498 = vpack.c.b16 %v932, %v930
      %v1499 = vpack.c.b16 %v933, %v931
      %v1500 = vpack.c.b16 %v936, %v934
      %v1501 = vpack.c.b16 %v937, %v935
      %v1502 = vpack.c.b16 %v940, %v938
      %v1503 = vpack.c.b16 %v941, %v939
      %v1504 = vpack.c.b16 %v944, %v942
      %v1505 = vpack.c.b16 %v945, %v943
      %v1506 = vpack.c.b16 %v948, %v946
      %v1507 = vpack.c.b16 %v949, %v947
      %v1508 = vpack.c.b16 %v952, %v950
      %v1509 = vpack.c.b16 %v953, %v951
      %v1510 = vpack.c.b16 %v956, %v954
      %v1511 = vpack.c.b16 %v957, %v955
      %v1512 = vpack.c.b16 %v960, %v958
      %v1513 = vpack.c.b16 %v961, %v959
      %v1514 = vpack.c.b16 %v964, %v962
      %v1515 = vpack.c.b16 %v965, %v963
      %v1516 = vpack.c.b16 %v968, %v966
      %v1517 = vpack.c.b16 %v969, %v967
      %v1518 = vpack.c.b16 %v972, %v970
      %v1519 = vpack.c.b16 %v973, %v971
      %v1520 = vpack.c.b16 %v976, %v974
      %v1521 = vpack.c.b16 %v977, %v975
      %v1522 = vpack.c.b16 %v980, %v978
      %v1523 = vpack.c.b16 %v981, %v979
      %v1524 = vpack.c.b16 %v984, %v982
      %v1525 = vpack.c.b16 %v985, %v983
      %v1526 = vpack.c.b16 %v988, %v986
      %v1527 = vpack.c.b16 %v989, %v987
      %v1528 = vpack.c.b16 %v992, %v990
      %v1529 = vpack.c.b16 %v993, %v991
      %v1530 = vpack.c.b16 %v996, %v994
      %v1531 = vpack.c.b16 %v997, %v995
      %v1532 = vpack.c.b16 %v1000, %v998
      %v1533 = vpack.c.b16 %v1001, %v999
      %v1534 = vpack.c.b16 %v1004, %v1002
      %v1535 = vpack.c.b16 %v1005, %v1003
      %v1536 = vpack.c.b16 %v1008, %v1006
      %v1537 = vpack.c.b16 %v1009, %v1007
      %v1538 = vpack.c.b16 %v1012, %v1010
      %v1539 = vpack.c.b16 %v1013, %v1011
      %v1540 = vpack.c.b16 %v1016, %v1014
      %v1541 = vpack.c.b16 %v1017, %v1015
      %v1542 = vpack.c.b16 %v1020, %v1018
      %v1543 = vpack.c.b16 %v1021, %v1019
      %v1544 = vpack.c.b16 %v1024, %v1022
      %v1545 = vpack.c.b16 %v1025, %v1023
      %v1546 = vpack.c.b16 %v1028, %v1026
      %v1547 = vpack.c.b16 %v1029, %v1027
      %v1548 = vpack.c.b16 %v1032, %v1030
      %v1549 = vpack.c.b16 %v1033, %v1031
      %v1550 = vpack.c.b16 %v1036, %v1034
      %v1551 = vpack.c.b16 %v1037, %v1035
      %v1552 = vpack.c.b16 %v1040, %v1038
      %v1553 = vpack.c.b16 %v1041, %v1039
      %v1554 = vpack.c.b16 %v1044, %v1042
      %v1555 = vpack.c.b16 %v1045, %v1043
      %v1556 = vpack.c.b16 %v1048, %v1046
      %v1557 = vpack.c.b16 %v1049, %v1047
      %v1558 = vpack.c.b16 %v1052, %v1050
      %v1559 = vpack.c.b16 %v1053, %v1051
      %v1560 = vpack.c.b16 %v1056, %v1054
      %v1561 = vpack.c.b16 %v1057, %v1055
      %v1562 = vpack.c.b16 %v1060, %v1058
      %v1563 = vpack.c.b16 %v1061, %v1059
      %v1564 = vpack.c.b16 %v1064, %v1062
      %v1565 = vpack.c.b16 %v1065, %v1063
      %v1566 = vpack.c.b16 %v1068, %v1066
      %v1567 = vpack.c.b16 %v1069, %v1067
      %v1568 = vpack.c.b16 %v1072, %v1070
      %v1569 = vpack.c.b16 %v1073, %v1071
      %v1570 = vpack.c.b16 %v1076, %v1074
      %v1571 = vpack.c.b16 %v1077, %v1075
      %v1572 = vpack.c.b16 %v1080, %v1078
      %v1573 = vpack.c.b16 %v1081, %v1079
      %v1574 = vpack.c.b16 %v1084, %v1082
      %v1575 = vpack.c.b16 %v1085, %v1083
      %v1576 = vpack.c.b16 %v1088, %v1086
      %v1577 = vpack.c.b16 %v1089, %v1087
      %v1578 = vpack.c.b16 %v1092, %v1090
      %v1579 = vpack.c.b16 %v1093, %v1091
      %v1580 = vpack.c.b16 %v1096, %v1094
      %v1581 = vpack.c.b16 %v1097, %v1095
      %v1582 = vpack.c.b16 %v1100, %v1098
      %v1583 = vpack.c.b16 %v1101, %v1099
      %v1584 = vpack.c.b16 %v1104, %v1102
      %v1585 = vpack.c.b16 %v1105, %v1103
      %v1586 = vpack.c.b16 %v1108, %v1106
      %v1587 = vpack.c.b16 %v1109, %v1107
      %v1588 = vpack.c.b16 %v1112, %v1110
      %v1589 = vpack.c.b16 %v1113, %v1111
      %v1590 = vpack.c.b16 %v1116, %v1114
      %v1591 = vpack.c.b16 %v1117, %v1115
      %v1592 = vpack.c.b16 %v1120, %v1118
      %v1593 = vpack.c.b16 %v1121, %v1119
      %v1594 = vpack.c.b16 %v1124, %v1122
      %v1595 = vpack.c.b16 %v1125, %v1123
      %v1596 = vpack.c.b16 %v1128, %v1126
      %v1597 = vpack.c.b16 %v1129, %v1127
      %v1598 = vpack.c.b16 %v1132, %v1130
      %v1599 = vpack.c.b16 %v1133, %v1131
      %v1600 = vpack.c.b16 %v1136, %v1134
      %v1601 = vpack.c.b16 %v1137, %v1135
      %v1602 = vpack.c.b16 %v1140, %v1138
      %v1603 = vpack.c.b16 %v1141, %v1139
      %v1604 = vpack.c.b16 %v1144, %v1142
      %v1605 = vpack.c.b16 %v1145, %v1143
      %v1606 = vpack.c.b16 %v1148, %v1146
      %v1607 = vpack.c.b16 %v1149, %v1147
      %v1608 = vpack.c.b16 %v1152, %v1150
      %v1609 = vpack.c.b16 %v1153, %v1151
      %v1610 = vpack.c.b16 %v1156, %v1154
      %v1611 = vpack.c.b16 %v1157, %v1155
      %v1612 = vpack.c.b16 %v1160, %v1158
      %v1613 = vpack.c.b16 %v1161, %v1159
      %v1614 = vpack.c.b16 %v1164, %v1162
      %v1615 = vpack.c.b16 %v1165, %v1163
      %v1616 = vpack.c.b16 %v1168, %v1166
      %v1617 = vpack.c.b16 %v1169, %v1167
      %v1618 = vpack.c.b16 %v1172, %v1170
      %v1619 = vpack.c.b16 %v1173, %v1171
      %v1620 = vpack.c.b16 %v1176, %v1174
      %v1621 = vpack.c.b16 %v1177, %v1175
      %v1622 = vpack.c.b16 %v1180, %v1178
      %v1623 = vpack.c.b16 %v1181, %v1179
      %v1624 = vpack.c.b16 %v1184, %v1182
      %v1625 = vpack.c.b16 %v1185, %v1183
      %v1626 = vpack.c.b16 %v1188, %v1186
      %v1627 = vpack.c.b16 %v1189, %v1187
      %v1628 = vpack.c.b16 %v1192, %v1190
      %v1629 = vpack.c.b16 %v1193, %v1191
      %v1630 = vpack.c.b16 %v1196, %v1194
      %v1631 = vpack.c.b16 %v1197, %v1195
      %v1632 = vpack.c.b16 %v1200, %v1198
      %v1633 = vpack.c.b16 %v1201, %v1199
      %v1634 = vpack.c.b16 %v1204, %v1202
      %v1635 = vpack.c.b16 %v1205, %v1203
      %v1636 = vpack.c.b16 %v1208, %v1206
      %v1637 = vpack.c.b16 %v1209, %v1207
      %v1638 = vpack.c.b16 %v1212, %v1210
      %v1639 = vpack.c.b16 %v1213, %v1211
      %v1640 = vpack.c.b16 %v1216, %v1214
      %v1641 = vpack.c.b16 %v1217, %v1215
      %v1642 = vpack.c.b16 %v1220, %v1218
      %v1643 = vpack.c.b16 %v1221, %v1219
      %v1644 = vpack.c.b16 %v1224, %v1222
      %v1645 = vpack.c.b16 %v1225, %v1223
      %v1646 = vpack.c.b16 %v1228, %v1226
      %v1647 = vpack.c.b16 %v1229, %v1227
      %v1648 = vpack.c.b16 %v1232, %v1230
      %v1649 = vpack.c.b16 %v1233, %v1231
      %v1650 = vpack.c.b16 %v1236, %v1234
      %v1651 = vpack.c.b16 %v1237, %v1235
      %v1652 = vpack.c.b16 %v1240, %v1238
      %v1653 = vpack.c.b16 %v1241, %v1239
      %v1654 = vpack.c.b16 %v1244, %v1242
      %v1655 = vpack.c.b16 %v1245, %v1243
      %v1656 = vpack.c.b16 %v1248, %v1246
      %v1657 = vpack.c.b16 %v1249, %v1247
      %v1658 = vpack.c.b16 %v1252, %v1250
      %v1659 = vpack.c.b16 %v1253, %v1251
      %v1660 = vpack.c.b16 %v1256, %v1254
      %v1661 = vpack.c.b16 %v1257, %v1255
      %v1662 = vpack.c.b16 %v1260, %v1258
      %v1663 = vpack.c.b16 %v1261, %v1259
      %v1664 = vpack.c.b16 %v1264, %v1262
      %v1665 = vpack.c.b16 %v1265, %v1263
      %v1666 = vpack.c.b16 %v1268, %v1266
      %v1667 = vpack.c.b16 %v1269, %v1267
      %v1668 = vpack.c.b16 %v1272, %v1270
      %v1669 = vpack.c.b16 %v1273, %v1271
      %v1670 = vpack.c.b16 %v1276, %v1274
      %v1671 = vpack.c.b16 %v1277, %v1275
      %v1672 = vpack.c.b16 %v1280, %v1278
      %v1673 = vpack.c.b16 %v1281, %v1279
      %v1674 = vpack.c.b16 %v1284, %v1282
      %v1675 = vpack.c.b16 %v1285, %v1283
      %v1676 = vpack.c.b16 %v1288, %v1286
      %v1677 = vpack.c.b16 %v1289, %v1287
      %v1678 = vpack.c.b16 %v1292, %v1290
      %v1679 = vpack.c.b16 %v1293, %v1291
      %v1680 = vpack.c.b16 %v1296, %v1294
      %v1681 = vpack.c.b16 %v1297, %v1295
      %v1682 = vpack.c.b16 %v1300, %v1298
      %v1683 = vpack.c.b16 %v1301, %v1299
      %v1684 = vpack.c.b16 %v1304, %v1302
      %v1685 = vpack.c.b16 %v1305, %v1303
      %v1686 = vpack.c.b16 %v1308, %v1306
      %v1687 = vpack.c.b16 %v1309, %v1307
      %v1688 = vpack.c.b16 %v1312, %v1310
      %v1689 = vpack.c.b16 %v1313, %v1311
      %v1690 = vpack.c.b16 %v1316, %v1314
      %v1691 = vpack.c.b16 %v1317, %v1315
      %v1692 = vpack.c.b16 %v1320, %v1318
      %v1693 = vpack.c.b16 %v1321, %v1319
      %v1694 = vpack.c.b16 %v1324, %v1322
      %v1695 = vpack.c.b16 %v1325, %v1323
      %v1696 = vpack.c.b16 %v1328, %v1326
      %v1697 = vpack.c.b16 %v1329, %v1327
      %v1698 = vpack.c.b16 %v1332, %v1330
      %v1699 = vpack.c.b16 %v1333, %v1331
      %v1700 = vpack.c.b16 %v1336, %v1334
      %v1701 = vpack.c.b16 %v1337, %v1335
      %v1702 = vpack.c.b16 %v1340, %v1338
      %v1703 = vpack.c.b16 %v1341, %v1339
      %v1704 = vpack.c.b16 %v1344, %v1342
      %v1705 = vpack.c.b16 %v1345, %v1343
      %v1706 = vpack.c.b16 %v1348, %v1346
      %v1707 = vpack.c.b16 %v1349, %v1347
      %v1708 = vpack.c.b16 %v1352, %v1350
      %v1709 = vpack.c.b16 %v1353, %v1351
      %v1710 = vpack.c.b16 %v1356, %v1354
      %v1711 = vpack.c.b16 %v1357, %v1355
      %v1712 = vpack.c.b16 %v1360, %v1358
      %v1713 = vpack.c.b16 %v1361, %v1359
      %v1714 = vpack.c.b16 %v1364, %v1362
      %v1715 = vpack.c.b16 %v1365, %v1363
      %v1716 = vpack.c.b16 %v1368, %v1366
      %v1717 = vpack.c.b16 %v1369, %v1367
      %v1718 = vpack.c.b16 %v1372, %v1370
      %v1719 = vpack.c.b16 %v1373, %v1371
      %v1720 = vpack.c.b16 %v1376, %v1374
      %v1721 = vpack.c.b16 %v1377, %v1375
      %v1722 = vpack.c.b16 %v1380, %v1378
      %v1723 = vpack.c.b16 %v1381, %v1379
      %v1724 = vpack.c.b16 %v1384, %v1382
      %v1725 = vpack.c.b16 %v1385, %v1383
      %v1726 = vpack.c.b16 %v1388, %v1386
      %v1727 = vpack.c.b16 %v1389, %v1387
      %v1728 = vpack.c.b16 %v1392, %v1390
      %v1729 = vpack.c.b16 %v1393, %v1391
      %v1730 = vpack.c.b16 %v1396, %v1394
      %v1731 = vpack.c.b16 %v1397, %v1395
      %v1732 = vpack.c.b16 %v1400, %v1398
      %v1733 = vpack.c.b16 %v1401, %v1399
      %v1734 = vpack.c.b16 %v1404, %v1402
      %v1735 = vpack.c.b16 %v1405, %v1403
      %v1736 = vpack.c.b16 %v1408, %v1406
      %v1737 = vpack.c.b16 %v1409, %v1407
      %v1738 = vpack.c.b16 %v1412, %v1410
      %v1739 = vpack.c.b16 %v1413, %v1411
      %v1740 = vpack.c.b16 %v1416, %v1414
      %v1741 = vpack.c.b16 %v1417, %v1415
      %v1742 = vpack.c.b16 %v1420, %v1418
      %v1743 = vpack.c.b16 %v1421, %v1419
      %v1744 = vpack.c.b16 %v1424, %v1422
      %v1745 = vpack.c.b16 %v1425, %v1423
      %v1746 = vpack.c.b16 %v1428, %v1426
      %v1747 = vpack.c.b16 %v1429, %v1427
      %v1748 = vpack.c.b16 %v1432, %v1430
      %v1749 = vpack.c.b16 %v1433, %v1431
      %v1750 = vpack.c.b16 %v1436, %v1434
      %v1751 = vpack.c.b16 %v1437, %v1435
      %v1752 = vpack.c.b16 %v1440, %v1438
      %v1753 = vpack.c.b16 %v1441, %v1439
      %v1754 = vpack.c.b16 %v1444, %v1442
      %v1755 = vpack.c.b16 %v1445, %v1443
      %v1756 = vpack.c.b16 %v1448, %v1446
      %v1757 = vpack.c.b16 %v1449, %v1447
      %v1758 = vpack.c.b16 %v1452, %v1450
      %v1759 = vpack.c.b16 %v1453, %v1451
      %v1760 = vpack.c.b16 %v1456, %v1454
      %v1761 = vpack.c.b16 %v1457, %v1455
      %v1762 = vpack.c.b16 %v1460, %v1458
      %v1763 = vpack.c.b16 %v1461, %v1459
      %v1764 = vpack.c.b16 %v1464, %v1462
      %v1765 = vpack.c.b16 %v1465, %v1463
      %v1766 = vpack.c.b16 %v1468, %v1466
      %v1767 = vpack.c.b16 %v1469, %v1467
      %v1768 = vpack.c.b16 %v1472, %v1470
      %v1769 = vpack.c.b16 %v1473, %v1471
      %v1770 = vpack.c.b16 %v1476, %v1474
      %v1771 = vpack.c.b16 %v1477, %v1475
      %v1772 = vpack.c.b16 %v1480, %v1478
      %v1773 = vpack.c.b16 %v1481, %v1479
      %v1774 = vpack.c.b16 %v1484, %v1482
      %v1775 = vpack.c.b16 %v1485, %v1483
      %v1776 = vpack.c.b16 %v1488, %v1486
      %v1777 = vpack.c.b16 %v1489, %v1487
      %2066 = vmatprep.subr.bf16.mxu0 %v1505
      %2067 = vmatpush1.bf16.msra.mxu0 %v1504
      %2068 = vmatprep.subr.bf16.mxu0 %v1503
      %2069 = vmatpush1.bf16.msra.mxu0 %v1502
      %2070 = vmatprep.subr.bf16.mxu0 %v1501
      %2071 = vmatpush1.bf16.msra.mxu0 %v1500
      %2072 = vmatprep.subr.bf16.mxu0 %v1499
      %2073 = vmatpush1.bf16.msra.mxu0 %v1498
      %2074 = vmatprep.subr.bf16.mxu0 %v1497
      %2075 = vmatpush1.bf16.msra.mxu0 %v1496
      %2076 = vmatprep.subr.bf16.mxu0 %v1495
      %2077 = vmatpush1.bf16.msra.mxu0 %v1494
      %2078 = vmatprep.subr.bf16.mxu0 %v1493
      %2079 = vmatpush1.bf16.msra.mxu0 %v1492
      %2080 = vmatprep.subr.bf16.mxu0 %v1491
      %2081 = vmatpush1.bf16.msra.mxu0 %v1490
      %2082 = vmatprep.subr.bf16.mxu0 %v1521
      %2083 = vmatpush2.bf16.msra.mxu0 %v1520
      %2084 = vmatprep.subr.bf16.mxu0 %v1519
      %2085 = vmatpush2.bf16.msra.mxu0 %v1518
      %2086 = vmatprep.subr.bf16.mxu0 %v1517
      %2087 = vmatpush2.bf16.msra.mxu0 %v1516
      %2088 = vmatprep.subr.bf16.mxu0 %v1515
      %2089 = vmatpush2.bf16.msra.mxu0 %v1514
      %2090 = vmatprep.subr.bf16.mxu0 %v1513
      %2091 = vmatpush2.bf16.msra.mxu0 %v1512
      %2092 = vmatprep.subr.bf16.mxu0 %v1511
      %2093 = vmatpush2.bf16.msra.mxu0 %v1510
      %2094 = vmatprep.subr.bf16.mxu0 %v1509
      %2095 = vmatpush2.bf16.msra.mxu0 %v1508
      %2096 = vmatprep.subr.bf16.mxu0 %v1507
      %2097 = vmatpush2.bf16.msra.mxu0 %v1506
      %2098 = vmatprep.mubr.bf16.mxu0 %v591
      %2099 = vmatmul.mubr.bf16.gmra.mxu0 %v590
      %v2100 = vpop.f32.mrf.mxu0
      %v2101 = vadd.f32 %v529, %v2100
      %v2102 = vpop.f32.mrf.mxu0
      %v2103 = vadd.f32 %v533, %v2102
      %v2104 = vpop.f32.mrf.mxu0
      %v2105 = vadd.f32 %v529, %v2104
      %v2106 = vpop.f32.mrf.mxu0
      %v2107 = vadd.f32 %v533, %v2106
      %2108 = vdwg.mxu0
      %2109 = vmatprep.subr.bf16.mxu0 %v1537
      %2110 = vmatpush1.bf16.msra.mxu0 %v1536
      %2111 = vmatprep.subr.bf16.mxu0 %v1535
      %2112 = vmatpush1.bf16.msra.mxu0 %v1534
      %2113 = vmatprep.subr.bf16.mxu0 %v1533
      %2114 = vmatpush1.bf16.msra.mxu0 %v1532
      %2115 = vmatprep.subr.bf16.mxu0 %v1531
      %2116 = vmatpush1.bf16.msra.mxu0 %v1530
      %2117 = vmatprep.subr.bf16.mxu0 %v1529
      %2118 = vmatpush1.bf16.msra.mxu0 %v1528
      %2119 = vmatprep.subr.bf16.mxu0 %v1527
      %2120 = vmatpush1.bf16.msra.mxu0 %v1526
      %2121 = vmatprep.subr.bf16.mxu0 %v1525
      %2122 = vmatpush1.bf16.msra.mxu0 %v1524
      %2123 = vmatprep.subr.bf16.mxu0 %v1523
      %2124 = vmatpush1.bf16.msra.mxu0 %v1522
      %2125 = vmatprep.subr.bf16.mxu0 %v1553
      %2126 = vmatpush2.bf16.msra.mxu0 %v1552
      %2127 = vmatprep.subr.bf16.mxu0 %v1551
      %2128 = vmatpush2.bf16.msra.mxu0 %v1550
      %2129 = vmatprep.subr.bf16.mxu0 %v1549
      %2130 = vmatpush2.bf16.msra.mxu0 %v1548
      %2131 = vmatprep.subr.bf16.mxu0 %v1547
      %2132 = vmatpush2.bf16.msra.mxu0 %v1546
      %2133 = vmatprep.subr.bf16.mxu0 %v1545
      %2134 = vmatpush2.bf16.msra.mxu0 %v1544
      %2135 = vmatprep.subr.bf16.mxu0 %v1543
      %2136 = vmatpush2.bf16.msra.mxu0 %v1542
      %2137 = vmatprep.subr.bf16.mxu0 %v1541
      %2138 = vmatpush2.bf16.msra.mxu0 %v1540
      %2139 = vmatprep.subr.bf16.mxu0 %v1539
      %2140 = vmatpush2.bf16.msra.mxu0 %v1538
      %2141 = vmatprep.mubr.bf16.mxu0 %v593
      %2142 = vmatmul.mubr.bf16.gmra.mxu0 %v592
      %v2143 = vpop.f32.mrf.mxu0
      %v2144 = vadd.f32 %v2101, %v2143
      %v2145 = vpop.f32.mrf.mxu0
      %v2146 = vadd.f32 %v2103, %v2145
      %v2147 = vpop.f32.mrf.mxu0
      %v2148 = vadd.f32 %v2105, %v2147
      %v2149 = vpop.f32.mrf.mxu0
      %v2150 = vadd.f32 %v2107, %v2149
      %2151 = vdwg.mxu0
      %2152 = vmatprep.subr.bf16.mxu0 %v1569
      %2153 = vmatpush1.bf16.msra.mxu0 %v1568
      %2154 = vmatprep.subr.bf16.mxu0 %v1567
      %2155 = vmatpush1.bf16.msra.mxu0 %v1566
      %2156 = vmatprep.subr.bf16.mxu0 %v1565
      %2157 = vmatpush1.bf16.msra.mxu0 %v1564
      %2158 = vmatprep.subr.bf16.mxu0 %v1563
      %2159 = vmatpush1.bf16.msra.mxu0 %v1562
      %2160 = vmatprep.subr.bf16.mxu0 %v1561
      %2161 = vmatpush1.bf16.msra.mxu0 %v1560
      %2162 = vmatprep.subr.bf16.mxu0 %v1559
      %2163 = vmatpush1.bf16.msra.mxu0 %v1558
      %2164 = vmatprep.subr.bf16.mxu0 %v1557
      %2165 = vmatpush1.bf16.msra.mxu0 %v1556
      %2166 = vmatprep.subr.bf16.mxu0 %v1555
      %2167 = vmatpush1.bf16.msra.mxu0 %v1554
      %2168 = vmatprep.subr.bf16.mxu0 %v1585
      %2169 = vmatpush2.bf16.msra.mxu0 %v1584
      %2170 = vmatprep.subr.bf16.mxu0 %v1583
      %2171 = vmatpush2.bf16.msra.mxu0 %v1582
      %2172 = vmatprep.subr.bf16.mxu0 %v1581
      %2173 = vmatpush2.bf16.msra.mxu0 %v1580
      %2174 = vmatprep.subr.bf16.mxu0 %v1579
      %2175 = vmatpush2.bf16.msra.mxu0 %v1578
      %2176 = vmatprep.subr.bf16.mxu0 %v1577
      %2177 = vmatpush2.bf16.msra.mxu0 %v1576
      %2178 = vmatprep.subr.bf16.mxu0 %v1575
      %2179 = vmatpush2.bf16.msra.mxu0 %v1574
      %2180 = vmatprep.subr.bf16.mxu0 %v1573
      %2181 = vmatpush2.bf16.msra.mxu0 %v1572
      %2182 = vmatprep.subr.bf16.mxu0 %v1571
      %2183 = vmatpush2.bf16.msra.mxu0 %v1570
      %2184 = vmatprep.mubr.bf16.mxu0 %v595
      %2185 = vmatmul.mubr.bf16.gmra.mxu0 %v594
      %v2186 = vpop.f32.mrf.mxu0
      %v2187 = vadd.f32 %v2144, %v2186
      %v2188 = vpop.f32.mrf.mxu0
      %v2189 = vadd.f32 %v2146, %v2188
      %v2190 = vpop.f32.mrf.mxu0
      %v2191 = vadd.f32 %v2148, %v2190
      %v2192 = vpop.f32.mrf.mxu0
      %v2193 = vadd.f32 %v2150, %v2192
      %2194 = vdwg.mxu0
      %2195 = vmatprep.subr.bf16.mxu0 %v1601
      %2196 = vmatpush1.bf16.msra.mxu0 %v1600
      %2197 = vmatprep.subr.bf16.mxu0 %v1599
      %2198 = vmatpush1.bf16.msra.mxu0 %v1598
      %2199 = vmatprep.subr.bf16.mxu0 %v1597
      %2200 = vmatpush1.bf16.msra.mxu0 %v1596
      %2201 = vmatprep.subr.bf16.mxu0 %v1595
      %2202 = vmatpush1.bf16.msra.mxu0 %v1594
      %2203 = vmatprep.subr.bf16.mxu0 %v1593
      %2204 = vmatpush1.bf16.msra.mxu0 %v1592
      %2205 = vmatprep.subr.bf16.mxu0 %v1591
      %2206 = vmatpush1.bf16.msra.mxu0 %v1590
      %2207 = vmatprep.subr.bf16.mxu0 %v1589
      %2208 = vmatpush1.bf16.msra.mxu0 %v1588
      %2209 = vmatprep.subr.bf16.mxu0 %v1587
      %2210 = vmatpush1.bf16.msra.mxu0 %v1586
      %2211 = vmatprep.subr.bf16.mxu0 %v1617
      %2212 = vmatpush2.bf16.msra.mxu0 %v1616
      %2213 = vmatprep.subr.bf16.mxu0 %v1615
      %2214 = vmatpush2.bf16.msra.mxu0 %v1614
      %2215 = vmatprep.subr.bf16.mxu0 %v1613
      %2216 = vmatpush2.bf16.msra.mxu0 %v1612
      %2217 = vmatprep.subr.bf16.mxu0 %v1611
      %2218 = vmatpush2.bf16.msra.mxu0 %v1610
      %2219 = vmatprep.subr.bf16.mxu0 %v1609
      %2220 = vmatpush2.bf16.msra.mxu0 %v1608
      %2221 = vmatprep.subr.bf16.mxu0 %v1607
      %2222 = vmatpush2.bf16.msra.mxu0 %v1606
      %2223 = vmatprep.subr.bf16.mxu0 %v1605
      %2224 = vmatpush2.bf16.msra.mxu0 %v1604
      %2225 = vmatprep.subr.bf16.mxu0 %v1603
      %2226 = vmatpush2.bf16.msra.mxu0 %v1602
      %2227 = vmatprep.mubr.bf16.mxu0 %v597
      %2228 = vmatmul.mubr.bf16.gmra.mxu0 %v596
      %v2229 = vpop.f32.mrf.mxu0
      %v2230 = vadd.f32 %v2187, %v2229
      %v2231 = vpop.f32.mrf.mxu0
      %v2232 = vadd.f32 %v2189, %v2231
      %v2233 = vpop.f32.mrf.mxu0
      %v2234 = vadd.f32 %v2191, %v2233
      %v2235 = vpop.f32.mrf.mxu0
      %v2236 = vadd.f32 %v2193, %v2235
      %2237 = vdwg.mxu0
      %2238 = vmatprep.subr.bf16.mxu0 %v1633
      %2239 = vmatpush1.bf16.msra.mxu0 %v1632
      %2240 = vmatprep.subr.bf16.mxu0 %v1631
      %2241 = vmatpush1.bf16.msra.mxu0 %v1630
      %2242 = vmatprep.subr.bf16.mxu0 %v1629
      %2243 = vmatpush1.bf16.msra.mxu0 %v1628
      %2244 = vmatprep.subr.bf16.mxu0 %v1627
      %2245 = vmatpush1.bf16.msra.mxu0 %v1626
      %2246 = vmatprep.subr.bf16.mxu0 %v1625
      %2247 = vmatpush1.bf16.msra.mxu0 %v1624
      %2248 = vmatprep.subr.bf16.mxu0 %v1623
      %2249 = vmatpush1.bf16.msra.mxu0 %v1622
      %2250 = vmatprep.subr.bf16.mxu0 %v1621
      %2251 = vmatpush1.bf16.msra.mxu0 %v1620
      %2252 = vmatprep.subr.bf16.mxu0 %v1619
      %2253 = vmatpush1.bf16.msra.mxu0 %v1618
      %2254 = vmatprep.subr.bf16.mxu0 %v1649
      %2255 = vmatpush2.bf16.msra.mxu0 %v1648
      %2256 = vmatprep.subr.bf16.mxu0 %v1647
      %2257 = vmatpush2.bf16.msra.mxu0 %v1646
      %2258 = vmatprep.subr.bf16.mxu0 %v1645
      %2259 = vmatpush2.bf16.msra.mxu0 %v1644
      %2260 = vmatprep.subr.bf16.mxu0 %v1643
      %2261 = vmatpush2.bf16.msra.mxu0 %v1642
      %2262 = vmatprep.subr.bf16.mxu0 %v1641
      %2263 = vmatpush2.bf16.msra.mxu0 %v1640
      %2264 = vmatprep.subr.bf16.mxu0 %v1639
      %2265 = vmatpush2.bf16.msra.mxu0 %v1638
      %2266 = vmatprep.subr.bf16.mxu0 %v1637
      %2267 = vmatpush2.bf16.msra.mxu0 %v1636
      %2268 = vmatprep.subr.bf16.mxu0 %v1635
      %2269 = vmatpush2.bf16.msra.mxu0 %v1634
      %2270 = vmatprep.mubr.bf16.mxu0 %v599
      %2271 = vmatmul.mubr.bf16.gmra.mxu0 %v598
      %v2272 = vpop.f32.mrf.mxu0
      %v2273 = vadd.f32 %v2230, %v2272
      %v2274 = vpop.f32.mrf.mxu0
      %v2275 = vadd.f32 %v2232, %v2274
      %v2276 = vpop.f32.mrf.mxu0
      %v2277 = vadd.f32 %v2234, %v2276
      %v2278 = vpop.f32.mrf.mxu0
      %v2279 = vadd.f32 %v2236, %v2278
      %2280 = vdwg.mxu0
      %2281 = vmatprep.subr.bf16.mxu0 %v1665
      %2282 = vmatpush1.bf16.msra.mxu0 %v1664
      %2283 = vmatprep.subr.bf16.mxu0 %v1663
      %2284 = vmatpush1.bf16.msra.mxu0 %v1662
      %2285 = vmatprep.subr.bf16.mxu0 %v1661
      %2286 = vmatpush1.bf16.msra.mxu0 %v1660
      %2287 = vmatprep.subr.bf16.mxu0 %v1659
      %2288 = vmatpush1.bf16.msra.mxu0 %v1658
      %2289 = vmatprep.subr.bf16.mxu0 %v1657
      %2290 = vmatpush1.bf16.msra.mxu0 %v1656
      %2291 = vmatprep.subr.bf16.mxu0 %v1655
      %2292 = vmatpush1.bf16.msra.mxu0 %v1654
      %2293 = vmatprep.subr.bf16.mxu0 %v1653
      %2294 = vmatpush1.bf16.msra.mxu0 %v1652
      %2295 = vmatprep.subr.bf16.mxu0 %v1651
      %2296 = vmatpush1.bf16.msra.mxu0 %v1650
      %2297 = vmatprep.subr.bf16.mxu0 %v1681
      %2298 = vmatpush2.bf16.msra.mxu0 %v1680
      %2299 = vmatprep.subr.bf16.mxu0 %v1679
      %2300 = vmatpush2.bf16.msra.mxu0 %v1678
      %2301 = vmatprep.subr.bf16.mxu0 %v1677
      %2302 = vmatpush2.bf16.msra.mxu0 %v1676
      %2303 = vmatprep.subr.bf16.mxu0 %v1675
      %2304 = vmatpush2.bf16.msra.mxu0 %v1674
      %2305 = vmatprep.subr.bf16.mxu0 %v1673
      %2306 = vmatpush2.bf16.msra.mxu0 %v1672
      %2307 = vmatprep.subr.bf16.mxu0 %v1671
      %2308 = vmatpush2.bf16.msra.mxu0 %v1670
      %2309 = vmatprep.subr.bf16.mxu0 %v1669
      %2310 = vmatpush2.bf16.msra.mxu0 %v1668
      %2311 = vmatprep.subr.bf16.mxu0 %v1667
      %2312 = vmatpush2.bf16.msra.mxu0 %v1666
      %2313 = vmatprep.mubr.bf16.mxu0 %v601
      %2314 = vmatmul.mubr.bf16.gmra.mxu0 %v600
      %v2315 = vpop.f32.mrf.mxu0
      %v2316 = vadd.f32 %v2273, %v2315
      %v2317 = vpop.f32.mrf.mxu0
      %v2318 = vadd.f32 %v2275, %v2317
      %v2319 = vpop.f32.mrf.mxu0
      %v2320 = vadd.f32 %v2277, %v2319
      %v2321 = vpop.f32.mrf.mxu0
      %v2322 = vadd.f32 %v2279, %v2321
      %2323 = vdwg.mxu0
      %2324 = vmatprep.subr.bf16.mxu0 %v1697
      %2325 = vmatpush1.bf16.msra.mxu0 %v1696
      %2326 = vmatprep.subr.bf16.mxu0 %v1695
      %2327 = vmatpush1.bf16.msra.mxu0 %v1694
      %2328 = vmatprep.subr.bf16.mxu0 %v1693
      %2329 = vmatpush1.bf16.msra.mxu0 %v1692
      %2330 = vmatprep.subr.bf16.mxu0 %v1691
      %2331 = vmatpush1.bf16.msra.mxu0 %v1690
      %2332 = vmatprep.subr.bf16.mxu0 %v1689
      %2333 = vmatpush1.bf16.msra.mxu0 %v1688
      %2334 = vmatprep.subr.bf16.mxu0 %v1687
      %2335 = vmatpush1.bf16.msra.mxu0 %v1686
      %2336 = vmatprep.subr.bf16.mxu0 %v1685
      %2337 = vmatpush1.bf16.msra.mxu0 %v1684
      %2338 = vmatprep.subr.bf16.mxu0 %v1683
      %2339 = vmatpush1.bf16.msra.mxu0 %v1682
      %2340 = vmatprep.subr.bf16.mxu0 %v1713
      %2341 = vmatpush2.bf16.msra.mxu0 %v1712
      %2342 = vmatprep.subr.bf16.mxu0 %v1711
      %2343 = vmatpush2.bf16.msra.mxu0 %v1710
      %2344 = vmatprep.subr.bf16.mxu0 %v1709
      %2345 = vmatpush2.bf16.msra.mxu0 %v1708
      %2346 = vmatprep.subr.bf16.mxu0 %v1707
      %2347 = vmatpush2.bf16.msra.mxu0 %v1706
      %2348 = vmatprep.subr.bf16.mxu0 %v1705
      %2349 = vmatpush2.bf16.msra.mxu0 %v1704
      %2350 = vmatprep.subr.bf16.mxu0 %v1703
      %2351 = vmatpush2.bf16.msra.mxu0 %v1702
      %2352 = vmatprep.subr.bf16.mxu0 %v1701
      %2353 = vmatpush2.bf16.msra.mxu0 %v1700
      %2354 = vmatprep.subr.bf16.mxu0 %v1699
      %2355 = vmatpush2.bf16.msra.mxu0 %v1698
      %2356 = vmatprep.mubr.bf16.mxu0 %v603
      %2357 = vmatmul.mubr.bf16.gmra.mxu0 %v602
      %v2358 = vpop.f32.mrf.mxu0
      %v2359 = vadd.f32 %v2316, %v2358
      %v2360 = vpop.f32.mrf.mxu0
      %v2361 = vadd.f32 %v2318, %v2360
      %v2362 = vpop.f32.mrf.mxu0
      %v2363 = vadd.f32 %v2320, %v2362
      %v2364 = vpop.f32.mrf.mxu0
      %v2365 = vadd.f32 %v2322, %v2364
      %2366 = vdwg.mxu0
      %2367 = vmatprep.subr.bf16.mxu0 %v1729
      %2368 = vmatpush1.bf16.msra.mxu0 %v1728
      %2369 = vmatprep.subr.bf16.mxu0 %v1727
      %2370 = vmatpush1.bf16.msra.mxu0 %v1726
      %2371 = vmatprep.subr.bf16.mxu0 %v1725
      %2372 = vmatpush1.bf16.msra.mxu0 %v1724
      %2373 = vmatprep.subr.bf16.mxu0 %v1723
      %2374 = vmatpush1.bf16.msra.mxu0 %v1722
      %2375 = vmatprep.subr.bf16.mxu0 %v1721
      %2376 = vmatpush1.bf16.msra.mxu0 %v1720
      %2377 = vmatprep.subr.bf16.mxu0 %v1719
      %2378 = vmatpush1.bf16.msra.mxu0 %v1718
      %2379 = vmatprep.subr.bf16.mxu0 %v1717
      %2380 = vmatpush1.bf16.msra.mxu0 %v1716
      %2381 = vmatprep.subr.bf16.mxu0 %v1715
      %2382 = vmatpush1.bf16.msra.mxu0 %v1714
      %2383 = vmatprep.subr.bf16.mxu0 %v1745
      %2384 = vmatpush2.bf16.msra.mxu0 %v1744
      %2385 = vmatprep.subr.bf16.mxu0 %v1743
      %2386 = vmatpush2.bf16.msra.mxu0 %v1742
      %2387 = vmatprep.subr.bf16.mxu0 %v1741
      %2388 = vmatpush2.bf16.msra.mxu0 %v1740
      %2389 = vmatprep.subr.bf16.mxu0 %v1739
      %2390 = vmatpush2.bf16.msra.mxu0 %v1738
      %2391 = vmatprep.subr.bf16.mxu0 %v1737
      %2392 = vmatpush2.bf16.msra.mxu0 %v1736
      %2393 = vmatprep.subr.bf16.mxu0 %v1735
      %2394 = vmatpush2.bf16.msra.mxu0 %v1734
      %2395 = vmatprep.subr.bf16.mxu0 %v1733
      %2396 = vmatpush2.bf16.msra.mxu0 %v1732
      %2397 = vmatprep.subr.bf16.mxu0 %v1731
      %2398 = vmatpush2.bf16.msra.mxu0 %v1730
      %2399 = vmatprep.mubr.bf16.mxu0 %v605
      %2400 = vmatmul.mubr.bf16.gmra.mxu0 %v604
      %v2401 = vpop.f32.mrf.mxu0
      %v2402 = vadd.f32 %v2359, %v2401
      %v2403 = vpop.f32.mrf.mxu0
      %v2404 = vadd.f32 %v2361, %v2403
      %v2405 = vpop.f32.mrf.mxu0
      %v2406 = vadd.f32 %v2363, %v2405
      %v2407 = vpop.f32.mrf.mxu0
      %v2408 = vadd.f32 %v2365, %v2407
      %2409 = vdwg.mxu0
      %2410 = vmatprep.subr.bf16.mxu0 %v1761
      %2411 = vmatpush1.bf16.msra.mxu0 %v1760
      %2412 = vmatprep.subr.bf16.mxu0 %v1759
      %2413 = vmatpush1.bf16.msra.mxu0 %v1758
      %2414 = vmatprep.subr.bf16.mxu0 %v1757
      %2415 = vmatpush1.bf16.msra.mxu0 %v1756
      %2416 = vmatprep.subr.bf16.mxu0 %v1755
      %2417 = vmatpush1.bf16.msra.mxu0 %v1754
      %2418 = vmatprep.subr.bf16.mxu0 %v1753
      %2419 = vmatpush1.bf16.msra.mxu0 %v1752
      %2420 = vmatprep.subr.bf16.mxu0 %v1751
      %2421 = vmatpush1.bf16.msra.mxu0 %v1750
      %2422 = vmatprep.subr.bf16.mxu0 %v1749
      %2423 = vmatpush1.bf16.msra.mxu0 %v1748
      %2424 = vmatprep.subr.bf16.mxu0 %v1747
      %2425 = vmatpush1.bf16.msra.mxu0 %v1746
      %2426 = vmatprep.subr.bf16.mxu0 %v1777
      %2427 = vmatpush2.bf16.msra.mxu0 %v1776
      %2428 = vmatprep.subr.bf16.mxu0 %v1775
      %2429 = vmatpush2.bf16.msra.mxu0 %v1774
      %2430 = vmatprep.subr.bf16.mxu0 %v1773
      %2431 = vmatpush2.bf16.msra.mxu0 %v1772
      %2432 = vmatprep.subr.bf16.mxu0 %v1771
      %2433 = vmatpush2.bf16.msra.mxu0 %v1770
      %2434 = vmatprep.subr.bf16.mxu0 %v1769
      %2435 = vmatpush2.bf16.msra.mxu0 %v1768
      %2436 = vmatprep.subr.bf16.mxu0 %v1767
      %2437 = vmatpush2.bf16.msra.mxu0 %v1766
      %2438 = vmatprep.subr.bf16.mxu0 %v1765
      %2439 = vmatpush2.bf16.msra.mxu0 %v1764
      %2440 = vmatprep.subr.bf16.mxu0 %v1763
      %2441 = vmatpush2.bf16.msra.mxu0 %v1762
      %2442 = vmatprep.mubr.bf16.mxu0 %v607
      %2443 = vmatmul.mubr.bf16.gmra.mxu0 %v606
      %v2444 = vpop.f32.mrf.mxu0
      %v2445 = vadd.f32 %v2402, %v2444
      %v2446 = vpop.f32.mrf.mxu0
      %v2447 = vadd.f32 %v2404, %v2446
      %v2448 = vpop.f32.mrf.mxu0
      %v2449 = vadd.f32 %v2406, %v2448
      %v2450 = vpop.f32.mrf.mxu0
      %v2451 = vadd.f32 %v2408, %v2450
      %2452 = vdwg.mxu0
      %v2453 = vadd.f32 %v2445, %v2449
      %v2454 = vrot.slane %v2453, 4
      %v2455 = vadd.f32 %v2453, %v2454
      %v2456 = vrot.slane %v2455, 2
      %v2457 = vadd.f32 %v2455, %v2456
      %v2458 = vrot.slane %v2457, 1
      %v2459 = vadd.f32 %v2457, %v2458
      %v2460 = vadd.f32 %v2447, %v2451
      %v2461 = vrot.slane %v2460, 4
      %v2462 = vadd.f32 %v2460, %v2461
      %v2463 = vrot.slane %v2462, 2
      %v2464 = vadd.f32 %v2462, %v2463
      %v2465 = vrot.slane %v2464, 1
      %v2466 = vadd.f32 %v2464, %v2465
      %v2467 = vrcp.pop 16.0
      %v2468 = vmul.f32 %v2459, %v2467
      %v2469 = vmul.f32 %v2466, %v2467
      %v2470 = vsub.f32 %v2445, %v2468
      %v2471 = vsub.f32 %v2447, %v2469
      %v2472 = vsub.f32 %v2449, %v2468
      %v2473 = vsub.f32 %v2451, %v2469
      %v2474 = vmul.f32 %v2470, %v2470
      %v2475 = vmul.f32 %v2471, %v2471
      %v2476 = vmul.f32 %v2472, %v2472
      %v2477 = vmul.f32 %v2473, %v2473
      %v2478 = vadd.f32 %v2474, %v2476
      %v2479 = vrot.slane %v2478, 4
      %v2480 = vadd.f32 %v2478, %v2479
      %v2481 = vrot.slane %v2480, 2
      %v2482 = vadd.f32 %v2480, %v2481
      %v2483 = vrot.slane %v2482, 1
      %v2484 = vadd.f32 %v2482, %v2483
      %v2485 = vadd.f32 %v2475, %v2477
      %v2486 = vrot.slane %v2485, 4
      %v2487 = vadd.f32 %v2485, %v2486
      %v2488 = vrot.slane %v2487, 2
      %v2489 = vadd.f32 %v2487, %v2488
      %v2490 = vrot.slane %v2489, 1
      %v2491 = vadd.f32 %v2489, %v2490
      %v2492 = vmul.f32 %v2484, %v2467
      %v2493 = vmul.f32 %v2491, %v2467
      %v2494 = vadd.f32 %v2492, 1e-05
      %v2495 = vadd.f32 %v2493, 1e-05
      %v2496 = vrsqrt.pop %v2494
      %v2497 = vrsqrt.pop %v2495
      %v2498 = vmul.f32 %v2470, %v2496
      %v2499 = vmul.f32 %v2471, %v2497
      %v2500 = vmul.f32 %v2472, %v2496
      %v2501 = vmul.f32 %v2473, %v2497
      %v2502 = vld [vmem:[%s212] sm:$0xf]
      %v2504 = vlaneseq
      %v2505 = vshrl.u32 %v2504, 7
      %v2506 = vsub.s32 0, %v2505
      %v2507 = vrot.slane %v2502, %v2506
      %v2508 = vlaneseq
      %v2509 = vshrl.u32 %v2508, 7
      %v2510 = vsub.s32 2, %v2509
      %v2511 = vrot.slane %v2502, %v2510
      %v2514 = vlaneseq
      %v2515 = vshrl.u32 %v2514, 7
      %v2516 = vsub.s32 0, %v2515
      %v2517 = vrot.slane %v2507, %v2516
      %v2518 = vlaneseq
      %v2519 = vshrl.u32 %v2518, 7
      %v2520 = vsub.s32 0, %v2519
      %v2521 = vrot.slane %v2511, %v2520
      %v2522 = vmul.f32 %v2517, %v2498
      %v2523 = vmul.f32 %v2521, %v2499
      %v2524 = vmul.f32 %v2517, %v2500
      %v2525 = vmul.f32 %v2521, %v2501
      %v2526 = vlaneseq
      %v2527 = vshrl.u32 %v2526, 7
      %v2528 = vsub.s32 1, %v2527
      %v2529 = vrot.slane %v2502, %v2528
      %v2530 = vlaneseq
      %v2531 = vshrl.u32 %v2530, 7
      %v2532 = vsub.s32 3, %v2531
      %v2533 = vrot.slane %v2502, %v2532
      %v2536 = vlaneseq
      %v2537 = vshrl.u32 %v2536, 7
      %v2538 = vsub.s32 1, %v2537
      %v2539 = vrot.slane %v2529, %v2538
      %v2540 = vlaneseq
      %v2541 = vshrl.u32 %v2540, 7
      %v2542 = vsub.s32 1, %v2541
      %v2543 = vrot.slane %v2533, %v2542
      %v2544 = vadd.f32 %v2522, %v2539
      %v2545 = vadd.f32 %v2523, %v2543
      %v2546 = vadd.f32 %v2524, %v2539
      %v2547 = vadd.f32 %v2525, %v2543
      %v2548 = vmax.f32 %v2544, 0.0
      %v2549 = vmax.f32 %v2545, 0.0
      %v2550 = vmax.f32 %v2546, 0.0
      %v2551 = vmax.f32 %v2547, 0.0
      %2552 = vst [vmem:[%s217] sm:$0xff] %v2548
      %2553 = vst [vmem:[%s217 + $0x8] sm:$0xff] %v2549
      %2554 = vst [vmem:[%s217 + $0x10] sm:$0xff] %v2550
      %2555 = vst [vmem:[%s217 + $0x18] sm:$0xff] %v2551
      %p2556 = scmp.lt.s32.totalorder %s15, 1
      %s2557 = scalar_select %p2556, %s15, 1
      %s2558 = smul.addr %s2557, 4
      %s2559 = smul.addr %s2558, 8
      %s2560 = scalar_lea.vmem %s4, %s2559
      // Predicated region
      $region37: #{vgg_decoder_forward.8} parent=35 // pred_check
        %p2561 = pneg %p127
      $region38: #{vgg_decoder_forward.8} parent=35 // pred_check_branch
        %2563 = sbr.rel (%p2561) target = $region40
      $region39: #{vgg_decoder_forward.8} parent=35 // pred_region
        _
      $region40: #{vgg_decoder_forward.8} parent=35 // pred_fallthru
        _
    $region36: #{vgg_decoder_forward.8} parent=5 // pred_fallthru
      _
    %p2564 = scmp.le.s32.totalorder 2, %s10
    // Predicated region
    $region41: #{vgg_decoder_forward.8} parent=5 // pred_check
      %p2565 = pneg %p2564
    $region42: #{vgg_decoder_forward.8} parent=5 // pred_check_branch
      %2567 = sbr.rel (%p2565) target = $region44
    $region43: #{vgg_decoder_forward.8} parent=5 // pred_region
      %s2568 = ssub.s32 %s10, 2
      // Predicated region
      $region45: #{vgg_decoder_forward.8} parent=43 // pred_check
        %p2569 = pneg %p133
      $region46: #{vgg_decoder_forward.8} parent=43 // pred_check_branch
        %2571 = sbr.rel (%p2569) target = $region48
      $region47: #{vgg_decoder_forward.8} parent=43 // pred_region
        %p2572 = scmp.lt.s32.totalorder %s16, 1
        %s2573 = scalar_select %p2572, %s16, 1
        %s2574 = smul.addr %s2573, 4
        %s2575 = smul.addr %s2574, 8
        %s2576 = scalar_lea.vmem %s4, %s2575
      $region48: #{vgg_decoder_forward.8} parent=43 // pred_fallthru
        _
    $region44: #{vgg_decoder_forward.8} parent=5 // pred_fallthru
      _
  $region6: #{vgg_decoder_forward.8} parent=0 // loop_footer
    %s14 = sadd.s32 1, %s10
  $region7: #{vgg_decoder_forward.8} parent=0 // loop_footer_branch
    %9 = sbr.rel target = $region3
  $region8: #{vgg_decoder_forward.8} parent=0 // loop_exit
    _

// kernel: vgg_decoder_forward.11
$region0: #{vgg_decoder_forward.11}
  #allocation0 [shape = 'u32[]', space=smem, size = 0x4, offset = 0x4, fixed_abs, tag = 'smem constant byte address 0x4 - core index']
  #allocation1 [shape = 'u32[144,128]{1,0:T(1,128)}', space=vmem, size = 0x12000, scoped, tag = 'internal scratch']
  %s0 = inlined_call_operand.vmem [shape: bf16[2,16,2304], index: 0, kind: input, shape index: {}]
  %s1 = inlined_call_operand.vmem [shape: bf16[2304,128], index: 1, kind: input, shape index: {}]
  %s2 = inlined_call_operand.vmem [shape: f32[1,128], index: 2, kind: input, shape index: {}]
  %s3 = inlined_call_operand.vmem [shape: f32[2,2,128], index: 3, kind: input, shape index: {}]
  %s4 = inlined_call_operand.vmem [shape: f32[2,16,128], index: 4, kind: output, shape index: {}]
  %s5 = sld [smem:[#allocation0]]
  $region49: #{vgg_decoder_forward.11} parent=0
    _
  %s7 = ssub.s32 1, %s5
  %s8 = scalar_select 0, %s7, %s5
  loop: start=0, step=1, limit=4
  $region2: #{vgg_decoder_forward.11} parent=0 // loop_pre_header
    _
  $region3: #{vgg_decoder_forward.11} parent=0 // loop_header
    %s10 = sphi 0, %s14
    %p11 = scmp.ge.s32.totalorder %s10, 4
    %s20 = sphi 0, %s22
    %s23 = sphi 0, %s20
    %s24 = sphi 0, %s23
    %s40 = sphi 0, %s24
    %s44 = sphi 0, %s44
    %s46 = sphi 0, %s44
    %s47 = sphi 0, %s46
    %s61 = sphi 0, %s47
    %s65 = sphi 0, %s65
    %s67 = sphi 0, %s65
    %s68 = sphi 0, %s67
    %s82 = sphi 0, %s68
    %s88 = sphi 0, %s90
    %s91 = sphi 0, %s88
    %s92 = sphi 0, %s91
    %s108 = sphi 0, %s92
    %s114 = sphi 0, %s116
    %s117 = sphi 0, %s114
    %s118 = sphi 0, %s117
    %s134 = sphi 0, %s118
  $region4: #{vgg_decoder_forward.11} parent=0 // loop_header_branch
    %13 = sbr.rel (%p11) target = $region8
  $region5: #{vgg_decoder_forward.11} parent=0 // loop_body
    %s15 = ssub.s32 %s10, 1
    %s16 = ssub.s32 %s10, 2
    %s17 = sadd.s32 %s10, 1
    %s18 = ssub.s32 %s10, %s17
    %p19 = scmp.eq.s32.totalorder %s18, 0
    %s21 = sadd.s32 %s20, 1
    %s22 = scalar_select %p19, %s20, %s21
    %p25 = pneg %p19
    %p26 = scmp.eq.s32.totalorder %s10, 1
    %p27 = por %p25, %p26
    %p28 = scmp.ne.s32.totalorder %s20, %s23
    %p29 = scmp.eq.s32.totalorder %s10, 0
    %p30 = por %p28, %p29
    %p31 = scmp.ne.s32.totalorder %s20, %s23
    %p32 = scmp.eq.s32.totalorder %s15, 1
    %p33 = por %p31, %p32
    %p34 = scmp.ne.s32.totalorder %s23, %s24
    %p35 = scmp.eq.s32.totalorder %s15, 0
    %p36 = por %p34, %p35
    %p37 = scmp.ne.s32.totalorder %s23, %s24
    %p38 = scmp.eq.s32.totalorder %s16, 1
    %p39 = por %p37, %p38
    %p41 = scmp.ne.s32.totalorder %s24, %s40
    %p42 = scmp.eq.s32.totalorder %s16, 0
    %p43 = por %p41, %p42
    %s45 = sadd.s32 %s44, 1
    %p48 = scmp.eq.s32.totalorder %s10, 1
    %p49 = scmp.ne.s32.totalorder %s44, %s46
    %p50 = scmp.eq.s32.totalorder %s10, 0
    %p51 = por %p49, %p50
    %p52 = scmp.ne.s32.totalorder %s44, %s46
    %p53 = scmp.eq.s32.totalorder %s15, 1
    %p54 = por %p52, %p53
    %p55 = scmp.ne.s32.totalorder %s46, %s47
    %p56 = scmp.eq.s32.totalorder %s15, 0
    %p57 = por %p55, %p56
    %p58 = scmp.ne.s32.totalorder %s46, %s47
    %p59 = scmp.eq.s32.totalorder %s16, 1
    %p60 = por %p58, %p59
    %p62 = scmp.ne.s32.totalorder %s47, %s61
    %p63 = scmp.eq.s32.totalorder %s16, 0
    %p64 = por %p62, %p63
    %s66 = sadd.s32 %s65, 1
    %p69 = scmp.eq.s32.totalorder %s10, 1
    %p70 = scmp.ne.s32.totalorder %s65, %s67
    %p71 = scmp.eq.s32.totalorder %s10, 0
    %p72 = por %p70, %p71
    %p73 = scmp.ne.s32.totalorder %s65, %s67
    %p74 = scmp.eq.s32.totalorder %s15, 1
    %p75 = por %p73, %p74
    %p76 = scmp.ne.s32.totalorder %s67, %s68
    %p77 = scmp.eq.s32.totalorder %s15, 0
    %p78 = por %p76, %p77
    %p79 = scmp.ne.s32.totalorder %s67, %s68
    %p80 = scmp.eq.s32.totalorder %s16, 1
    %p81 = por %p79, %p80
    %p83 = scmp.ne.s32.totalorder %s68, %s82
    %p84 = scmp.eq.s32.totalorder %s16, 0
    %p85 = por %p83, %p84
    %s86 = ssub.s32 %s10, %s17
    %p87 = scmp.eq.s32.totalorder %s86, 0
    %s89 = sadd.s32 %s88, 1
    %s90 = scalar_select %p87, %s88, %s89
    %p93 = pneg %p87
    %p94 = scmp.eq.s32.totalorder %s10, 1
    %p95 = por %p93, %p94
    %p96 = scmp.ne.s32.totalorder %s88, %s91
    %p97 = scmp.eq.s32.totalorder %s10, 0
    %p98 = por %p96, %p97
    %p99 = scmp.ne.s32.totalorder %s88, %s91
    %p100 = scmp.eq.s32.totalorder %s15, 1
    %p101 = por %p99, %p100
    %p102 = scmp.ne.s32.totalorder %s91, %s92
    %p103 = scmp.eq.s32.totalorder %s15, 0
    %p104 = por %p102, %p103
    %p105 = scmp.ne.s32.totalorder %s91, %s92
    %p106 = scmp.eq.s32.totalorder %s16, 1
    %p107 = por %p105, %p106
    %p109 = scmp.ne.s32.totalorder %s92, %s108
    %p110 = scmp.eq.s32.totalorder %s16, 0
    %p111 = por %p109, %p110
    %s112 = ssub.s32 %s10, %s17
    %p113 = scmp.eq.s32.totalorder %s112, 0
    %s115 = sadd.s32 %s114, 1
    %s116 = scalar_select %p113, %s114, %s115
    %p119 = pneg %p113
    %p120 = scmp.eq.s32.totalorder %s10, 1
    %p121 = por %p119, %p120
    %p122 = scmp.ne.s32.totalorder %s114, %s117
    %p123 = scmp.eq.s32.totalorder %s10, 0
    %p124 = por %p122, %p123
    %p125 = scmp.ne.s32.totalorder %s114, %s117
    %p126 = scmp.eq.s32.totalorder %s15, 1
    %p127 = por %p125, %p126
    %p128 = scmp.ne.s32.totalorder %s117, %s118
    %p129 = scmp.eq.s32.totalorder %s15, 0
    %p130 = por %p128, %p129
    %p131 = scmp.ne.s32.totalorder %s117, %s118
    %p132 = scmp.eq.s32.totalorder %s16, 1
    %p133 = por %p131, %p132
    %p135 = scmp.ne.s32.totalorder %s118, %s134
    %p136 = scmp.eq.s32.totalorder %s16, 0
    %p137 = por %p135, %p136
    %p138 = scmp.le.s32.totalorder 1, %s10
    %p139 = scmp.lt.s32.totalorder %s10, 3
    %p140 = pnand %p138, %p139
    %p141 = pneg %p140
    // Predicated region
    $region9: #{vgg_decoder_forward.11} parent=5 // pred_check
      _
    $region10: #{vgg_decoder_forward.11} parent=5 // pred_check_branch
      %143 = sbr.rel (%p140) target = $region12
    $region11: #{vgg_decoder_forward.11} parent=5 // pred_region
      %s144 = ssub.s32 %s10, 1
      // Predicated region
      $region13: #{vgg_decoder_forward.11} parent=11 // pred_check
        %p145 = pneg %p57
      $region14: #{vgg_decoder_forward.11} parent=11 // pred_check_branch
        %147 = sbr.rel (%p145) target = $region16
      $region15: #{vgg_decoder_forward.11} parent=11 // pred_region
        _
      $region16: #{vgg_decoder_forward.11} parent=11 // pred_fallthru
        _
      // Predicated region
      $region17: #{vgg_decoder_forward.11} parent=11 // pred_check
        %p148 = pneg %p78
      $region18: #{vgg_decoder_forward.11} parent=11 // pred_check_branch
        %150 = sbr.rel (%p148) target = $region20
      $region19: #{vgg_decoder_forward.11} parent=11 // pred_region
        _
      $region20: #{vgg_decoder_forward.11} parent=11 // pred_fallthru
        _
    $region12: #{vgg_decoder_forward.11} parent=5 // pred_fallthru
      _
    %p151 = scmp.lt.s32.totalorder %s10, 2
    // Predicated region
    $region21: #{vgg_decoder_forward.11} parent=5 // pred_check
      %p152 = pneg %p151
    $region22: #{vgg_decoder_forward.11} parent=5 // pred_check_branch
      %154 = sbr.rel (%p152) target = $region24
    $region23: #{vgg_decoder_forward.11} parent=5 // pred_region
      // Predicated region
      $region25: #{vgg_decoder_forward.11} parent=23 // pred_check
        %p155 = pneg %p30
      $region26: #{vgg_decoder_forward.11} parent=23 // pred_check_branch
        %157 = sbr.rel (%p155) target = $region28
      $region27: #{vgg_decoder_forward.11} parent=23 // pred_region
        %p158 = scmp.lt.s32.totalorder %s10, 1
        %s159 = scalar_select %p158, %s10, 1
        %s160 = smul.addr %s159, 36
        %s161 = smul.addr %s160, 4
        %s162 = scalar_lea.vmem %s0, %s161
      $region28: #{vgg_decoder_forward.11} parent=23 // pred_fallthru
        _
      // Predicated region
      $region29: #{vgg_decoder_forward.11} parent=23 // pred_check
        %p163 = pneg %p98
      $region30: #{vgg_decoder_forward.11} parent=23 // pred_check_branch
        %165 = sbr.rel (%p163) target = $region32
      $region31: #{vgg_decoder_forward.11} parent=23 // pred_region
        %p166 = scmp.lt.s32.totalorder %s10, 1
        %s167 = scalar_select %p166, %s10, 1
        %s168 = smul.addr %s167, 2
        %s169 = scalar_lea.vmem %s3, %s168
      $region32: #{vgg_decoder_forward.11} parent=23 // pred_fallthru
        _
    $region24: #{vgg_decoder_forward.11} parent=5 // pred_fallthru
      _
    %p170 = scmp.le.s32.totalorder 1, %s10
    %p171 = scmp.lt.s32.totalorder %s10, 3
    %p172 = pnand %p170, %p171
    %p173 = pneg %p172
    // Predicated region
    $region33: #{vgg_decoder_forward.11} parent=5 // pred_check
      _
    $region34: #{vgg_decoder_forward.11} parent=5 // pred_check_branch
      %175 = sbr.rel (%p172) target = $region36
    $region35: #{vgg_decoder_forward.11} parent=5 // pred_region
      %s176 = ssub.s32 %s10, 1
      %p177 = scmp.lt.s32.totalorder %s15, 1
      %s178 = scalar_select %p177, %s15, 1
      %s179 = smul.addr %s178, 36
      %s180 = smul.addr %s179, 4
      %s181 = scalar_lea.vmem %s0, %s180
      %p182 = pneg %p36
      %p183 = pneg %p33
      %p184 = pneg %p57
      %p185 = pneg %p54
      %p186 = pneg %p78
      %p187 = pneg %p75
      %p188 = scmp.lt.s32.totalorder %s15, 1
      %s189 = scalar_select %p188, %s15, 1
      %s190 = smul.addr %s189, 2
      %s191 = scalar_lea.vmem %s3, %s190
      %p192 = pneg %p104
      %p193 = pneg %p101
      %p194 = pneg %p130
      %p195 = pneg %p127
      %p196 = scmp.lt.s32.totalorder %s15, 1
      %s197 = scalar_select %p196, %s15, 1
      %s198 = smul.addr %s197, 2
      %s199 = smul.addr %s198, 8
      %s200 = scalar_lea.vmem %s4, %s199
      %p201 = scmp.lt.s32.totalorder %s15, 1
      %s202 = scalar_select %p201, %s15, 1
      %s203 = smul.addr %s202, 36
      %s204 = smul.addr %s203, 4
      %s205 = scalar_lea.vmem %s0, %s204
      %p206 = scmp.lt.s32.totalorder %s15, 1
      %s207 = scalar_select %p206, %s15, 1
      %s208 = smul.addr %s207, 2
      %s209 = scalar_lea.vmem %s3, %s208
      %p210 = scmp.lt.s32.totalorder %s15, 1
      %s211 = scalar_select %p210, %s15, 1
      %s212 = smul.addr %s211, 2
      %s213 = smul.addr %s212, 8
      %s214 = scalar_lea.vmem %s4, %s213
      %v216 = vld [vmem:[%s205] sm:$0xff]
      %v217 = vld [vmem:[%s205 + $0x8] sm:$0xff]
      %v218 = vld [vmem:[%s205 + $0x10] sm:$0xff]
      %v219 = vld [vmem:[%s205 + $0x18] sm:$0xff]
      %v220 = vld [vmem:[%s205 + $0x20] sm:$0xff]
      %v221 = vld [vmem:[%s205 + $0x28] sm:$0xff]
      %v222 = vld [vmem:[%s205 + $0x30] sm:$0xff]
      %v223 = vld [vmem:[%s205 + $0x38] sm:$0xff]
      %v224 = vld [vmem:[%s205 + $0x40] sm:$0xff]
      %v225 = vld [vmem:[%s205 + $0x48] sm:$0xff]
      %v226 = vld [vmem:[%s205 + $0x50] sm:$0xff]
      %v227 = vld [vmem:[%s205 + $0x58] sm:$0xff]
      %v228 = vld [vmem:[%s205 + $0x60] sm:$0xff]
      %v229 = vld [vmem:[%s205 + $0x68] sm:$0xff]
      %v230 = vld [vmem:[%s205 + $0x70] sm:$0xff]
      %v231 = vld [vmem:[%s205 + $0x78] sm:$0xff]
      %v232 = vld [vmem:[%s205 + $0x80] sm:$0xff]
      %v233 = vld [vmem:[%s205 + $0x88] sm:$0xff]
      %v234 = vld [vmem:[%s1] sm:$0xf]
      %v235 = vld [vmem:[%s1 + $0x4] sm:$0xf]
      %v236 = vld [vmem:[%s1 + $0x8] sm:$0xf]
      %v237 = vld [vmem:[%s1 + $0xc] sm:$0xf]
      %v238 = vld [vmem:[%s1 + $0x10] sm:$0xf]
      %v239 = vld [vmem:[%s1 + $0x14] sm:$0xf]
      %v240 = vld [vmem:[%s1 + $0x18] sm:$0xf]
      %v241 = vld [vmem:[%s1 + $0x1c] sm:$0xf]
      %v242 = vld [vmem:[%s1 + $0x20] sm:$0xf]
      %v243 = vld [vmem:[%s1 + $0x24] sm:$0xf]
      %v244 = vld [vmem:[%s1 + $0x28] sm:$0xf]
      %v245 = vld [vmem:[%s1 + $0x2c] sm:$0xf]
      %v246 = vld [vmem:[%s1 + $0x30] sm:$0xf]
      %v247 = vld [vmem:[%s1 + $0x34] sm:$0xf]
      %v248 = vld [vmem:[%s1 + $0x38] sm:$0xf]
      %v249 = vld [vmem:[%s1 + $0x3c] sm:$0xf]
      %v250 = vld [vmem:[%s1 + $0x40] sm:$0xf]
      %v251 = vld [vmem:[%s1 + $0x44] sm:$0xf]
      %v252 = vld [vmem:[%s1 + $0x48] sm:$0xf]
      %v253 = vld [vmem:[%s1 + $0x4c] sm:$0xf]
      %v254 = vld [vmem:[%s1 + $0x50] sm:$0xf]
      %v255 = vld [vmem:[%s1 + $0x54] sm:$0xf]
      %v256 = vld [vmem:[%s1 + $0x58] sm:$0xf]
      %v257 = vld [vmem:[%s1 + $0x5c] sm:$0xf]
      %v258 = vld [vmem:[%s1 + $0x60] sm:$0xf]
      %v259 = vld [vmem:[%s1 + $0x64] sm:$0xf]
      %v260 = vld [vmem:[%s1 + $0x68] sm:$0xf]
      %v261 = vld [vmem:[%s1 + $0x6c] sm:$0xf]
      %v262 = vld [vmem:[%s1 + $0x70] sm:$0xf]
      %v263 = vld [vmem:[%s1 + $0x74] sm:$0xf]
      %v264 = vld [vmem:[%s1 + $0x78] sm:$0xf]
      %v265 = vld [vmem:[%s1 + $0x7c] sm:$0xf]
      %v266 = vld [vmem:[%s1 + $0x80] sm:$0xf]
      %v267 = vld [vmem:[%s1 + $0x84] sm:$0xf]
      %v268 = vld [vmem:[%s1 + $0x88] sm:$0xf]
      %v269 = vld [vmem:[%s1 + $0x8c] sm:$0xf]
      %v270 = vld [vmem:[%s1 + $0x90] sm:$0xf]
      %v271 = vld [vmem:[%s1 + $0x94] sm:$0xf]
      %v272 = vld [vmem:[%s1 + $0x98] sm:$0xf]
      %v273 = vld [vmem:[%s1 + $0x9c] sm:$0xf]
      %v274 = vld [vmem:[%s1 + $0xa0] sm:$0xf]
      %v275 = vld [vmem:[%s1 + $0xa4] sm:$0xf]
      %v276 = vld [vmem:[%s1 + $0xa8] sm:$0xf]
      %v277 = vld [vmem:[%s1 + $0xac] sm:$0xf]
      %v278 = vld [vmem:[%s1 + $0xb0] sm:$0xf]
      %v279 = vld [vmem:[%s1 + $0xb4] sm:$0xf]
      %v280 = vld [vmem:[%s1 + $0xb8] sm:$0xf]
      %v281 = vld [vmem:[%s1 + $0xbc] sm:$0xf]
      %v282 = vld [vmem:[%s1 + $0xc0] sm:$0xf]
      %v283 = vld [vmem:[%s1 + $0xc4] sm:$0xf]
      %v284 = vld [vmem:[%s1 + $0xc8] sm:$0xf]
      %v285 = vld [vmem:[%s1 + $0xcc] sm:$0xf]
      %v286 = vld [vmem:[%s1 + $0xd0] sm:$0xf]
      %v287 = vld [vmem:[%s1 + $0xd4] sm:$0xf]
      %v288 = vld [vmem:[%s1 + $0xd8] sm:$0xf]
      %v289 = vld [vmem:[%s1 + $0xdc] sm:$0xf]
      %v290 = vld [vmem:[%s1 + $0xe0] sm:$0xf]
      %v291 = vld [vmem:[%s1 + $0xe4] sm:$0xf]
      %v292 = vld [vmem:[%s1 + $0xe8] sm:$0xf]
      %v293 = vld [vmem:[%s1 + $0xec] sm:$0xf]
      %v294 = vld [vmem:[%s1 + $0xf0] sm:$0xf]
      %v295 = vld [vmem:[%s1 + $0xf4] sm:$0xf]
      %v296 = vld [vmem:[%s1 + $0xf8] sm:$0xf]
      %v297 = vld [vmem:[%s1 + $0xfc] sm:$0xf]
      %v298 = vld [vmem:[%s1 + $0x100] sm:$0xf]
      %v299 = vld [vmem:[%s1 + $0x104] sm:$0xf]
      %v300 = vld [vmem:[%s1 + $0x108] sm:$0xf]
      %v301 = vld [vmem:[%s1 + $0x10c] sm:$0xf]
      %v302 = vld [vmem:[%s1 + $0x110] sm:$0xf]
      %v303 = vld [vmem:[%s1 + $0x114] sm:$0xf]
      %v304 = vld [vmem:[%s1 + $0x118] sm:$0xf]
      %v305 = vld [vmem:[%s1 + $0x11c] sm:$0xf]
      %v306 = vld [vmem:[%s1 + $0x120] sm:$0xf]
      %v307 = vld [vmem:[%s1 + $0x124] sm:$0xf]
      %v308 = vld [vmem:[%s1 + $0x128] sm:$0xf]
      %v309 = vld [vmem:[%s1 + $0x12c] sm:$0xf]
      %v310 = vld [vmem:[%s1 + $0x130] sm:$0xf]
      %v311 = vld [vmem:[%s1 + $0x134] sm:$0xf]
      %v312 = vld [vmem:[%s1 + $0x138] sm:$0xf]
      %v313 = vld [vmem:[%s1 + $0x13c] sm:$0xf]
      %v314 = vld [vmem:[%s1 + $0x140] sm:$0xf]
      %v315 = vld [vmem:[%s1 + $0x144] sm:$0xf]
      %v316 = vld [vmem:[%s1 + $0x148] sm:$0xf]
      %v317 = vld [vmem:[%s1 + $0x14c] sm:$0xf]
      %v318 = vld [vmem:[%s1 + $0x150] sm:$0xf]
      %v319 = vld [vmem:[%s1 + $0x154] sm:$0xf]
      %v320 = vld [vmem:[%s1 + $0x158] sm:$0xf]
      %v321 = vld [vmem:[%s1 + $0x15c] sm:$0xf]
      %v322 = vld [vmem:[%s1 + $0x160] sm:$0xf]
      %v323 = vld [vmem:[%s1 + $0x164] sm:$0xf]
      %v324 = vld [vmem:[%s1 + $0x168] sm:$0xf]
      %v325 = vld [vmem:[%s1 + $0x16c] sm:$0xf]
      %v326 = vld [vmem:[%s1 + $0x170] sm:$0xf]
      %v327 = vld [vmem:[%s1 + $0x174] sm:$0xf]
      %v328 = vld [vmem:[%s1 + $0x178] sm:$0xf]
      %v329 = vld [vmem:[%s1 + $0x17c] sm:$0xf]
      %v330 = vld [vmem:[%s1 + $0x180] sm:$0xf]
      %v331 = vld [vmem:[%s1 + $0x184] sm:$0xf]
      %v332 = vld [vmem:[%s1 + $0x188] sm:$0xf]
      %v333 = vld [vmem:[%s1 + $0x18c] sm:$0xf]
      %v334 = vld [vmem:[%s1 + $0x190] sm:$0xf]
      %v335 = vld [vmem:[%s1 + $0x194] sm:$0xf]
      %v336 = vld [vmem:[%s1 + $0x198] sm:$0xf]
      %v337 = vld [vmem:[%s1 + $0x19c] sm:$0xf]
      %v338 = vld [vmem:[%s1 + $0x1a0] sm:$0xf]
      %v339 = vld [vmem:[%s1 + $0x1a4] sm:$0xf]
      %v340 = vld [vmem:[%s1 + $0x1a8] sm:$0xf]
      %v341 = vld [vmem:[%s1 + $0x1ac] sm:$0xf]
      %v342 = vld [vmem:[%s1 + $0x1b0] sm:$0xf]
      %v343 = vld [vmem:[%s1 + $0x1b4] sm:$0xf]
      %v344 = vld [vmem:[%s1 + $0x1b8] sm:$0xf]
      %v345 = vld [vmem:[%s1 + $0x1bc] sm:$0xf]
      %v346 = vld [vmem:[%s1 + $0x1c0] sm:$0xf]
      %v347 = vld [vmem:[%s1 + $0x1c4] sm:$0xf]
      %v348 = vld [vmem:[%s1 + $0x1c8] sm:$0xf]
      %v349 = vld [vmem:[%s1 + $0x1cc] sm:$0xf]
      %v350 = vld [vmem:[%s1 + $0x1d0] sm:$0xf]
      %v351 = vld [vmem:[%s1 + $0x1d4] sm:$0xf]
      %v352 = vld [vmem:[%s1 + $0x1d8] sm:$0xf]
      %v353 = vld [vmem:[%s1 + $0x1dc] sm:$0xf]
      %v354 = vld [vmem:[%s1 + $0x1e0] sm:$0xf]
      %v355 = vld [vmem:[%s1 + $0x1e4] sm:$0xf]
      %v356 = vld [vmem:[%s1 + $0x1e8] sm:$0xf]
      %v357 = vld [vmem:[%s1 + $0x1ec] sm:$0xf]
      %v358 = vld [vmem:[%s1 + $0x1f0] sm:$0xf]
      %v359 = vld [vmem:[%s1 + $0x1f4] sm:$0xf]
      %v360 = vld [vmem:[%s1 + $0x1f8] sm:$0xf]
      %v361 = vld [vmem:[%s1 + $0x1fc] sm:$0xf]
      %v362 = vld [vmem:[%s1 + $0x200] sm:$0xf]
      %v363 = vld [vmem:[%s1 + $0x204] sm:$0xf]
      %v364 = vld [vmem:[%s1 + $0x208] sm:$0xf]
      %v365 = vld [vmem:[%s1 + $0x20c] sm:$0xf]
      %v366 = vld [vmem:[%s1 + $0x210] sm:$0xf]
      %v367 = vld [vmem:[%s1 + $0x214] sm:$0xf]
      %v368 = vld [vmem:[%s1 + $0x218] sm:$0xf]
      %v369 = vld [vmem:[%s1 + $0x21c] sm:$0xf]
      %v370 = vld [vmem:[%s1 + $0x220] sm:$0xf]
      %v371 = vld [vmem:[%s1 + $0x224] sm:$0xf]
      %v372 = vld [vmem:[%s1 + $0x228] sm:$0xf]
      %v373 = vld [vmem:[%s1 + $0x22c] sm:$0xf]
      %v374 = vld [vmem:[%s1 + $0x230] sm:$0xf]
      %v375 = vld [vmem:[%s1 + $0x234] sm:$0xf]
      %v376 = vld [vmem:[%s1 + $0x238] sm:$0xf]
      %v377 = vld [vmem:[%s1 + $0x23c] sm:$0xf]
      %v378 = vld [vmem:[%s1 + $0x240] sm:$0xf]
      %v379 = vld [vmem:[%s1 + $0x244] sm:$0xf]
      %v380 = vld [vmem:[%s1 + $0x248] sm:$0xf]
      %v381 = vld [vmem:[%s1 + $0x24c] sm:$0xf]
      %v382 = vld [vmem:[%s1 + $0x250] sm:$0xf]
      %v383 = vld [vmem:[%s1 + $0x254] sm:$0xf]
      %v384 = vld [vmem:[%s1 + $0x258] sm:$0xf]
      %v385 = vld [vmem:[%s1 + $0x25c] sm:$0xf]
      %v386 = vld [vmem:[%s1 + $0x260] sm:$0xf]
      %v387 = vld [vmem:[%s1 + $0x264] sm:$0xf]
      %v388 = vld [vmem:[%s1 + $0x268] sm:$0xf]
      %v389 = vld [vmem:[%s1 + $0x26c] sm:$0xf]
      %v390 = vld [vmem:[%s1 + $0x270] sm:$0xf]
      %v391 = vld [vmem:[%s1 + $0x274] sm:$0xf]
      %v392 = vld [vmem:[%s1 + $0x278] sm:$0xf]
      %v393 = vld [vmem:[%s1 + $0x27c] sm:$0xf]
      %v394 = vld [vmem:[%s1 + $0x280] sm:$0xf]
      %v395 = vld [vmem:[%s1 + $0x284] sm:$0xf]
      %v396 = vld [vmem:[%s1 + $0x288] sm:$0xf]
      %v397 = vld [vmem:[%s1 + $0x28c] sm:$0xf]
      %v398 = vld [vmem:[%s1 + $0x290] sm:$0xf]
      %v399 = vld [vmem:[%s1 + $0x294] sm:$0xf]
      %v400 = vld [vmem:[%s1 + $0x298] sm:$0xf]
      %v401 = vld [vmem:[%s1 + $0x29c] sm:$0xf]
      %v402 = vld [vmem:[%s1 + $0x2a0] sm:$0xf]
      %v403 = vld [vmem:[%s1 + $0x2a4] sm:$0xf]
      %v404 = vld [vmem:[%s1 + $0x2a8] sm:$0xf]
      %v405 = vld [vmem:[%s1 + $0x2ac] sm:$0xf]
      %v406 = vld [vmem:[%s1 + $0x2b0] sm:$0xf]
      %v407 = vld [vmem:[%s1 + $0x2b4] sm:$0xf]
      %v408 = vld [vmem:[%s1 + $0x2b8] sm:$0xf]
      %v409 = vld [vmem:[%s1 + $0x2bc] sm:$0xf]
      %v410 = vld [vmem:[%s1 + $0x2c0] sm:$0xf]
      %v411 = vld [vmem:[%s1 + $0x2c4] sm:$0xf]
      %v412 = vld [vmem:[%s1 + $0x2c8] sm:$0xf]
      %v413 = vld [vmem:[%s1 + $0x2cc] sm:$0xf]
      %v414 = vld [vmem:[%s1 + $0x2d0] sm:$0xf]
      %v415 = vld [vmem:[%s1 + $0x2d4] sm:$0xf]
      %v416 = vld [vmem:[%s1 + $0x2d8] sm:$0xf]
      %v417 = vld [vmem:[%s1 + $0x2dc] sm:$0xf]
      %v418 = vld [vmem:[%s1 + $0x2e0] sm:$0xf]
      %v419 = vld [vmem:[%s1 + $0x2e4] sm:$0xf]
      %v420 = vld [vmem:[%s1 + $0x2e8] sm:$0xf]
      %v421 = vld [vmem:[%s1 + $0x2ec] sm:$0xf]
      %v422 = vld [vmem:[%s1 + $0x2f0] sm:$0xf]
      %v423 = vld [vmem:[%s1 + $0x2f4] sm:$0xf]
      %v424 = vld [vmem:[%s1 + $0x2f8] sm:$0xf]
      %v425 = vld [vmem:[%s1 + $0x2fc] sm:$0xf]
      %v426 = vld [vmem:[%s1 + $0x300] sm:$0xf]
      %v427 = vld [vmem:[%s1 + $0x304] sm:$0xf]
      %v428 = vld [vmem:[%s1 + $0x308] sm:$0xf]
      %v429 = vld [vmem:[%s1 + $0x30c] sm:$0xf]
      %v430 = vld [vmem:[%s1 + $0x310] sm:$0xf]
      %v431 = vld [vmem:[%s1 + $0x314] sm:$0xf]
      %v432 = vld [vmem:[%s1 + $0x318] sm:$0xf]
      %v433 = vld [vmem:[%s1 + $0x31c] sm:$0xf]
      %v434 = vld [vmem:[%s1 + $0x320] sm:$0xf]
      %v435 = vld [vmem:[%s1 + $0x324] sm:$0xf]
      %v436 = vld [vmem:[%s1 + $0x328] sm:$0xf]
      %v437 = vld [vmem:[%s1 + $0x32c] sm:$0xf]
      %v438 = vld [vmem:[%s1 + $0x330] sm:$0xf]
      %v439 = vld [vmem:[%s1 + $0x334] sm:$0xf]
      %v440 = vld [vmem:[%s1 + $0x338] sm:$0xf]
      %v441 = vld [vmem:[%s1 + $0x33c] sm:$0xf]
      %v442 = vld [vmem:[%s1 + $0x340] sm:$0xf]
      %v443 = vld [vmem:[%s1 + $0x344] sm:$0xf]
      %v444 = vld [vmem:[%s1 + $0x348] sm:$0xf]
      %v445 = vld [vmem:[%s1 + $0x34c] sm:$0xf]
      %v446 = vld [vmem:[%s1 + $0x350] sm:$0xf]
      %v447 = vld [vmem:[%s1 + $0x354] sm:$0xf]
      %v448 = vld [vmem:[%s1 + $0x358] sm:$0xf]
      %v449 = vld [vmem:[%s1 + $0x35c] sm:$0xf]
      %v450 = vld [vmem:[%s1 + $0x360] sm:$0xf]
      %v451 = vld [vmem:[%s1 + $0x364] sm:$0xf]
      %v452 = vld [vmem:[%s1 + $0x368] sm:$0xf]
      %v453 = vld [vmem:[%s1 + $0x36c] sm:$0xf]
      %v454 = vld [vmem:[%s1 + $0x370] sm:$0xf]
      %v455 = vld [vmem:[%s1 + $0x374] sm:$0xf]
      %v456 = vld [vmem:[%s1 + $0x378] sm:$0xf]
      %v457 = vld [vmem:[%s1 + $0x37c] sm:$0xf]
      %v458 = vld [vmem:[%s1 + $0x380] sm:$0xf]
      %v459 = vld [vmem:[%s1 + $0x384] sm:$0xf]
      %v460 = vld [vmem:[%s1 + $0x388] sm:$0xf]
      %v461 = vld [vmem:[%s1 + $0x38c] sm:$0xf]
      %v462 = vld [vmem:[%s1 + $0x390] sm:$0xf]
      %v463 = vld [vmem:[%s1 + $0x394] sm:$0xf]
      %v464 = vld [vmem:[%s1 + $0x398] sm:$0xf]
      %v465 = vld [vmem:[%s1 + $0x39c] sm:$0xf]
      %v466 = vld [vmem:[%s1 + $0x3a0] sm:$0xf]
      %v467 = vld [vmem:[%s1 + $0x3a4] sm:$0xf]
      %v468 = vld [vmem:[%s1 + $0x3a8] sm:$0xf]
      %v469 = vld [vmem:[%s1 + $0x3ac] sm:$0xf]
      %v470 = vld [vmem:[%s1 + $0x3b0] sm:$0xf]
      %v471 = vld [vmem:[%s1 + $0x3b4] sm:$0xf]
      %v472 = vld [vmem:[%s1 + $0x3b8] sm:$0xf]
      %v473 = vld [vmem:[%s1 + $0x3bc] sm:$0xf]
      %v474 = vld [vmem:[%s1 + $0x3c0] sm:$0xf]
      %v475 = vld [vmem:[%s1 + $0x3c4] sm:$0xf]
      %v476 = vld [vmem:[%s1 + $0x3c8] sm:$0xf]
      %v477 = vld [vmem:[%s1 + $0x3cc] sm:$0xf]
      %v478 = vld [vmem:[%s1 + $0x3d0] sm:$0xf]
      %v479 = vld [vmem:[%s1 + $0x3d4] sm:$0xf]
      %v480 = vld [vmem:[%s1 + $0x3d8] sm:$0xf]
      %v481 = vld [vmem:[%s1 + $0x3dc] sm:$0xf]
      %v482 = vld [vmem:[%s1 + $0x3e0] sm:$0xf]
      %v483 = vld [vmem:[%s1 + $0x3e4] sm:$0xf]
      %v484 = vld [vmem:[%s1 + $0x3e8] sm:$0xf]
      %v485 = vld [vmem:[%s1 + $0x3ec] sm:$0xf]
      %v486 = vld [vmem:[%s1 + $0x3f0] sm:$0xf]
      %v487 = vld [vmem:[%s1 + $0x3f4] sm:$0xf]
      %v488 = vld [vmem:[%s1 + $0x3f8] sm:$0xf]
      %v489 = vld [vmem:[%s1 + $0x3fc] sm:$0xf]
      %v490 = vld [vmem:[%s1 + $0x400] sm:$0xf]
      %v491 = vld [vmem:[%s1 + $0x404] sm:$0xf]
      %v492 = vld [vmem:[%s1 + $0x408] sm:$0xf]
      %v493 = vld [vmem:[%s1 + $0x40c] sm:$0xf]
      %v494 = vld [vmem:[%s1 + $0x410] sm:$0xf]
      %v495 = vld [vmem:[%s1 + $0x414] sm:$0xf]
      %v496 = vld [vmem:[%s1 + $0x418] sm:$0xf]
      %v497 = vld [vmem:[%s1 + $0x41c] sm:$0xf]
      %v498 = vld [vmem:[%s1 + $0x420] sm:$0xf]
      %v499 = vld [vmem:[%s1 + $0x424] sm:$0xf]
      %v500 = vld [vmem:[%s1 + $0x428] sm:$0xf]
      %v501 = vld [vmem:[%s1 + $0x42c] sm:$0xf]
      %v502 = vld [vmem:[%s1 + $0x430] sm:$0xf]
      %v503 = vld [vmem:[%s1 + $0x434] sm:$0xf]
      %v504 = vld [vmem:[%s1 + $0x438] sm:$0xf]
      %v505 = vld [vmem:[%s1 + $0x43c] sm:$0xf]
      %v506 = vld [vmem:[%s1 + $0x440] sm:$0xf]
      %v507 = vld [vmem:[%s1 + $0x444] sm:$0xf]
      %v508 = vld [vmem:[%s1 + $0x448] sm:$0xf]
      %v509 = vld [vmem:[%s1 + $0x44c] sm:$0xf]
      %v510 = vld [vmem:[%s1 + $0x450] sm:$0xf]
      %v511 = vld [vmem:[%s1 + $0x454] sm:$0xf]
      %v512 = vld [vmem:[%s1 + $0x458] sm:$0xf]
      %v513 = vld [vmem:[%s1 + $0x45c] sm:$0xf]
      %v514 = vld [vmem:[%s1 + $0x460] sm:$0xf]
      %v515 = vld [vmem:[%s1 + $0x464] sm:$0xf]
      %v516 = vld [vmem:[%s1 + $0x468] sm:$0xf]
      %v517 = vld [vmem:[%s1 + $0x46c] sm:$0xf]
      %v518 = vld [vmem:[%s1 + $0x470] sm:$0xf]
      %v519 = vld [vmem:[%s1 + $0x474] sm:$0xf]
      %v520 = vld [vmem:[%s1 + $0x478] sm:$0xf]
      %v521 = vld [vmem:[%s1 + $0x47c] sm:$0xf]
      %v522 = vld [vmem:[%s2] sm:$0x1]
      %v524 = vlaneseq
      %v525 = vshrl.u32 %v524, 7
      %v526 = vsub.s32 0, %v525
      %v527 = vrot.slane %v522, %v526
      %v547 = vunpack.c.l.b16 %v216
      %v548 = vunpack.c.h.b16 %v216
      %v549 = vunpack.c.l.b16 %v217
      %v550 = vunpack.c.h.b16 %v217
      %v551 = vunpack.c.l.b16 %v218
      %v552 = vunpack.c.h.b16 %v218
      %v553 = vunpack.c.l.b16 %v219
      %v554 = vunpack.c.h.b16 %v219
      %v555 = vunpack.c.l.b16 %v220
      %v556 = vunpack.c.h.b16 %v220
      %v557 = vunpack.c.l.b16 %v221
      %v558 = vunpack.c.h.b16 %v221
      %v559 = vunpack.c.l.b16 %v222
      %v560 = vunpack.c.h.b16 %v222
      %v561 = vunpack.c.l.b16 %v223
      %v562 = vunpack.c.h.b16 %v223
      %v563 = vunpack.c.l.b16 %v224
      %v564 = vunpack.c.h.b16 %v224
      %v565 = vunpack.c.l.b16 %v225
      %v566 = vunpack.c.h.b16 %v225
      %v567 = vunpack.c.l.b16 %v226
      %v568 = vunpack.c.h.b16 %v226
      %v569 = vunpack.c.l.b16 %v227
      %v570 = vunpack.c.h.b16 %v227
      %v571 = vunpack.c.l.b16 %v228
      %v572 = vunpack.c.h.b16 %v228
      %v573 = vunpack.c.l.b16 %v229
      %v574 = vunpack.c.h.b16 %v229
      %v575 = vunpack.c.l.b16 %v230
      %v576 = vunpack.c.h.b16 %v230
      %v577 = vunpack.c.l.b16 %v231
      %v578 = vunpack.c.h.b16 %v231
      %v579 = vunpack.c.l.b16 %v232
      %v580 = vunpack.c.h.b16 %v232
      %v581 = vunpack.c.l.b16 %v233
      %v582 = vunpack.c.h.b16 %v233
      %v583 = vpack.c.b16 %v565, %v547
      %v584 = vpack.c.b16 %v566, %v548
      %v585 = vpack.c.b16 %v567, %v549
      %v586 = vpack.c.b16 %v568, %v550
      %v587 = vpack.c.b16 %v569, %v551
      %v588 = vpack.c.b16 %v570, %v552
      %v589 = vpack.c.b16 %v571, %v553
      %v590 = vpack.c.b16 %v572, %v554
      %v591 = vpack.c.b16 %v573, %v555
      %v592 = vpack.c.b16 %v574, %v556
      %v593 = vpack.c.b16 %v575, %v557
      %v594 = vpack.c.b16 %v576, %v558
      %v595 = vpack.c.b16 %v577, %v559
      %v596 = vpack.c.b16 %v578, %v560
      %v597 = vpack.c.b16 %v579, %v561
      %v598 = vpack.c.b16 %v580, %v562
      %v599 = vpack.c.b16 %v581, %v563
      %v600 = vpack.c.b16 %v582, %v564
      %v907 = vunpack.c.l.b16 %v234
      %v908 = vunpack.c.l.b16 %v235
      %v909 = vunpack.c.l.b16 %v236
      %v910 = vunpack.c.l.b16 %v237
      %v911 = vunpack.c.l.b16 %v238
      %v912 = vunpack.c.l.b16 %v239
      %v913 = vunpack.c.l.b16 %v240
      %v914 = vunpack.c.l.b16 %v241
      %v915 = vunpack.c.l.b16 %v242
      %v916 = vunpack.c.l.b16 %v243
      %v917 = vunpack.c.l.b16 %v244
      %v918 = vunpack.c.l.b16 %v245
      %v919 = vunpack.c.l.b16 %v246
      %v920 = vunpack.c.l.b16 %v247
      %v921 = vunpack.c.l.b16 %v248
      %v922 = vunpack.c.l.b16 %v249
      %v923 = vunpack.c.l.b16 %v250
      %v924 = vunpack.c.l.b16 %v251
      %v925 = vunpack.c.l.b16 %v252
      %v926 = vunpack.c.l.b16 %v253
      %v927 = vunpack.c.l.b16 %v254
      %v928 = vunpack.c.l.b16 %v255
      %v929 = vunpack.c.l.b16 %v256
      %v930 = vunpack.c.l.b16 %v257
      %v931 = vunpack.c.l.b16 %v258
      %v932 = vunpack.c.l.b16 %v259
      %v933 = vunpack.c.l.b16 %v260
      %v934 = vunpack.c.l.b16 %v261
      %v935 = vunpack.c.l.b16 %v262
      %v936 = vunpack.c.l.b16 %v263
      %v937 = vunpack.c.l.b16 %v264
      %v938 = vunpack.c.l.b16 %v265
      %v939 = vunpack.c.l.b16 %v266
      %v940 = vunpack.c.l.b16 %v267
      %v941 = vunpack.c.l.b16 %v268
      %v942 = vunpack.c.l.b16 %v269
      %v943 = vunpack.c.l.b16 %v270
      %v944 = vunpack.c.l.b16 %v271
      %v945 = vunpack.c.l.b16 %v272
      %v946 = vunpack.c.l.b16 %v273
      %v947 = vunpack.c.l.b16 %v274
      %v948 = vunpack.c.l.b16 %v275
      %v949 = vunpack.c.l.b16 %v276
      %v950 = vunpack.c.l.b16 %v277
      %v951 = vunpack.c.l.b16 %v278
      %v952 = vunpack.c.l.b16 %v279
      %v953 = vunpack.c.l.b16 %v280
      %v954 = vunpack.c.l.b16 %v281
      %v955 = vunpack.c.l.b16 %v282
      %v956 = vunpack.c.l.b16 %v283
      %v957 = vunpack.c.l.b16 %v284
      %v958 = vunpack.c.l.b16 %v285
      %v959 = vunpack.c.l.b16 %v286
      %v960 = vunpack.c.l.b16 %v287
      %v961 = vunpack.c.l.b16 %v288
      %v962 = vunpack.c.l.b16 %v289
      %v963 = vunpack.c.l.b16 %v290
      %v964 = vunpack.c.l.b16 %v291
      %v965 = vunpack.c.l.b16 %v292
      %v966 = vunpack.c.l.b16 %v293
      %v967 = vunpack.c.l.b16 %v294
      %v968 = vunpack.c.l.b16 %v295
      %v969 = vunpack.c.l.b16 %v296
      %v970 = vunpack.c.l.b16 %v297
      %v971 = vunpack.c.l.b16 %v298
      %v972 = vunpack.c.l.b16 %v299
      %v973 = vunpack.c.l.b16 %v300
      %v974 = vunpack.c.l.b16 %v301
      %v975 = vunpack.c.l.b16 %v302
      %v976 = vunpack.c.l.b16 %v303
      %v977 = vunpack.c.l.b16 %v304
      %v978 = vunpack.c.l.b16 %v305
      %v979 = vunpack.c.l.b16 %v306
      %v980 = vunpack.c.l.b16 %v307
      %v981 = vunpack.c.l.b16 %v308
      %v982 = vunpack.c.l.b16 %v309
      %v983 = vunpack.c.l.b16 %v310
      %v984 = vunpack.c.l.b16 %v311
      %v985 = vunpack.c.l.b16 %v312
      %v986 = vunpack.c.l.b16 %v313
      %v987 = vunpack.c.l.b16 %v314
      %v988 = vunpack.c.l.b16 %v315
      %v989 = vunpack.c.l.b16 %v316
      %v990 = vunpack.c.l.b16 %v317
      %v991 = vunpack.c.l.b16 %v318
      %v992 = vunpack.c.l.b16 %v319
      %v993 = vunpack.c.l.b16 %v320
      %v994 = vunpack.c.l.b16 %v321
      %v995 = vunpack.c.l.b16 %v322
      %v996 = vunpack.c.l.b16 %v323
      %v997 = vunpack.c.l.b16 %v324
      %v998 = vunpack.c.l.b16 %v325
      %v999 = vunpack.c.l.b16 %v326
      %v1000 = vunpack.c.l.b16 %v327
      %v1001 = vunpack.c.l.b16 %v328
      %v1002 = vunpack.c.l.b16 %v329
      %v1003 = vunpack.c.l.b16 %v330
      %v1004 = vunpack.c.l.b16 %v331
      %v1005 = vunpack.c.l.b16 %v332
      %v1006 = vunpack.c.l.b16 %v333
      %v1007 = vunpack.c.l.b16 %v334
      %v1008 = vunpack.c.l.b16 %v335
      %v1009 = vunpack.c.l.b16 %v336
      %v1010 = vunpack.c.l.b16 %v337
      %v1011 = vunpack.c.l.b16 %v338
      %v1012 = vunpack.c.l.b16 %v339
      %v1013 = vunpack.c.l.b16 %v340
      %v1014 = vunpack.c.l.b16 %v341
      %v1015 = vunpack.c.l.b16 %v342
      %v1016 = vunpack.c.l.b16 %v343
      %v1017 = vunpack.c.l.b16 %v344
      %v1018 = vunpack.c.l.b16 %v345
      %v1019 = vunpack.c.l.b16 %v346
      %v1020 = vunpack.c.l.b16 %v347
      %v1021 = vunpack.c.l.b16 %v348
      %v1022 = vunpack.c.l.b16 %v349
      %v1023 = vunpack.c.l.b16 %v350
      %v1024 = vunpack.c.l.b16 %v351
      %v1025 = vunpack.c.l.b16 %v352
      %v1026 = vunpack.c.l.b16 %v353
      %v1027 = vunpack.c.l.b16 %v354
      %v1028 = vunpack.c.l.b16 %v355
      %v1029 = vunpack.c.l.b16 %v356
      %v1030 = vunpack.c.l.b16 %v357
      %v1031 = vunpack.c.l.b16 %v358
      %v1032 = vunpack.c.l.b16 %v359
      %v1033 = vunpack.c.l.b16 %v360
      %v1034 = vunpack.c.l.b16 %v361
      %v1035 = vunpack.c.l.b16 %v362
      %v1036 = vunpack.c.l.b16 %v363
      %v1037 = vunpack.c.l.b16 %v364
      %v1038 = vunpack.c.l.b16 %v365
      %v1039 = vunpack.c.l.b16 %v366
      %v1040 = vunpack.c.l.b16 %v367
      %v1041 = vunpack.c.l.b16 %v368
      %v1042 = vunpack.c.l.b16 %v369
      %v1043 = vunpack.c.l.b16 %v370
      %v1044 = vunpack.c.l.b16 %v371
      %v1045 = vunpack.c.l.b16 %v372
      %v1046 = vunpack.c.l.b16 %v373
      %v1047 = vunpack.c.l.b16 %v374
      %v1048 = vunpack.c.l.b16 %v375
      %v1049 = vunpack.c.l.b16 %v376
      %v1050 = vunpack.c.l.b16 %v377
      %v1051 = vunpack.c.l.b16 %v378
      %v1052 = vunpack.c.l.b16 %v379
      %v1053 = vunpack.c.l.b16 %v380
      %v1054 = vunpack.c.l.b16 %v381
      %v1055 = vunpack.c.l.b16 %v382
      %v1056 = vunpack.c.l.b16 %v383
      %v1057 = vunpack.c.l.b16 %v384
      %v1058 = vunpack.c.l.b16 %v385
      %v1059 = vunpack.c.l.b16 %v386
      %v1060 = vunpack.c.l.b16 %v387
      %v1061 = vunpack.c.l.b16 %v388
      %v1062 = vunpack.c.l.b16 %v389
      %v1063 = vunpack.c.l.b16 %v390
      %v1064 = vunpack.c.l.b16 %v391
      %v1065 = vunpack.c.l.b16 %v392
      %v1066 = vunpack.c.l.b16 %v393
      %v1067 = vunpack.c.l.b16 %v394
      %v1068 = vunpack.c.l.b16 %v395
      %v1069 = vunpack.c.l.b16 %v396
      %v1070 = vunpack.c.l.b16 %v397
      %v1071 = vunpack.c.l.b16 %v398
      %v1072 = vunpack.c.l.b16 %v399
      %v1073 = vunpack.c.l.b16 %v400
      %v1074 = vunpack.c.l.b16 %v401
      %v1075 = vunpack.c.l.b16 %v402
      %v1076 = vunpack.c.l.b16 %v403
      %v1077 = vunpack.c.l.b16 %v404
      %v1078 = vunpack.c.l.b16 %v405
      %v1079 = vunpack.c.l.b16 %v406
      %v1080 = vunpack.c.l.b16 %v407
      %v1081 = vunpack.c.l.b16 %v408
      %v1082 = vunpack.c.l.b16 %v409
      %v1083 = vunpack.c.l.b16 %v410
      %v1084 = vunpack.c.l.b16 %v411
      %v1085 = vunpack.c.l.b16 %v412
      %v1086 = vunpack.c.l.b16 %v413
      %v1087 = vunpack.c.l.b16 %v414
      %v1088 = vunpack.c.l.b16 %v415
      %v1089 = vunpack.c.l.b16 %v416
      %v1090 = vunpack.c.l.b16 %v417
      %v1091 = vunpack.c.l.b16 %v418
      %v1092 = vunpack.c.l.b16 %v419
      %v1093 = vunpack.c.l.b16 %v420
      %v1094 = vunpack.c.l.b16 %v421
      %v1095 = vunpack.c.l.b16 %v422
      %v1096 = vunpack.c.l.b16 %v423
      %v1097 = vunpack.c.l.b16 %v424
      %v1098 = vunpack.c.l.b16 %v425
      %v1099 = vunpack.c.l.b16 %v426
      %v1100 = vunpack.c.l.b16 %v427
      %v1101 = vunpack.c.l.b16 %v428
      %v1102 = vunpack.c.l.b16 %v429
      %v1103 = vunpack.c.l.b16 %v430
      %v1104 = vunpack.c.l.b16 %v431
      %v1105 = vunpack.c.l.b16 %v432
      %v1106 = vunpack.c.l.b16 %v433
      %v1107 = vunpack.c.l.b16 %v434
      %v1108 = vunpack.c.l.b16 %v435
      %v1109 = vunpack.c.l.b16 %v436
      %v1110 = vunpack.c.l.b16 %v437
      %v1111 = vunpack.c.l.b16 %v438
      %v1112 = vunpack.c.l.b16 %v439
      %v1113 = vunpack.c.l.b16 %v440
      %v1114 = vunpack.c.l.b16 %v441
      %v1115 = vunpack.c.l.b16 %v442
      %v1116 = vunpack.c.l.b16 %v443
      %v1117 = vunpack.c.l.b16 %v444
      %v1118 = vunpack.c.l.b16 %v445
      %v1119 = vunpack.c.l.b16 %v446
      %v1120 = vunpack.c.l.b16 %v447
      %v1121 = vunpack.c.l.b16 %v448
      %v1122 = vunpack.c.l.b16 %v449
      %v1123 = vunpack.c.l.b16 %v450
      %v1124 = vunpack.c.l.b16 %v451
      %v1125 = vunpack.c.l.b16 %v452
      %v1126 = vunpack.c.l.b16 %v453
      %v1127 = vunpack.c.l.b16 %v454
      %v1128 = vunpack.c.l.b16 %v455
      %v1129 = vunpack.c.l.b16 %v456
      %v1130 = vunpack.c.l.b16 %v457
      %v1131 = vunpack.c.l.b16 %v458
      %v1132 = vunpack.c.l.b16 %v459
      %v1133 = vunpack.c.l.b16 %v460
      %v1134 = vunpack.c.l.b16 %v461
      %v1135 = vunpack.c.l.b16 %v462
      %v1136 = vunpack.c.l.b16 %v463
      %v1137 = vunpack.c.l.b16 %v464
      %v1138 = vunpack.c.l.b16 %v465
      %v1139 = vunpack.c.l.b16 %v466
      %v1140 = vunpack.c.l.b16 %v467
      %v1141 = vunpack.c.l.b16 %v468
      %v1142 = vunpack.c.l.b16 %v469
      %v1143 = vunpack.c.l.b16 %v470
      %v1144 = vunpack.c.l.b16 %v471
      %v1145 = vunpack.c.l.b16 %v472
      %v1146 = vunpack.c.l.b16 %v473
      %v1147 = vunpack.c.l.b16 %v474
      %v1148 = vunpack.c.l.b16 %v475
      %v1149 = vunpack.c.l.b16 %v476
      %v1150 = vunpack.c.l.b16 %v477
      %v1151 = vunpack.c.l.b16 %v478
      %v1152 = vunpack.c.l.b16 %v479
      %v1153 = vunpack.c.l.b16 %v480
      %v1154 = vunpack.c.l.b16 %v481
      %v1155 = vunpack.c.l.b16 %v482
      %v1156 = vunpack.c.l.b16 %v483
      %v1157 = vunpack.c.l.b16 %v484
      %v1158 = vunpack.c.l.b16 %v485
      %v1159 = vunpack.c.l.b16 %v486
      %v1160 = vunpack.c.l.b16 %v487
      %v1161 = vunpack.c.l.b16 %v488
      %v1162 = vunpack.c.l.b16 %v489
      %v1163 = vunpack.c.l.b16 %v490
      %v1164 = vunpack.c.l.b16 %v491
      %v1165 = vunpack.c.l.b16 %v492
      %v1166 = vunpack.c.l.b16 %v493
      %v1167 = vunpack.c.l.b16 %v494
      %v1168 = vunpack.c.l.b16 %v495
      %v1169 = vunpack.c.l.b16 %v496
      %v1170 = vunpack.c.l.b16 %v497
      %v1171 = vunpack.c.l.b16 %v498
      %v1172 = vunpack.c.l.b16 %v499
      %v1173 = vunpack.c.l.b16 %v500
      %v1174 = vunpack.c.l.b16 %v501
      %v1175 = vunpack.c.l.b16 %v502
      %v1176 = vunpack.c.l.b16 %v503
      %v1177 = vunpack.c.l.b16 %v504
      %v1178 = vunpack.c.l.b16 %v505
      %v1179 = vunpack.c.l.b16 %v506
      %v1180 = vunpack.c.l.b16 %v507
      %v1181 = vunpack.c.l.b16 %v508
      %v1182 = vunpack.c.l.b16 %v509
      %v1183 = vunpack.c.l.b16 %v510
      %v1184 = vunpack.c.l.b16 %v511
      %v1185 = vunpack.c.l.b16 %v512
      %v1186 = vunpack.c.l.b16 %v513
      %v1187 = vunpack.c.l.b16 %v514
      %v1188 = vunpack.c.l.b16 %v515
      %v1189 = vunpack.c.l.b16 %v516
      %v1190 = vunpack.c.l.b16 %v517
      %v1191 = vunpack.c.l.b16 %v518
      %v1192 = vunpack.c.l.b16 %v519
      %v1193 = vunpack.c.l.b16 %v520
      %v1194 = vunpack.c.l.b16 %v521
      %v1195 = vpack.c.b16 %v908, %v907
      %v1196 = vpack.c.b16 %v910, %v909
      %v1197 = vpack.c.b16 %v912, %v911
      %v1198 = vpack.c.b16 %v914, %v913
      %v1199 = vpack.c.b16 %v916, %v915
      %v1200 = vpack.c.b16 %v918, %v917
      %v1201 = vpack.c.b16 %v920, %v919
      %v1202 = vpack.c.b16 %v922, %v921
      %v1203 = vpack.c.b16 %v924, %v923
      %v1204 = vpack.c.b16 %v926, %v925
      %v1205 = vpack.c.b16 %v928, %v927
      %v1206 = vpack.c.b16 %v930, %v929
      %v1207 = vpack.c.b16 %v932, %v931
      %v1208 = vpack.c.b16 %v934, %v933
      %v1209 = vpack.c.b16 %v936, %v935
      %v1210 = vpack.c.b16 %v938, %v937
      %v1211 = vpack.c.b16 %v940, %v939
      %v1212 = vpack.c.b16 %v942, %v941
      %v1213 = vpack.c.b16 %v944, %v943
      %v1214 = vpack.c.b16 %v946, %v945
      %v1215 = vpack.c.b16 %v948, %v947
      %v1216 = vpack.c.b16 %v950, %v949
      %v1217 = vpack.c.b16 %v952, %v951
      %v1218 = vpack.c.b16 %v954, %v953
      %v1219 = vpack.c.b16 %v956, %v955
      %v1220 = vpack.c.b16 %v958, %v957
      %v1221 = vpack.c.b16 %v960, %v959
      %v1222 = vpack.c.b16 %v962, %v961
      %v1223 = vpack.c.b16 %v964, %v963
      %v1224 = vpack.c.b16 %v966, %v965
      %v1225 = vpack.c.b16 %v968, %v967
      %v1226 = vpack.c.b16 %v970, %v969
      %v1227 = vpack.c.b16 %v972, %v971
      %v1228 = vpack.c.b16 %v974, %v973
      %v1229 = vpack.c.b16 %v976, %v975
      %v1230 = vpack.c.b16 %v978, %v977
      %v1231 = vpack.c.b16 %v980, %v979
      %v1232 = vpack.c.b16 %v982, %v981
      %v1233 = vpack.c.b16 %v984, %v983
      %v1234 = vpack.c.b16 %v986, %v985
      %v1235 = vpack.c.b16 %v988, %v987
      %v1236 = vpack.c.b16 %v990, %v989
      %v1237 = vpack.c.b16 %v992, %v991
      %v1238 = vpack.c.b16 %v994, %v993
      %v1239 = vpack.c.b16 %v996, %v995
      %v1240 = vpack.c.b16 %v998, %v997
      %v1241 = vpack.c.b16 %v1000, %v999
      %v1242 = vpack.c.b16 %v1002, %v1001
      %v1243 = vpack.c.b16 %v1004, %v1003
      %v1244 = vpack.c.b16 %v1006, %v1005
      %v1245 = vpack.c.b16 %v1008, %v1007
      %v1246 = vpack.c.b16 %v1010, %v1009
      %v1247 = vpack.c.b16 %v1012, %v1011
      %v1248 = vpack.c.b16 %v1014, %v1013
      %v1249 = vpack.c.b16 %v1016, %v1015
      %v1250 = vpack.c.b16 %v1018, %v1017
      %v1251 = vpack.c.b16 %v1020, %v1019
      %v1252 = vpack.c.b16 %v1022, %v1021
      %v1253 = vpack.c.b16 %v1024, %v1023
      %v1254 = vpack.c.b16 %v1026, %v1025
      %v1255 = vpack.c.b16 %v1028, %v1027
      %v1256 = vpack.c.b16 %v1030, %v1029
      %v1257 = vpack.c.b16 %v1032, %v1031
      %v1258 = vpack.c.b16 %v1034, %v1033
      %v1259 = vpack.c.b16 %v1036, %v1035
      %v1260 = vpack.c.b16 %v1038, %v1037
      %v1261 = vpack.c.b16 %v1040, %v1039
      %v1262 = vpack.c.b16 %v1042, %v1041
      %v1263 = vpack.c.b16 %v1044, %v1043
      %v1264 = vpack.c.b16 %v1046, %v1045
      %v1265 = vpack.c.b16 %v1048, %v1047
      %v1266 = vpack.c.b16 %v1050, %v1049
      %v1267 = vpack.c.b16 %v1052, %v1051
      %v1268 = vpack.c.b16 %v1054, %v1053
      %v1269 = vpack.c.b16 %v1056, %v1055
      %v1270 = vpack.c.b16 %v1058, %v1057
      %v1271 = vpack.c.b16 %v1060, %v1059
      %v1272 = vpack.c.b16 %v1062, %v1061
      %v1273 = vpack.c.b16 %v1064, %v1063
      %v1274 = vpack.c.b16 %v1066, %v1065
      %v1275 = vpack.c.b16 %v1068, %v1067
      %v1276 = vpack.c.b16 %v1070, %v1069
      %v1277 = vpack.c.b16 %v1072, %v1071
      %v1278 = vpack.c.b16 %v1074, %v1073
      %v1279 = vpack.c.b16 %v1076, %v1075
      %v1280 = vpack.c.b16 %v1078, %v1077
      %v1281 = vpack.c.b16 %v1080, %v1079
      %v1282 = vpack.c.b16 %v1082, %v1081
      %v1283 = vpack.c.b16 %v1084, %v1083
      %v1284 = vpack.c.b16 %v1086, %v1085
      %v1285 = vpack.c.b16 %v1088, %v1087
      %v1286 = vpack.c.b16 %v1090, %v1089
      %v1287 = vpack.c.b16 %v1092, %v1091
      %v1288 = vpack.c.b16 %v1094, %v1093
      %v1289 = vpack.c.b16 %v1096, %v1095
      %v1290 = vpack.c.b16 %v1098, %v1097
      %v1291 = vpack.c.b16 %v1100, %v1099
      %v1292 = vpack.c.b16 %v1102, %v1101
      %v1293 = vpack.c.b16 %v1104, %v1103
      %v1294 = vpack.c.b16 %v1106, %v1105
      %v1295 = vpack.c.b16 %v1108, %v1107
      %v1296 = vpack.c.b16 %v1110, %v1109
      %v1297 = vpack.c.b16 %v1112, %v1111
      %v1298 = vpack.c.b16 %v1114, %v1113
      %v1299 = vpack.c.b16 %v1116, %v1115
      %v1300 = vpack.c.b16 %v1118, %v1117
      %v1301 = vpack.c.b16 %v1120, %v1119
      %v1302 = vpack.c.b16 %v1122, %v1121
      %v1303 = vpack.c.b16 %v1124, %v1123
      %v1304 = vpack.c.b16 %v1126, %v1125
      %v1305 = vpack.c.b16 %v1128, %v1127
      %v1306 = vpack.c.b16 %v1130, %v1129
      %v1307 = vpack.c.b16 %v1132, %v1131
      %v1308 = vpack.c.b16 %v1134, %v1133
      %v1309 = vpack.c.b16 %v1136, %v1135
      %v1310 = vpack.c.b16 %v1138, %v1137
      %v1311 = vpack.c.b16 %v1140, %v1139
      %v1312 = vpack.c.b16 %v1142, %v1141
      %v1313 = vpack.c.b16 %v1144, %v1143
      %v1314 = vpack.c.b16 %v1146, %v1145
      %v1315 = vpack.c.b16 %v1148, %v1147
      %v1316 = vpack.c.b16 %v1150, %v1149
      %v1317 = vpack.c.b16 %v1152, %v1151
      %v1318 = vpack.c.b16 %v1154, %v1153
      %v1319 = vpack.c.b16 %v1156, %v1155
      %v1320 = vpack.c.b16 %v1158, %v1157
      %v1321 = vpack.c.b16 %v1160, %v1159
      %v1322 = vpack.c.b16 %v1162, %v1161
      %v1323 = vpack.c.b16 %v1164, %v1163
      %v1324 = vpack.c.b16 %v1166, %v1165
      %v1325 = vpack.c.b16 %v1168, %v1167
      %v1326 = vpack.c.b16 %v1170, %v1169
      %v1327 = vpack.c.b16 %v1172, %v1171
      %v1328 = vpack.c.b16 %v1174, %v1173
      %v1329 = vpack.c.b16 %v1176, %v1175
      %v1330 = vpack.c.b16 %v1178, %v1177
      %v1331 = vpack.c.b16 %v1180, %v1179
      %v1332 = vpack.c.b16 %v1182, %v1181
      %v1333 = vpack.c.b16 %v1184, %v1183
      %v1334 = vpack.c.b16 %v1186, %v1185
      %v1335 = vpack.c.b16 %v1188, %v1187
      %v1336 = vpack.c.b16 %v1190, %v1189
      %v1337 = vpack.c.b16 %v1192, %v1191
      %v1338 = vpack.c.b16 %v1194, %v1193
      %1483 = vmatprep.subr.bf16.mxu0 0
      %1484 = vmatpush1.bf16.msra.mxu0 %v1202
      %1485 = vmatprep.subr.bf16.mxu0 0
      %1486 = vmatpush1.bf16.msra.mxu0 %v1201
      %1487 = vmatprep.subr.bf16.mxu0 0
      %1488 = vmatpush1.bf16.msra.mxu0 %v1200
      %1489 = vmatprep.subr.bf16.mxu0 0
      %1490 = vmatpush1.bf16.msra.mxu0 %v1199
      %1491 = vmatprep.subr.bf16.mxu0 0
      %1492 = vmatpush1.bf16.msra.mxu0 %v1198
      %1493 = vmatprep.subr.bf16.mxu0 0
      %1494 = vmatpush1.bf16.msra.mxu0 %v1197
      %1495 = vmatprep.subr.bf16.mxu0 0
      %1496 = vmatpush1.bf16.msra.mxu0 %v1196
      %1497 = vmatprep.subr.bf16.mxu0 0
      %1498 = vmatpush1.bf16.msra.mxu0 %v1195
      %1499 = vmatprep.subr.bf16.mxu0 0
      %1500 = vmatpush2.bf16.msra.mxu0 %v1210
      %1501 = vmatprep.subr.bf16.mxu0 0
      %1502 = vmatpush2.bf16.msra.mxu0 %v1209
      %1503 = vmatprep.subr.bf16.mxu0 0
      %1504 = vmatpush2.bf16.msra.mxu0 %v1208
      %1505 = vmatprep.subr.bf16.mxu0 0
      %1506 = vmatpush2.bf16.msra.mxu0 %v1207
      %1507 = vmatprep.subr.bf16.mxu0 0
      %1508 = vmatpush2.bf16.msra.mxu0 %v1206
      %1509 = vmatprep.subr.bf16.mxu0 0
      %1510 = vmatpush2.bf16.msra.mxu0 %v1205
      %1511 = vmatprep.subr.bf16.mxu0 0
      %1512 = vmatpush2.bf16.msra.mxu0 %v1204
      %1513 = vmatprep.subr.bf16.mxu0 0
      %1514 = vmatpush2.bf16.msra.mxu0 %v1203
      %1515 = vmatprep.mubr.bf16.mxu0 %v584
      %1516 = vmatmul.mubr.bf16.gmra.mxu0 %v583
      %v1517 = vpop.f32.mrf.mxu0
      %v1518 = vadd.f32 %v527, %v1517
      %v1519 = vpop.f32.mrf.mxu0
      %v1520 = vpop.f32.mrf.mxu0
      %v1521 = vadd.f32 %v527, %v1520
      %v1522 = vpop.f32.mrf.mxu0
      %1523 = vdwg.mxu0
      %1524 = vmatprep.subr.bf16.mxu0 0
      %1525 = vmatpush1.bf16.msra.mxu0 %v1218
      %1526 = vmatprep.subr.bf16.mxu0 0
      %1527 = vmatpush1.bf16.msra.mxu0 %v1217
      %1528 = vmatprep.subr.bf16.mxu0 0
      %1529 = vmatpush1.bf16.msra.mxu0 %v1216
      %1530 = vmatprep.subr.bf16.mxu0 0
      %1531 = vmatpush1.bf16.msra.mxu0 %v1215
      %1532 = vmatprep.subr.bf16.mxu0 0
      %1533 = vmatpush1.bf16.msra.mxu0 %v1214
      %1534 = vmatprep.subr.bf16.mxu0 0
      %1535 = vmatpush1.bf16.msra.mxu0 %v1213
      %1536 = vmatprep.subr.bf16.mxu0 0
      %1537 = vmatpush1.bf16.msra.mxu0 %v1212
      %1538 = vmatprep.subr.bf16.mxu0 0
      %1539 = vmatpush1.bf16.msra.mxu0 %v1211
      %1540 = vmatprep.subr.bf16.mxu0 0
      %1541 = vmatpush2.bf16.msra.mxu0 %v1226
      %1542 = vmatprep.subr.bf16.mxu0 0
      %1543 = vmatpush2.bf16.msra.mxu0 %v1225
      %1544 = vmatprep.subr.bf16.mxu0 0
      %1545 = vmatpush2.bf16.msra.mxu0 %v1224
      %1546 = vmatprep.subr.bf16.mxu0 0
      %1547 = vmatpush2.bf16.msra.mxu0 %v1223
      %1548 = vmatprep.subr.bf16.mxu0 0
      %1549 = vmatpush2.bf16.msra.mxu0 %v1222
      %1550 = vmatprep.subr.bf16.mxu0 0
      %1551 = vmatpush2.bf16.msra.mxu0 %v1221
      %1552 = vmatprep.subr.bf16.mxu0 0
      %1553 = vmatpush2.bf16.msra.mxu0 %v1220
      %1554 = vmatprep.subr.bf16.mxu0 0
      %1555 = vmatpush2.bf16.msra.mxu0 %v1219
      %1556 = vmatprep.mubr.bf16.mxu0 %v586
      %1557 = vmatmul.mubr.bf16.gmra.mxu0 %v585
      %v1558 = vpop.f32.mrf.mxu0
      %v1559 = vadd.f32 %v1518, %v1558
      %v1560 = vpop.f32.mrf.mxu0
      %v1561 = vpop.f32.mrf.mxu0
      %v1562 = vadd.f32 %v1521, %v1561
      %v1563 = vpop.f32.mrf.mxu0
      %1564 = vdwg.mxu0
      %1565 = vmatprep.subr.bf16.mxu0 0
      %1566 = vmatpush1.bf16.msra.mxu0 %v1234
      %1567 = vmatprep.subr.bf16.mxu0 0
      %1568 = vmatpush1.bf16.msra.mxu0 %v1233
      %1569 = vmatprep.subr.bf16.mxu0 0
      %1570 = vmatpush1.bf16.msra.mxu0 %v1232
      %1571 = vmatprep.subr.bf16.mxu0 0
      %1572 = vmatpush1.bf16.msra.mxu0 %v1231
      %1573 = vmatprep.subr.bf16.mxu0 0
      %1574 = vmatpush1.bf16.msra.mxu0 %v1230
      %1575 = vmatprep.subr.bf16.mxu0 0
      %1576 = vmatpush1.bf16.msra.mxu0 %v1229
      %1577 = vmatprep.subr.bf16.mxu0 0
      %1578 = vmatpush1.bf16.msra.mxu0 %v1228
      %1579 = vmatprep.subr.bf16.mxu0 0
      %1580 = vmatpush1.bf16.msra.mxu0 %v1227
      %1581 = vmatprep.subr.bf16.mxu0 0
      %1582 = vmatpush2.bf16.msra.mxu0 %v1242
      %1583 = vmatprep.subr.bf16.mxu0 0
      %1584 = vmatpush2.bf16.msra.mxu0 %v1241
      %1585 = vmatprep.subr.bf16.mxu0 0
      %1586 = vmatpush2.bf16.msra.mxu0 %v1240
      %1587 = vmatprep.subr.bf16.mxu0 0
      %1588 = vmatpush2.bf16.msra.mxu0 %v1239
      %1589 = vmatprep.subr.bf16.mxu0 0
      %1590 = vmatpush2.bf16.msra.mxu0 %v1238
      %1591 = vmatprep.subr.bf16.mxu0 0
      %1592 = vmatpush2.bf16.msra.mxu0 %v1237
      %1593 = vmatprep.subr.bf16.mxu0 0
      %1594 = vmatpush2.bf16.msra.mxu0 %v1236
      %1595 = vmatprep.subr.bf16.mxu0 0
      %1596 = vmatpush2.bf16.msra.mxu0 %v1235
      %1597 = vmatprep.mubr.bf16.mxu0 %v588
      %1598 = vmatmul.mubr.bf16.gmra.mxu0 %v587
      %v1599 = vpop.f32.mrf.mxu0
      %v1600 = vadd.f32 %v1559, %v1599
      %v1601 = vpop.f32.mrf.mxu0
      %v1602 = vpop.f32.mrf.mxu0
      %v1603 = vadd.f32 %v1562, %v1602
      %v1604 = vpop.f32.mrf.mxu0
      %1605 = vdwg.mxu0
      %1606 = vmatprep.subr.bf16.mxu0 0
      %1607 = vmatpush1.bf16.msra.mxu0 %v1250
      %1608 = vmatprep.subr.bf16.mxu0 0
      %1609 = vmatpush1.bf16.msra.mxu0 %v1249
      %1610 = vmatprep.subr.bf16.mxu0 0
      %1611 = vmatpush1.bf16.msra.mxu0 %v1248
      %1612 = vmatprep.subr.bf16.mxu0 0
      %1613 = vmatpush1.bf16.msra.mxu0 %v1247
      %1614 = vmatprep.subr.bf16.mxu0 0
      %1615 = vmatpush1.bf16.msra.mxu0 %v1246
      %1616 = vmatprep.subr.bf16.mxu0 0
      %1617 = vmatpush1.bf16.msra.mxu0 %v1245
      %1618 = vmatprep.subr.bf16.mxu0 0
      %1619 = vmatpush1.bf16.msra.mxu0 %v1244
      %1620 = vmatprep.subr.bf16.mxu0 0
      %1621 = vmatpush1.bf16.msra.mxu0 %v1243
      %1622 = vmatprep.subr.bf16.mxu0 0
      %1623 = vmatpush2.bf16.msra.mxu0 %v1258
      %1624 = vmatprep.subr.bf16.mxu0 0
      %1625 = vmatpush2.bf16.msra.mxu0 %v1257
      %1626 = vmatprep.subr.bf16.mxu0 0
      %1627 = vmatpush2.bf16.msra.mxu0 %v1256
      %1628 = vmatprep.subr.bf16.mxu0 0
      %1629 = vmatpush2.bf16.msra.mxu0 %v1255
      %1630 = vmatprep.subr.bf16.mxu0 0
      %1631 = vmatpush2.bf16.msra.mxu0 %v1254
      %1632 = vmatprep.subr.bf16.mxu0 0
      %1633 = vmatpush2.bf16.msra.mxu0 %v1253
      %1634 = vmatprep.subr.bf16.mxu0 0
      %1635 = vmatpush2.bf16.msra.mxu0 %v1252
      %1636 = vmatprep.subr.bf16.mxu0 0
      %1637 = vmatpush2.bf16.msra.mxu0 %v1251
      %1638 = vmatprep.mubr.bf16.mxu0 %v590
      %1639 = vmatmul.mubr.bf16.gmra.mxu0 %v589
      %v1640 = vpop.f32.mrf.mxu0
      %v1641 = vadd.f32 %v1600, %v1640
      %v1642 = vpop.f32.mrf.mxu0
      %v1643 = vpop.f32.mrf.mxu0
      %v1644 = vadd.f32 %v1603, %v1643
      %v1645 = vpop.f32.mrf.mxu0
      %1646 = vdwg.mxu0
      %1647 = vmatprep.subr.bf16.mxu0 0
      %1648 = vmatpush1.bf16.msra.mxu0 %v1266
      %1649 = vmatprep.subr.bf16.mxu0 0
      %1650 = vmatpush1.bf16.msra.mxu0 %v1265
      %1651 = vmatprep.subr.bf16.mxu0 0
      %1652 = vmatpush1.bf16.msra.mxu0 %v1264
      %1653 = vmatprep.subr.bf16.mxu0 0
      %1654 = vmatpush1.bf16.msra.mxu0 %v1263
      %1655 = vmatprep.subr.bf16.mxu0 0
      %1656 = vmatpush1.bf16.msra.mxu0 %v1262
      %1657 = vmatprep.subr.bf16.mxu0 0
      %1658 = vmatpush1.bf16.msra.mxu0 %v1261
      %1659 = vmatprep.subr.bf16.mxu0 0
      %1660 = vmatpush1.bf16.msra.mxu0 %v1260
      %1661 = vmatprep.subr.bf16.mxu0 0
      %1662 = vmatpush1.bf16.msra.mxu0 %v1259
      %1663 = vmatprep.subr.bf16.mxu0 0
      %1664 = vmatpush2.bf16.msra.mxu0 %v1274
      %1665 = vmatprep.subr.bf16.mxu0 0
      %1666 = vmatpush2.bf16.msra.mxu0 %v1273
      %1667 = vmatprep.subr.bf16.mxu0 0
      %1668 = vmatpush2.bf16.msra.mxu0 %v1272
      %1669 = vmatprep.subr.bf16.mxu0 0
      %1670 = vmatpush2.bf16.msra.mxu0 %v1271
      %1671 = vmatprep.subr.bf16.mxu0 0
      %1672 = vmatpush2.bf16.msra.mxu0 %v1270
      %1673 = vmatprep.subr.bf16.mxu0 0
      %1674 = vmatpush2.bf16.msra.mxu0 %v1269
      %1675 = vmatprep.subr.bf16.mxu0 0
      %1676 = vmatpush2.bf16.msra.mxu0 %v1268
      %1677 = vmatprep.subr.bf16.mxu0 0
      %1678 = vmatpush2.bf16.msra.mxu0 %v1267
      %1679 = vmatprep.mubr.bf16.mxu0 %v592
      %1680 = vmatmul.mubr.bf16.gmra.mxu0 %v591
      %v1681 = vpop.f32.mrf.mxu0
      %v1682 = vadd.f32 %v1641, %v1681
      %v1683 = vpop.f32.mrf.mxu0
      %v1684 = vpop.f32.mrf.mxu0
      %v1685 = vadd.f32 %v1644, %v1684
      %v1686 = vpop.f32.mrf.mxu0
      %1687 = vdwg.mxu0
      %1688 = vmatprep.subr.bf16.mxu0 0
      %1689 = vmatpush1.bf16.msra.mxu0 %v1282
      %1690 = vmatprep.subr.bf16.mxu0 0
      %1691 = vmatpush1.bf16.msra.mxu0 %v1281
      %1692 = vmatprep.subr.bf16.mxu0 0
      %1693 = vmatpush1.bf16.msra.mxu0 %v1280
      %1694 = vmatprep.subr.bf16.mxu0 0
      %1695 = vmatpush1.bf16.msra.mxu0 %v1279
      %1696 = vmatprep.subr.bf16.mxu0 0
      %1697 = vmatpush1.bf16.msra.mxu0 %v1278
      %1698 = vmatprep.subr.bf16.mxu0 0
      %1699 = vmatpush1.bf16.msra.mxu0 %v1277
      %1700 = vmatprep.subr.bf16.mxu0 0
      %1701 = vmatpush1.bf16.msra.mxu0 %v1276
      %1702 = vmatprep.subr.bf16.mxu0 0
      %1703 = vmatpush1.bf16.msra.mxu0 %v1275
      %1704 = vmatprep.subr.bf16.mxu0 0
      %1705 = vmatpush2.bf16.msra.mxu0 %v1290
      %1706 = vmatprep.subr.bf16.mxu0 0
      %1707 = vmatpush2.bf16.msra.mxu0 %v1289
      %1708 = vmatprep.subr.bf16.mxu0 0
      %1709 = vmatpush2.bf16.msra.mxu0 %v1288
      %1710 = vmatprep.subr.bf16.mxu0 0
      %1711 = vmatpush2.bf16.msra.mxu0 %v1287
      %1712 = vmatprep.subr.bf16.mxu0 0
      %1713 = vmatpush2.bf16.msra.mxu0 %v1286
      %1714 = vmatprep.subr.bf16.mxu0 0
      %1715 = vmatpush2.bf16.msra.mxu0 %v1285
      %1716 = vmatprep.subr.bf16.mxu0 0
      %1717 = vmatpush2.bf16.msra.mxu0 %v1284
      %1718 = vmatprep.subr.bf16.mxu0 0
      %1719 = vmatpush2.bf16.msra.mxu0 %v1283
      %1720 = vmatprep.mubr.bf16.mxu0 %v594
      %1721 = vmatmul.mubr.bf16.gmra.mxu0 %v593
      %v1722 = vpop.f32.mrf.mxu0
      %v1723 = vadd.f32 %v1682, %v1722
      %v1724 = vpop.f32.mrf.mxu0
      %v1725 = vpop.f32.mrf.mxu0
      %v1726 = vadd.f32 %v1685, %v1725
      %v1727 = vpop.f32.mrf.mxu0
      %1728 = vdwg.mxu0
      %1729 = vmatprep.subr.bf16.mxu0 0
      %1730 = vmatpush1.bf16.msra.mxu0 %v1298
      %1731 = vmatprep.subr.bf16.mxu0 0
      %1732 = vmatpush1.bf16.msra.mxu0 %v1297
      %1733 = vmatprep.subr.bf16.mxu0 0
      %1734 = vmatpush1.bf16.msra.mxu0 %v1296
      %1735 = vmatprep.subr.bf16.mxu0 0
      %1736 = vmatpush1.bf16.msra.mxu0 %v1295
      %1737 = vmatprep.subr.bf16.mxu0 0
      %1738 = vmatpush1.bf16.msra.mxu0 %v1294
      %1739 = vmatprep.subr.bf16.mxu0 0
      %1740 = vmatpush1.bf16.msra.mxu0 %v1293
      %1741 = vmatprep.subr.bf16.mxu0 0
      %1742 = vmatpush1.bf16.msra.mxu0 %v1292
      %1743 = vmatprep.subr.bf16.mxu0 0
      %1744 = vmatpush1.bf16.msra.mxu0 %v1291
      %1745 = vmatprep.subr.bf16.mxu0 0
      %1746 = vmatpush2.bf16.msra.mxu0 %v1306
      %1747 = vmatprep.subr.bf16.mxu0 0
      %1748 = vmatpush2.bf16.msra.mxu0 %v1305
      %1749 = vmatprep.subr.bf16.mxu0 0
      %1750 = vmatpush2.bf16.msra.mxu0 %v1304
      %1751 = vmatprep.subr.bf16.mxu0 0
      %1752 = vmatpush2.bf16.msra.mxu0 %v1303
      %1753 = vmatprep.subr.bf16.mxu0 0
      %1754 = vmatpush2.bf16.msra.mxu0 %v1302
      %1755 = vmatprep.subr.bf16.mxu0 0
      %1756 = vmatpush2.bf16.msra.mxu0 %v1301
      %1757 = vmatprep.subr.bf16.mxu0 0
      %1758 = vmatpush2.bf16.msra.mxu0 %v1300
      %1759 = vmatprep.subr.bf16.mxu0 0
      %1760 = vmatpush2.bf16.msra.mxu0 %v1299
      %1761 = vmatprep.mubr.bf16.mxu0 %v596
      %1762 = vmatmul.mubr.bf16.gmra.mxu0 %v595
      %v1763 = vpop.f32.mrf.mxu0
      %v1764 = vadd.f32 %v1723, %v1763
      %v1765 = vpop.f32.mrf.mxu0
      %v1766 = vpop.f32.mrf.mxu0
      %v1767 = vadd.f32 %v1726, %v1766
      %v1768 = vpop.f32.mrf.mxu0
      %1769 = vdwg.mxu0
      %1770 = vmatprep.subr.bf16.mxu0 0
      %1771 = vmatpush1.bf16.msra.mxu0 %v1314
      %1772 = vmatprep.subr.bf16.mxu0 0
      %1773 = vmatpush1.bf16.msra.mxu0 %v1313
      %1774 = vmatprep.subr.bf16.mxu0 0
      %1775 = vmatpush1.bf16.msra.mxu0 %v1312
      %1776 = vmatprep.subr.bf16.mxu0 0
      %1777 = vmatpush1.bf16.msra.mxu0 %v1311
      %1778 = vmatprep.subr.bf16.mxu0 0
      %1779 = vmatpush1.bf16.msra.mxu0 %v1310
      %1780 = vmatprep.subr.bf16.mxu0 0
      %1781 = vmatpush1.bf16.msra.mxu0 %v1309
      %1782 = vmatprep.subr.bf16.mxu0 0
      %1783 = vmatpush1.bf16.msra.mxu0 %v1308
      %1784 = vmatprep.subr.bf16.mxu0 0
      %1785 = vmatpush1.bf16.msra.mxu0 %v1307
      %1786 = vmatprep.subr.bf16.mxu0 0
      %1787 = vmatpush2.bf16.msra.mxu0 %v1322
      %1788 = vmatprep.subr.bf16.mxu0 0
      %1789 = vmatpush2.bf16.msra.mxu0 %v1321
      %1790 = vmatprep.subr.bf16.mxu0 0
      %1791 = vmatpush2.bf16.msra.mxu0 %v1320
      %1792 = vmatprep.subr.bf16.mxu0 0
      %1793 = vmatpush2.bf16.msra.mxu0 %v1319
      %1794 = vmatprep.subr.bf16.mxu0 0
      %1795 = vmatpush2.bf16.msra.mxu0 %v1318
      %1796 = vmatprep.subr.bf16.mxu0 0
      %1797 = vmatpush2.bf16.msra.mxu0 %v1317
      %1798 = vmatprep.subr.bf16.mxu0 0
      %1799 = vmatpush2.bf16.msra.mxu0 %v1316
      %1800 = vmatprep.subr.bf16.mxu0 0
      %1801 = vmatpush2.bf16.msra.mxu0 %v1315
      %1802 = vmatprep.mubr.bf16.mxu0 %v598
      %1803 = vmatmul.mubr.bf16.gmra.mxu0 %v597
      %v1804 = vpop.f32.mrf.mxu0
      %v1805 = vadd.f32 %v1764, %v1804
      %v1806 = vpop.f32.mrf.mxu0
      %v1807 = vpop.f32.mrf.mxu0
      %v1808 = vadd.f32 %v1767, %v1807
      %v1809 = vpop.f32.mrf.mxu0
      %1810 = vdwg.mxu0
      %1811 = vmatprep.subr.bf16.mxu0 0
      %1812 = vmatpush1.bf16.msra.mxu0 %v1330
      %1813 = vmatprep.subr.bf16.mxu0 0
      %1814 = vmatpush1.bf16.msra.mxu0 %v1329
      %1815 = vmatprep.subr.bf16.mxu0 0
      %1816 = vmatpush1.bf16.msra.mxu0 %v1328
      %1817 = vmatprep.subr.bf16.mxu0 0
      %1818 = vmatpush1.bf16.msra.mxu0 %v1327
      %1819 = vmatprep.subr.bf16.mxu0 0
      %1820 = vmatpush1.bf16.msra.mxu0 %v1326
      %1821 = vmatprep.subr.bf16.mxu0 0
      %1822 = vmatpush1.bf16.msra.mxu0 %v1325
      %1823 = vmatprep.subr.bf16.mxu0 0
      %1824 = vmatpush1.bf16.msra.mxu0 %v1324
      %1825 = vmatprep.subr.bf16.mxu0 0
      %1826 = vmatpush1.bf16.msra.mxu0 %v1323
      %1827 = vmatprep.subr.bf16.mxu0 0
      %1828 = vmatpush2.bf16.msra.mxu0 %v1338
      %1829 = vmatprep.subr.bf16.mxu0 0
      %1830 = vmatpush2.bf16.msra.mxu0 %v1337
      %1831 = vmatprep.subr.bf16.mxu0 0
      %1832 = vmatpush2.bf16.msra.mxu0 %v1336
      %1833 = vmatprep.subr.bf16.mxu0 0
      %1834 = vmatpush2.bf16.msra.mxu0 %v1335
      %1835 = vmatprep.subr.bf16.mxu0 0
      %1836 = vmatpush2.bf16.msra.mxu0 %v1334
      %1837 = vmatprep.subr.bf16.mxu0 0
      %1838 = vmatpush2.bf16.msra.mxu0 %v1333
      %1839 = vmatprep.subr.bf16.mxu0 0
      %1840 = vmatpush2.bf16.msra.mxu0 %v1332
      %1841 = vmatprep.subr.bf16.mxu0 0
      %1842 = vmatpush2.bf16.msra.mxu0 %v1331
      %1843 = vmatprep.mubr.bf16.mxu0 %v600
      %1844 = vmatmul.mubr.bf16.gmra.mxu0 %v599
      %v1845 = vpop.f32.mrf.mxu0
      %v1846 = vadd.f32 %v1805, %v1845
      %v1847 = vpop.f32.mrf.mxu0
      %v1848 = vpop.f32.mrf.mxu0
      %v1849 = vadd.f32 %v1808, %v1848
      %v1850 = vpop.f32.mrf.mxu0
      %1851 = vdwg.mxu0
      %v1852 = vadd.f32 %v1846, %v1849
      %v1853 = vrot.slane %v1852, 4
      %v1854 = vadd.f32 %v1852, %v1853
      %v1855 = vrot.slane %v1854, 2
      %v1856 = vadd.f32 %v1854, %v1855
      %v1857 = vrot.slane %v1856, 1
      %v1858 = vadd.f32 %v1856, %v1857
      %v1859 = vrcp.pop 16.0
      %v1860 = vmul.f32 %v1858, %v1859
      %v1861 = vsub.f32 %v1846, %v1860
      %v1862 = vsub.f32 %v1849, %v1860
      %v1863 = vmul.f32 %v1861, %v1861
      %v1864 = vmul.f32 %v1862, %v1862
      %v1865 = vadd.f32 %v1863, %v1864
      %v1866 = vrot.slane %v1865, 4
      %v1867 = vadd.f32 %v1865, %v1866
      %v1868 = vrot.slane %v1867, 2
      %v1869 = vadd.f32 %v1867, %v1868
      %v1870 = vrot.slane %v1869, 1
      %v1871 = vadd.f32 %v1869, %v1870
      %v1872 = vmul.f32 %v1871, %v1859
      %v1873 = vadd.f32 %v1872, 1e-05
      %v1874 = vrsqrt.pop %v1873
      %v1875 = vmul.f32 %v1861, %v1874
      %v1876 = vmul.f32 %v1862, %v1874
      %v1877 = vld [vmem:[%s209] sm:$0x3]
      %v1878 = vlaneseq
      %v1879 = vshrl.u32 %v1878, 7
      %v1880 = vsub.s32 0, %v1879
      %v1881 = vrot.slane %v1877, %v1880
      %v1882 = vmul.f32 %v1881, %v1875
      %v1883 = vmul.f32 %v1881, %v1876
      %v1884 = vlaneseq
      %v1885 = vshrl.u32 %v1884, 7
      %v1886 = vsub.s32 1, %v1885
      %v1887 = vrot.slane %v1877, %v1886
      %v1888 = vadd.f32 %v1882, %v1887
      %v1889 = vadd.f32 %v1883, %v1887
      %v1890 = vmax.f32 %v1888, 0.0
      %v1891 = vmax.f32 %v1889, 0.0
      %1892 = vst [vmem:[%s214] sm:$0xff] %v1890
      %1893 = vst [vmem:[%s214 + $0x8] sm:$0xff] %v1891
      %p1894 = scmp.lt.s32.totalorder %s15, 1
      %s1895 = scalar_select %p1894, %s15, 1
      %s1896 = smul.addr %s1895, 2
      %s1897 = smul.addr %s1896, 8
      %s1898 = scalar_lea.vmem %s4, %s1897
      // Predicated region
      $region37: #{vgg_decoder_forward.11} parent=35 // pred_check
        %p1899 = pneg %p127
      $region38: #{vgg_decoder_forward.11} parent=35 // pred_check_branch
        %1901 = sbr.rel (%p1899) target = $region40
      $region39: #{vgg_decoder_forward.11} parent=35 // pred_region
        _
      $region40: #{vgg_decoder_forward.11} parent=35 // pred_fallthru
        _
    $region36: #{vgg_decoder_forward.11} parent=5 // pred_fallthru
      _
    %p1902 = scmp.le.s32.totalorder 2, %s10
    // Predicated region
    $region41: #{vgg_decoder_forward.11} parent=5 // pred_check
      %p1903 = pneg %p1902
    $region42: #{vgg_decoder_forward.11} parent=5 // pred_check_branch
      %1905 = sbr.rel (%p1903) target = $region44
    $region43: #{vgg_decoder_forward.11} parent=5 // pred_region
      %s1906 = ssub.s32 %s10, 2
      // Predicated region
      $region45: #{vgg_decoder_forward.11} parent=43 // pred_check
        %p1907 = pneg %p133
      $region46: #{vgg_decoder_forward.11} parent=43 // pred_check_branch
        %1909 = sbr.rel (%p1907) target = $region48
      $region47: #{vgg_decoder_forward.11} parent=43 // pred_region
        %p1910 = scmp.lt.s32.totalorder %s16, 1
        %s1911 = scalar_select %p1910, %s16, 1
        %s1912 = smul.addr %s1911, 2
        %s1913 = smul.addr %s1912, 8
        %s1914 = scalar_lea.vmem %s4, %s1913
      $region48: #{vgg_decoder_forward.11} parent=43 // pred_fallthru
        _
    $region44: #{vgg_decoder_forward.11} parent=5 // pred_fallthru
      _
  $region6: #{vgg_decoder_forward.11} parent=0 // loop_footer
    %s14 = sadd.s32 1, %s10
  $region7: #{vgg_decoder_forward.11} parent=0 // loop_footer_branch
    %9 = sbr.rel target = $region3
  $region8: #{vgg_decoder_forward.11} parent=0 // loop_exit
    _

// kernel: vgg_decoder_forward.12
$region0: #{vgg_decoder_forward.12}
  #allocation0 [shape = 'u32[]', space=smem, size = 0x4, offset = 0x4, fixed_abs, tag = 'smem constant byte address 0x4 - core index']
  #allocation1 [shape = 'u32[144,128]{1,0:T(1,128)}', space=vmem, size = 0x12000, scoped, tag = 'internal scratch']
  %s0 = inlined_call_operand.vmem [shape: bf16[2,64,1152], index: 0, kind: input, shape index: {}]
  %s1 = inlined_call_operand.vmem [shape: bf16[1152,128], index: 1, kind: input, shape index: {}]
  %s2 = inlined_call_operand.vmem [shape: f32[1,128], index: 2, kind: input, shape index: {}]
  %s3 = inlined_call_operand.vmem [shape: f32[2,2,128], index: 3, kind: input, shape index: {}]
  %s4 = inlined_call_operand.vmem [shape: f32[2,64,128], index: 4, kind: output, shape index: {}]
  %s5 = sld [smem:[#allocation0]]
  $region49: #{vgg_decoder_forward.12} parent=0
    _
  %s7 = ssub.s32 1, %s5
  %s8 = scalar_select 0, %s7, %s5
  loop: start=0, step=1, limit=4
  $region2: #{vgg_decoder_forward.12} parent=0 // loop_pre_header
    _
  $region3: #{vgg_decoder_forward.12} parent=0 // loop_header
    %s10 = sphi 0, %s14
    %p11 = scmp.ge.s32.totalorder %s10, 4
    %s20 = sphi 0, %s22
    %s23 = sphi 0, %s20
    %s24 = sphi 0, %s23
    %s40 = sphi 0, %s24
    %s44 = sphi 0, %s44
    %s46 = sphi 0, %s44
    %s47 = sphi 0, %s46
    %s61 = sphi 0, %s47
    %s65 = sphi 0, %s65
    %s67 = sphi 0, %s65
    %s68 = sphi 0, %s67
    %s82 = sphi 0, %s68
    %s88 = sphi 0, %s90
    %s91 = sphi 0, %s88
    %s92 = sphi 0, %s91
    %s108 = sphi 0, %s92
    %s114 = sphi 0, %s116
    %s117 = sphi 0, %s114
    %s118 = sphi 0, %s117
    %s134 = sphi 0, %s118
  $region4: #{vgg_decoder_forward.12} parent=0 // loop_header_branch
    %13 = sbr.rel (%p11) target = $region8
  $region5: #{vgg_decoder_forward.12} parent=0 // loop_body
    %s15 = ssub.s32 %s10, 1
    %s16 = ssub.s32 %s10, 2
    %s17 = sadd.s32 %s10, 1
    %s18 = ssub.s32 %s10, %s17
    %p19 = scmp.eq.s32.totalorder %s18, 0
    %s21 = sadd.s32 %s20, 1
    %s22 = scalar_select %p19, %s20, %s21
    %p25 = pneg %p19
    %p26 = scmp.eq.s32.totalorder %s10, 1
    %p27 = por %p25, %p26
    %p28 = scmp.ne.s32.totalorder %s20, %s23
    %p29 = scmp.eq.s32.totalorder %s10, 0
    %p30 = por %p28, %p29
    %p31 = scmp.ne.s32.totalorder %s20, %s23
    %p32 = scmp.eq.s32.totalorder %s15, 1
    %p33 = por %p31, %p32
    %p34 = scmp.ne.s32.totalorder %s23, %s24
    %p35 = scmp.eq.s32.totalorder %s15, 0
    %p36 = por %p34, %p35
    %p37 = scmp.ne.s32.totalorder %s23, %s24
    %p38 = scmp.eq.s32.totalorder %s16, 1
    %p39 = por %p37, %p38
    %p41 = scmp.ne.s32.totalorder %s24, %s40
    %p42 = scmp.eq.s32.totalorder %s16, 0
    %p43 = por %p41, %p42
    %s45 = sadd.s32 %s44, 1
    %p48 = scmp.eq.s32.totalorder %s10, 1
    %p49 = scmp.ne.s32.totalorder %s44, %s46
    %p50 = scmp.eq.s32.totalorder %s10, 0
    %p51 = por %p49, %p50
    %p52 = scmp.ne.s32.totalorder %s44, %s46
    %p53 = scmp.eq.s32.totalorder %s15, 1
    %p54 = por %p52, %p53
    %p55 = scmp.ne.s32.totalorder %s46, %s47
    %p56 = scmp.eq.s32.totalorder %s15, 0
    %p57 = por %p55, %p56
    %p58 = scmp.ne.s32.totalorder %s46, %s47
    %p59 = scmp.eq.s32.totalorder %s16, 1
    %p60 = por %p58, %p59
    %p62 = scmp.ne.s32.totalorder %s47, %s61
    %p63 = scmp.eq.s32.totalorder %s16, 0
    %p64 = por %p62, %p63
    %s66 = sadd.s32 %s65, 1
    %p69 = scmp.eq.s32.totalorder %s10, 1
    %p70 = scmp.ne.s32.totalorder %s65, %s67
    %p71 = scmp.eq.s32.totalorder %s10, 0
    %p72 = por %p70, %p71
    %p73 = scmp.ne.s32.totalorder %s65, %s67
    %p74 = scmp.eq.s32.totalorder %s15, 1
    %p75 = por %p73, %p74
    %p76 = scmp.ne.s32.totalorder %s67, %s68
    %p77 = scmp.eq.s32.totalorder %s15, 0
    %p78 = por %p76, %p77
    %p79 = scmp.ne.s32.totalorder %s67, %s68
    %p80 = scmp.eq.s32.totalorder %s16, 1
    %p81 = por %p79, %p80
    %p83 = scmp.ne.s32.totalorder %s68, %s82
    %p84 = scmp.eq.s32.totalorder %s16, 0
    %p85 = por %p83, %p84
    %s86 = ssub.s32 %s10, %s17
    %p87 = scmp.eq.s32.totalorder %s86, 0
    %s89 = sadd.s32 %s88, 1
    %s90 = scalar_select %p87, %s88, %s89
    %p93 = pneg %p87
    %p94 = scmp.eq.s32.totalorder %s10, 1
    %p95 = por %p93, %p94
    %p96 = scmp.ne.s32.totalorder %s88, %s91
    %p97 = scmp.eq.s32.totalorder %s10, 0
    %p98 = por %p96, %p97
    %p99 = scmp.ne.s32.totalorder %s88, %s91
    %p100 = scmp.eq.s32.totalorder %s15, 1
    %p101 = por %p99, %p100
    %p102 = scmp.ne.s32.totalorder %s91, %s92
    %p103 = scmp.eq.s32.totalorder %s15, 0
    %p104 = por %p102, %p103
    %p105 = scmp.ne.s32.totalorder %s91, %s92
    %p106 = scmp.eq.s32.totalorder %s16, 1
    %p107 = por %p105, %p106
    %p109 = scmp.ne.s32.totalorder %s92, %s108
    %p110 = scmp.eq.s32.totalorder %s16, 0
    %p111 = por %p109, %p110
    %s112 = ssub.s32 %s10, %s17
    %p113 = scmp.eq.s32.totalorder %s112, 0
    %s115 = sadd.s32 %s114, 1
    %s116 = scalar_select %p113, %s114, %s115
    %p119 = pneg %p113
    %p120 = scmp.eq.s32.totalorder %s10, 1
    %p121 = por %p119, %p120
    %p122 = scmp.ne.s32.totalorder %s114, %s117
    %p123 = scmp.eq.s32.totalorder %s10, 0
    %p124 = por %p122, %p123
    %p125 = scmp.ne.s32.totalorder %s114, %s117
    %p126 = scmp.eq.s32.totalorder %s15, 1
    %p127 = por %p125, %p126
    %p128 = scmp.ne.s32.totalorder %s117, %s118
    %p129 = scmp.eq.s32.totalorder %s15, 0
    %p130 = por %p128, %p129
    %p131 = scmp.ne.s32.totalorder %s117, %s118
    %p132 = scmp.eq.s32.totalorder %s16, 1
    %p133 = por %p131, %p132
    %p135 = scmp.ne.s32.totalorder %s118, %s134
    %p136 = scmp.eq.s32.totalorder %s16, 0
    %p137 = por %p135, %p136
    %p138 = scmp.le.s32.totalorder 1, %s10
    %p139 = scmp.lt.s32.totalorder %s10, 3
    %p140 = pnand %p138, %p139
    %p141 = pneg %p140
    // Predicated region
    $region9: #{vgg_decoder_forward.12} parent=5 // pred_check
      _
    $region10: #{vgg_decoder_forward.12} parent=5 // pred_check_branch
      %143 = sbr.rel (%p140) target = $region12
    $region11: #{vgg_decoder_forward.12} parent=5 // pred_region
      %s144 = ssub.s32 %s10, 1
      // Predicated region
      $region13: #{vgg_decoder_forward.12} parent=11 // pred_check
        %p145 = pneg %p57
      $region14: #{vgg_decoder_forward.12} parent=11 // pred_check_branch
        %147 = sbr.rel (%p145) target = $region16
      $region15: #{vgg_decoder_forward.12} parent=11 // pred_region
        _
      $region16: #{vgg_decoder_forward.12} parent=11 // pred_fallthru
        _
      // Predicated region
      $region17: #{vgg_decoder_forward.12} parent=11 // pred_check
        %p148 = pneg %p78
      $region18: #{vgg_decoder_forward.12} parent=11 // pred_check_branch
        %150 = sbr.rel (%p148) target = $region20
      $region19: #{vgg_decoder_forward.12} parent=11 // pred_region
        _
      $region20: #{vgg_decoder_forward.12} parent=11 // pred_fallthru
        _
    $region12: #{vgg_decoder_forward.12} parent=5 // pred_fallthru
      _
    %p151 = scmp.lt.s32.totalorder %s10, 2
    // Predicated region
    $region21: #{vgg_decoder_forward.12} parent=5 // pred_check
      %p152 = pneg %p151
    $region22: #{vgg_decoder_forward.12} parent=5 // pred_check_branch
      %154 = sbr.rel (%p152) target = $region24
    $region23: #{vgg_decoder_forward.12} parent=5 // pred_region
      // Predicated region
      $region25: #{vgg_decoder_forward.12} parent=23 // pred_check
        %p155 = pneg %p30
      $region26: #{vgg_decoder_forward.12} parent=23 // pred_check_branch
        %157 = sbr.rel (%p155) target = $region28
      $region27: #{vgg_decoder_forward.12} parent=23 // pred_region
        %p158 = scmp.lt.s32.totalorder %s10, 1
        %s159 = scalar_select %p158, %s10, 1
        %s160 = smul.addr %s159, 72
        %s161 = smul.addr %s160, 4
        %s162 = scalar_lea.vmem %s0, %s161
      $region28: #{vgg_decoder_forward.12} parent=23 // pred_fallthru
        _
      // Predicated region
      $region29: #{vgg_decoder_forward.12} parent=23 // pred_check
        %p163 = pneg %p98
      $region30: #{vgg_decoder_forward.12} parent=23 // pred_check_branch
        %165 = sbr.rel (%p163) target = $region32
      $region31: #{vgg_decoder_forward.12} parent=23 // pred_region
        %p166 = scmp.lt.s32.totalorder %s10, 1
        %s167 = scalar_select %p166, %s10, 1
        %s168 = smul.addr %s167, 2
        %s169 = scalar_lea.vmem %s3, %s168
      $region32: #{vgg_decoder_forward.12} parent=23 // pred_fallthru
        _
    $region24: #{vgg_decoder_forward.12} parent=5 // pred_fallthru
      _
    %p170 = scmp.le.s32.totalorder 1, %s10
    %p171 = scmp.lt.s32.totalorder %s10, 3
    %p172 = pnand %p170, %p171
    %p173 = pneg %p172
    // Predicated region
    $region33: #{vgg_decoder_forward.12} parent=5 // pred_check
      _
    $region34: #{vgg_decoder_forward.12} parent=5 // pred_check_branch
      %175 = sbr.rel (%p172) target = $region36
    $region35: #{vgg_decoder_forward.12} parent=5 // pred_region
      %s176 = ssub.s32 %s10, 1
      %p177 = scmp.lt.s32.totalorder %s15, 1
      %s178 = scalar_select %p177, %s15, 1
      %s179 = smul.addr %s178, 72
      %s180 = smul.addr %s179, 4
      %s181 = scalar_lea.vmem %s0, %s180
      %p182 = pneg %p36
      %p183 = pneg %p33
      %p184 = pneg %p57
      %p185 = pneg %p54
      %p186 = pneg %p78
      %p187 = pneg %p75
      %p188 = scmp.lt.s32.totalorder %s15, 1
      %s189 = scalar_select %p188, %s15, 1
      %s190 = smul.addr %s189, 2
      %s191 = scalar_lea.vmem %s3, %s190
      %p192 = pneg %p104
      %p193 = pneg %p101
      %p194 = pneg %p130
      %p195 = pneg %p127
      %p196 = scmp.lt.s32.totalorder %s15, 1
      %s197 = scalar_select %p196, %s15, 1
      %s198 = smul.addr %s197, 8
      %s199 = smul.addr %s198, 8
      %s200 = scalar_lea.vmem %s4, %s199
      %p201 = scmp.lt.s32.totalorder %s15, 1
      %s202 = scalar_select %p201, %s15, 1
      %s203 = smul.addr %s202, 72
      %s204 = smul.addr %s203, 4
      %s205 = scalar_lea.vmem %s0, %s204
      %p206 = scmp.lt.s32.totalorder %s15, 1
      %s207 = scalar_select %p206, %s15, 1
      %s208 = smul.addr %s207, 2
      %s209 = scalar_lea.vmem %s3, %s208
      %p210 = scmp.lt.s32.totalorder %s15, 1
      %s211 = scalar_select %p210, %s15, 1
      %s212 = smul.addr %s211, 8
      %s213 = smul.addr %s212, 8
      %s214 = scalar_lea.vmem %s4, %s213
      %v216 = vld [vmem:[%s205] sm:$0xff]
      %v217 = vld [vmem:[%s205 + $0x8] sm:$0xff]
      %v218 = vld [vmem:[%s205 + $0x10] sm:$0xff]
      %v219 = vld [vmem:[%s205 + $0x18] sm:$0xff]
      %v220 = vld [vmem:[%s205 + $0x20] sm:$0xf]
      %v221 = vld [vmem:[%s205 + $0x24] sm:$0xff]
      %v222 = vld [vmem:[%s205 + $0x2c] sm:$0xff]
      %v223 = vld [vmem:[%s205 + $0x34] sm:$0xff]
      %v224 = vld [vmem:[%s205 + $0x3c] sm:$0xff]
      %v225 = vld [vmem:[%s205 + $0x44] sm:$0xf]
      %v226 = vld [vmem:[%s205 + $0x48] sm:$0xff]
      %v227 = vld [vmem:[%s205 + $0x50] sm:$0xff]
      %v228 = vld [vmem:[%s205 + $0x58] sm:$0xff]
      %v229 = vld [vmem:[%s205 + $0x60] sm:$0xff]
      %v230 = vld [vmem:[%s205 + $0x68] sm:$0xf]
      %v231 = vld [vmem:[%s205 + $0x6c] sm:$0xff]
      %v232 = vld [vmem:[%s205 + $0x74] sm:$0xff]
      %v233 = vld [vmem:[%s205 + $0x7c] sm:$0xff]
      %v234 = vld [vmem:[%s205 + $0x84] sm:$0xff]
      %v235 = vld [vmem:[%s205 + $0x8c] sm:$0xf]
      %v236 = vld [vmem:[%s205 + $0x90] sm:$0xff]
      %v237 = vld [vmem:[%s205 + $0x98] sm:$0xff]
      %v238 = vld [vmem:[%s205 + $0xa0] sm:$0xff]
      %v239 = vld [vmem:[%s205 + $0xa8] sm:$0xff]
      %v240 = vld [vmem:[%s205 + $0xb0] sm:$0xf]
      %v241 = vld [vmem:[%s205 + $0xb4] sm:$0xff]
      %v242 = vld [vmem:[%s205 + $0xbc] sm:$0xff]
      %v243 = vld [vmem:[%s205 + $0xc4] sm:$0xff]
      %v244 = vld [vmem:[%s205 + $0xcc] sm:$0xff]
      %v245 = vld [vmem:[%s205 + $0xd4] sm:$0xf]
      %v246 = vld [vmem:[%s205 + $0xd8] sm:$0xff]
      %v247 = vld [vmem:[%s205 + $0xe0] sm:$0xff]
      %v248 = vld [vmem:[%s205 + $0xe8] sm:$0xff]
      %v249 = vld [vmem:[%s205 + $0xf0] sm:$0xff]
      %v250 = vld [vmem:[%s205 + $0xf8] sm:$0xf]
      %v251 = vld [vmem:[%s205 + $0xfc] sm:$0xff]
      %v252 = vld [vmem:[%s205 + $0x104] sm:$0xff]
      %v253 = vld [vmem:[%s205 + $0x10c] sm:$0xff]
      %v254 = vld [vmem:[%s205 + $0x114] sm:$0xff]
      %v255 = vld [vmem:[%s205 + $0x11c] sm:$0xf]
      %v256 = vld [vmem:[%s1] sm:$0xf]
      %v257 = vld [vmem:[%s1 + $0x4] sm:$0xf]
      %v258 = vld [vmem:[%s1 + $0x8] sm:$0xf]
      %v259 = vld [vmem:[%s1 + $0xc] sm:$0xf]
      %v260 = vld [vmem:[%s1 + $0x10] sm:$0xf]
      %v261 = vld [vmem:[%s1 + $0x14] sm:$0xf]
      %v262 = vld [vmem:[%s1 + $0x18] sm:$0xf]
      %v263 = vld [vmem:[%s1 + $0x1c] sm:$0xf]
      %v264 = vld [vmem:[%s1 + $0x20] sm:$0xf]
      %v265 = vld [vmem:[%s1 + $0x24] sm:$0xf]
      %v266 = vld [vmem:[%s1 + $0x28] sm:$0xf]
      %v267 = vld [vmem:[%s1 + $0x2c] sm:$0xf]
      %v268 = vld [vmem:[%s1 + $0x30] sm:$0xf]
      %v269 = vld [vmem:[%s1 + $0x34] sm:$0xf]
      %v270 = vld [vmem:[%s1 + $0x38] sm:$0xf]
      %v271 = vld [vmem:[%s1 + $0x3c] sm:$0xf]
      %v272 = vld [vmem:[%s1 + $0x40] sm:$0xf]
      %v273 = vld [vmem:[%s1 + $0x44] sm:$0xf]
      %v274 = vld [vmem:[%s1 + $0x48] sm:$0xf]
      %v275 = vld [vmem:[%s1 + $0x4c] sm:$0xf]
      %v276 = vld [vmem:[%s1 + $0x50] sm:$0xf]
      %v277 = vld [vmem:[%s1 + $0x54] sm:$0xf]
      %v278 = vld [vmem:[%s1 + $0x58] sm:$0xf]
      %v279 = vld [vmem:[%s1 + $0x5c] sm:$0xf]
      %v280 = vld [vmem:[%s1 + $0x60] sm:$0xf]
      %v281 = vld [vmem:[%s1 + $0x64] sm:$0xf]
      %v282 = vld [vmem:[%s1 + $0x68] sm:$0xf]
      %v283 = vld [vmem:[%s1 + $0x6c] sm:$0xf]
      %v284 = vld [vmem:[%s1 + $0x70] sm:$0xf]
      %v285 = vld [vmem:[%s1 + $0x74] sm:$0xf]
      %v286 = vld [vmem:[%s1 + $0x78] sm:$0xf]
      %v287 = vld [vmem:[%s1 + $0x7c] sm:$0xf]
      %v288 = vld [vmem:[%s1 + $0x80] sm:$0xf]
      %v289 = vld [vmem:[%s1 + $0x84] sm:$0xf]
      %v290 = vld [vmem:[%s1 + $0x88] sm:$0xf]
      %v291 = vld [vmem:[%s1 + $0x8c] sm:$0xf]
      %v292 = vld [vmem:[%s1 + $0x90] sm:$0xf]
      %v293 = vld [vmem:[%s1 + $0x94] sm:$0xf]
      %v294 = vld [vmem:[%s1 + $0x98] sm:$0xf]
      %v295 = vld [vmem:[%s1 + $0x9c] sm:$0xf]
      %v296 = vld [vmem:[%s1 + $0xa0] sm:$0xf]
      %v297 = vld [vmem:[%s1 + $0xa4] sm:$0xf]
      %v298 = vld [vmem:[%s1 + $0xa8] sm:$0xf]
      %v299 = vld [vmem:[%s1 + $0xac] sm:$0xf]
      %v300 = vld [vmem:[%s1 + $0xb0] sm:$0xf]
      %v301 = vld [vmem:[%s1 + $0xb4] sm:$0xf]
      %v302 = vld [vmem:[%s1 + $0xb8] sm:$0xf]
      %v303 = vld [vmem:[%s1 + $0xbc] sm:$0xf]
      %v304 = vld [vmem:[%s1 + $0xc0] sm:$0xf]
      %v305 = vld [vmem:[%s1 + $0xc4] sm:$0xf]
      %v306 = vld [vmem:[%s1 + $0xc8] sm:$0xf]
      %v307 = vld [vmem:[%s1 + $0xcc] sm:$0xf]
      %v308 = vld [vmem:[%s1 + $0xd0] sm:$0xf]
      %v309 = vld [vmem:[%s1 + $0xd4] sm:$0xf]
      %v310 = vld [vmem:[%s1 + $0xd8] sm:$0xf]
      %v311 = vld [vmem:[%s1 + $0xdc] sm:$0xf]
      %v312 = vld [vmem:[%s1 + $0xe0] sm:$0xf]
      %v313 = vld [vmem:[%s1 + $0xe4] sm:$0xf]
      %v314 = vld [vmem:[%s1 + $0xe8] sm:$0xf]
      %v315 = vld [vmem:[%s1 + $0xec] sm:$0xf]
      %v316 = vld [vmem:[%s1 + $0xf0] sm:$0xf]
      %v317 = vld [vmem:[%s1 + $0xf4] sm:$0xf]
      %v318 = vld [vmem:[%s1 + $0xf8] sm:$0xf]
      %v319 = vld [vmem:[%s1 + $0xfc] sm:$0xf]
      %v320 = vld [vmem:[%s1 + $0x100] sm:$0xf]
      %v321 = vld [vmem:[%s1 + $0x104] sm:$0xf]
      %v322 = vld [vmem:[%s1 + $0x108] sm:$0xf]
      %v323 = vld [vmem:[%s1 + $0x10c] sm:$0xf]
      %v324 = vld [vmem:[%s1 + $0x110] sm:$0xf]
      %v325 = vld [vmem:[%s1 + $0x114] sm:$0xf]
      %v326 = vld [vmem:[%s1 + $0x118] sm:$0xf]
      %v327 = vld [vmem:[%s1 + $0x11c] sm:$0xf]
      %v328 = vld [vmem:[%s1 + $0x120] sm:$0xf]
      %v329 = vld [vmem:[%s1 + $0x124] sm:$0xf]
      %v330 = vld [vmem:[%s1 + $0x128] sm:$0xf]
      %v331 = vld [vmem:[%s1 + $0x12c] sm:$0xf]
      %v332 = vld [vmem:[%s1 + $0x130] sm:$0xf]
      %v333 = vld [vmem:[%s1 + $0x134] sm:$0xf]
      %v334 = vld [vmem:[%s1 + $0x138] sm:$0xf]
      %v335 = vld [vmem:[%s1 + $0x13c] sm:$0xf]
      %v336 = vld [vmem:[%s1 + $0x140] sm:$0xf]
      %v337 = vld [vmem:[%s1 + $0x144] sm:$0xf]
      %v338 = vld [vmem:[%s1 + $0x148] sm:$0xf]
      %v339 = vld [vmem:[%s1 + $0x14c] sm:$0xf]
      %v340 = vld [vmem:[%s1 + $0x150] sm:$0xf]
      %v341 = vld [vmem:[%s1 + $0x154] sm:$0xf]
      %v342 = vld [vmem:[%s1 + $0x158] sm:$0xf]
      %v343 = vld [vmem:[%s1 + $0x15c] sm:$0xf]
      %v344 = vld [vmem:[%s1 + $0x160] sm:$0xf]
      %v345 = vld [vmem:[%s1 + $0x164] sm:$0xf]
      %v346 = vld [vmem:[%s1 + $0x168] sm:$0xf]
      %v347 = vld [vmem:[%s1 + $0x16c] sm:$0xf]
      %v348 = vld [vmem:[%s1 + $0x170] sm:$0xf]
      %v349 = vld [vmem:[%s1 + $0x174] sm:$0xf]
      %v350 = vld [vmem:[%s1 + $0x178] sm:$0xf]
      %v351 = vld [vmem:[%s1 + $0x17c] sm:$0xf]
      %v352 = vld [vmem:[%s1 + $0x180] sm:$0xf]
      %v353 = vld [vmem:[%s1 + $0x184] sm:$0xf]
      %v354 = vld [vmem:[%s1 + $0x188] sm:$0xf]
      %v355 = vld [vmem:[%s1 + $0x18c] sm:$0xf]
      %v356 = vld [vmem:[%s1 + $0x190] sm:$0xf]
      %v357 = vld [vmem:[%s1 + $0x194] sm:$0xf]
      %v358 = vld [vmem:[%s1 + $0x198] sm:$0xf]
      %v359 = vld [vmem:[%s1 + $0x19c] sm:$0xf]
      %v360 = vld [vmem:[%s1 + $0x1a0] sm:$0xf]
      %v361 = vld [vmem:[%s1 + $0x1a4] sm:$0xf]
      %v362 = vld [vmem:[%s1 + $0x1a8] sm:$0xf]
      %v363 = vld [vmem:[%s1 + $0x1ac] sm:$0xf]
      %v364 = vld [vmem:[%s1 + $0x1b0] sm:$0xf]
      %v365 = vld [vmem:[%s1 + $0x1b4] sm:$0xf]
      %v366 = vld [vmem:[%s1 + $0x1b8] sm:$0xf]
      %v367 = vld [vmem:[%s1 + $0x1bc] sm:$0xf]
      %v368 = vld [vmem:[%s1 + $0x1c0] sm:$0xf]
      %v369 = vld [vmem:[%s1 + $0x1c4] sm:$0xf]
      %v370 = vld [vmem:[%s1 + $0x1c8] sm:$0xf]
      %v371 = vld [vmem:[%s1 + $0x1cc] sm:$0xf]
      %v372 = vld [vmem:[%s1 + $0x1d0] sm:$0xf]
      %v373 = vld [vmem:[%s1 + $0x1d4] sm:$0xf]
      %v374 = vld [vmem:[%s1 + $0x1d8] sm:$0xf]
      %v375 = vld [vmem:[%s1 + $0x1dc] sm:$0xf]
      %v376 = vld [vmem:[%s1 + $0x1e0] sm:$0xf]
      %v377 = vld [vmem:[%s1 + $0x1e4] sm:$0xf]
      %v378 = vld [vmem:[%s1 + $0x1e8] sm:$0xf]
      %v379 = vld [vmem:[%s1 + $0x1ec] sm:$0xf]
      %v380 = vld [vmem:[%s1 + $0x1f0] sm:$0xf]
      %v381 = vld [vmem:[%s1 + $0x1f4] sm:$0xf]
      %v382 = vld [vmem:[%s1 + $0x1f8] sm:$0xf]
      %v383 = vld [vmem:[%s1 + $0x1fc] sm:$0xf]
      %v384 = vld [vmem:[%s1 + $0x200] sm:$0xf]
      %v385 = vld [vmem:[%s1 + $0x204] sm:$0xf]
      %v386 = vld [vmem:[%s1 + $0x208] sm:$0xf]
      %v387 = vld [vmem:[%s1 + $0x20c] sm:$0xf]
      %v388 = vld [vmem:[%s1 + $0x210] sm:$0xf]
      %v389 = vld [vmem:[%s1 + $0x214] sm:$0xf]
      %v390 = vld [vmem:[%s1 + $0x218] sm:$0xf]
      %v391 = vld [vmem:[%s1 + $0x21c] sm:$0xf]
      %v392 = vld [vmem:[%s1 + $0x220] sm:$0xf]
      %v393 = vld [vmem:[%s1 + $0x224] sm:$0xf]
      %v394 = vld [vmem:[%s1 + $0x228] sm:$0xf]
      %v395 = vld [vmem:[%s1 + $0x22c] sm:$0xf]
      %v396 = vld [vmem:[%s1 + $0x230] sm:$0xf]
      %v397 = vld [vmem:[%s1 + $0x234] sm:$0xf]
      %v398 = vld [vmem:[%s1 + $0x238] sm:$0xf]
      %v399 = vld [vmem:[%s1 + $0x23c] sm:$0xf]
      %v400 = vld [vmem:[%s2] sm:$0x1]
      %v402 = vlaneseq
      %v403 = vshrl.u32 %v402, 7
      %v404 = vsub.s32 0, %v403
      %v405 = vrot.slane %v400, %v404
      %v447 = vunpack.c.l.b16 %v216
      %v448 = vunpack.c.h.b16 %v216
      %v449 = vunpack.c.l.b16 %v217
      %v450 = vunpack.c.h.b16 %v217
      %v451 = vunpack.c.l.b16 %v218
      %v452 = vunpack.c.h.b16 %v218
      %v453 = vunpack.c.l.b16 %v219
      %v454 = vunpack.c.h.b16 %v219
      %v455 = vunpack.c.l.b16 %v220
      %v456 = vunpack.c.l.b16 %v221
      %v457 = vunpack.c.h.b16 %v221
      %v458 = vunpack.c.l.b16 %v222
      %v459 = vunpack.c.h.b16 %v222
      %v460 = vunpack.c.l.b16 %v223
      %v461 = vunpack.c.h.b16 %v223
      %v462 = vunpack.c.l.b16 %v224
      %v463 = vunpack.c.h.b16 %v224
      %v464 = vunpack.c.l.b16 %v225
      %v465 = vunpack.c.l.b16 %v226
      %v466 = vunpack.c.h.b16 %v226
      %v467 = vunpack.c.l.b16 %v227
      %v468 = vunpack.c.h.b16 %v227
      %v469 = vunpack.c.l.b16 %v228
      %v470 = vunpack.c.h.b16 %v228
      %v471 = vunpack.c.l.b16 %v229
      %v472 = vunpack.c.h.b16 %v229
      %v473 = vunpack.c.l.b16 %v230
      %v474 = vunpack.c.l.b16 %v231
      %v475 = vunpack.c.h.b16 %v231
      %v476 = vunpack.c.l.b16 %v232
      %v477 = vunpack.c.h.b16 %v232
      %v478 = vunpack.c.l.b16 %v233
      %v479 = vunpack.c.h.b16 %v233
      %v480 = vunpack.c.l.b16 %v234
      %v481 = vunpack.c.h.b16 %v234
      %v482 = vunpack.c.l.b16 %v235
      %v483 = vunpack.c.l.b16 %v236
      %v484 = vunpack.c.h.b16 %v236
      %v485 = vunpack.c.l.b16 %v237
      %v486 = vunpack.c.h.b16 %v237
      %v487 = vunpack.c.l.b16 %v238
      %v488 = vunpack.c.h.b16 %v238
      %v489 = vunpack.c.l.b16 %v239
      %v490 = vunpack.c.h.b16 %v239
      %v491 = vunpack.c.l.b16 %v240
      %v492 = vunpack.c.l.b16 %v241
      %v493 = vunpack.c.h.b16 %v241
      %v494 = vunpack.c.l.b16 %v242
      %v495 = vunpack.c.h.b16 %v242
      %v496 = vunpack.c.l.b16 %v243
      %v497 = vunpack.c.h.b16 %v243
      %v498 = vunpack.c.l.b16 %v244
      %v499 = vunpack.c.h.b16 %v244
      %v500 = vunpack.c.l.b16 %v245
      %v501 = vunpack.c.l.b16 %v246
      %v502 = vunpack.c.h.b16 %v246
      %v503 = vunpack.c.l.b16 %v247
      %v504 = vunpack.c.h.b16 %v247
      %v505 = vunpack.c.l.b16 %v248
      %v506 = vunpack.c.h.b16 %v248
      %v507 = vunpack.c.l.b16 %v249
      %v508 = vunpack.c.h.b16 %v249
      %v509 = vunpack.c.l.b16 %v250
      %v510 = vunpack.c.l.b16 %v251
      %v511 = vunpack.c.h.b16 %v251
      %v512 = vunpack.c.l.b16 %v252
      %v513 = vunpack.c.h.b16 %v252
      %v514 = vunpack.c.l.b16 %v253
      %v515 = vunpack.c.h.b16 %v253
      %v516 = vunpack.c.l.b16 %v254
      %v517 = vunpack.c.h.b16 %v254
      %v518 = vunpack.c.l.b16 %v255
      %v519 = vpack.c.b16 %v456, %v447
      %v520 = vpack.c.b16 %v457, %v448
      %v521 = vpack.c.b16 %v458, %v449
      %v522 = vpack.c.b16 %v459, %v450
      %v523 = vpack.c.b16 %v460, %v451
      %v524 = vpack.c.b16 %v461, %v452
      %v525 = vpack.c.b16 %v462, %v453
      %v526 = vpack.c.b16 %v463, %v454
      %v527 = vpack.c.b16 %v464, %v455
      %v528 = vpack.c.b16 %v474, %v465
      %v529 = vpack.c.b16 %v475, %v466
      %v530 = vpack.c.b16 %v476, %v467
      %v531 = vpack.c.b16 %v477, %v468
      %v532 = vpack.c.b16 %v478, %v469
      %v533 = vpack.c.b16 %v479, %v470
      %v534 = vpack.c.b16 %v480, %v471
      %v535 = vpack.c.b16 %v481, %v472
      %v536 = vpack.c.b16 %v482, %v473
      %v537 = vpack.c.b16 %v492, %v483
      %v538 = vpack.c.b16 %v493, %v484
      %v539 = vpack.c.b16 %v494, %v485
      %v540 = vpack.c.b16 %v495, %v486
      %v541 = vpack.c.b16 %v496, %v487
      %v542 = vpack.c.b16 %v497, %v488
      %v543 = vpack.c.b16 %v498, %v489
      %v544 = vpack.c.b16 %v499, %v490
      %v545 = vpack.c.b16 %v500, %v491
      %v546 = vpack.c.b16 %v510, %v501
      %v547 = vpack.c.b16 %v511, %v502
      %v548 = vpack.c.b16 %v512, %v503
      %v549 = vpack.c.b16 %v513, %v504
      %v550 = vpack.c.b16 %v514, %v505
      %v551 = vpack.c.b16 %v515, %v506
      %v552 = vpack.c.b16 %v516, %v507
      %v553 = vpack.c.b16 %v517, %v508
      %v554 = vpack.c.b16 %v518, %v509
      %v735 = vunpack.c.l.b16 %v256
      %v736 = vunpack.c.l.b16 %v257
      %v737 = vunpack.c.l.b16 %v258
      %v738 = vunpack.c.l.b16 %v259
      %v739 = vunpack.c.l.b16 %v260
      %v740 = vunpack.c.l.b16 %v261
      %v741 = vunpack.c.l.b16 %v262
      %v742 = vunpack.c.l.b16 %v263
      %v743 = vunpack.c.l.b16 %v264
      %v744 = vunpack.c.l.b16 %v265
      %v745 = vunpack.c.l.b16 %v266
      %v746 = vunpack.c.l.b16 %v267
      %v747 = vunpack.c.l.b16 %v268
      %v748 = vunpack.c.l.b16 %v269
      %v749 = vunpack.c.l.b16 %v270
      %v750 = vunpack.c.l.b16 %v271
      %v751 = vunpack.c.l.b16 %v272
      %v752 = vunpack.c.l.b16 %v273
      %v753 = vunpack.c.l.b16 %v274
      %v754 = vunpack.c.l.b16 %v275
      %v755 = vunpack.c.l.b16 %v276
      %v756 = vunpack.c.l.b16 %v277
      %v757 = vunpack.c.l.b16 %v278
      %v758 = vunpack.c.l.b16 %v279
      %v759 = vunpack.c.l.b16 %v280
      %v760 = vunpack.c.l.b16 %v281
      %v761 = vunpack.c.l.b16 %v282
      %v762 = vunpack.c.l.b16 %v283
      %v763 = vunpack.c.l.b16 %v284
      %v764 = vunpack.c.l.b16 %v285
      %v765 = vunpack.c.l.b16 %v286
      %v766 = vunpack.c.l.b16 %v287
      %v767 = vunpack.c.l.b16 %v288
      %v768 = vunpack.c.l.b16 %v289
      %v769 = vunpack.c.l.b16 %v290
      %v770 = vunpack.c.l.b16 %v291
      %v771 = vunpack.c.l.b16 %v292
      %v772 = vunpack.c.l.b16 %v293
      %v773 = vunpack.c.l.b16 %v294
      %v774 = vunpack.c.l.b16 %v295
      %v775 = vunpack.c.l.b16 %v296
      %v776 = vunpack.c.l.b16 %v297
      %v777 = vunpack.c.l.b16 %v298
      %v778 = vunpack.c.l.b16 %v299
      %v779 = vunpack.c.l.b16 %v300
      %v780 = vunpack.c.l.b16 %v301
      %v781 = vunpack.c.l.b16 %v302
      %v782 = vunpack.c.l.b16 %v303
      %v783 = vunpack.c.l.b16 %v304
      %v784 = vunpack.c.l.b16 %v305
      %v785 = vunpack.c.l.b16 %v306
      %v786 = vunpack.c.l.b16 %v307
      %v787 = vunpack.c.l.b16 %v308
      %v788 = vunpack.c.l.b16 %v309
      %v789 = vunpack.c.l.b16 %v310
      %v790 = vunpack.c.l.b16 %v311
      %v791 = vunpack.c.l.b16 %v312
      %v792 = vunpack.c.l.b16 %v313
      %v793 = vunpack.c.l.b16 %v314
      %v794 = vunpack.c.l.b16 %v315
      %v795 = vunpack.c.l.b16 %v316
      %v796 = vunpack.c.l.b16 %v317
      %v797 = vunpack.c.l.b16 %v318
      %v798 = vunpack.c.l.b16 %v319
      %v799 = vunpack.c.l.b16 %v320
      %v800 = vunpack.c.l.b16 %v321
      %v801 = vunpack.c.l.b16 %v322
      %v802 = vunpack.c.l.b16 %v323
      %v803 = vunpack.c.l.b16 %v324
      %v804 = vunpack.c.l.b16 %v325
      %v805 = vunpack.c.l.b16 %v326
      %v806 = vunpack.c.l.b16 %v327
      %v807 = vunpack.c.l.b16 %v328
      %v808 = vunpack.c.l.b16 %v329
      %v809 = vunpack.c.l.b16 %v330
      %v810 = vunpack.c.l.b16 %v331
      %v811 = vunpack.c.l.b16 %v332
      %v812 = vunpack.c.l.b16 %v333
      %v813 = vunpack.c.l.b16 %v334
      %v814 = vunpack.c.l.b16 %v335
      %v815 = vunpack.c.l.b16 %v336
      %v816 = vunpack.c.l.b16 %v337
      %v817 = vunpack.c.l.b16 %v338
      %v818 = vunpack.c.l.b16 %v339
      %v819 = vunpack.c.l.b16 %v340
      %v820 = vunpack.c.l.b16 %v341
      %v821 = vunpack.c.l.b16 %v342
      %v822 = vunpack.c.l.b16 %v343
      %v823 = vunpack.c.l.b16 %v344
      %v824 = vunpack.c.l.b16 %v345
      %v825 = vunpack.c.l.b16 %v346
      %v826 = vunpack.c.l.b16 %v347
      %v827 = vunpack.c.l.b16 %v348
      %v828 = vunpack.c.l.b16 %v349
      %v829 = vunpack.c.l.b16 %v350
      %v830 = vunpack.c.l.b16 %v351
      %v831 = vunpack.c.l.b16 %v352
      %v832 = vunpack.c.l.b16 %v353
      %v833 = vunpack.c.l.b16 %v354
      %v834 = vunpack.c.l.b16 %v355
      %v835 = vunpack.c.l.b16 %v356
      %v836 = vunpack.c.l.b16 %v357
      %v837 = vunpack.c.l.b16 %v358
      %v838 = vunpack.c.l.b16 %v359
      %v839 = vunpack.c.l.b16 %v360
      %v840 = vunpack.c.l.b16 %v361
      %v841 = vunpack.c.l.b16 %v362
      %v842 = vunpack.c.l.b16 %v363
      %v843 = vunpack.c.l.b16 %v364
      %v844 = vunpack.c.l.b16 %v365
      %v845 = vunpack.c.l.b16 %v366
      %v846 = vunpack.c.l.b16 %v367
      %v847 = vunpack.c.l.b16 %v368
      %v848 = vunpack.c.l.b16 %v369
      %v849 = vunpack.c.l.b16 %v370
      %v850 = vunpack.c.l.b16 %v371
      %v851 = vunpack.c.l.b16 %v372
      %v852 = vunpack.c.l.b16 %v373
      %v853 = vunpack.c.l.b16 %v374
      %v854 = vunpack.c.l.b16 %v375
      %v855 = vunpack.c.l.b16 %v376
      %v856 = vunpack.c.l.b16 %v377
      %v857 = vunpack.c.l.b16 %v378
      %v858 = vunpack.c.l.b16 %v379
      %v859 = vunpack.c.l.b16 %v380
      %v860 = vunpack.c.l.b16 %v381
      %v861 = vunpack.c.l.b16 %v382
      %v862 = vunpack.c.l.b16 %v383
      %v863 = vunpack.c.l.b16 %v384
      %v864 = vunpack.c.l.b16 %v385
      %v865 = vunpack.c.l.b16 %v386
      %v866 = vunpack.c.l.b16 %v387
      %v867 = vunpack.c.l.b16 %v388
      %v868 = vunpack.c.l.b16 %v389
      %v869 = vunpack.c.l.b16 %v390
      %v870 = vunpack.c.l.b16 %v391
      %v871 = vunpack.c.l.b16 %v392
      %v872 = vunpack.c.l.b16 %v393
      %v873 = vunpack.c.l.b16 %v394
      %v874 = vunpack.c.l.b16 %v395
      %v875 = vunpack.c.l.b16 %v396
      %v876 = vunpack.c.l.b16 %v397
      %v877 = vunpack.c.l.b16 %v398
      %v878 = vunpack.c.l.b16 %v399
      %v879 = vpack.c.b16 %v736, %v735
      %v880 = vpack.c.b16 %v738, %v737
      %v881 = vpack.c.b16 %v740, %v739
      %v882 = vpack.c.b16 %v742, %v741
      %v883 = vpack.c.b16 %v744, %v743
      %v884 = vpack.c.b16 %v746, %v745
      %v885 = vpack.c.b16 %v748, %v747
      %v886 = vpack.c.b16 %v750, %v749
      %v887 = vpack.c.b16 %v752, %v751
      %v888 = vpack.c.b16 %v754, %v753
      %v889 = vpack.c.b16 %v756, %v755
      %v890 = vpack.c.b16 %v758, %v757
      %v891 = vpack.c.b16 %v760, %v759
      %v892 = vpack.c.b16 %v762, %v761
      %v893 = vpack.c.b16 %v764, %v763
      %v894 = vpack.c.b16 %v766, %v765
      %v895 = vpack.c.b16 %v768, %v767
      %v896 = vpack.c.b16 %v770, %v769
      %v897 = vpack.c.b16 %v772, %v771
      %v898 = vpack.c.b16 %v774, %v773
      %v899 = vpack.c.b16 %v776, %v775
      %v900 = vpack.c.b16 %v778, %v777
      %v901 = vpack.c.b16 %v780, %v779
      %v902 = vpack.c.b16 %v782, %v781
      %v903 = vpack.c.b16 %v784, %v783
      %v904 = vpack.c.b16 %v786, %v785
      %v905 = vpack.c.b16 %v788, %v787
      %v906 = vpack.c.b16 %v790, %v789
      %v907 = vpack.c.b16 %v792, %v791
      %v908 = vpack.c.b16 %v794, %v793
      %v909 = vpack.c.b16 %v796, %v795
      %v910 = vpack.c.b16 %v798, %v797
      %v911 = vpack.c.b16 %v800, %v799
      %v912 = vpack.c.b16 %v802, %v801
      %v913 = vpack.c.b16 %v804, %v803
      %v914 = vpack.c.b16 %v806, %v805
      %v915 = vpack.c.b16 %v808, %v807
      %v916 = vpack.c.b16 %v810, %v809
      %v917 = vpack.c.b16 %v812, %v811
      %v918 = vpack.c.b16 %v814, %v813
      %v919 = vpack.c.b16 %v816, %v815
      %v920 = vpack.c.b16 %v818, %v817
      %v921 = vpack.c.b16 %v820, %v819
      %v922 = vpack.c.b16 %v822, %v821
      %v923 = vpack.c.b16 %v824, %v823
      %v924 = vpack.c.b16 %v826, %v825
      %v925 = vpack.c.b16 %v828, %v827
      %v926 = vpack.c.b16 %v830, %v829
      %v927 = vpack.c.b16 %v832, %v831
      %v928 = vpack.c.b16 %v834, %v833
      %v929 = vpack.c.b16 %v836, %v835
      %v930 = vpack.c.b16 %v838, %v837
      %v931 = vpack.c.b16 %v840, %v839
      %v932 = vpack.c.b16 %v842, %v841
      %v933 = vpack.c.b16 %v844, %v843
      %v934 = vpack.c.b16 %v846, %v845
      %v935 = vpack.c.b16 %v848, %v847
      %v936 = vpack.c.b16 %v850, %v849
      %v937 = vpack.c.b16 %v852, %v851
      %v938 = vpack.c.b16 %v854, %v853
      %v939 = vpack.c.b16 %v856, %v855
      %v940 = vpack.c.b16 %v858, %v857
      %v941 = vpack.c.b16 %v860, %v859
      %v942 = vpack.c.b16 %v862, %v861
      %v943 = vpack.c.b16 %v864, %v863
      %v944 = vpack.c.b16 %v866, %v865
      %v945 = vpack.c.b16 %v868, %v867
      %v946 = vpack.c.b16 %v870, %v869
      %v947 = vpack.c.b16 %v872, %v871
      %v948 = vpack.c.b16 %v874, %v873
      %v949 = vpack.c.b16 %v876, %v875
      %v950 = vpack.c.b16 %v878, %v877
      %1023 = vmatprep.subr.bf16.mxu0 0
      %1024 = vmatpush1.bf16.msra.mxu0 %v886
      %1025 = vmatprep.subr.bf16.mxu0 0
      %1026 = vmatpush1.bf16.msra.mxu0 %v885
      %1027 = vmatprep.subr.bf16.mxu0 0
      %1028 = vmatpush1.bf16.msra.mxu0 %v884
      %1029 = vmatprep.subr.bf16.mxu0 0
      %1030 = vmatpush1.bf16.msra.mxu0 %v883
      %1031 = vmatprep.subr.bf16.mxu0 0
      %1032 = vmatpush1.bf16.msra.mxu0 %v882
      %1033 = vmatprep.subr.bf16.mxu0 0
      %1034 = vmatpush1.bf16.msra.mxu0 %v881
      %1035 = vmatprep.subr.bf16.mxu0 0
      %1036 = vmatpush1.bf16.msra.mxu0 %v880
      %1037 = vmatprep.subr.bf16.mxu0 0
      %1038 = vmatpush1.bf16.msra.mxu0 %v879
      %1039 = vmatprep.subr.bf16.mxu0 0
      %1040 = vmatpush2.bf16.msra.mxu0 %v894
      %1041 = vmatprep.subr.bf16.mxu0 0
      %1042 = vmatpush2.bf16.msra.mxu0 %v893
      %1043 = vmatprep.subr.bf16.mxu0 0
      %1044 = vmatpush2.bf16.msra.mxu0 %v892
      %1045 = vmatprep.subr.bf16.mxu0 0
      %1046 = vmatpush2.bf16.msra.mxu0 %v891
      %1047 = vmatprep.subr.bf16.mxu0 0
      %1048 = vmatpush2.bf16.msra.mxu0 %v890
      %1049 = vmatprep.subr.bf16.mxu0 0
      %1050 = vmatpush2.bf16.msra.mxu0 %v889
      %1051 = vmatprep.subr.bf16.mxu0 0
      %1052 = vmatpush2.bf16.msra.mxu0 %v888
      %1053 = vmatprep.subr.bf16.mxu0 0
      %1054 = vmatpush2.bf16.msra.mxu0 %v887
      %1055 = vmatprep.mubr.bf16.mxu0 %v520
      %1056 = vmatmul.mubr.bf16.gmra.mxu0 %v519
      %v1057 = vpop.f32.mrf.mxu0
      %v1058 = vadd.f32 %v405, %v1057
      %v1059 = vpop.f32.mrf.mxu0
      %v1060 = vpop.f32.mrf.mxu0
      %v1061 = vadd.f32 %v405, %v1060
      %v1062 = vpop.f32.mrf.mxu0
      %1063 = vmatprep.mubr.bf16.mxu0 %v529
      %1064 = vmatmul.mubr.bf16.gmra.mxu0 %v528
      %v1065 = vpop.f32.mrf.mxu0
      %v1066 = vadd.f32 %v405, %v1065
      %v1067 = vpop.f32.mrf.mxu0
      %v1068 = vpop.f32.mrf.mxu0
      %v1069 = vadd.f32 %v405, %v1068
      %v1070 = vpop.f32.mrf.mxu0
      %1071 = vmatprep.mubr.bf16.mxu0 %v538
      %1072 = vmatmul.mubr.bf16.gmra.mxu0 %v537
      %v1073 = vpop.f32.mrf.mxu0
      %v1074 = vadd.f32 %v405, %v1073
      %v1075 = vpop.f32.mrf.mxu0
      %v1076 = vpop.f32.mrf.mxu0
      %v1077 = vadd.f32 %v405, %v1076
      %v1078 = vpop.f32.mrf.mxu0
      %1079 = vmatprep.mubr.bf16.mxu0 %v547
      %1080 = vmatmul.mubr.bf16.gmra.mxu0 %v546
      %v1081 = vpop.f32.mrf.mxu0
      %v1082 = vadd.f32 %v405, %v1081
      %v1083 = vpop.f32.mrf.mxu0
      %v1084 = vpop.f32.mrf.mxu0
      %v1085 = vadd.f32 %v405, %v1084
      %v1086 = vpop.f32.mrf.mxu0
      %1087 = vdwg.mxu0
      %1088 = vmatprep.subr.bf16.mxu0 0
      %1089 = vmatpush1.bf16.msra.mxu0 %v902
      %1090 = vmatprep.subr.bf16.mxu0 0
      %1091 = vmatpush1.bf16.msra.mxu0 %v901
      %1092 = vmatprep.subr.bf16.mxu0 0
      %1093 = vmatpush1.bf16.msra.mxu0 %v900
      %1094 = vmatprep.subr.bf16.mxu0 0
      %1095 = vmatpush1.bf16.msra.mxu0 %v899
      %1096 = vmatprep.subr.bf16.mxu0 0
      %1097 = vmatpush1.bf16.msra.mxu0 %v898
      %1098 = vmatprep.subr.bf16.mxu0 0
      %1099 = vmatpush1.bf16.msra.mxu0 %v897
      %1100 = vmatprep.subr.bf16.mxu0 0
      %1101 = vmatpush1.bf16.msra.mxu0 %v896
      %1102 = vmatprep.subr.bf16.mxu0 0
      %1103 = vmatpush1.bf16.msra.mxu0 %v895
      %1104 = vmatprep.subr.bf16.mxu0 0
      %1105 = vmatpush2.bf16.msra.mxu0 %v910
      %1106 = vmatprep.subr.bf16.mxu0 0
      %1107 = vmatpush2.bf16.msra.mxu0 %v909
      %1108 = vmatprep.subr.bf16.mxu0 0
      %1109 = vmatpush2.bf16.msra.mxu0 %v908
      %1110 = vmatprep.subr.bf16.mxu0 0
      %1111 = vmatpush2.bf16.msra.mxu0 %v907
      %1112 = vmatprep.subr.bf16.mxu0 0
      %1113 = vmatpush2.bf16.msra.mxu0 %v906
      %1114 = vmatprep.subr.bf16.mxu0 0
      %1115 = vmatpush2.bf16.msra.mxu0 %v905
      %1116 = vmatprep.subr.bf16.mxu0 0
      %1117 = vmatpush2.bf16.msra.mxu0 %v904
      %1118 = vmatprep.subr.bf16.mxu0 0
      %1119 = vmatpush2.bf16.msra.mxu0 %v903
      %1120 = vmatprep.mubr.bf16.mxu0 %v522
      %1121 = vmatmul.mubr.bf16.gmra.mxu0 %v521
      %v1122 = vpop.f32.mrf.mxu0
      %v1123 = vadd.f32 %v1058, %v1122
      %v1124 = vpop.f32.mrf.mxu0
      %v1125 = vpop.f32.mrf.mxu0
      %v1126 = vadd.f32 %v1061, %v1125
      %v1127 = vpop.f32.mrf.mxu0
      %1128 = vmatprep.mubr.bf16.mxu0 %v531
      %1129 = vmatmul.mubr.bf16.gmra.mxu0 %v530
      %v1130 = vpop.f32.mrf.mxu0
      %v1131 = vadd.f32 %v1066, %v1130
      %v1132 = vpop.f32.mrf.mxu0
      %v1133 = vpop.f32.mrf.mxu0
      %v1134 = vadd.f32 %v1069, %v1133
      %v1135 = vpop.f32.mrf.mxu0
      %1136 = vmatprep.mubr.bf16.mxu0 %v540
      %1137 = vmatmul.mubr.bf16.gmra.mxu0 %v539
      %v1138 = vpop.f32.mrf.mxu0
      %v1139 = vadd.f32 %v1074, %v1138
      %v1140 = vpop.f32.mrf.mxu0
      %v1141 = vpop.f32.mrf.mxu0
      %v1142 = vadd.f32 %v1077, %v1141
      %v1143 = vpop.f32.mrf.mxu0
      %1144 = vmatprep.mubr.bf16.mxu0 %v549
      %1145 = vmatmul.mubr.bf16.gmra.mxu0 %v548
      %v1146 = vpop.f32.mrf.mxu0
      %v1147 = vadd.f32 %v1082, %v1146
      %v1148 = vpop.f32.mrf.mxu0
      %v1149 = vpop.f32.mrf.mxu0
      %v1150 = vadd.f32 %v1085, %v1149
      %v1151 = vpop.f32.mrf.mxu0
      %1152 = vdwg.mxu0
      %1153 = vmatprep.subr.bf16.mxu0 0
      %1154 = vmatpush1.bf16.msra.mxu0 %v918
      %1155 = vmatprep.subr.bf16.mxu0 0
      %1156 = vmatpush1.bf16.msra.mxu0 %v917
      %1157 = vmatprep.subr.bf16.mxu0 0
      %1158 = vmatpush1.bf16.msra.mxu0 %v916
      %1159 = vmatprep.subr.bf16.mxu0 0
      %1160 = vmatpush1.bf16.msra.mxu0 %v915
      %1161 = vmatprep.subr.bf16.mxu0 0
      %1162 = vmatpush1.bf16.msra.mxu0 %v914
      %1163 = vmatprep.subr.bf16.mxu0 0
      %1164 = vmatpush1.bf16.msra.mxu0 %v913
      %1165 = vmatprep.subr.bf16.mxu0 0
      %1166 = vmatpush1.bf16.msra.mxu0 %v912
      %1167 = vmatprep.subr.bf16.mxu0 0
      %1168 = vmatpush1.bf16.msra.mxu0 %v911
      %1169 = vmatprep.subr.bf16.mxu0 0
      %1170 = vmatpush2.bf16.msra.mxu0 %v926
      %1171 = vmatprep.subr.bf16.mxu0 0
      %1172 = vmatpush2.bf16.msra.mxu0 %v925
      %1173 = vmatprep.subr.bf16.mxu0 0
      %1174 = vmatpush2.bf16.msra.mxu0 %v924
      %1175 = vmatprep.subr.bf16.mxu0 0
      %1176 = vmatpush2.bf16.msra.mxu0 %v923
      %1177 = vmatprep.subr.bf16.mxu0 0
      %1178 = vmatpush2.bf16.msra.mxu0 %v922
      %1179 = vmatprep.subr.bf16.mxu0 0
      %1180 = vmatpush2.bf16.msra.mxu0 %v921
      %1181 = vmatprep.subr.bf16.mxu0 0
      %1182 = vmatpush2.bf16.msra.mxu0 %v920
      %1183 = vmatprep.subr.bf16.mxu0 0
      %1184 = vmatpush2.bf16.msra.mxu0 %v919
      %1185 = vmatprep.mubr.bf16.mxu0 %v524
      %1186 = vmatmul.mubr.bf16.gmra.mxu0 %v523
      %v1187 = vpop.f32.mrf.mxu0
      %v1188 = vadd.f32 %v1123, %v1187
      %v1189 = vpop.f32.mrf.mxu0
      %v1190 = vpop.f32.mrf.mxu0
      %v1191 = vadd.f32 %v1126, %v1190
      %v1192 = vpop.f32.mrf.mxu0
      %1193 = vmatprep.mubr.bf16.mxu0 %v533
      %1194 = vmatmul.mubr.bf16.gmra.mxu0 %v532
      %v1195 = vpop.f32.mrf.mxu0
      %v1196 = vadd.f32 %v1131, %v1195
      %v1197 = vpop.f32.mrf.mxu0
      %v1198 = vpop.f32.mrf.mxu0
      %v1199 = vadd.f32 %v1134, %v1198
      %v1200 = vpop.f32.mrf.mxu0
      %1201 = vmatprep.mubr.bf16.mxu0 %v542
      %1202 = vmatmul.mubr.bf16.gmra.mxu0 %v541
      %v1203 = vpop.f32.mrf.mxu0
      %v1204 = vadd.f32 %v1139, %v1203
      %v1205 = vpop.f32.mrf.mxu0
      %v1206 = vpop.f32.mrf.mxu0
      %v1207 = vadd.f32 %v1142, %v1206
      %v1208 = vpop.f32.mrf.mxu0
      %1209 = vmatprep.mubr.bf16.mxu0 %v551
      %1210 = vmatmul.mubr.bf16.gmra.mxu0 %v550
      %v1211 = vpop.f32.mrf.mxu0
      %v1212 = vadd.f32 %v1147, %v1211
      %v1213 = vpop.f32.mrf.mxu0
      %v1214 = vpop.f32.mrf.mxu0
      %v1215 = vadd.f32 %v1150, %v1214
      %v1216 = vpop.f32.mrf.mxu0
      %1217 = vdwg.mxu0
      %1218 = vmatprep.subr.bf16.mxu0 0
      %1219 = vmatpush1.bf16.msra.mxu0 %v934
      %1220 = vmatprep.subr.bf16.mxu0 0
      %1221 = vmatpush1.bf16.msra.mxu0 %v933
      %1222 = vmatprep.subr.bf16.mxu0 0
      %1223 = vmatpush1.bf16.msra.mxu0 %v932
      %1224 = vmatprep.subr.bf16.mxu0 0
      %1225 = vmatpush1.bf16.msra.mxu0 %v931
      %1226 = vmatprep.subr.bf16.mxu0 0
      %1227 = vmatpush1.bf16.msra.mxu0 %v930
      %1228 = vmatprep.subr.bf16.mxu0 0
      %1229 = vmatpush1.bf16.msra.mxu0 %v929
      %1230 = vmatprep.subr.bf16.mxu0 0
      %1231 = vmatpush1.bf16.msra.mxu0 %v928
      %1232 = vmatprep.subr.bf16.mxu0 0
      %1233 = vmatpush1.bf16.msra.mxu0 %v927
      %1234 = vmatprep.subr.bf16.mxu0 0
      %1235 = vmatpush2.bf16.msra.mxu0 %v942
      %1236 = vmatprep.subr.bf16.mxu0 0
      %1237 = vmatpush2.bf16.msra.mxu0 %v941
      %1238 = vmatprep.subr.bf16.mxu0 0
      %1239 = vmatpush2.bf16.msra.mxu0 %v940
      %1240 = vmatprep.subr.bf16.mxu0 0
      %1241 = vmatpush2.bf16.msra.mxu0 %v939
      %1242 = vmatprep.subr.bf16.mxu0 0
      %1243 = vmatpush2.bf16.msra.mxu0 %v938
      %1244 = vmatprep.subr.bf16.mxu0 0
      %1245 = vmatpush2.bf16.msra.mxu0 %v937
      %1246 = vmatprep.subr.bf16.mxu0 0
      %1247 = vmatpush2.bf16.msra.mxu0 %v936
      %1248 = vmatprep.subr.bf16.mxu0 0
      %1249 = vmatpush2.bf16.msra.mxu0 %v935
      %1250 = vmatprep.mubr.bf16.mxu0 %v526
      %1251 = vmatmul.mubr.bf16.gmra.mxu0 %v525
      %v1252 = vpop.f32.mrf.mxu0
      %v1253 = vadd.f32 %v1188, %v1252
      %v1254 = vpop.f32.mrf.mxu0
      %v1255 = vpop.f32.mrf.mxu0
      %v1256 = vadd.f32 %v1191, %v1255
      %v1257 = vpop.f32.mrf.mxu0
      %1258 = vmatprep.mubr.bf16.mxu0 %v535
      %1259 = vmatmul.mubr.bf16.gmra.mxu0 %v534
      %v1260 = vpop.f32.mrf.mxu0
      %v1261 = vadd.f32 %v1196, %v1260
      %v1262 = vpop.f32.mrf.mxu0
      %v1263 = vpop.f32.mrf.mxu0
      %v1264 = vadd.f32 %v1199, %v1263
      %v1265 = vpop.f32.mrf.mxu0
      %1266 = vmatprep.mubr.bf16.mxu0 %v544
      %1267 = vmatmul.mubr.bf16.gmra.mxu0 %v543
      %v1268 = vpop.f32.mrf.mxu0
      %v1269 = vadd.f32 %v1204, %v1268
      %v1270 = vpop.f32.mrf.mxu0
      %v1271 = vpop.f32.mrf.mxu0
      %v1272 = vadd.f32 %v1207, %v1271
      %v1273 = vpop.f32.mrf.mxu0
      %1274 = vmatprep.mubr.bf16.mxu0 %v553
      %1275 = vmatmul.mubr.bf16.gmra.mxu0 %v552
      %v1276 = vpop.f32.mrf.mxu0
      %v1277 = vadd.f32 %v1212, %v1276
      %v1278 = vpop.f32.mrf.mxu0
      %v1279 = vpop.f32.mrf.mxu0
      %v1280 = vadd.f32 %v1215, %v1279
      %v1281 = vpop.f32.mrf.mxu0
      %1282 = vdwg.mxu0
      %1283 = vmatprep.subr.bf16.mxu0 0
      %1284 = vmatpush1.bf16.msra.mxu0 %v950
      %1285 = vmatprep.subr.bf16.mxu0 0
      %1286 = vmatpush1.bf16.msra.mxu0 %v949
      %1287 = vmatprep.subr.bf16.mxu0 0
      %1288 = vmatpush1.bf16.msra.mxu0 %v948
      %1289 = vmatprep.subr.bf16.mxu0 0
      %1290 = vmatpush1.bf16.msra.mxu0 %v947
      %1291 = vmatprep.subr.bf16.mxu0 0
      %1292 = vmatpush1.bf16.msra.mxu0 %v946
      %1293 = vmatprep.subr.bf16.mxu0 0
      %1294 = vmatpush1.bf16.msra.mxu0 %v945
      %1295 = vmatprep.subr.bf16.mxu0 0
      %1296 = vmatpush1.bf16.msra.mxu0 %v944
      %1297 = vmatprep.subr.bf16.mxu0 0
      %1298 = vmatpush1.bf16.msra.mxu0 %v943
      %1299 = vmatprep.subr.bf16.mxu0 0
      %1300 = vmatpush2.bf16.msra.mxu0 0
      %1301 = vmatprep.subr.bf16.mxu0 0
      %1302 = vmatpush2.bf16.msra.mxu0 0
      %1303 = vmatprep.subr.bf16.mxu0 0
      %1304 = vmatpush2.bf16.msra.mxu0 0
      %1305 = vmatprep.subr.bf16.mxu0 0
      %1306 = vmatpush2.bf16.msra.mxu0 0
      %1307 = vmatprep.subr.bf16.mxu0 0
      %1308 = vmatpush2.bf16.msra.mxu0 0
      %1309 = vmatprep.subr.bf16.mxu0 0
      %1310 = vmatpush2.bf16.msra.mxu0 0
      %1311 = vmatprep.subr.bf16.mxu0 0
      %1312 = vmatpush2.bf16.msra.mxu0 0
      %1313 = vmatprep.subr.bf16.mxu0 0
      %1314 = vmatpush2.bf16.msra.mxu0 0
      %1315 = vmatprep.mubr.bf16.mxu0 0
      %1316 = vmatmul.mubr.bf16.gmra.mxu0 %v527
      %v1317 = vpop.f32.mrf.mxu0
      %v1318 = vadd.f32 %v1253, %v1317
      %v1319 = vpop.f32.mrf.mxu0
      %v1320 = vpop.f32.mrf.mxu0
      %v1321 = vadd.f32 %v1256, %v1320
      %v1322 = vpop.f32.mrf.mxu0
      %1323 = vmatprep.mubr.bf16.mxu0 0
      %1324 = vmatmul.mubr.bf16.gmra.mxu0 %v536
      %v1325 = vpop.f32.mrf.mxu0
      %v1326 = vadd.f32 %v1261, %v1325
      %v1327 = vpop.f32.mrf.mxu0
      %v1328 = vpop.f32.mrf.mxu0
      %v1329 = vadd.f32 %v1264, %v1328
      %v1330 = vpop.f32.mrf.mxu0
      %1331 = vmatprep.mubr.bf16.mxu0 0
      %1332 = vmatmul.mubr.bf16.gmra.mxu0 %v545
      %v1333 = vpop.f32.mrf.mxu0
      %v1334 = vadd.f32 %v1269, %v1333
      %v1335 = vpop.f32.mrf.mxu0
      %v1336 = vpop.f32.mrf.mxu0
      %v1337 = vadd.f32 %v1272, %v1336
      %v1338 = vpop.f32.mrf.mxu0
      %1339 = vmatprep.mubr.bf16.mxu0 0
      %1340 = vmatmul.mubr.bf16.gmra.mxu0 %v554
      %v1341 = vpop.f32.mrf.mxu0
      %v1342 = vadd.f32 %v1277, %v1341
      %v1343 = vpop.f32.mrf.mxu0
      %v1344 = vpop.f32.mrf.mxu0
      %v1345 = vadd.f32 %v1280, %v1344
      %v1346 = vpop.f32.mrf.mxu0
      %1347 = vdwg.mxu0
      %v1348 = vadd.f32 %v1318, %v1321
      %v1349 = vadd.f32 %v1348, %v1326
      %v1350 = vadd.f32 %v1349, %v1329
      %v1351 = vadd.f32 %v1350, %v1334
      %v1352 = vadd.f32 %v1351, %v1337
      %v1353 = vadd.f32 %v1352, %v1342
      %v1354 = vadd.f32 %v1353, %v1345
      %v1355 = vrot.slane %v1354, 4
      %v1356 = vadd.f32 %v1354, %v1355
      %v1357 = vrot.slane %v1356, 2
      %v1358 = vadd.f32 %v1356, %v1357
      %v1359 = vrot.slane %v1358, 1
      %v1360 = vadd.f32 %v1358, %v1359
      %v1361 = vrcp.pop 64.0
      %v1362 = vmul.f32 %v1360, %v1361
      %v1363 = vsub.f32 %v1318, %v1362
      %v1364 = vsub.f32 %v1321, %v1362
      %v1365 = vsub.f32 %v1326, %v1362
      %v1366 = vsub.f32 %v1329, %v1362
      %v1367 = vsub.f32 %v1334, %v1362
      %v1368 = vsub.f32 %v1337, %v1362
      %v1369 = vsub.f32 %v1342, %v1362
      %v1370 = vsub.f32 %v1345, %v1362
      %v1371 = vmul.f32 %v1363, %v1363
      %v1372 = vmul.f32 %v1364, %v1364
      %v1373 = vmul.f32 %v1365, %v1365
      %v1374 = vmul.f32 %v1366, %v1366
      %v1375 = vmul.f32 %v1367, %v1367
      %v1376 = vmul.f32 %v1368, %v1368
      %v1377 = vmul.f32 %v1369, %v1369
      %v1378 = vmul.f32 %v1370, %v1370
      %v1379 = vadd.f32 %v1371, %v1372
      %v1380 = vadd.f32 %v1379, %v1373
      %v1381 = vadd.f32 %v1380, %v1374
      %v1382 = vadd.f32 %v1381, %v1375
      %v1383 = vadd.f32 %v1382, %v1376
      %v1384 = vadd.f32 %v1383, %v1377
      %v1385 = vadd.f32 %v1384, %v1378
      %v1386 = vrot.slane %v1385, 4
      %v1387 = vadd.f32 %v1385, %v1386
      %v1388 = vrot.slane %v1387, 2
      %v1389 = vadd.f32 %v1387, %v1388
      %v1390 = vrot.slane %v1389, 1
      %v1391 = vadd.f32 %v1389, %v1390
      %v1392 = vmul.f32 %v1391, %v1361
      %v1393 = vadd.f32 %v1392, 1e-05
      %v1394 = vrsqrt.pop %v1393
      %v1395 = vmul.f32 %v1363, %v1394
      %v1396 = vmul.f32 %v1364, %v1394
      %v1397 = vmul.f32 %v1365, %v1394
      %v1398 = vmul.f32 %v1366, %v1394
      %v1399 = vmul.f32 %v1367, %v1394
      %v1400 = vmul.f32 %v1368, %v1394
      %v1401 = vmul.f32 %v1369, %v1394
      %v1402 = vmul.f32 %v1370, %v1394
      %v1403 = vld [vmem:[%s209] sm:$0x3]
      %v1404 = vlaneseq
      %v1405 = vshrl.u32 %v1404, 7
      %v1406 = vsub.s32 0, %v1405
      %v1407 = vrot.slane %v1403, %v1406
      %v1408 = vmul.f32 %v1407, %v1395
      %v1409 = vmul.f32 %v1407, %v1396
      %v1410 = vmul.f32 %v1407, %v1397
      %v1411 = vmul.f32 %v1407, %v1398
      %v1412 = vmul.f32 %v1407, %v1399
      %v1413 = vmul.f32 %v1407, %v1400
      %v1414 = vmul.f32 %v1407, %v1401
      %v1415 = vmul.f32 %v1407, %v1402
      %v1416 = vlaneseq
      %v1417 = vshrl.u32 %v1416, 7
      %v1418 = vsub.s32 1, %v1417
      %v1419 = vrot.slane %v1403, %v1418
      %v1420 = vadd.f32 %v1408, %v1419
      %v1421 = vadd.f32 %v1409, %v1419
      %v1422 = vadd.f32 %v1410, %v1419
      %v1423 = vadd.f32 %v1411, %v1419
      %v1424 = vadd.f32 %v1412, %v1419
      %v1425 = vadd.f32 %v1413, %v1419
      %v1426 = vadd.f32 %v1414, %v1419
      %v1427 = vadd.f32 %v1415, %v1419
      %v1428 = vmax.f32 %v1420, 0.0
      %v1429 = vmax.f32 %v1421, 0.0
      %v1430 = vmax.f32 %v1422, 0.0
      %v1431 = vmax.f32 %v1423, 0.0
      %v1432 = vmax.f32 %v1424, 0.0
      %v1433 = vmax.f32 %v1425, 0.0
      %v1434 = vmax.f32 %v1426, 0.0
      %v1435 = vmax.f32 %v1427, 0.0
      %1436 = vst [vmem:[%s214] sm:$0xff] %v1428
      %1437 = vst [vmem:[%s214 + $0x8] sm:$0xff] %v1429
      %1438 = vst [vmem:[%s214 + $0x10] sm:$0xff] %v1430
      %1439 = vst [vmem:[%s214 + $0x18] sm:$0xff] %v1431
      %1440 = vst [vmem:[%s214 + $0x20] sm:$0xff] %v1432
      %1441 = vst [vmem:[%s214 + $0x28] sm:$0xff] %v1433
      %1442 = vst [vmem:[%s214 + $0x30] sm:$0xff] %v1434
      %1443 = vst [vmem:[%s214 + $0x38] sm:$0xff] %v1435
      %p1444 = scmp.lt.s32.totalorder %s15, 1
      %s1445 = scalar_select %p1444, %s15, 1
      %s1446 = smul.addr %s1445, 8
      %s1447 = smul.addr %s1446, 8
      %s1448 = scalar_lea.vmem %s4, %s1447
      // Predicated region
      $region37: #{vgg_decoder_forward.12} parent=35 // pred_check
        %p1449 = pneg %p127
      $region38: #{vgg_decoder_forward.12} parent=35 // pred_check_branch
        %1451 = sbr.rel (%p1449) target = $region40
      $region39: #{vgg_decoder_forward.12} parent=35 // pred_region
        _
      $region40: #{vgg_decoder_forward.12} parent=35 // pred_fallthru
        _
    $region36: #{vgg_decoder_forward.12} parent=5 // pred_fallthru
      _
    %p1452 = scmp.le.s32.totalorder 2, %s10
    // Predicated region
    $region41: #{vgg_decoder_forward.12} parent=5 // pred_check
      %p1453 = pneg %p1452
    $region42: #{vgg_decoder_forward.12} parent=5 // pred_check_branch
      %1455 = sbr.rel (%p1453) target = $region44
    $region43: #{vgg_decoder_forward.12} parent=5 // pred_region
      %s1456 = ssub.s32 %s10, 2
      // Predicated region
      $region45: #{vgg_decoder_forward.12} parent=43 // pred_check
        %p1457 = pneg %p133
      $region46: #{vgg_decoder_forward.12} parent=43 // pred_check_branch
        %1459 = sbr.rel (%p1457) target = $region48
      $region47: #{vgg_decoder_forward.12} parent=43 // pred_region
        %p1460 = scmp.lt.s32.totalorder %s16, 1
        %s1461 = scalar_select %p1460, %s16, 1
        %s1462 = smul.addr %s1461, 8
        %s1463 = smul.addr %s1462, 8
        %s1464 = scalar_lea.vmem %s4, %s1463
      $region48: #{vgg_decoder_forward.12} parent=43 // pred_fallthru
        _
    $region44: #{vgg_decoder_forward.12} parent=5 // pred_fallthru
      _
  $region6: #{vgg_decoder_forward.12} parent=0 // loop_footer
    %s14 = sadd.s32 1, %s10
  $region7: #{vgg_decoder_forward.12} parent=0 // loop_footer_branch
    %9 = sbr.rel target = $region3
  $region8: #{vgg_decoder_forward.12} parent=0 // loop_exit
    _

// kernel: vgg_decoder_forward.14
$region0: #{vgg_decoder_forward.14}
  #allocation0 [shape = 'u32[]', space=smem, size = 0x4, offset = 0x4, fixed_abs, tag = 'smem constant byte address 0x4 - core index']
  #allocation1 [shape = 'u32[144,128]{1,0:T(1,128)}', space=vmem, size = 0x12000, scoped, tag = 'internal scratch']
  %s0 = inlined_call_operand.vmem [shape: bf16[2,256,576], index: 0, kind: input, shape index: {}]
  %s1 = inlined_call_operand.vmem [shape: bf16[576,128], index: 1, kind: input, shape index: {}]
  %s2 = inlined_call_operand.vmem [shape: f32[1,128], index: 2, kind: input, shape index: {}]
  %s3 = inlined_call_operand.vmem [shape: f32[2,2,128], index: 3, kind: input, shape index: {}]
  %s4 = inlined_call_operand.vmem [shape: f32[2,256,128], index: 4, kind: output, shape index: {}]
  %s5 = sld [smem:[#allocation0]]
  $region49: #{vgg_decoder_forward.14} parent=0
    _
  %s7 = ssub.s32 1, %s5
  %s8 = scalar_select 0, %s7, %s5
  loop: start=0, step=1, limit=4
  $region2: #{vgg_decoder_forward.14} parent=0 // loop_pre_header
    _
  $region3: #{vgg_decoder_forward.14} parent=0 // loop_header
    %s10 = sphi 0, %s14
    %p11 = scmp.ge.s32.totalorder %s10, 4
    %s20 = sphi 0, %s22
    %s23 = sphi 0, %s20
    %s24 = sphi 0, %s23
    %s40 = sphi 0, %s24
    %s44 = sphi 0, %s44
    %s46 = sphi 0, %s44
    %s47 = sphi 0, %s46
    %s61 = sphi 0, %s47
    %s65 = sphi 0, %s65
    %s67 = sphi 0, %s65
    %s68 = sphi 0, %s67
    %s82 = sphi 0, %s68
    %s88 = sphi 0, %s90
    %s91 = sphi 0, %s88
    %s92 = sphi 0, %s91
    %s108 = sphi 0, %s92
    %s114 = sphi 0, %s116
    %s117 = sphi 0, %s114
    %s118 = sphi 0, %s117
    %s134 = sphi 0, %s118
  $region4: #{vgg_decoder_forward.14} parent=0 // loop_header_branch
    %13 = sbr.rel (%p11) target = $region8
  $region5: #{vgg_decoder_forward.14} parent=0 // loop_body
    %s15 = ssub.s32 %s10, 1
    %s16 = ssub.s32 %s10, 2
    %s17 = sadd.s32 %s10, 1
    %s18 = ssub.s32 %s10, %s17
    %p19 = scmp.eq.s32.totalorder %s18, 0
    %s21 = sadd.s32 %s20, 1
    %s22 = scalar_select %p19, %s20, %s21
    %p25 = pneg %p19
    %p26 = scmp.eq.s32.totalorder %s10, 1
    %p27 = por %p25, %p26
    %p28 = scmp.ne.s32.totalorder %s20, %s23
    %p29 = scmp.eq.s32.totalorder %s10, 0
    %p30 = por %p28, %p29
    %p31 = scmp.ne.s32.totalorder %s20, %s23
    %p32 = scmp.eq.s32.totalorder %s15, 1
    %p33 = por %p31, %p32
    %p34 = scmp.ne.s32.totalorder %s23, %s24
    %p35 = scmp.eq.s32.totalorder %s15, 0
    %p36 = por %p34, %p35
    %p37 = scmp.ne.s32.totalorder %s23, %s24
    %p38 = scmp.eq.s32.totalorder %s16, 1
    %p39 = por %p37, %p38
    %p41 = scmp.ne.s32.totalorder %s24, %s40
    %p42 = scmp.eq.s32.totalorder %s16, 0
    %p43 = por %p41, %p42
    %s45 = sadd.s32 %s44, 1
    %p48 = scmp.eq.s32.totalorder %s10, 1
    %p49 = scmp.ne.s32.totalorder %s44, %s46
    %p50 = scmp.eq.s32.totalorder %s10, 0
    %p51 = por %p49, %p50
    %p52 = scmp.ne.s32.totalorder %s44, %s46
    %p53 = scmp.eq.s32.totalorder %s15, 1
    %p54 = por %p52, %p53
    %p55 = scmp.ne.s32.totalorder %s46, %s47
    %p56 = scmp.eq.s32.totalorder %s15, 0
    %p57 = por %p55, %p56
    %p58 = scmp.ne.s32.totalorder %s46, %s47
    %p59 = scmp.eq.s32.totalorder %s16, 1
    %p60 = por %p58, %p59
    %p62 = scmp.ne.s32.totalorder %s47, %s61
    %p63 = scmp.eq.s32.totalorder %s16, 0
    %p64 = por %p62, %p63
    %s66 = sadd.s32 %s65, 1
    %p69 = scmp.eq.s32.totalorder %s10, 1
    %p70 = scmp.ne.s32.totalorder %s65, %s67
    %p71 = scmp.eq.s32.totalorder %s10, 0
    %p72 = por %p70, %p71
    %p73 = scmp.ne.s32.totalorder %s65, %s67
    %p74 = scmp.eq.s32.totalorder %s15, 1
    %p75 = por %p73, %p74
    %p76 = scmp.ne.s32.totalorder %s67, %s68
    %p77 = scmp.eq.s32.totalorder %s15, 0
    %p78 = por %p76, %p77
    %p79 = scmp.ne.s32.totalorder %s67, %s68
    %p80 = scmp.eq.s32.totalorder %s16, 1
    %p81 = por %p79, %p80
    %p83 = scmp.ne.s32.totalorder %s68, %s82
    %p84 = scmp.eq.s32.totalorder %s16, 0
    %p85 = por %p83, %p84
    %s86 = ssub.s32 %s10, %s17
    %p87 = scmp.eq.s32.totalorder %s86, 0
    %s89 = sadd.s32 %s88, 1
    %s90 = scalar_select %p87, %s88, %s89
    %p93 = pneg %p87
    %p94 = scmp.eq.s32.totalorder %s10, 1
    %p95 = por %p93, %p94
    %p96 = scmp.ne.s32.totalorder %s88, %s91
    %p97 = scmp.eq.s32.totalorder %s10, 0
    %p98 = por %p96, %p97
    %p99 = scmp.ne.s32.totalorder %s88, %s91
    %p100 = scmp.eq.s32.totalorder %s15, 1
    %p101 = por %p99, %p100
    %p102 = scmp.ne.s32.totalorder %s91, %s92
    %p103 = scmp.eq.s32.totalorder %s15, 0
    %p104 = por %p102, %p103
    %p105 = scmp.ne.s32.totalorder %s91, %s92
    %p106 = scmp.eq.s32.totalorder %s16, 1
    %p107 = por %p105, %p106
    %p109 = scmp.ne.s32.totalorder %s92, %s108
    %p110 = scmp.eq.s32.totalorder %s16, 0
    %p111 = por %p109, %p110
    %s112 = ssub.s32 %s10, %s17
    %p113 = scmp.eq.s32.totalorder %s112, 0
    %s115 = sadd.s32 %s114, 1
    %s116 = scalar_select %p113, %s114, %s115
    %p119 = pneg %p113
    %p120 = scmp.eq.s32.totalorder %s10, 1
    %p121 = por %p119, %p120
    %p122 = scmp.ne.s32.totalorder %s114, %s117
    %p123 = scmp.eq.s32.totalorder %s10, 0
    %p124 = por %p122, %p123
    %p125 = scmp.ne.s32.totalorder %s114, %s117
    %p126 = scmp.eq.s32.totalorder %s15, 1
    %p127 = por %p125, %p126
    %p128 = scmp.ne.s32.totalorder %s117, %s118
    %p129 = scmp.eq.s32.totalorder %s15, 0
    %p130 = por %p128, %p129
    %p131 = scmp.ne.s32.totalorder %s117, %s118
    %p132 = scmp.eq.s32.totalorder %s16, 1
    %p133 = por %p131, %p132
    %p135 = scmp.ne.s32.totalorder %s118, %s134
    %p136 = scmp.eq.s32.totalorder %s16, 0
    %p137 = por %p135, %p136
    %p138 = scmp.le.s32.totalorder 1, %s10
    %p139 = scmp.lt.s32.totalorder %s10, 3
    %p140 = pnand %p138, %p139
    %p141 = pneg %p140
    // Predicated region
    $region9: #{vgg_decoder_forward.14} parent=5 // pred_check
      _
    $region10: #{vgg_decoder_forward.14} parent=5 // pred_check_branch
      %143 = sbr.rel (%p140) target = $region12
    $region11: #{vgg_decoder_forward.14} parent=5 // pred_region
      %s144 = ssub.s32 %s10, 1
      // Predicated region
      $region13: #{vgg_decoder_forward.14} parent=11 // pred_check
        %p145 = pneg %p57
      $region14: #{vgg_decoder_forward.14} parent=11 // pred_check_branch
        %147 = sbr.rel (%p145) target = $region16
      $region15: #{vgg_decoder_forward.14} parent=11 // pred_region
        _
      $region16: #{vgg_decoder_forward.14} parent=11 // pred_fallthru
        _
      // Predicated region
      $region17: #{vgg_decoder_forward.14} parent=11 // pred_check
        %p148 = pneg %p78
      $region18: #{vgg_decoder_forward.14} parent=11 // pred_check_branch
        %150 = sbr.rel (%p148) target = $region20
      $region19: #{vgg_decoder_forward.14} parent=11 // pred_region
        _
      $region20: #{vgg_decoder_forward.14} parent=11 // pred_fallthru
        _
    $region12: #{vgg_decoder_forward.14} parent=5 // pred_fallthru
      _
    %p151 = scmp.lt.s32.totalorder %s10, 2
    // Predicated region
    $region21: #{vgg_decoder_forward.14} parent=5 // pred_check
      %p152 = pneg %p151
    $region22: #{vgg_decoder_forward.14} parent=5 // pred_check_branch
      %154 = sbr.rel (%p152) target = $region24
    $region23: #{vgg_decoder_forward.14} parent=5 // pred_region
      // Predicated region
      $region25: #{vgg_decoder_forward.14} parent=23 // pred_check
        %p155 = pneg %p30
      $region26: #{vgg_decoder_forward.14} parent=23 // pred_check_branch
        %157 = sbr.rel (%p155) target = $region28
      $region27: #{vgg_decoder_forward.14} parent=23 // pred_region
        %p158 = scmp.lt.s32.totalorder %s10, 1
        %s159 = scalar_select %p158, %s10, 1
        %s160 = smul.addr %s159, 160
        %s161 = smul.addr %s160, 4
        %s162 = scalar_lea.vmem %s0, %s161
      $region28: #{vgg_decoder_forward.14} parent=23 // pred_fallthru
        _
      // Predicated region
      $region29: #{vgg_decoder_forward.14} parent=23 // pred_check
        %p163 = pneg %p98
      $region30: #{vgg_decoder_forward.14} parent=23 // pred_check_branch
        %165 = sbr.rel (%p163) target = $region32
      $region31: #{vgg_decoder_forward.14} parent=23 // pred_region
        %p166 = scmp.lt.s32.totalorder %s10, 1
        %s167 = scalar_select %p166, %s10, 1
        %s168 = smul.addr %s167, 2
        %s169 = scalar_lea.vmem %s3, %s168
      $region32: #{vgg_decoder_forward.14} parent=23 // pred_fallthru
        _
    $region24: #{vgg_decoder_forward.14} parent=5 // pred_fallthru
      _
    %p170 = scmp.le.s32.totalorder 1, %s10
    %p171 = scmp.lt.s32.totalorder %s10, 3
    %p172 = pnand %p170, %p171
    %p173 = pneg %p172
    // Predicated region
    $region33: #{vgg_decoder_forward.14} parent=5 // pred_check
      _
    $region34: #{vgg_decoder_forward.14} parent=5 // pred_check_branch
      %175 = sbr.rel (%p172) target = $region36
    $region35: #{vgg_decoder_forward.14} parent=5 // pred_region
      %s176 = ssub.s32 %s10, 1
      %p177 = scmp.lt.s32.totalorder %s15, 1
      %s178 = scalar_select %p177, %s15, 1
      %s179 = smul.addr %s178, 160
      %s180 = smul.addr %s179, 4
      %s181 = scalar_lea.vmem %s0, %s180
      %p182 = pneg %p36
      %p183 = pneg %p33
      %p184 = pneg %p57
      %p185 = pneg %p54
      %p186 = pneg %p78
      %p187 = pneg %p75
      %p188 = scmp.lt.s32.totalorder %s15, 1
      %s189 = scalar_select %p188, %s15, 1
      %s190 = smul.addr %s189, 2
      %s191 = scalar_lea.vmem %s3, %s190
      %p192 = pneg %p104
      %p193 = pneg %p101
      %p194 = pneg %p130
      %p195 = pneg %p127
      %p196 = scmp.lt.s32.totalorder %s15, 1
      %s197 = scalar_select %p196, %s15, 1
      %s198 = smul.addr %s197, 32
      %s199 = smul.addr %s198, 8
      %s200 = scalar_lea.vmem %s4, %s199
      %p201 = scmp.lt.s32.totalorder %s15, 1
      %s202 = scalar_select %p201, %s15, 1
      %s203 = smul.addr %s202, 160
      %s204 = smul.addr %s203, 4
      %s205 = scalar_lea.vmem %s0, %s204
      %p206 = scmp.lt.s32.totalorder %s15, 1
      %s207 = scalar_select %p206, %s15, 1
      %s208 = smul.addr %s207, 2
      %s209 = scalar_lea.vmem %s3, %s208
      %p210 = scmp.lt.s32.totalorder %s15, 1
      %s211 = scalar_select %p210, %s15, 1
      %s212 = smul.addr %s211, 32
      %s213 = smul.addr %s212, 8
      %s214 = scalar_lea.vmem %s4, %s213
      %v216 = vld [vmem:[%s205] sm:$0xff]
      %v217 = vld [vmem:[%s205 + $0x8] sm:$0xff]
      %v218 = vld [vmem:[%s205 + $0x10] sm:$0xf]
      %v219 = vld [vmem:[%s205 + $0x14] sm:$0xff]
      %v220 = vld [vmem:[%s205 + $0x1c] sm:$0xff]
      %v221 = vld [vmem:[%s205 + $0x24] sm:$0xf]
      %v222 = vld [vmem:[%s205 + $0x28] sm:$0xff]
      %v223 = vld [vmem:[%s205 + $0x30] sm:$0xff]
      %v224 = vld [vmem:[%s205 + $0x38] sm:$0xf]
      %v225 = vld [vmem:[%s205 + $0x3c] sm:$0xff]
      %v226 = vld [vmem:[%s205 + $0x44] sm:$0xff]
      %v227 = vld [vmem:[%s205 + $0x4c] sm:$0xf]
      %v228 = vld [vmem:[%s205 + $0x50] sm:$0xff]
      %v229 = vld [vmem:[%s205 + $0x58] sm:$0xff]
      %v230 = vld [vmem:[%s205 + $0x60] sm:$0xf]
      %v231 = vld [vmem:[%s205 + $0x64] sm:$0xff]
      %v232 = vld [vmem:[%s205 + $0x6c] sm:$0xff]
      %v233 = vld [vmem:[%s205 + $0x74] sm:$0xf]
      %v234 = vld [vmem:[%s205 + $0x78] sm:$0xff]
      %v235 = vld [vmem:[%s205 + $0x80] sm:$0xff]
      %v236 = vld [vmem:[%s205 + $0x88] sm:$0xf]
      %v237 = vld [vmem:[%s205 + $0x8c] sm:$0xff]
      %v238 = vld [vmem:[%s205 + $0x94] sm:$0xff]
      %v239 = vld [vmem:[%s205 + $0x9c] sm:$0xf]
      %v240 = vld [vmem:[%s205 + $0xa0] sm:$0xff]
      %v241 = vld [vmem:[%s205 + $0xa8] sm:$0xff]
      %v242 = vld [vmem:[%s205 + $0xb0] sm:$0xf]
      %v243 = vld [vmem:[%s205 + $0xb4] sm:$0xff]
      %v244 = vld [vmem:[%s205 + $0xbc] sm:$0xff]
      %v245 = vld [vmem:[%s205 + $0xc4] sm:$0xf]
      %v246 = vld [vmem:[%s205 + $0xc8] sm:$0xff]
      %v247 = vld [vmem:[%s205 + $0xd0] sm:$0xff]
      %v248 = vld [vmem:[%s205 + $0xd8] sm:$0xf]
      %v249 = vld [vmem:[%s205 + $0xdc] sm:$0xff]
      %v250 = vld [vmem:[%s205 + $0xe4] sm:$0xff]
      %v251 = vld [vmem:[%s205 + $0xec] sm:$0xf]
      %v252 = vld [vmem:[%s205 + $0xf0] sm:$0xff]
      %v253 = vld [vmem:[%s205 + $0xf8] sm:$0xff]
      %v254 = vld [vmem:[%s205 + $0x100] sm:$0xf]
      %v255 = vld [vmem:[%s205 + $0x104] sm:$0xff]
      %v256 = vld [vmem:[%s205 + $0x10c] sm:$0xff]
      %v257 = vld [vmem:[%s205 + $0x114] sm:$0xf]
      %v258 = vld [vmem:[%s205 + $0x118] sm:$0xff]
      %v259 = vld [vmem:[%s205 + $0x120] sm:$0xff]
      %v260 = vld [vmem:[%s205 + $0x128] sm:$0xf]
      %v261 = vld [vmem:[%s205 + $0x12c] sm:$0xff]
      %v262 = vld [vmem:[%s205 + $0x134] sm:$0xff]
      %v263 = vld [vmem:[%s205 + $0x13c] sm:$0xf]
      %v264 = vld [vmem:[%s205 + $0x140] sm:$0xff]
      %v265 = vld [vmem:[%s205 + $0x148] sm:$0xff]
      %v266 = vld [vmem:[%s205 + $0x150] sm:$0xf]
      %v267 = vld [vmem:[%s205 + $0x154] sm:$0xff]
      %v268 = vld [vmem:[%s205 + $0x15c] sm:$0xff]
      %v269 = vld [vmem:[%s205 + $0x164] sm:$0xf]
      %v270 = vld [vmem:[%s205 + $0x168] sm:$0xff]
      %v271 = vld [vmem:[%s205 + $0x170] sm:$0xff]
      %v272 = vld [vmem:[%s205 + $0x178] sm:$0xf]
      %v273 = vld [vmem:[%s205 + $0x17c] sm:$0xff]
      %v274 = vld [vmem:[%s205 + $0x184] sm:$0xff]
      %v275 = vld [vmem:[%s205 + $0x18c] sm:$0xf]
      %v276 = vld [vmem:[%s205 + $0x190] sm:$0xff]
      %v277 = vld [vmem:[%s205 + $0x198] sm:$0xff]
      %v278 = vld [vmem:[%s205 + $0x1a0] sm:$0xf]
      %v279 = vld [vmem:[%s205 + $0x1a4] sm:$0xff]
      %v280 = vld [vmem:[%s205 + $0x1ac] sm:$0xff]
      %v281 = vld [vmem:[%s205 + $0x1b4] sm:$0xf]
      %v282 = vld [vmem:[%s205 + $0x1b8] sm:$0xff]
      %v283 = vld [vmem:[%s205 + $0x1c0] sm:$0xff]
      %v284 = vld [vmem:[%s205 + $0x1c8] sm:$0xf]
      %v285 = vld [vmem:[%s205 + $0x1cc] sm:$0xff]
      %v286 = vld [vmem:[%s205 + $0x1d4] sm:$0xff]
      %v287 = vld [vmem:[%s205 + $0x1dc] sm:$0xf]
      %v288 = vld [vmem:[%s205 + $0x1e0] sm:$0xff]
      %v289 = vld [vmem:[%s205 + $0x1e8] sm:$0xff]
      %v290 = vld [vmem:[%s205 + $0x1f0] sm:$0xf]
      %v291 = vld [vmem:[%s205 + $0x1f4] sm:$0xff]
      %v292 = vld [vmem:[%s205 + $0x1fc] sm:$0xff]
      %v293 = vld [vmem:[%s205 + $0x204] sm:$0xf]
      %v294 = vld [vmem:[%s205 + $0x208] sm:$0xff]
      %v295 = vld [vmem:[%s205 + $0x210] sm:$0xff]
      %v296 = vld [vmem:[%s205 + $0x218] sm:$0xf]
      %v297 = vld [vmem:[%s205 + $0x21c] sm:$0xff]
      %v298 = vld [vmem:[%s205 + $0x224] sm:$0xff]
      %v299 = vld [vmem:[%s205 + $0x22c] sm:$0xf]
      %v300 = vld [vmem:[%s205 + $0x230] sm:$0xff]
      %v301 = vld [vmem:[%s205 + $0x238] sm:$0xff]
      %v302 = vld [vmem:[%s205 + $0x240] sm:$0xf]
      %v303 = vld [vmem:[%s205 + $0x244] sm:$0xff]
      %v304 = vld [vmem:[%s205 + $0x24c] sm:$0xff]
      %v305 = vld [vmem:[%s205 + $0x254] sm:$0xf]
      %v306 = vld [vmem:[%s205 + $0x258] sm:$0xff]
      %v307 = vld [vmem:[%s205 + $0x260] sm:$0xff]
      %v308 = vld [vmem:[%s205 + $0x268] sm:$0xf]
      %v309 = vld [vmem:[%s205 + $0x26c] sm:$0xff]
      %v310 = vld [vmem:[%s205 + $0x274] sm:$0xff]
      %v311 = vld [vmem:[%s205 + $0x27c] sm:$0xf]
      %v312 = vld [vmem:[%s1] sm:$0xf]
      %v313 = vld [vmem:[%s1 + $0x4] sm:$0xf]
      %v314 = vld [vmem:[%s1 + $0x8] sm:$0xf]
      %v315 = vld [vmem:[%s1 + $0xc] sm:$0xf]
      %v316 = vld [vmem:[%s1 + $0x10] sm:$0xf]
      %v317 = vld [vmem:[%s1 + $0x14] sm:$0xf]
      %v318 = vld [vmem:[%s1 + $0x18] sm:$0xf]
      %v319 = vld [vmem:[%s1 + $0x1c] sm:$0xf]
      %v320 = vld [vmem:[%s1 + $0x20] sm:$0xf]
      %v321 = vld [vmem:[%s1 + $0x24] sm:$0xf]
      %v322 = vld [vmem:[%s1 + $0x28] sm:$0xf]
      %v323 = vld [vmem:[%s1 + $0x2c] sm:$0xf]
      %v324 = vld [vmem:[%s1 + $0x30] sm:$0xf]
      %v325 = vld [vmem:[%s1 + $0x34] sm:$0xf]
      %v326 = vld [vmem:[%s1 + $0x38] sm:$0xf]
      %v327 = vld [vmem:[%s1 + $0x3c] sm:$0xf]
      %v328 = vld [vmem:[%s1 + $0x40] sm:$0xf]
      %v329 = vld [vmem:[%s1 + $0x44] sm:$0xf]
      %v330 = vld [vmem:[%s1 + $0x48] sm:$0xf]
      %v331 = vld [vmem:[%s1 + $0x4c] sm:$0xf]
      %v332 = vld [vmem:[%s1 + $0x50] sm:$0xf]
      %v333 = vld [vmem:[%s1 + $0x54] sm:$0xf]
      %v334 = vld [vmem:[%s1 + $0x58] sm:$0xf]
      %v335 = vld [vmem:[%s1 + $0x5c] sm:$0xf]
      %v336 = vld [vmem:[%s1 + $0x60] sm:$0xf]
      %v337 = vld [vmem:[%s1 + $0x64] sm:$0xf]
      %v338 = vld [vmem:[%s1 + $0x68] sm:$0xf]
      %v339 = vld [vmem:[%s1 + $0x6c] sm:$0xf]
      %v340 = vld [vmem:[%s1 + $0x70] sm:$0xf]
      %v341 = vld [vmem:[%s1 + $0x74] sm:$0xf]
      %v342 = vld [vmem:[%s1 + $0x78] sm:$0xf]
      %v343 = vld [vmem:[%s1 + $0x7c] sm:$0xf]
      %v344 = vld [vmem:[%s1 + $0x80] sm:$0xf]
      %v345 = vld [vmem:[%s1 + $0x84] sm:$0xf]
      %v346 = vld [vmem:[%s1 + $0x88] sm:$0xf]
      %v347 = vld [vmem:[%s1 + $0x8c] sm:$0xf]
      %v348 = vld [vmem:[%s1 + $0x90] sm:$0xf]
      %v349 = vld [vmem:[%s1 + $0x94] sm:$0xf]
      %v350 = vld [vmem:[%s1 + $0x98] sm:$0xf]
      %v351 = vld [vmem:[%s1 + $0x9c] sm:$0xf]
      %v352 = vld [vmem:[%s1 + $0xa0] sm:$0xf]
      %v353 = vld [vmem:[%s1 + $0xa4] sm:$0xf]
      %v354 = vld [vmem:[%s1 + $0xa8] sm:$0xf]
      %v355 = vld [vmem:[%s1 + $0xac] sm:$0xf]
      %v356 = vld [vmem:[%s1 + $0xb0] sm:$0xf]
      %v357 = vld [vmem:[%s1 + $0xb4] sm:$0xf]
      %v358 = vld [vmem:[%s1 + $0xb8] sm:$0xf]
      %v359 = vld [vmem:[%s1 + $0xbc] sm:$0xf]
      %v360 = vld [vmem:[%s1 + $0xc0] sm:$0xf]
      %v361 = vld [vmem:[%s1 + $0xc4] sm:$0xf]
      %v362 = vld [vmem:[%s1 + $0xc8] sm:$0xf]
      %v363 = vld [vmem:[%s1 + $0xcc] sm:$0xf]
      %v364 = vld [vmem:[%s1 + $0xd0] sm:$0xf]
      %v365 = vld [vmem:[%s1 + $0xd4] sm:$0xf]
      %v366 = vld [vmem:[%s1 + $0xd8] sm:$0xf]
      %v367 = vld [vmem:[%s1 + $0xdc] sm:$0xf]
      %v368 = vld [vmem:[%s1 + $0xe0] sm:$0xf]
      %v369 = vld [vmem:[%s1 + $0xe4] sm:$0xf]
      %v370 = vld [vmem:[%s1 + $0xe8] sm:$0xf]
      %v371 = vld [vmem:[%s1 + $0xec] sm:$0xf]
      %v372 = vld [vmem:[%s1 + $0xf0] sm:$0xf]
      %v373 = vld [vmem:[%s1 + $0xf4] sm:$0xf]
      %v374 = vld [vmem:[%s1 + $0xf8] sm:$0xf]
      %v375 = vld [vmem:[%s1 + $0xfc] sm:$0xf]
      %v376 = vld [vmem:[%s1 + $0x100] sm:$0xf]
      %v377 = vld [vmem:[%s1 + $0x104] sm:$0xf]
      %v378 = vld [vmem:[%s1 + $0x108] sm:$0xf]
      %v379 = vld [vmem:[%s1 + $0x10c] sm:$0xf]
      %v380 = vld [vmem:[%s1 + $0x110] sm:$0xf]
      %v381 = vld [vmem:[%s1 + $0x114] sm:$0xf]
      %v382 = vld [vmem:[%s1 + $0x118] sm:$0xf]
      %v383 = vld [vmem:[%s1 + $0x11c] sm:$0xf]
      %v384 = vld [vmem:[%s2] sm:$0x1]
      %v386 = vlaneseq
      %v387 = vshrl.u32 %v386, 7
      %v388 = vsub.s32 0, %v387
      %v389 = vrot.slane %v384, %v388
      %v487 = vunpack.c.l.b16 %v216
      %v488 = vunpack.c.h.b16 %v216
      %v489 = vunpack.c.l.b16 %v217
      %v490 = vunpack.c.h.b16 %v217
      %v491 = vunpack.c.l.b16 %v218
      %v492 = vunpack.c.l.b16 %v219
      %v493 = vunpack.c.h.b16 %v219
      %v494 = vunpack.c.l.b16 %v220
      %v495 = vunpack.c.h.b16 %v220
      %v496 = vunpack.c.l.b16 %v221
      %v497 = vunpack.c.l.b16 %v222
      %v498 = vunpack.c.h.b16 %v222
      %v499 = vunpack.c.l.b16 %v223
      %v500 = vunpack.c.h.b16 %v223
      %v501 = vunpack.c.l.b16 %v224
      %v502 = vunpack.c.l.b16 %v225
      %v503 = vunpack.c.h.b16 %v225
      %v504 = vunpack.c.l.b16 %v226
      %v505 = vunpack.c.h.b16 %v226
      %v506 = vunpack.c.l.b16 %v227
      %v507 = vunpack.c.l.b16 %v228
      %v508 = vunpack.c.h.b16 %v228
      %v509 = vunpack.c.l.b16 %v229
      %v510 = vunpack.c.h.b16 %v229
      %v511 = vunpack.c.l.b16 %v230
      %v512 = vunpack.c.l.b16 %v231
      %v513 = vunpack.c.h.b16 %v231
      %v514 = vunpack.c.l.b16 %v232
      %v515 = vunpack.c.h.b16 %v232
      %v516 = vunpack.c.l.b16 %v233
      %v517 = vunpack.c.l.b16 %v234
      %v518 = vunpack.c.h.b16 %v234
      %v519 = vunpack.c.l.b16 %v235
      %v520 = vunpack.c.h.b16 %v235
      %v521 = vunpack.c.l.b16 %v236
      %v522 = vunpack.c.l.b16 %v237
      %v523 = vunpack.c.h.b16 %v237
      %v524 = vunpack.c.l.b16 %v238
      %v525 = vunpack.c.h.b16 %v238
      %v526 = vunpack.c.l.b16 %v239
      %v527 = vunpack.c.l.b16 %v240
      %v528 = vunpack.c.h.b16 %v240
      %v529 = vunpack.c.l.b16 %v241
      %v530 = vunpack.c.h.b16 %v241
      %v531 = vunpack.c.l.b16 %v242
      %v532 = vunpack.c.l.b16 %v243
      %v533 = vunpack.c.h.b16 %v243
      %v534 = vunpack.c.l.b16 %v244
      %v535 = vunpack.c.h.b16 %v244
      %v536 = vunpack.c.l.b16 %v245
      %v537 = vunpack.c.l.b16 %v246
      %v538 = vunpack.c.h.b16 %v246
      %v539 = vunpack.c.l.b16 %v247
      %v540 = vunpack.c.h.b16 %v247
      %v541 = vunpack.c.l.b16 %v248
      %v542 = vunpack.c.l.b16 %v249
      %v543 = vunpack.c.h.b16 %v249
      %v544 = vunpack.c.l.b16 %v250
      %v545 = vunpack.c.h.b16 %v250
      %v546 = vunpack.c.l.b16 %v251
      %v547 = vunpack.c.l.b16 %v252
      %v548 = vunpack.c.h.b16 %v252
      %v549 = vunpack.c.l.b16 %v253
      %v550 = vunpack.c.h.b16 %v253
      %v551 = vunpack.c.l.b16 %v254
      %v552 = vunpack.c.l.b16 %v255
      %v553 = vunpack.c.h.b16 %v255
      %v554 = vunpack.c.l.b16 %v256
      %v555 = vunpack.c.h.b16 %v256
      %v556 = vunpack.c.l.b16 %v257
      %v557 = vunpack.c.l.b16 %v258
      %v558 = vunpack.c.h.b16 %v258
      %v559 = vunpack.c.l.b16 %v259
      %v560 = vunpack.c.h.b16 %v259
      %v561 = vunpack.c.l.b16 %v260
      %v562 = vunpack.c.l.b16 %v261
      %v563 = vunpack.c.h.b16 %v261
      %v564 = vunpack.c.l.b16 %v262
      %v565 = vunpack.c.h.b16 %v262
      %v566 = vunpack.c.l.b16 %v263
      %v567 = vunpack.c.l.b16 %v264
      %v568 = vunpack.c.h.b16 %v264
      %v569 = vunpack.c.l.b16 %v265
      %v570 = vunpack.c.h.b16 %v265
      %v571 = vunpack.c.l.b16 %v266
      %v572 = vunpack.c.l.b16 %v267
      %v573 = vunpack.c.h.b16 %v267
      %v574 = vunpack.c.l.b16 %v268
      %v575 = vunpack.c.h.b16 %v268
      %v576 = vunpack.c.l.b16 %v269
      %v577 = vunpack.c.l.b16 %v270
      %v578 = vunpack.c.h.b16 %v270
      %v579 = vunpack.c.l.b16 %v271
      %v580 = vunpack.c.h.b16 %v271
      %v581 = vunpack.c.l.b16 %v272
      %v582 = vunpack.c.l.b16 %v273
      %v583 = vunpack.c.h.b16 %v273
      %v584 = vunpack.c.l.b16 %v274
      %v585 = vunpack.c.h.b16 %v274
      %v586 = vunpack.c.l.b16 %v275
      %v587 = vunpack.c.l.b16 %v276
      %v588 = vunpack.c.h.b16 %v276
      %v589 = vunpack.c.l.b16 %v277
      %v590 = vunpack.c.h.b16 %v277
      %v591 = vunpack.c.l.b16 %v278
      %v592 = vunpack.c.l.b16 %v279
      %v593 = vunpack.c.h.b16 %v279
      %v594 = vunpack.c.l.b16 %v280
      %v595 = vunpack.c.h.b16 %v280
      %v596 = vunpack.c.l.b16 %v281
      %v597 = vunpack.c.l.b16 %v282
      %v598 = vunpack.c.h.b16 %v282
      %v599 = vunpack.c.l.b16 %v283
      %v600 = vunpack.c.h.b16 %v283
      %v601 = vunpack.c.l.b16 %v284
      %v602 = vunpack.c.l.b16 %v285
      %v603 = vunpack.c.h.b16 %v285
      %v604 = vunpack.c.l.b16 %v286
      %v605 = vunpack.c.h.b16 %v286
      %v606 = vunpack.c.l.b16 %v287
      %v607 = vunpack.c.l.b16 %v288
      %v608 = vunpack.c.h.b16 %v288
      %v609 = vunpack.c.l.b16 %v289
      %v610 = vunpack.c.h.b16 %v289
      %v611 = vunpack.c.l.b16 %v290
      %v612 = vunpack.c.l.b16 %v291
      %v613 = vunpack.c.h.b16 %v291
      %v614 = vunpack.c.l.b16 %v292
      %v615 = vunpack.c.h.b16 %v292
      %v616 = vunpack.c.l.b16 %v293
      %v617 = vunpack.c.l.b16 %v294
      %v618 = vunpack.c.h.b16 %v294
      %v619 = vunpack.c.l.b16 %v295
      %v620 = vunpack.c.h.b16 %v295
      %v621 = vunpack.c.l.b16 %v296
      %v622 = vunpack.c.l.b16 %v297
      %v623 = vunpack.c.h.b16 %v297
      %v624 = vunpack.c.l.b16 %v298
      %v625 = vunpack.c.h.b16 %v298
      %v626 = vunpack.c.l.b16 %v299
      %v627 = vunpack.c.l.b16 %v300
      %v628 = vunpack.c.h.b16 %v300
      %v629 = vunpack.c.l.b16 %v301
      %v630 = vunpack.c.h.b16 %v301
      %v631 = vunpack.c.l.b16 %v302
      %v632 = vunpack.c.l.b16 %v303
      %v633 = vunpack.c.h.b16 %v303
      %v634 = vunpack.c.l.b16 %v304
      %v635 = vunpack.c.h.b16 %v304
      %v636 = vunpack.c.l.b16 %v305
      %v637 = vunpack.c.l.b16 %v306
      %v638 = vunpack.c.h.b16 %v306
      %v639 = vunpack.c.l.b16 %v307
      %v640 = vunpack.c.h.b16 %v307
      %v641 = vunpack.c.l.b16 %v308
      %v642 = vunpack.c.l.b16 %v309
      %v643 = vunpack.c.h.b16 %v309
      %v644 = vunpack.c.l.b16 %v310
      %v645 = vunpack.c.h.b16 %v310
      %v646 = vunpack.c.l.b16 %v311
      %v647 = vpack.c.b16 %v492, %v487
      %v648 = vpack.c.b16 %v493, %v488
      %v649 = vpack.c.b16 %v494, %v489
      %v650 = vpack.c.b16 %v495, %v490
      %v651 = vpack.c.b16 %v496, %v491
      %v652 = vpack.c.b16 %v502, %v497
      %v653 = vpack.c.b16 %v503, %v498
      %v654 = vpack.c.b16 %v504, %v499
      %v655 = vpack.c.b16 %v505, %v500
      %v656 = vpack.c.b16 %v506, %v501
      %v657 = vpack.c.b16 %v512, %v507
      %v658 = vpack.c.b16 %v513, %v508
      %v659 = vpack.c.b16 %v514, %v509
      %v660 = vpack.c.b16 %v515, %v510
      %v661 = vpack.c.b16 %v516, %v511
      %v662 = vpack.c.b16 %v522, %v517
      %v663 = vpack.c.b16 %v523, %v518
      %v664 = vpack.c.b16 %v524, %v519
      %v665 = vpack.c.b16 %v525, %v520
      %v666 = vpack.c.b16 %v526, %v521
      %v667 = vpack.c.b16 %v532, %v527
      %v668 = vpack.c.b16 %v533, %v528
      %v669 = vpack.c.b16 %v534, %v529
      %v670 = vpack.c.b16 %v535, %v530
      %v671 = vpack.c.b16 %v536, %v531
      %v672 = vpack.c.b16 %v542, %v537
      %v673 = vpack.c.b16 %v543, %v538
      %v674 = vpack.c.b16 %v544, %v539
      %v675 = vpack.c.b16 %v545, %v540
      %v676 = vpack.c.b16 %v546, %v541
      %v677 = vpack.c.b16 %v552, %v547
      %v678 = vpack.c.b16 %v553, %v548
      %v679 = vpack.c.b16 %v554, %v549
      %v680 = vpack.c.b16 %v555, %v550
      %v681 = vpack.c.b16 %v556, %v551
      %v682 = vpack.c.b16 %v562, %v557
      %v683 = vpack.c.b16 %v563, %v558
      %v684 = vpack.c.b16 %v564, %v559
      %v685 = vpack.c.b16 %v565, %v560
      %v686 = vpack.c.b16 %v566, %v561
      %v687 = vpack.c.b16 %v572, %v567
      %v688 = vpack.c.b16 %v573, %v568
      %v689 = vpack.c.b16 %v574, %v569
      %v690 = vpack.c.b16 %v575, %v570
      %v691 = vpack.c.b16 %v576, %v571
      %v692 = vpack.c.b16 %v582, %v577
      %v693 = vpack.c.b16 %v583, %v578
      %v694 = vpack.c.b16 %v584, %v579
      %v695 = vpack.c.b16 %v585, %v580
      %v696 = vpack.c.b16 %v586, %v581
      %v697 = vpack.c.b16 %v592, %v587
      %v698 = vpack.c.b16 %v593, %v588
      %v699 = vpack.c.b16 %v594, %v589
      %v700 = vpack.c.b16 %v595, %v590
      %v701 = vpack.c.b16 %v596, %v591
      %v702 = vpack.c.b16 %v602, %v597
      %v703 = vpack.c.b16 %v603, %v598
      %v704 = vpack.c.b16 %v604, %v599
      %v705 = vpack.c.b16 %v605, %v600
      %v706 = vpack.c.b16 %v606, %v601
      %v707 = vpack.c.b16 %v612, %v607
      %v708 = vpack.c.b16 %v613, %v608
      %v709 = vpack.c.b16 %v614, %v609
      %v710 = vpack.c.b16 %v615, %v610
      %v711 = vpack.c.b16 %v616, %v611
      %v712 = vpack.c.b16 %v622, %v617
      %v713 = vpack.c.b16 %v623, %v618
      %v714 = vpack.c.b16 %v624, %v619
      %v715 = vpack.c.b16 %v625, %v620
      %v716 = vpack.c.b16 %v626, %v621
      %v717 = vpack.c.b16 %v632, %v627
      %v718 = vpack.c.b16 %v633, %v628
      %v719 = vpack.c.b16 %v634, %v629
      %v720 = vpack.c.b16 %v635, %v630
      %v721 = vpack.c.b16 %v636, %v631
      %v722 = vpack.c.b16 %v642, %v637
      %v723 = vpack.c.b16 %v643, %v638
      %v724 = vpack.c.b16 %v644, %v639
      %v725 = vpack.c.b16 %v645, %v640
      %v726 = vpack.c.b16 %v646, %v641
      %v863 = vunpack.c.l.b16 %v312
      %v864 = vunpack.c.l.b16 %v313
      %v865 = vunpack.c.l.b16 %v314
      %v866 = vunpack.c.l.b16 %v315
      %v867 = vunpack.c.l.b16 %v316
      %v868 = vunpack.c.l.b16 %v317
      %v869 = vunpack.c.l.b16 %v318
      %v870 = vunpack.c.l.b16 %v319
      %v871 = vunpack.c.l.b16 %v320
      %v872 = vunpack.c.l.b16 %v321
      %v873 = vunpack.c.l.b16 %v322
      %v874 = vunpack.c.l.b16 %v323
      %v875 = vunpack.c.l.b16 %v324
      %v876 = vunpack.c.l.b16 %v325
      %v877 = vunpack.c.l.b16 %v326
      %v878 = vunpack.c.l.b16 %v327
      %v879 = vunpack.c.l.b16 %v328
      %v880 = vunpack.c.l.b16 %v329
      %v881 = vunpack.c.l.b16 %v330
      %v882 = vunpack.c.l.b16 %v331
      %v883 = vunpack.c.l.b16 %v332
      %v884 = vunpack.c.l.b16 %v333
      %v885 = vunpack.c.l.b16 %v334
      %v886 = vunpack.c.l.b16 %v335
      %v887 = vunpack.c.l.b16 %v336
      %v888 = vunpack.c.l.b16 %v337
      %v889 = vunpack.c.l.b16 %v338
      %v890 = vunpack.c.l.b16 %v339
      %v891 = vunpack.c.l.b16 %v340
      %v892 = vunpack.c.l.b16 %v341
      %v893 = vunpack.c.l.b16 %v342
      %v894 = vunpack.c.l.b16 %v343
      %v895 = vunpack.c.l.b16 %v344
      %v896 = vunpack.c.l.b16 %v345
      %v897 = vunpack.c.l.b16 %v346
      %v898 = vunpack.c.l.b16 %v347
      %v899 = vunpack.c.l.b16 %v348
      %v900 = vunpack.c.l.b16 %v349
      %v901 = vunpack.c.l.b16 %v350
      %v902 = vunpack.c.l.b16 %v351
      %v903 = vunpack.c.l.b16 %v352
      %v904 = vunpack.c.l.b16 %v353
      %v905 = vunpack.c.l.b16 %v354
      %v906 = vunpack.c.l.b16 %v355
      %v907 = vunpack.c.l.b16 %v356
      %v908 = vunpack.c.l.b16 %v357
      %v909 = vunpack.c.l.b16 %v358
      %v910 = vunpack.c.l.b16 %v359
      %v911 = vunpack.c.l.b16 %v360
      %v912 = vunpack.c.l.b16 %v361
      %v913 = vunpack.c.l.b16 %v362
      %v914 = vunpack.c.l.b16 %v363
      %v915 = vunpack.c.l.b16 %v364
      %v916 = vunpack.c.l.b16 %v365
      %v917 = vunpack.c.l.b16 %v366
      %v918 = vunpack.c.l.b16 %v367
      %v919 = vunpack.c.l.b16 %v368
      %v920 = vunpack.c.l.b16 %v369
      %v921 = vunpack.c.l.b16 %v370
      %v922 = vunpack.c.l.b16 %v371
      %v923 = vunpack.c.l.b16 %v372
      %v924 = vunpack.c.l.b16 %v373
      %v925 = vunpack.c.l.b16 %v374
      %v926 = vunpack.c.l.b16 %v375
      %v927 = vunpack.c.l.b16 %v376
      %v928 = vunpack.c.l.b16 %v377
      %v929 = vunpack.c.l.b16 %v378
      %v930 = vunpack.c.l.b16 %v379
      %v931 = vunpack.c.l.b16 %v380
      %v932 = vunpack.c.l.b16 %v381
      %v933 = vunpack.c.l.b16 %v382
      %v934 = vunpack.c.l.b16 %v383
      %v935 = vpack.c.b16 %v864, %v863
      %v936 = vpack.c.b16 %v866, %v865
      %v937 = vpack.c.b16 %v868, %v867
      %v938 = vpack.c.b16 %v870, %v869
      %v939 = vpack.c.b16 %v872, %v871
      %v940 = vpack.c.b16 %v874, %v873
      %v941 = vpack.c.b16 %v876, %v875
      %v942 = vpack.c.b16 %v878, %v877
      %v943 = vpack.c.b16 %v880, %v879
      %v944 = vpack.c.b16 %v882, %v881
      %v945 = vpack.c.b16 %v884, %v883
      %v946 = vpack.c.b16 %v886, %v885
      %v947 = vpack.c.b16 %v888, %v887
      %v948 = vpack.c.b16 %v890, %v889
      %v949 = vpack.c.b16 %v892, %v891
      %v950 = vpack.c.b16 %v894, %v893
      %v951 = vpack.c.b16 %v896, %v895
      %v952 = vpack.c.b16 %v898, %v897
      %v953 = vpack.c.b16 %v900, %v899
      %v954 = vpack.c.b16 %v902, %v901
      %v955 = vpack.c.b16 %v904, %v903
      %v956 = vpack.c.b16 %v906, %v905
      %v957 = vpack.c.b16 %v908, %v907
      %v958 = vpack.c.b16 %v910, %v909
      %v959 = vpack.c.b16 %v912, %v911
      %v960 = vpack.c.b16 %v914, %v913
      %v961 = vpack.c.b16 %v916, %v915
      %v962 = vpack.c.b16 %v918, %v917
      %v963 = vpack.c.b16 %v920, %v919
      %v964 = vpack.c.b16 %v922, %v921
      %v965 = vpack.c.b16 %v924, %v923
      %v966 = vpack.c.b16 %v926, %v925
      %v967 = vpack.c.b16 %v928, %v927
      %v968 = vpack.c.b16 %v930, %v929
      %v969 = vpack.c.b16 %v932, %v931
      %v970 = vpack.c.b16 %v934, %v933
      %vm1007 = vcmask 523264
      %v1009 = vsel %vm1007, %v651, 0
      %v1012 = vsel %vm1007, %v656, 0
      %v1015 = vsel %vm1007, %v661, 0
      %v1018 = vsel %vm1007, %v666, 0
      %v1021 = vsel %vm1007, %v671, 0
      %v1024 = vsel %vm1007, %v676, 0
      %v1027 = vsel %vm1007, %v681, 0
      %v1030 = vsel %vm1007, %v686, 0
      %v1033 = vsel %vm1007, %v691, 0
      %v1036 = vsel %vm1007, %v696, 0
      %v1039 = vsel %vm1007, %v701, 0
      %v1042 = vsel %vm1007, %v706, 0
      %v1045 = vsel %vm1007, %v711, 0
      %v1048 = vsel %vm1007, %v716, 0
      %v1051 = vsel %vm1007, %v721, 0
      %v1054 = vsel %vm1007, %v726, 0
      %1056 = vmatprep.subr.bf16.mxu0 0
      %1057 = vmatpush1.bf16.msra.mxu0 %v942
      %1058 = vmatprep.subr.bf16.mxu0 0
      %1059 = vmatpush1.bf16.msra.mxu0 %v941
      %1060 = vmatprep.subr.bf16.mxu0 0
      %1061 = vmatpush1.bf16.msra.mxu0 %v940
      %1062 = vmatprep.subr.bf16.mxu0 0
      %1063 = vmatpush1.bf16.msra.mxu0 %v939
      %1064 = vmatprep.subr.bf16.mxu0 0
      %1065 = vmatpush1.bf16.msra.mxu0 %v938
      %1066 = vmatprep.subr.bf16.mxu0 0
      %1067 = vmatpush1.bf16.msra.mxu0 %v937
      %1068 = vmatprep.subr.bf16.mxu0 0
      %1069 = vmatpush1.bf16.msra.mxu0 %v936
      %1070 = vmatprep.subr.bf16.mxu0 0
      %1071 = vmatpush1.bf16.msra.mxu0 %v935
      %1072 = vmatprep.subr.bf16.mxu0 0
      %1073 = vmatpush2.bf16.msra.mxu0 %v950
      %1074 = vmatprep.subr.bf16.mxu0 0
      %1075 = vmatpush2.bf16.msra.mxu0 %v949
      %1076 = vmatprep.subr.bf16.mxu0 0
      %1077 = vmatpush2.bf16.msra.mxu0 %v948
      %1078 = vmatprep.subr.bf16.mxu0 0
      %1079 = vmatpush2.bf16.msra.mxu0 %v947
      %1080 = vmatprep.subr.bf16.mxu0 0
      %1081 = vmatpush2.bf16.msra.mxu0 %v946
      %1082 = vmatprep.subr.bf16.mxu0 0
      %1083 = vmatpush2.bf16.msra.mxu0 %v945
      %1084 = vmatprep.subr.bf16.mxu0 0
      %1085 = vmatpush2.bf16.msra.mxu0 %v944
      %1086 = vmatprep.subr.bf16.mxu0 0
      %1087 = vmatpush2.bf16.msra.mxu0 %v943
      %1088 = vmatprep.mubr.bf16.mxu0 %v648
      %1089 = vmatmul.mubr.bf16.gmra.mxu0 %v647
      %v1090 = vpop.f32.mrf.mxu0
      %v1091 = vadd.f32 %v389, %v1090
      %v1092 = vpop.f32.mrf.mxu0
      %v1093 = vpop.f32.mrf.mxu0
      %v1094 = vadd.f32 %v389, %v1093
      %v1095 = vpop.f32.mrf.mxu0
      %1096 = vmatprep.mubr.bf16.mxu0 %v653
      %1097 = vmatmul.mubr.bf16.gmra.mxu0 %v652
      %v1098 = vpop.f32.mrf.mxu0
      %v1099 = vadd.f32 %v389, %v1098
      %v1100 = vpop.f32.mrf.mxu0
      %v1101 = vpop.f32.mrf.mxu0
      %v1102 = vadd.f32 %v389, %v1101
      %v1103 = vpop.f32.mrf.mxu0
      %1104 = vmatprep.mubr.bf16.mxu0 %v658
      %1105 = vmatmul.mubr.bf16.gmra.mxu0 %v657
      %v1106 = vpop.f32.mrf.mxu0
      %v1107 = vadd.f32 %v389, %v1106
      %v1108 = vpop.f32.mrf.mxu0
      %v1109 = vpop.f32.mrf.mxu0
      %v1110 = vadd.f32 %v389, %v1109
      %v1111 = vpop.f32.mrf.mxu0
      %1112 = vmatprep.mubr.bf16.mxu0 %v663
      %1113 = vmatmul.mubr.bf16.gmra.mxu0 %v662
      %v1114 = vpop.f32.mrf.mxu0
      %v1115 = vadd.f32 %v389, %v1114
      %v1116 = vpop.f32.mrf.mxu0
      %v1117 = vpop.f32.mrf.mxu0
      %v1118 = vadd.f32 %v389, %v1117
      %v1119 = vpop.f32.mrf.mxu0
      %1120 = vmatprep.mubr.bf16.mxu0 %v668
      %1121 = vmatmul.mubr.bf16.gmra.mxu0 %v667
      %v1122 = vpop.f32.mrf.mxu0
      %v1123 = vadd.f32 %v389, %v1122
      %v1124 = vpop.f32.mrf.mxu0
      %v1125 = vpop.f32.mrf.mxu0
      %v1126 = vadd.f32 %v389, %v1125
      %v1127 = vpop.f32.mrf.mxu0
      %1128 = vmatprep.mubr.bf16.mxu0 %v673
      %1129 = vmatmul.mubr.bf16.gmra.mxu0 %v672
      %v1130 = vpop.f32.mrf.mxu0
      %v1131 = vadd.f32 %v389, %v1130
      %v1132 = vpop.f32.mrf.mxu0
      %v1133 = vpop.f32.mrf.mxu0
      %v1134 = vadd.f32 %v389, %v1133
      %v1135 = vpop.f32.mrf.mxu0
      %1136 = vmatprep.mubr.bf16.mxu0 %v678
      %1137 = vmatmul.mubr.bf16.gmra.mxu0 %v677
      %v1138 = vpop.f32.mrf.mxu0
      %v1139 = vadd.f32 %v389, %v1138
      %v1140 = vpop.f32.mrf.mxu0
      %v1141 = vpop.f32.mrf.mxu0
      %v1142 = vadd.f32 %v389, %v1141
      %v1143 = vpop.f32.mrf.mxu0
      %1144 = vmatprep.mubr.bf16.mxu0 %v683
      %1145 = vmatmul.mubr.bf16.gmra.mxu0 %v682
      %v1146 = vpop.f32.mrf.mxu0
      %v1147 = vadd.f32 %v389, %v1146
      %v1148 = vpop.f32.mrf.mxu0
      %v1149 = vpop.f32.mrf.mxu0
      %v1150 = vadd.f32 %v389, %v1149
      %v1151 = vpop.f32.mrf.mxu0
      %1152 = vmatprep.mubr.bf16.mxu0 %v688
      %1153 = vmatmul.mubr.bf16.gmra.mxu0 %v687
      %v1154 = vpop.f32.mrf.mxu0
      %v1155 = vadd.f32 %v389, %v1154
      %v1156 = vpop.f32.mrf.mxu0
      %v1157 = vpop.f32.mrf.mxu0
      %v1158 = vadd.f32 %v389, %v1157
      %v1159 = vpop.f32.mrf.mxu0
      %1160 = vmatprep.mubr.bf16.mxu0 %v693
      %1161 = vmatmul.mubr.bf16.gmra.mxu0 %v692
      %v1162 = vpop.f32.mrf.mxu0
      %v1163 = vadd.f32 %v389, %v1162
      %v1164 = vpop.f32.mrf.mxu0
      %v1165 = vpop.f32.mrf.mxu0
      %v1166 = vadd.f32 %v389, %v1165
      %v1167 = vpop.f32.mrf.mxu0
      %1168 = vmatprep.mubr.bf16.mxu0 %v698
      %1169 = vmatmul.mubr.bf16.gmra.mxu0 %v697
      %v1170 = vpop.f32.mrf.mxu0
      %v1171 = vadd.f32 %v389, %v1170
      %v1172 = vpop.f32.mrf.mxu0
      %v1173 = vpop.f32.mrf.mxu0
      %v1174 = vadd.f32 %v389, %v1173
      %v1175 = vpop.f32.mrf.mxu0
      %1176 = vmatprep.mubr.bf16.mxu0 %v703
      %1177 = vmatmul.mubr.bf16.gmra.mxu0 %v702
      %v1178 = vpop.f32.mrf.mxu0
      %v1179 = vadd.f32 %v389, %v1178
      %v1180 = vpop.f32.mrf.mxu0
      %v1181 = vpop.f32.mrf.mxu0
      %v1182 = vadd.f32 %v389, %v1181
      %v1183 = vpop.f32.mrf.mxu0
      %1184 = vmatprep.mubr.bf16.mxu0 %v708
      %1185 = vmatmul.mubr.bf16.gmra.mxu0 %v707
      %v1186 = vpop.f32.mrf.mxu0
      %v1187 = vadd.f32 %v389, %v1186
      %v1188 = vpop.f32.mrf.mxu0
      %v1189 = vpop.f32.mrf.mxu0
      %v1190 = vadd.f32 %v389, %v1189
      %v1191 = vpop.f32.mrf.mxu0
      %1192 = vmatprep.mubr.bf16.mxu0 %v713
      %1193 = vmatmul.mubr.bf16.gmra.mxu0 %v712
      %v1194 = vpop.f32.mrf.mxu0
      %v1195 = vadd.f32 %v389, %v1194
      %v1196 = vpop.f32.mrf.mxu0
      %v1197 = vpop.f32.mrf.mxu0
      %v1198 = vadd.f32 %v389, %v1197
      %v1199 = vpop.f32.mrf.mxu0
      %1200 = vmatprep.mubr.bf16.mxu0 %v718
      %1201 = vmatmul.mubr.bf16.gmra.mxu0 %v717
      %v1202 = vpop.f32.mrf.mxu0
      %v1203 = vadd.f32 %v389, %v1202
      %v1204 = vpop.f32.mrf.mxu0
      %v1205 = vpop.f32.mrf.mxu0
      %v1206 = vadd.f32 %v389, %v1205
      %v1207 = vpop.f32.mrf.mxu0
      %1208 = vmatprep.mubr.bf16.mxu0 %v723
      %1209 = vmatmul.mubr.bf16.gmra.mxu0 %v722
      %v1210 = vpop.f32.mrf.mxu0
      %v1211 = vadd.f32 %v389, %v1210
      %v1212 = vpop.f32.mrf.mxu0
      %v1213 = vpop.f32.mrf.mxu0
      %v1214 = vadd.f32 %v389, %v1213
      %v1215 = vpop.f32.mrf.mxu0
      %1216 = vdwg.mxu0
      %1217 = vmatprep.subr.bf16.mxu0 0
      %1218 = vmatpush1.bf16.msra.mxu0 %v958
      %1219 = vmatprep.subr.bf16.mxu0 0
      %1220 = vmatpush1.bf16.msra.mxu0 %v957
      %1221 = vmatprep.subr.bf16.mxu0 0
      %1222 = vmatpush1.bf16.msra.mxu0 %v956
      %1223 = vmatprep.subr.bf16.mxu0 0
      %1224 = vmatpush1.bf16.msra.mxu0 %v955
      %1225 = vmatprep.subr.bf16.mxu0 0
      %1226 = vmatpush1.bf16.msra.mxu0 %v954
      %1227 = vmatprep.subr.bf16.mxu0 0
      %1228 = vmatpush1.bf16.msra.mxu0 %v953
      %1229 = vmatprep.subr.bf16.mxu0 0
      %1230 = vmatpush1.bf16.msra.mxu0 %v952
      %1231 = vmatprep.subr.bf16.mxu0 0
      %1232 = vmatpush1.bf16.msra.mxu0 %v951
      %1233 = vmatprep.subr.bf16.mxu0 0
      %1234 = vmatpush2.bf16.msra.mxu0 %v966
      %1235 = vmatprep.subr.bf16.mxu0 0
      %1236 = vmatpush2.bf16.msra.mxu0 %v965
      %1237 = vmatprep.subr.bf16.mxu0 0
      %1238 = vmatpush2.bf16.msra.mxu0 %v964
      %1239 = vmatprep.subr.bf16.mxu0 0
      %1240 = vmatpush2.bf16.msra.mxu0 %v963
      %1241 = vmatprep.subr.bf16.mxu0 0
      %1242 = vmatpush2.bf16.msra.mxu0 %v962
      %1243 = vmatprep.subr.bf16.mxu0 0
      %1244 = vmatpush2.bf16.msra.mxu0 %v961
      %1245 = vmatprep.subr.bf16.mxu0 0
      %1246 = vmatpush2.bf16.msra.mxu0 %v960
      %1247 = vmatprep.subr.bf16.mxu0 0
      %1248 = vmatpush2.bf16.msra.mxu0 %v959
      %1249 = vmatprep.mubr.bf16.mxu0 %v650
      %1250 = vmatmul.mubr.bf16.gmra.mxu0 %v649
      %v1251 = vpop.f32.mrf.mxu0
      %v1252 = vadd.f32 %v1091, %v1251
      %v1253 = vpop.f32.mrf.mxu0
      %v1254 = vpop.f32.mrf.mxu0
      %v1255 = vadd.f32 %v1094, %v1254
      %v1256 = vpop.f32.mrf.mxu0
      %1257 = vmatprep.mubr.bf16.mxu0 %v655
      %1258 = vmatmul.mubr.bf16.gmra.mxu0 %v654
      %v1259 = vpop.f32.mrf.mxu0
      %v1260 = vadd.f32 %v1099, %v1259
      %v1261 = vpop.f32.mrf.mxu0
      %v1262 = vpop.f32.mrf.mxu0
      %v1263 = vadd.f32 %v1102, %v1262
      %v1264 = vpop.f32.mrf.mxu0
      %1265 = vmatprep.mubr.bf16.mxu0 %v660
      %1266 = vmatmul.mubr.bf16.gmra.mxu0 %v659
      %v1267 = vpop.f32.mrf.mxu0
      %v1268 = vadd.f32 %v1107, %v1267
      %v1269 = vpop.f32.mrf.mxu0
      %v1270 = vpop.f32.mrf.mxu0
      %v1271 = vadd.f32 %v1110, %v1270
      %v1272 = vpop.f32.mrf.mxu0
      %1273 = vmatprep.mubr.bf16.mxu0 %v665
      %1274 = vmatmul.mubr.bf16.gmra.mxu0 %v664
      %v1275 = vpop.f32.mrf.mxu0
      %v1276 = vadd.f32 %v1115, %v1275
      %v1277 = vpop.f32.mrf.mxu0
      %v1278 = vpop.f32.mrf.mxu0
      %v1279 = vadd.f32 %v1118, %v1278
      %v1280 = vpop.f32.mrf.mxu0
      %1281 = vmatprep.mubr.bf16.mxu0 %v670
      %1282 = vmatmul.mubr.bf16.gmra.mxu0 %v669
      %v1283 = vpop.f32.mrf.mxu0
      %v1284 = vadd.f32 %v1123, %v1283
      %v1285 = vpop.f32.mrf.mxu0
      %v1286 = vpop.f32.mrf.mxu0
      %v1287 = vadd.f32 %v1126, %v1286
      %v1288 = vpop.f32.mrf.mxu0
      %1289 = vmatprep.mubr.bf16.mxu0 %v675
      %1290 = vmatmul.mubr.bf16.gmra.mxu0 %v674
      %v1291 = vpop.f32.mrf.mxu0
      %v1292 = vadd.f32 %v1131, %v1291
      %v1293 = vpop.f32.mrf.mxu0
      %v1294 = vpop.f32.mrf.mxu0
      %v1295 = vadd.f32 %v1134, %v1294
      %v1296 = vpop.f32.mrf.mxu0
      %1297 = vmatprep.mubr.bf16.mxu0 %v680
      %1298 = vmatmul.mubr.bf16.gmra.mxu0 %v679
      %v1299 = vpop.f32.mrf.mxu0
      %v1300 = vadd.f32 %v1139, %v1299
      %v1301 = vpop.f32.mrf.mxu0
      %v1302 = vpop.f32.mrf.mxu0
      %v1303 = vadd.f32 %v1142, %v1302
      %v1304 = vpop.f32.mrf.mxu0
      %1305 = vmatprep.mubr.bf16.mxu0 %v685
      %1306 = vmatmul.mubr.bf16.gmra.mxu0 %v684
      %v1307 = vpop.f32.mrf.mxu0
      %v1308 = vadd.f32 %v1147, %v1307
      %v1309 = vpop.f32.mrf.mxu0
      %v1310 = vpop.f32.mrf.mxu0
      %v1311 = vadd.f32 %v1150, %v1310
      %v1312 = vpop.f32.mrf.mxu0
      %1313 = vmatprep.mubr.bf16.mxu0 %v690
      %1314 = vmatmul.mubr.bf16.gmra.mxu0 %v689
      %v1315 = vpop.f32.mrf.mxu0
      %v1316 = vadd.f32 %v1155, %v1315
      %v1317 = vpop.f32.mrf.mxu0
      %v1318 = vpop.f32.mrf.mxu0
      %v1319 = vadd.f32 %v1158, %v1318
      %v1320 = vpop.f32.mrf.mxu0
      %1321 = vmatprep.mubr.bf16.mxu0 %v695
      %1322 = vmatmul.mubr.bf16.gmra.mxu0 %v694
      %v1323 = vpop.f32.mrf.mxu0
      %v1324 = vadd.f32 %v1163, %v1323
      %v1325 = vpop.f32.mrf.mxu0
      %v1326 = vpop.f32.mrf.mxu0
      %v1327 = vadd.f32 %v1166, %v1326
      %v1328 = vpop.f32.mrf.mxu0
      %1329 = vmatprep.mubr.bf16.mxu0 %v700
      %1330 = vmatmul.mubr.bf16.gmra.mxu0 %v699
      %v1331 = vpop.f32.mrf.mxu0
      %v1332 = vadd.f32 %v1171, %v1331
      %v1333 = vpop.f32.mrf.mxu0
      %v1334 = vpop.f32.mrf.mxu0
      %v1335 = vadd.f32 %v1174, %v1334
      %v1336 = vpop.f32.mrf.mxu0
      %1337 = vmatprep.mubr.bf16.mxu0 %v705
      %1338 = vmatmul.mubr.bf16.gmra.mxu0 %v704
      %v1339 = vpop.f32.mrf.mxu0
      %v1340 = vadd.f32 %v1179, %v1339
      %v1341 = vpop.f32.mrf.mxu0
      %v1342 = vpop.f32.mrf.mxu0
      %v1343 = vadd.f32 %v1182, %v1342
      %v1344 = vpop.f32.mrf.mxu0
      %1345 = vmatprep.mubr.bf16.mxu0 %v710
      %1346 = vmatmul.mubr.bf16.gmra.mxu0 %v709
      %v1347 = vpop.f32.mrf.mxu0
      %v1348 = vadd.f32 %v1187, %v1347
      %v1349 = vpop.f32.mrf.mxu0
      %v1350 = vpop.f32.mrf.mxu0
      %v1351 = vadd.f32 %v1190, %v1350
      %v1352 = vpop.f32.mrf.mxu0
      %1353 = vmatprep.mubr.bf16.mxu0 %v715
      %1354 = vmatmul.mubr.bf16.gmra.mxu0 %v714
      %v1355 = vpop.f32.mrf.mxu0
      %v1356 = vadd.f32 %v1195, %v1355
      %v1357 = vpop.f32.mrf.mxu0
      %v1358 = vpop.f32.mrf.mxu0
      %v1359 = vadd.f32 %v1198, %v1358
      %v1360 = vpop.f32.mrf.mxu0
      %1361 = vmatprep.mubr.bf16.mxu0 %v720
      %1362 = vmatmul.mubr.bf16.gmra.mxu0 %v719
      %v1363 = vpop.f32.mrf.mxu0
      %v1364 = vadd.f32 %v1203, %v1363
      %v1365 = vpop.f32.mrf.mxu0
      %v1366 = vpop.f32.mrf.mxu0
      %v1367 = vadd.f32 %v1206, %v1366
      %v1368 = vpop.f32.mrf.mxu0
      %1369 = vmatprep.mubr.bf16.mxu0 %v725
      %1370 = vmatmul.mubr.bf16.gmra.mxu0 %v724
      %v1371 = vpop.f32.mrf.mxu0
      %v1372 = vadd.f32 %v1211, %v1371
      %v1373 = vpop.f32.mrf.mxu0
      %v1374 = vpop.f32.mrf.mxu0
      %v1375 = vadd.f32 %v1214, %v1374
      %v1376 = vpop.f32.mrf.mxu0
      %1377 = vdwg.mxu0
      %1378 = vmatprep.subr.bf16.mxu0 0
      %1379 = vmatpush1.bf16.msra.mxu0 0
      %1380 = vmatprep.subr.bf16.mxu0 0
      %1381 = vmatpush1.bf16.msra.mxu0 0
      %1382 = vmatprep.subr.bf16.mxu0 0
      %1383 = vmatpush1.bf16.msra.mxu0 0
      %1384 = vmatprep.subr.bf16.mxu0 0
      %1385 = vmatpush1.bf16.msra.mxu0 0
      %1386 = vmatprep.subr.bf16.mxu0 0
      %1387 = vmatpush1.bf16.msra.mxu0 %v970
      %1388 = vmatprep.subr.bf16.mxu0 0
      %1389 = vmatpush1.bf16.msra.mxu0 %v969
      %1390 = vmatprep.subr.bf16.mxu0 0
      %1391 = vmatpush1.bf16.msra.mxu0 %v968
      %1392 = vmatprep.subr.bf16.mxu0 0
      %1393 = vmatpush1.bf16.msra.mxu0 %v967
      %1394 = vmatprep.subr.bf16.mxu0 0
      %1395 = vmatpush2.bf16.msra.mxu0 0
      %1396 = vmatprep.subr.bf16.mxu0 0
      %1397 = vmatpush2.bf16.msra.mxu0 0
      %1398 = vmatprep.subr.bf16.mxu0 0
      %1399 = vmatpush2.bf16.msra.mxu0 0
      %1400 = vmatprep.subr.bf16.mxu0 0
      %1401 = vmatpush2.bf16.msra.mxu0 0
      %1402 = vmatprep.subr.bf16.mxu0 0
      %1403 = vmatpush2.bf16.msra.mxu0 0
      %1404 = vmatprep.subr.bf16.mxu0 0
      %1405 = vmatpush2.bf16.msra.mxu0 0
      %1406 = vmatprep.subr.bf16.mxu0 0
      %1407 = vmatpush2.bf16.msra.mxu0 0
      %1408 = vmatprep.subr.bf16.mxu0 0
      %1409 = vmatpush2.bf16.msra.mxu0 0
      %1410 = vmatprep.mubr.bf16.mxu0 0
      %1411 = vmatmul.mubr.bf16.gmra.mxu0 %v1009
      %v1412 = vpop.f32.mrf.mxu0
      %v1413 = vadd.f32 %v1252, %v1412
      %v1414 = vpop.f32.mrf.mxu0
      %v1415 = vpop.f32.mrf.mxu0
      %v1416 = vadd.f32 %v1255, %v1415
      %v1417 = vpop.f32.mrf.mxu0
      %1418 = vmatprep.mubr.bf16.mxu0 0
      %1419 = vmatmul.mubr.bf16.gmra.mxu0 %v1012
      %v1420 = vpop.f32.mrf.mxu0
      %v1421 = vadd.f32 %v1260, %v1420
      %v1422 = vpop.f32.mrf.mxu0
      %v1423 = vpop.f32.mrf.mxu0
      %v1424 = vadd.f32 %v1263, %v1423
      %v1425 = vpop.f32.mrf.mxu0
      %1426 = vmatprep.mubr.bf16.mxu0 0
      %1427 = vmatmul.mubr.bf16.gmra.mxu0 %v1015
      %v1428 = vpop.f32.mrf.mxu0
      %v1429 = vadd.f32 %v1268, %v1428
      %v1430 = vpop.f32.mrf.mxu0
      %v1431 = vpop.f32.mrf.mxu0
      %v1432 = vadd.f32 %v1271, %v1431
      %v1433 = vpop.f32.mrf.mxu0
      %1434 = vmatprep.mubr.bf16.mxu0 0
      %1435 = vmatmul.mubr.bf16.gmra.mxu0 %v1018
      %v1436 = vpop.f32.mrf.mxu0
      %v1437 = vadd.f32 %v1276, %v1436
      %v1438 = vpop.f32.mrf.mxu0
      %v1439 = vpop.f32.mrf.mxu0
      %v1440 = vadd.f32 %v1279, %v1439
      %v1441 = vpop.f32.mrf.mxu0
      %1442 = vmatprep.mubr.bf16.mxu0 0
      %1443 = vmatmul.mubr.bf16.gmra.mxu0 %v1021
      %v1444 = vpop.f32.mrf.mxu0
      %v1445 = vadd.f32 %v1284, %v1444
      %v1446 = vpop.f32.mrf.mxu0
      %v1447 = vpop.f32.mrf.mxu0
      %v1448 = vadd.f32 %v1287, %v1447
      %v1449 = vpop.f32.mrf.mxu0
      %1450 = vmatprep.mubr.bf16.mxu0 0
      %1451 = vmatmul.mubr.bf16.gmra.mxu0 %v1024
      %v1452 = vpop.f32.mrf.mxu0
      %v1453 = vadd.f32 %v1292, %v1452
      %v1454 = vpop.f32.mrf.mxu0
      %v1455 = vpop.f32.mrf.mxu0
      %v1456 = vadd.f32 %v1295, %v1455
      %v1457 = vpop.f32.mrf.mxu0
      %1458 = vmatprep.mubr.bf16.mxu0 0
      %1459 = vmatmul.mubr.bf16.gmra.mxu0 %v1027
      %v1460 = vpop.f32.mrf.mxu0
      %v1461 = vadd.f32 %v1300, %v1460
      %v1462 = vpop.f32.mrf.mxu0
      %v1463 = vpop.f32.mrf.mxu0
      %v1464 = vadd.f32 %v1303, %v1463
      %v1465 = vpop.f32.mrf.mxu0
      %1466 = vmatprep.mubr.bf16.mxu0 0
      %1467 = vmatmul.mubr.bf16.gmra.mxu0 %v1030
      %v1468 = vpop.f32.mrf.mxu0
      %v1469 = vadd.f32 %v1308, %v1468
      %v1470 = vpop.f32.mrf.mxu0
      %v1471 = vpop.f32.mrf.mxu0
      %v1472 = vadd.f32 %v1311, %v1471
      %v1473 = vpop.f32.mrf.mxu0
      %1474 = vmatprep.mubr.bf16.mxu0 0
      %1475 = vmatmul.mubr.bf16.gmra.mxu0 %v1033
      %v1476 = vpop.f32.mrf.mxu0
      %v1477 = vadd.f32 %v1316, %v1476
      %v1478 = vpop.f32.mrf.mxu0
      %v1479 = vpop.f32.mrf.mxu0
      %v1480 = vadd.f32 %v1319, %v1479
      %v1481 = vpop.f32.mrf.mxu0
      %1482 = vmatprep.mubr.bf16.mxu0 0
      %1483 = vmatmul.mubr.bf16.gmra.mxu0 %v1036
      %v1484 = vpop.f32.mrf.mxu0
      %v1485 = vadd.f32 %v1324, %v1484
      %v1486 = vpop.f32.mrf.mxu0
      %v1487 = vpop.f32.mrf.mxu0
      %v1488 = vadd.f32 %v1327, %v1487
      %v1489 = vpop.f32.mrf.mxu0
      %1490 = vmatprep.mubr.bf16.mxu0 0
      %1491 = vmatmul.mubr.bf16.gmra.mxu0 %v1039
      %v1492 = vpop.f32.mrf.mxu0
      %v1493 = vadd.f32 %v1332, %v1492
      %v1494 = vpop.f32.mrf.mxu0
      %v1495 = vpop.f32.mrf.mxu0
      %v1496 = vadd.f32 %v1335, %v1495
      %v1497 = vpop.f32.mrf.mxu0
      %1498 = vmatprep.mubr.bf16.mxu0 0
      %1499 = vmatmul.mubr.bf16.gmra.mxu0 %v1042
      %v1500 = vpop.f32.mrf.mxu0
      %v1501 = vadd.f32 %v1340, %v1500
      %v1502 = vpop.f32.mrf.mxu0
      %v1503 = vpop.f32.mrf.mxu0
      %v1504 = vadd.f32 %v1343, %v1503
      %v1505 = vpop.f32.mrf.mxu0
      %1506 = vmatprep.mubr.bf16.mxu0 0
      %1507 = vmatmul.mubr.bf16.gmra.mxu0 %v1045
      %v1508 = vpop.f32.mrf.mxu0
      %v1509 = vadd.f32 %v1348, %v1508
      %v1510 = vpop.f32.mrf.mxu0
      %v1511 = vpop.f32.mrf.mxu0
      %v1512 = vadd.f32 %v1351, %v1511
      %v1513 = vpop.f32.mrf.mxu0
      %1514 = vmatprep.mubr.bf16.mxu0 0
      %1515 = vmatmul.mubr.bf16.gmra.mxu0 %v1048
      %v1516 = vpop.f32.mrf.mxu0
      %v1517 = vadd.f32 %v1356, %v1516
      %v1518 = vpop.f32.mrf.mxu0
      %v1519 = vpop.f32.mrf.mxu0
      %v1520 = vadd.f32 %v1359, %v1519
      %v1521 = vpop.f32.mrf.mxu0
      %1522 = vmatprep.mubr.bf16.mxu0 0
      %1523 = vmatmul.mubr.bf16.gmra.mxu0 %v1051
      %v1524 = vpop.f32.mrf.mxu0
      %v1525 = vadd.f32 %v1364, %v1524
      %v1526 = vpop.f32.mrf.mxu0
      %v1527 = vpop.f32.mrf.mxu0
      %v1528 = vadd.f32 %v1367, %v1527
      %v1529 = vpop.f32.mrf.mxu0
      %1530 = vmatprep.mubr.bf16.mxu0 0
      %1531 = vmatmul.mubr.bf16.gmra.mxu0 %v1054
      %v1532 = vpop.f32.mrf.mxu0
      %v1533 = vadd.f32 %v1372, %v1532
      %v1534 = vpop.f32.mrf.mxu0
      %v1535 = vpop.f32.mrf.mxu0
      %v1536 = vadd.f32 %v1375, %v1535
      %v1537 = vpop.f32.mrf.mxu0
      %1538 = vdwg.mxu0
      %v1539 = vadd.f32 %v1413, %v1416
      %v1540 = vadd.f32 %v1539, %v1421
      %v1541 = vadd.f32 %v1540, %v1424
      %v1542 = vadd.f32 %v1541, %v1429
      %v1543 = vadd.f32 %v1542, %v1432
      %v1544 = vadd.f32 %v1543, %v1437
      %v1545 = vadd.f32 %v1544, %v1440
      %v1546 = vadd.f32 %v1545, %v1445
      %v1547 = vadd.f32 %v1546, %v1448
      %v1548 = vadd.f32 %v1547, %v1453
      %v1549 = vadd.f32 %v1548, %v1456
      %v1550 = vadd.f32 %v1549, %v1461
      %v1551 = vadd.f32 %v1550, %v1464
      %v1552 = vadd.f32 %v1551, %v1469
      %v1553 = vadd.f32 %v1552, %v1472
      %v1554 = vadd.f32 %v1553, %v1477
      %v1555 = vadd.f32 %v1554, %v1480
      %v1556 = vadd.f32 %v1555, %v1485
      %v1557 = vadd.f32 %v1556, %v1488
      %v1558 = vadd.f32 %v1557, %v1493
      %v1559 = vadd.f32 %v1558, %v1496
      %v1560 = vadd.f32 %v1559, %v1501
      %v1561 = vadd.f32 %v1560, %v1504
      %v1562 = vadd.f32 %v1561, %v1509
      %v1563 = vadd.f32 %v1562, %v1512
      %v1564 = vadd.f32 %v1563, %v1517
      %v1565 = vadd.f32 %v1564, %v1520
      %v1566 = vadd.f32 %v1565, %v1525
      %v1567 = vadd.f32 %v1566, %v1528
      %v1568 = vadd.f32 %v1567, %v1533
      %v1569 = vadd.f32 %v1568, %v1536
      %v1570 = vrot.slane %v1569, 4
      %v1571 = vadd.f32 %v1569, %v1570
      %v1572 = vrot.slane %v1571, 2
      %v1573 = vadd.f32 %v1571, %v1572
      %v1574 = vrot.slane %v1573, 1
      %v1575 = vadd.f32 %v1573, %v1574
      %v1576 = vrcp.pop 256.0
      %v1577 = vmul.f32 %v1575, %v1576
      %v1578 = vsub.f32 %v1413, %v1577
      %v1579 = vsub.f32 %v1416, %v1577
      %v1580 = vsub.f32 %v1421, %v1577
      %v1581 = vsub.f32 %v1424, %v1577
      %v1582 = vsub.f32 %v1429, %v1577
      %v1583 = vsub.f32 %v1432, %v1577
      %v1584 = vsub.f32 %v1437, %v1577
      %v1585 = vsub.f32 %v1440, %v1577
      %v1586 = vsub.f32 %v1445, %v1577
      %v1587 = vsub.f32 %v1448, %v1577
      %v1588 = vsub.f32 %v1453, %v1577
      %v1589 = vsub.f32 %v1456, %v1577
      %v1590 = vsub.f32 %v1461, %v1577
      %v1591 = vsub.f32 %v1464, %v1577
      %v1592 = vsub.f32 %v1469, %v1577
      %v1593 = vsub.f32 %v1472, %v1577
      %v1594 = vsub.f32 %v1477, %v1577
      %v1595 = vsub.f32 %v1480, %v1577
      %v1596 = vsub.f32 %v1485, %v1577
      %v1597 = vsub.f32 %v1488, %v1577
      %v1598 = vsub.f32 %v1493, %v1577
      %v1599 = vsub.f32 %v1496, %v1577
      %v1600 = vsub.f32 %v1501, %v1577
      %v1601 = vsub.f32 %v1504, %v1577
      %v1602 = vsub.f32 %v1509, %v1577
      %v1603 = vsub.f32 %v1512, %v1577
      %v1604 = vsub.f32 %v1517, %v1577
      %v1605 = vsub.f32 %v1520, %v1577
      %v1606 = vsub.f32 %v1525, %v1577
      %v1607 = vsub.f32 %v1528, %v1577
      %v1608 = vsub.f32 %v1533, %v1577
      %v1609 = vsub.f32 %v1536, %v1577
      %v1610 = vmul.f32 %v1578, %v1578
      %v1611 = vmul.f32 %v1579, %v1579
      %v1612 = vmul.f32 %v1580, %v1580
      %v1613 = vmul.f32 %v1581, %v1581
      %v1614 = vmul.f32 %v1582, %v1582
      %v1615 = vmul.f32 %v1583, %v1583
      %v1616 = vmul.f32 %v1584, %v1584
      %v1617 = vmul.f32 %v1585, %v1585
      %v1618 = vmul.f32 %v1586, %v1586
      %v1619 = vmul.f32 %v1587, %v1587
      %v1620 = vmul.f32 %v1588, %v1588
      %v1621 = vmul.f32 %v1589, %v1589
      %v1622 = vmul.f32 %v1590, %v1590
      %v1623 = vmul.f32 %v1591, %v1591
      %v1624 = vmul.f32 %v1592, %v1592
      %v1625 = vmul.f32 %v1593, %v1593
      %v1626 = vmul.f32 %v1594, %v1594
      %v1627 = vmul.f32 %v1595, %v1595
      %v1628 = vmul.f32 %v1596, %v1596
      %v1629 = vmul.f32 %v1597, %v1597
      %v1630 = vmul.f32 %v1598, %v1598
      %v1631 = vmul.f32 %v1599, %v1599
      %v1632 = vmul.f32 %v1600, %v1600
      %v1633 = vmul.f32 %v1601, %v1601
      %v1634 = vmul.f32 %v1602, %v1602
      %v1635 = vmul.f32 %v1603, %v1603
      %v1636 = vmul.f32 %v1604, %v1604
      %v1637 = vmul.f32 %v1605, %v1605
      %v1638 = vmul.f32 %v1606, %v1606
      %v1639 = vmul.f32 %v1607, %v1607
      %v1640 = vmul.f32 %v1608, %v1608
      %v1641 = vmul.f32 %v1609, %v1609
      %v1642 = vadd.f32 %v1610, %v1611
      %v1643 = vadd.f32 %v1642, %v1612
      %v1644 = vadd.f32 %v1643, %v1613
      %v1645 = vadd.f32 %v1644, %v1614
      %v1646 = vadd.f32 %v1645, %v1615
      %v1647 = vadd.f32 %v1646, %v1616
      %v1648 = vadd.f32 %v1647, %v1617
      %v1649 = vadd.f32 %v1648, %v1618
      %v1650 = vadd.f32 %v1649, %v1619
      %v1651 = vadd.f32 %v1650, %v1620
      %v1652 = vadd.f32 %v1651, %v1621
      %v1653 = vadd.f32 %v1652, %v1622
      %v1654 = vadd.f32 %v1653, %v1623
      %v1655 = vadd.f32 %v1654, %v1624
      %v1656 = vadd.f32 %v1655, %v1625
      %v1657 = vadd.f32 %v1656, %v1626
      %v1658 = vadd.f32 %v1657, %v1627
      %v1659 = vadd.f32 %v1658, %v1628
      %v1660 = vadd.f32 %v1659, %v1629
      %v1661 = vadd.f32 %v1660, %v1630
      %v1662 = vadd.f32 %v1661, %v1631
      %v1663 = vadd.f32 %v1662, %v1632
      %v1664 = vadd.f32 %v1663, %v1633
      %v1665 = vadd.f32 %v1664, %v1634
      %v1666 = vadd.f32 %v1665, %v1635
      %v1667 = vadd.f32 %v1666, %v1636
      %v1668 = vadd.f32 %v1667, %v1637
      %v1669 = vadd.f32 %v1668, %v1638
      %v1670 = vadd.f32 %v1669, %v1639
      %v1671 = vadd.f32 %v1670, %v1640
      %v1672 = vadd.f32 %v1671, %v1641
      %v1673 = vrot.slane %v1672, 4
      %v1674 = vadd.f32 %v1672, %v1673
      %v1675 = vrot.slane %v1674, 2
      %v1676 = vadd.f32 %v1674, %v1675
      %v1677 = vrot.slane %v1676, 1
      %v1678 = vadd.f32 %v1676, %v1677
      %v1679 = vmul.f32 %v1678, %v1576
      %v1680 = vadd.f32 %v1679, 1e-05
      %v1681 = vrsqrt.pop %v1680
      %v1682 = vmul.f32 %v1578, %v1681
      %v1683 = vmul.f32 %v1579, %v1681
      %v1684 = vmul.f32 %v1580, %v1681
      %v1685 = vmul.f32 %v1581, %v1681
      %v1686 = vmul.f32 %v1582, %v1681
      %v1687 = vmul.f32 %v1583, %v1681
      %v1688 = vmul.f32 %v1584, %v1681
      %v1689 = vmul.f32 %v1585, %v1681
      %v1690 = vmul.f32 %v1586, %v1681
      %v1691 = vmul.f32 %v1587, %v1681
      %v1692 = vmul.f32 %v1588, %v1681
      %v1693 = vmul.f32 %v1589, %v1681
      %v1694 = vmul.f32 %v1590, %v1681
      %v1695 = vmul.f32 %v1591, %v1681
      %v1696 = vmul.f32 %v1592, %v1681
      %v1697 = vmul.f32 %v1593, %v1681
      %v1698 = vmul.f32 %v1594, %v1681
      %v1699 = vmul.f32 %v1595, %v1681
      %v1700 = vmul.f32 %v1596, %v1681
      %v1701 = vmul.f32 %v1597, %v1681
      %v1702 = vmul.f32 %v1598, %v1681
      %v1703 = vmul.f32 %v1599, %v1681
      %v1704 = vmul.f32 %v1600, %v1681
      %v1705 = vmul.f32 %v1601, %v1681
      %v1706 = vmul.f32 %v1602, %v1681
      %v1707 = vmul.f32 %v1603, %v1681
      %v1708 = vmul.f32 %v1604, %v1681
      %v1709 = vmul.f32 %v1605, %v1681
      %v1710 = vmul.f32 %v1606, %v1681
      %v1711 = vmul.f32 %v1607, %v1681
      %v1712 = vmul.f32 %v1608, %v1681
      %v1713 = vmul.f32 %v1609, %v1681
      %v1714 = vld [vmem:[%s209] sm:$0x3]
      %v1715 = vlaneseq
      %v1716 = vshrl.u32 %v1715, 7
      %v1717 = vsub.s32 0, %v1716
      %v1718 = vrot.slane %v1714, %v1717
      %v1719 = vmul.f32 %v1718, %v1682
      %v1720 = vmul.f32 %v1718, %v1683
      %v1721 = vmul.f32 %v1718, %v1684
      %v1722 = vmul.f32 %v1718, %v1685
      %v1723 = vmul.f32 %v1718, %v1686
      %v1724 = vmul.f32 %v1718, %v1687
      %v1725 = vmul.f32 %v1718, %v1688
      %v1726 = vmul.f32 %v1718, %v1689
      %v1727 = vmul.f32 %v1718, %v1690
      %v1728 = vmul.f32 %v1718, %v1691
      %v1729 = vmul.f32 %v1718, %v1692
      %v1730 = vmul.f32 %v1718, %v1693
      %v1731 = vmul.f32 %v1718, %v1694
      %v1732 = vmul.f32 %v1718, %v1695
      %v1733 = vmul.f32 %v1718, %v1696
      %v1734 = vmul.f32 %v1718, %v1697
      %v1735 = vmul.f32 %v1718, %v1698
      %v1736 = vmul.f32 %v1718, %v1699
      %v1737 = vmul.f32 %v1718, %v1700
      %v1738 = vmul.f32 %v1718, %v1701
      %v1739 = vmul.f32 %v1718, %v1702
      %v1740 = vmul.f32 %v1718, %v1703
      %v1741 = vmul.f32 %v1718, %v1704
      %v1742 = vmul.f32 %v1718, %v1705
      %v1743 = vmul.f32 %v1718, %v1706
      %v1744 = vmul.f32 %v1718, %v1707
      %v1745 = vmul.f32 %v1718, %v1708
      %v1746 = vmul.f32 %v1718, %v1709
      %v1747 = vmul.f32 %v1718, %v1710
      %v1748 = vmul.f32 %v1718, %v1711
      %v1749 = vmul.f32 %v1718, %v1712
      %v1750 = vmul.f32 %v1718, %v1713
      %v1751 = vlaneseq
      %v1752 = vshrl.u32 %v1751, 7
      %v1753 = vsub.s32 1, %v1752
      %v1754 = vrot.slane %v1714, %v1753
      %v1755 = vadd.f32 %v1719, %v1754
      %v1756 = vadd.f32 %v1720, %v1754
      %v1757 = vadd.f32 %v1721, %v1754
      %v1758 = vadd.f32 %v1722, %v1754
      %v1759 = vadd.f32 %v1723, %v1754
      %v1760 = vadd.f32 %v1724, %v1754
      %v1761 = vadd.f32 %v1725, %v1754
      %v1762 = vadd.f32 %v1726, %v1754
      %v1763 = vadd.f32 %v1727, %v1754
      %v1764 = vadd.f32 %v1728, %v1754
      %v1765 = vadd.f32 %v1729, %v1754
      %v1766 = vadd.f32 %v1730, %v1754
      %v1767 = vadd.f32 %v1731, %v1754
      %v1768 = vadd.f32 %v1732, %v1754
      %v1769 = vadd.f32 %v1733, %v1754
      %v1770 = vadd.f32 %v1734, %v1754
      %v1771 = vadd.f32 %v1735, %v1754
      %v1772 = vadd.f32 %v1736, %v1754
      %v1773 = vadd.f32 %v1737, %v1754
      %v1774 = vadd.f32 %v1738, %v1754
      %v1775 = vadd.f32 %v1739, %v1754
      %v1776 = vadd.f32 %v1740, %v1754
      %v1777 = vadd.f32 %v1741, %v1754
      %v1778 = vadd.f32 %v1742, %v1754
      %v1779 = vadd.f32 %v1743, %v1754
      %v1780 = vadd.f32 %v1744, %v1754
      %v1781 = vadd.f32 %v1745, %v1754
      %v1782 = vadd.f32 %v1746, %v1754
      %v1783 = vadd.f32 %v1747, %v1754
      %v1784 = vadd.f32 %v1748, %v1754
      %v1785 = vadd.f32 %v1749, %v1754
      %v1786 = vadd.f32 %v1750, %v1754
      %v1787 = vmax.f32 %v1755, 0.0
      %v1788 = vmax.f32 %v1756, 0.0
      %v1789 = vmax.f32 %v1757, 0.0
      %v1790 = vmax.f32 %v1758, 0.0
      %v1791 = vmax.f32 %v1759, 0.0
      %v1792 = vmax.f32 %v1760, 0.0
      %v1793 = vmax.f32 %v1761, 0.0
      %v1794 = vmax.f32 %v1762, 0.0
      %v1795 = vmax.f32 %v1763, 0.0
      %v1796 = vmax.f32 %v1764, 0.0
      %v1797 = vmax.f32 %v1765, 0.0
      %v1798 = vmax.f32 %v1766, 0.0
      %v1799 = vmax.f32 %v1767, 0.0
      %v1800 = vmax.f32 %v1768, 0.0
      %v1801 = vmax.f32 %v1769, 0.0
      %v1802 = vmax.f32 %v1770, 0.0
      %v1803 = vmax.f32 %v1771, 0.0
      %v1804 = vmax.f32 %v1772, 0.0
      %v1805 = vmax.f32 %v1773, 0.0
      %v1806 = vmax.f32 %v1774, 0.0
      %v1807 = vmax.f32 %v1775, 0.0
      %v1808 = vmax.f32 %v1776, 0.0
      %v1809 = vmax.f32 %v1777, 0.0
      %v1810 = vmax.f32 %v1778, 0.0
      %v1811 = vmax.f32 %v1779, 0.0
      %v1812 = vmax.f32 %v1780, 0.0
      %v1813 = vmax.f32 %v1781, 0.0
      %v1814 = vmax.f32 %v1782, 0.0
      %v1815 = vmax.f32 %v1783, 0.0
      %v1816 = vmax.f32 %v1784, 0.0
      %v1817 = vmax.f32 %v1785, 0.0
      %v1818 = vmax.f32 %v1786, 0.0
      %1819 = vst [vmem:[%s214] sm:$0xff] %v1787
      %1820 = vst [vmem:[%s214 + $0x8] sm:$0xff] %v1788
      %1821 = vst [vmem:[%s214 + $0x10] sm:$0xff] %v1789
      %1822 = vst [vmem:[%s214 + $0x18] sm:$0xff] %v1790
      %1823 = vst [vmem:[%s214 + $0x20] sm:$0xff] %v1791
      %1824 = vst [vmem:[%s214 + $0x28] sm:$0xff] %v1792
      %1825 = vst [vmem:[%s214 + $0x30] sm:$0xff] %v1793
      %1826 = vst [vmem:[%s214 + $0x38] sm:$0xff] %v1794
      %1827 = vst [vmem:[%s214 + $0x40] sm:$0xff] %v1795
      %1828 = vst [vmem:[%s214 + $0x48] sm:$0xff] %v1796
      %1829 = vst [vmem:[%s214 + $0x50] sm:$0xff] %v1797
      %1830 = vst [vmem:[%s214 + $0x58] sm:$0xff] %v1798
      %1831 = vst [vmem:[%s214 + $0x60] sm:$0xff] %v1799
      %1832 = vst [vmem:[%s214 + $0x68] sm:$0xff] %v1800
      %1833 = vst [vmem:[%s214 + $0x70] sm:$0xff] %v1801
      %1834 = vst [vmem:[%s214 + $0x78] sm:$0xff] %v1802
      %1835 = vst [vmem:[%s214 + $0x80] sm:$0xff] %v1803
      %1836 = vst [vmem:[%s214 + $0x88] sm:$0xff] %v1804
      %1837 = vst [vmem:[%s214 + $0x90] sm:$0xff] %v1805
      %1838 = vst [vmem:[%s214 + $0x98] sm:$0xff] %v1806
      %1839 = vst [vmem:[%s214 + $0xa0] sm:$0xff] %v1807
      %1840 = vst [vmem:[%s214 + $0xa8] sm:$0xff] %v1808
      %1841 = vst [vmem:[%s214 + $0xb0] sm:$0xff] %v1809
      %1842 = vst [vmem:[%s214 + $0xb8] sm:$0xff] %v1810
      %1843 = vst [vmem:[%s214 + $0xc0] sm:$0xff] %v1811
      %1844 = vst [vmem:[%s214 + $0xc8] sm:$0xff] %v1812
      %1845 = vst [vmem:[%s214 + $0xd0] sm:$0xff] %v1813
      %1846 = vst [vmem:[%s214 + $0xd8] sm:$0xff] %v1814
      %1847 = vst [vmem:[%s214 + $0xe0] sm:$0xff] %v1815
      %1848 = vst [vmem:[%s214 + $0xe8] sm:$0xff] %v1816
      %1849 = vst [vmem:[%s214 + $0xf0] sm:$0xff] %v1817
      %1850 = vst [vmem:[%s214 + $0xf8] sm:$0xff] %v1818
      %p1851 = scmp.lt.s32.totalorder %s15, 1
      %s1852 = scalar_select %p1851, %s15, 1
      %s1853 = smul.addr %s1852, 32
      %s1854 = smul.addr %s1853, 8
      %s1855 = scalar_lea.vmem %s4, %s1854
      // Predicated region
      $region37: #{vgg_decoder_forward.14} parent=35 // pred_check
        %p1856 = pneg %p127
      $region38: #{vgg_decoder_forward.14} parent=35 // pred_check_branch
        %1858 = sbr.rel (%p1856) target = $region40
      $region39: #{vgg_decoder_forward.14} parent=35 // pred_region
        _
      $region40: #{vgg_decoder_forward.14} parent=35 // pred_fallthru
        _
    $region36: #{vgg_decoder_forward.14} parent=5 // pred_fallthru
      _
    %p1859 = scmp.le.s32.totalorder 2, %s10
    // Predicated region
    $region41: #{vgg_decoder_forward.14} parent=5 // pred_check
      %p1860 = pneg %p1859
    $region42: #{vgg_decoder_forward.14} parent=5 // pred_check_branch
      %1862 = sbr.rel (%p1860) target = $region44
    $region43: #{vgg_decoder_forward.14} parent=5 // pred_region
      %s1863 = ssub.s32 %s10, 2
      // Predicated region
      $region45: #{vgg_decoder_forward.14} parent=43 // pred_check
        %p1864 = pneg %p133
      $region46: #{vgg_decoder_forward.14} parent=43 // pred_check_branch
        %1866 = sbr.rel (%p1864) target = $region48
      $region47: #{vgg_decoder_forward.14} parent=43 // pred_region
        %p1867 = scmp.lt.s32.totalorder %s16, 1
        %s1868 = scalar_select %p1867, %s16, 1
        %s1869 = smul.addr %s1868, 32
        %s1870 = smul.addr %s1869, 8
        %s1871 = scalar_lea.vmem %s4, %s1870
      $region48: #{vgg_decoder_forward.14} parent=43 // pred_fallthru
        _
    $region44: #{vgg_decoder_forward.14} parent=5 // pred_fallthru
      _
  $region6: #{vgg_decoder_forward.14} parent=0 // loop_footer
    %s14 = sadd.s32 1, %s10
  $region7: #{vgg_decoder_forward.14} parent=0 // loop_footer_branch
    %9 = sbr.rel target = $region3
  $region8: #{vgg_decoder_forward.14} parent=0 // loop_exit
    _

// kernel: vgg_decoder_forward.15
$region0: #{vgg_decoder_forward.15}
  #allocation0 [shape = 'u32[]', space=smem, size = 0x4, offset = 0x4, fixed_abs, tag = 'smem constant byte address 0x4 - core index']
  #allocation1 [shape = 'u32[144,128]{1,0:T(1,128)}', space=vmem, size = 0x12000, scoped, tag = 'internal scratch']
  %s0 = inlined_call_operand.vmem [shape: bf16[2,256,576], index: 0, kind: input, shape index: {}]
  %s1 = inlined_call_operand.vmem [shape: bf16[576,128], index: 1, kind: input, shape index: {}]
  %s2 = inlined_call_operand.vmem [shape: f32[1,128], index: 2, kind: input, shape index: {}]
  %s3 = inlined_call_operand.vmem [shape: f32[2,2,128], index: 3, kind: input, shape index: {}]
  %s4 = inlined_call_operand.vmem [shape: f32[2,256,128], index: 4, kind: output, shape index: {}]
  %s5 = sld [smem:[#allocation0]]
  $region49: #{vgg_decoder_forward.15} parent=0
    _
  %s7 = ssub.s32 1, %s5
  %s8 = scalar_select 0, %s7, %s5
  loop: start=0, step=1, limit=4
  $region2: #{vgg_decoder_forward.15} parent=0 // loop_pre_header
    _
  $region3: #{vgg_decoder_forward.15} parent=0 // loop_header
    %s10 = sphi 0, %s14
    %p11 = scmp.ge.s32.totalorder %s10, 4
    %s20 = sphi 0, %s22
    %s23 = sphi 0, %s20
    %s24 = sphi 0, %s23
    %s40 = sphi 0, %s24
    %s44 = sphi 0, %s44
    %s46 = sphi 0, %s44
    %s47 = sphi 0, %s46
    %s61 = sphi 0, %s47
    %s65 = sphi 0, %s65
    %s67 = sphi 0, %s65
    %s68 = sphi 0, %s67
    %s82 = sphi 0, %s68
    %s88 = sphi 0, %s90
    %s91 = sphi 0, %s88
    %s92 = sphi 0, %s91
    %s108 = sphi 0, %s92
    %s114 = sphi 0, %s116
    %s117 = sphi 0, %s114
    %s118 = sphi 0, %s117
    %s134 = sphi 0, %s118
  $region4: #{vgg_decoder_forward.15} parent=0 // loop_header_branch
    %13 = sbr.rel (%p11) target = $region8
  $region5: #{vgg_decoder_forward.15} parent=0 // loop_body
    %s15 = ssub.s32 %s10, 1
    %s16 = ssub.s32 %s10, 2
    %s17 = sadd.s32 %s10, 1
    %s18 = ssub.s32 %s10, %s17
    %p19 = scmp.eq.s32.totalorder %s18, 0
    %s21 = sadd.s32 %s20, 1
    %s22 = scalar_select %p19, %s20, %s21
    %p25 = pneg %p19
    %p26 = scmp.eq.s32.totalorder %s10, 1
    %p27 = por %p25, %p26
    %p28 = scmp.ne.s32.totalorder %s20, %s23
    %p29 = scmp.eq.s32.totalorder %s10, 0
    %p30 = por %p28, %p29
    %p31 = scmp.ne.s32.totalorder %s20, %s23
    %p32 = scmp.eq.s32.totalorder %s15, 1
    %p33 = por %p31, %p32
    %p34 = scmp.ne.s32.totalorder %s23, %s24
    %p35 = scmp.eq.s32.totalorder %s15, 0
    %p36 = por %p34, %p35
    %p37 = scmp.ne.s32.totalorder %s23, %s24
    %p38 = scmp.eq.s32.totalorder %s16, 1
    %p39 = por %p37, %p38
    %p41 = scmp.ne.s32.totalorder %s24, %s40
    %p42 = scmp.eq.s32.totalorder %s16, 0
    %p43 = por %p41, %p42
    %s45 = sadd.s32 %s44, 1
    %p48 = scmp.eq.s32.totalorder %s10, 1
    %p49 = scmp.ne.s32.totalorder %s44, %s46
    %p50 = scmp.eq.s32.totalorder %s10, 0
    %p51 = por %p49, %p50
    %p52 = scmp.ne.s32.totalorder %s44, %s46
    %p53 = scmp.eq.s32.totalorder %s15, 1
    %p54 = por %p52, %p53
    %p55 = scmp.ne.s32.totalorder %s46, %s47
    %p56 = scmp.eq.s32.totalorder %s15, 0
    %p57 = por %p55, %p56
    %p58 = scmp.ne.s32.totalorder %s46, %s47
    %p59 = scmp.eq.s32.totalorder %s16, 1
    %p60 = por %p58, %p59
    %p62 = scmp.ne.s32.totalorder %s47, %s61
    %p63 = scmp.eq.s32.totalorder %s16, 0
    %p64 = por %p62, %p63
    %s66 = sadd.s32 %s65, 1
    %p69 = scmp.eq.s32.totalorder %s10, 1
    %p70 = scmp.ne.s32.totalorder %s65, %s67
    %p71 = scmp.eq.s32.totalorder %s10, 0
    %p72 = por %p70, %p71
    %p73 = scmp.ne.s32.totalorder %s65, %s67
    %p74 = scmp.eq.s32.totalorder %s15, 1
    %p75 = por %p73, %p74
    %p76 = scmp.ne.s32.totalorder %s67, %s68
    %p77 = scmp.eq.s32.totalorder %s15, 0
    %p78 = por %p76, %p77
    %p79 = scmp.ne.s32.totalorder %s67, %s68
    %p80 = scmp.eq.s32.totalorder %s16, 1
    %p81 = por %p79, %p80
    %p83 = scmp.ne.s32.totalorder %s68, %s82
    %p84 = scmp.eq.s32.totalorder %s16, 0
    %p85 = por %p83, %p84
    %s86 = ssub.s32 %s10, %s17
    %p87 = scmp.eq.s32.totalorder %s86, 0
    %s89 = sadd.s32 %s88, 1
    %s90 = scalar_select %p87, %s88, %s89
    %p93 = pneg %p87
    %p94 = scmp.eq.s32.totalorder %s10, 1
    %p95 = por %p93, %p94
    %p96 = scmp.ne.s32.totalorder %s88, %s91
    %p97 = scmp.eq.s32.totalorder %s10, 0
    %p98 = por %p96, %p97
    %p99 = scmp.ne.s32.totalorder %s88, %s91
    %p100 = scmp.eq.s32.totalorder %s15, 1
    %p101 = por %p99, %p100
    %p102 = scmp.ne.s32.totalorder %s91, %s92
    %p103 = scmp.eq.s32.totalorder %s15, 0
    %p104 = por %p102, %p103
    %p105 = scmp.ne.s32.totalorder %s91, %s92
    %p106 = scmp.eq.s32.totalorder %s16, 1
    %p107 = por %p105, %p106
    %p109 = scmp.ne.s32.totalorder %s92, %s108
    %p110 = scmp.eq.s32.totalorder %s16, 0
    %p111 = por %p109, %p110
    %s112 = ssub.s32 %s10, %s17
    %p113 = scmp.eq.s32.totalorder %s112, 0
    %s115 = sadd.s32 %s114, 1
    %s116 = scalar_select %p113, %s114, %s115
    %p119 = pneg %p113
    %p120 = scmp.eq.s32.totalorder %s10, 1
    %p121 = por %p119, %p120
    %p122 = scmp.ne.s32.totalorder %s114, %s117
    %p123 = scmp.eq.s32.totalorder %s10, 0
    %p124 = por %p122, %p123
    %p125 = scmp.ne.s32.totalorder %s114, %s117
    %p126 = scmp.eq.s32.totalorder %s15, 1
    %p127 = por %p125, %p126
    %p128 = scmp.ne.s32.totalorder %s117, %s118
    %p129 = scmp.eq.s32.totalorder %s15, 0
    %p130 = por %p128, %p129
    %p131 = scmp.ne.s32.totalorder %s117, %s118
    %p132 = scmp.eq.s32.totalorder %s16, 1
    %p133 = por %p131, %p132
    %p135 = scmp.ne.s32.totalorder %s118, %s134
    %p136 = scmp.eq.s32.totalorder %s16, 0
    %p137 = por %p135, %p136
    %p138 = scmp.le.s32.totalorder 1, %s10
    %p139 = scmp.lt.s32.totalorder %s10, 3
    %p140 = pnand %p138, %p139
    %p141 = pneg %p140
    // Predicated region
    $region9: #{vgg_decoder_forward.15} parent=5 // pred_check
      _
    $region10: #{vgg_decoder_forward.15} parent=5 // pred_check_branch
      %143 = sbr.rel (%p140) target = $region12
    $region11: #{vgg_decoder_forward.15} parent=5 // pred_region
      %s144 = ssub.s32 %s10, 1
      // Predicated region
      $region13: #{vgg_decoder_forward.15} parent=11 // pred_check
        %p145 = pneg %p57
      $region14: #{vgg_decoder_forward.15} parent=11 // pred_check_branch
        %147 = sbr.rel (%p145) target = $region16
      $region15: #{vgg_decoder_forward.15} parent=11 // pred_region
        _
      $region16: #{vgg_decoder_forward.15} parent=11 // pred_fallthru
        _
      // Predicated region
      $region17: #{vgg_decoder_forward.15} parent=11 // pred_check
        %p148 = pneg %p78
      $region18: #{vgg_decoder_forward.15} parent=11 // pred_check_branch
        %150 = sbr.rel (%p148) target = $region20
      $region19: #{vgg_decoder_forward.15} parent=11 // pred_region
        _
      $region20: #{vgg_decoder_forward.15} parent=11 // pred_fallthru
        _
    $region12: #{vgg_decoder_forward.15} parent=5 // pred_fallthru
      _
    %p151 = scmp.lt.s32.totalorder %s10, 2
    // Predicated region
    $region21: #{vgg_decoder_forward.15} parent=5 // pred_check
      %p152 = pneg %p151
    $region22: #{vgg_decoder_forward.15} parent=5 // pred_check_branch
      %154 = sbr.rel (%p152) target = $region24
    $region23: #{vgg_decoder_forward.15} parent=5 // pred_region
      // Predicated region
      $region25: #{vgg_decoder_forward.15} parent=23 // pred_check
        %p155 = pneg %p30
      $region26: #{vgg_decoder_forward.15} parent=23 // pred_check_branch
        %157 = sbr.rel (%p155) target = $region28
      $region27: #{vgg_decoder_forward.15} parent=23 // pred_region
        %p158 = scmp.lt.s32.totalorder %s10, 1
        %s159 = scalar_select %p158, %s10, 1
        %s160 = smul.addr %s159, 160
        %s161 = smul.addr %s160, 4
        %s162 = scalar_lea.vmem %s0, %s161
      $region28: #{vgg_decoder_forward.15} parent=23 // pred_fallthru
        _
      // Predicated region
      $region29: #{vgg_decoder_forward.15} parent=23 // pred_check
        %p163 = pneg %p98
      $region30: #{vgg_decoder_forward.15} parent=23 // pred_check_branch
        %165 = sbr.rel (%p163) target = $region32
      $region31: #{vgg_decoder_forward.15} parent=23 // pred_region
        %p166 = scmp.lt.s32.totalorder %s10, 1
        %s167 = scalar_select %p166, %s10, 1
        %s168 = smul.addr %s167, 2
        %s169 = scalar_lea.vmem %s3, %s168
      $region32: #{vgg_decoder_forward.15} parent=23 // pred_fallthru
        _
    $region24: #{vgg_decoder_forward.15} parent=5 // pred_fallthru
      _
    %p170 = scmp.le.s32.totalorder 1, %s10
    %p171 = scmp.lt.s32.totalorder %s10, 3
    %p172 = pnand %p170, %p171
    %p173 = pneg %p172
    // Predicated region
    $region33: #{vgg_decoder_forward.15} parent=5 // pred_check
      _
    $region34: #{vgg_decoder_forward.15} parent=5 // pred_check_branch
      %175 = sbr.rel (%p172) target = $region36
    $region35: #{vgg_decoder_forward.15} parent=5 // pred_region
      %s176 = ssub.s32 %s10, 1
      %p177 = scmp.lt.s32.totalorder %s15, 1
      %s178 = scalar_select %p177, %s15, 1
      %s179 = smul.addr %s178, 160
      %s180 = smul.addr %s179, 4
      %s181 = scalar_lea.vmem %s0, %s180
      %p182 = pneg %p36
      %p183 = pneg %p33
      %p184 = pneg %p57
      %p185 = pneg %p54
      %p186 = pneg %p78
      %p187 = pneg %p75
      %p188 = scmp.lt.s32.totalorder %s15, 1
      %s189 = scalar_select %p188, %s15, 1
      %s190 = smul.addr %s189, 2
      %s191 = scalar_lea.vmem %s3, %s190
      %p192 = pneg %p104
      %p193 = pneg %p101
      %p194 = pneg %p130
      %p195 = pneg %p127
      %p196 = scmp.lt.s32.totalorder %s15, 1
      %s197 = scalar_select %p196, %s15, 1
      %s198 = smul.addr %s197, 32
      %s199 = smul.addr %s198, 8
      %s200 = scalar_lea.vmem %s4, %s199
      %p201 = scmp.lt.s32.totalorder %s15, 1
      %s202 = scalar_select %p201, %s15, 1
      %s203 = smul.addr %s202, 160
      %s204 = smul.addr %s203, 4
      %s205 = scalar_lea.vmem %s0, %s204
      %p206 = scmp.lt.s32.totalorder %s15, 1
      %s207 = scalar_select %p206, %s15, 1
      %s208 = smul.addr %s207, 2
      %s209 = scalar_lea.vmem %s3, %s208
      %p210 = scmp.lt.s32.totalorder %s15, 1
      %s211 = scalar_select %p210, %s15, 1
      %s212 = smul.addr %s211, 32
      %s213 = smul.addr %s212, 8
      %s214 = scalar_lea.vmem %s4, %s213
      %v216 = vld [vmem:[%s205] sm:$0xff]
      %v217 = vld [vmem:[%s205 + $0x8] sm:$0xff]
      %v218 = vld [vmem:[%s205 + $0x10] sm:$0xf]
      %v219 = vld [vmem:[%s205 + $0x14] sm:$0xff]
      %v220 = vld [vmem:[%s205 + $0x1c] sm:$0xff]
      %v221 = vld [vmem:[%s205 + $0x24] sm:$0xf]
      %v222 = vld [vmem:[%s205 + $0x28] sm:$0xff]
      %v223 = vld [vmem:[%s205 + $0x30] sm:$0xff]
      %v224 = vld [vmem:[%s205 + $0x38] sm:$0xf]
      %v225 = vld [vmem:[%s205 + $0x3c] sm:$0xff]
      %v226 = vld [vmem:[%s205 + $0x44] sm:$0xff]
      %v227 = vld [vmem:[%s205 + $0x4c] sm:$0xf]
      %v228 = vld [vmem:[%s205 + $0x50] sm:$0xff]
      %v229 = vld [vmem:[%s205 + $0x58] sm:$0xff]
      %v230 = vld [vmem:[%s205 + $0x60] sm:$0xf]
      %v231 = vld [vmem:[%s205 + $0x64] sm:$0xff]
      %v232 = vld [vmem:[%s205 + $0x6c] sm:$0xff]
      %v233 = vld [vmem:[%s205 + $0x74] sm:$0xf]
      %v234 = vld [vmem:[%s205 + $0x78] sm:$0xff]
      %v235 = vld [vmem:[%s205 + $0x80] sm:$0xff]
      %v236 = vld [vmem:[%s205 + $0x88] sm:$0xf]
      %v237 = vld [vmem:[%s205 + $0x8c] sm:$0xff]
      %v238 = vld [vmem:[%s205 + $0x94] sm:$0xff]
      %v239 = vld [vmem:[%s205 + $0x9c] sm:$0xf]
      %v240 = vld [vmem:[%s205 + $0xa0] sm:$0xff]
      %v241 = vld [vmem:[%s205 + $0xa8] sm:$0xff]
      %v242 = vld [vmem:[%s205 + $0xb0] sm:$0xf]
      %v243 = vld [vmem:[%s205 + $0xb4] sm:$0xff]
      %v244 = vld [vmem:[%s205 + $0xbc] sm:$0xff]
      %v245 = vld [vmem:[%s205 + $0xc4] sm:$0xf]
      %v246 = vld [vmem:[%s205 + $0xc8] sm:$0xff]
      %v247 = vld [vmem:[%s205 + $0xd0] sm:$0xff]
      %v248 = vld [vmem:[%s205 + $0xd8] sm:$0xf]
      %v249 = vld [vmem:[%s205 + $0xdc] sm:$0xff]
      %v250 = vld [vmem:[%s205 + $0xe4] sm:$0xff]
      %v251 = vld [vmem:[%s205 + $0xec] sm:$0xf]
      %v252 = vld [vmem:[%s205 + $0xf0] sm:$0xff]
      %v253 = vld [vmem:[%s205 + $0xf8] sm:$0xff]
      %v254 = vld [vmem:[%s205 + $0x100] sm:$0xf]
      %v255 = vld [vmem:[%s205 + $0x104] sm:$0xff]
      %v256 = vld [vmem:[%s205 + $0x10c] sm:$0xff]
      %v257 = vld [vmem:[%s205 + $0x114] sm:$0xf]
      %v258 = vld [vmem:[%s205 + $0x118] sm:$0xff]
      %v259 = vld [vmem:[%s205 + $0x120] sm:$0xff]
      %v260 = vld [vmem:[%s205 + $0x128] sm:$0xf]
      %v261 = vld [vmem:[%s205 + $0x12c] sm:$0xff]
      %v262 = vld [vmem:[%s205 + $0x134] sm:$0xff]
      %v263 = vld [vmem:[%s205 + $0x13c] sm:$0xf]
      %v264 = vld [vmem:[%s205 + $0x140] sm:$0xff]
      %v265 = vld [vmem:[%s205 + $0x148] sm:$0xff]
      %v266 = vld [vmem:[%s205 + $0x150] sm:$0xf]
      %v267 = vld [vmem:[%s205 + $0x154] sm:$0xff]
      %v268 = vld [vmem:[%s205 + $0x15c] sm:$0xff]
      %v269 = vld [vmem:[%s205 + $0x164] sm:$0xf]
      %v270 = vld [vmem:[%s205 + $0x168] sm:$0xff]
      %v271 = vld [vmem:[%s205 + $0x170] sm:$0xff]
      %v272 = vld [vmem:[%s205 + $0x178] sm:$0xf]
      %v273 = vld [vmem:[%s205 + $0x17c] sm:$0xff]
      %v274 = vld [vmem:[%s205 + $0x184] sm:$0xff]
      %v275 = vld [vmem:[%s205 + $0x18c] sm:$0xf]
      %v276 = vld [vmem:[%s205 + $0x190] sm:$0xff]
      %v277 = vld [vmem:[%s205 + $0x198] sm:$0xff]
      %v278 = vld [vmem:[%s205 + $0x1a0] sm:$0xf]
      %v279 = vld [vmem:[%s205 + $0x1a4] sm:$0xff]
      %v280 = vld [vmem:[%s205 + $0x1ac] sm:$0xff]
      %v281 = vld [vmem:[%s205 + $0x1b4] sm:$0xf]
      %v282 = vld [vmem:[%s205 + $0x1b8] sm:$0xff]
      %v283 = vld [vmem:[%s205 + $0x1c0] sm:$0xff]
      %v284 = vld [vmem:[%s205 + $0x1c8] sm:$0xf]
      %v285 = vld [vmem:[%s205 + $0x1cc] sm:$0xff]
      %v286 = vld [vmem:[%s205 + $0x1d4] sm:$0xff]
      %v287 = vld [vmem:[%s205 + $0x1dc] sm:$0xf]
      %v288 = vld [vmem:[%s205 + $0x1e0] sm:$0xff]
      %v289 = vld [vmem:[%s205 + $0x1e8] sm:$0xff]
      %v290 = vld [vmem:[%s205 + $0x1f0] sm:$0xf]
      %v291 = vld [vmem:[%s205 + $0x1f4] sm:$0xff]
      %v292 = vld [vmem:[%s205 + $0x1fc] sm:$0xff]
      %v293 = vld [vmem:[%s205 + $0x204] sm:$0xf]
      %v294 = vld [vmem:[%s205 + $0x208] sm:$0xff]
      %v295 = vld [vmem:[%s205 + $0x210] sm:$0xff]
      %v296 = vld [vmem:[%s205 + $0x218] sm:$0xf]
      %v297 = vld [vmem:[%s205 + $0x21c] sm:$0xff]
      %v298 = vld [vmem:[%s205 + $0x224] sm:$0xff]
      %v299 = vld [vmem:[%s205 + $0x22c] sm:$0xf]
      %v300 = vld [vmem:[%s205 + $0x230] sm:$0xff]
      %v301 = vld [vmem:[%s205 + $0x238] sm:$0xff]
      %v302 = vld [vmem:[%s205 + $0x240] sm:$0xf]
      %v303 = vld [vmem:[%s205 + $0x244] sm:$0xff]
      %v304 = vld [vmem:[%s205 + $0x24c] sm:$0xff]
      %v305 = vld [vmem:[%s205 + $0x254] sm:$0xf]
      %v306 = vld [vmem:[%s205 + $0x258] sm:$0xff]
      %v307 = vld [vmem:[%s205 + $0x260] sm:$0xff]
      %v308 = vld [vmem:[%s205 + $0x268] sm:$0xf]
      %v309 = vld [vmem:[%s205 + $0x26c] sm:$0xff]
      %v310 = vld [vmem:[%s205 + $0x274] sm:$0xff]
      %v311 = vld [vmem:[%s205 + $0x27c] sm:$0xf]
      %v312 = vld [vmem:[%s1] sm:$0xf]
      %v313 = vld [vmem:[%s1 + $0x4] sm:$0xf]
      %v314 = vld [vmem:[%s1 + $0x8] sm:$0xf]
      %v315 = vld [vmem:[%s1 + $0xc] sm:$0xf]
      %v316 = vld [vmem:[%s1 + $0x10] sm:$0xf]
      %v317 = vld [vmem:[%s1 + $0x14] sm:$0xf]
      %v318 = vld [vmem:[%s1 + $0x18] sm:$0xf]
      %v319 = vld [vmem:[%s1 + $0x1c] sm:$0xf]
      %v320 = vld [vmem:[%s1 + $0x20] sm:$0xf]
      %v321 = vld [vmem:[%s1 + $0x24] sm:$0xf]
      %v322 = vld [vmem:[%s1 + $0x28] sm:$0xf]
      %v323 = vld [vmem:[%s1 + $0x2c] sm:$0xf]
      %v324 = vld [vmem:[%s1 + $0x30] sm:$0xf]
      %v325 = vld [vmem:[%s1 + $0x34] sm:$0xf]
      %v326 = vld [vmem:[%s1 + $0x38] sm:$0xf]
      %v327 = vld [vmem:[%s1 + $0x3c] sm:$0xf]
      %v328 = vld [vmem:[%s1 + $0x40] sm:$0xf]
      %v329 = vld [vmem:[%s1 + $0x44] sm:$0xf]
      %v330 = vld [vmem:[%s1 + $0x48] sm:$0xf]
      %v331 = vld [vmem:[%s1 + $0x4c] sm:$0xf]
      %v332 = vld [vmem:[%s1 + $0x50] sm:$0xf]
      %v333 = vld [vmem:[%s1 + $0x54] sm:$0xf]
      %v334 = vld [vmem:[%s1 + $0x58] sm:$0xf]
      %v335 = vld [vmem:[%s1 + $0x5c] sm:$0xf]
      %v336 = vld [vmem:[%s1 + $0x60] sm:$0xf]
      %v337 = vld [vmem:[%s1 + $0x64] sm:$0xf]
      %v338 = vld [vmem:[%s1 + $0x68] sm:$0xf]
      %v339 = vld [vmem:[%s1 + $0x6c] sm:$0xf]
      %v340 = vld [vmem:[%s1 + $0x70] sm:$0xf]
      %v341 = vld [vmem:[%s1 + $0x74] sm:$0xf]
      %v342 = vld [vmem:[%s1 + $0x78] sm:$0xf]
      %v343 = vld [vmem:[%s1 + $0x7c] sm:$0xf]
      %v344 = vld [vmem:[%s1 + $0x80] sm:$0xf]
      %v345 = vld [vmem:[%s1 + $0x84] sm:$0xf]
      %v346 = vld [vmem:[%s1 + $0x88] sm:$0xf]
      %v347 = vld [vmem:[%s1 + $0x8c] sm:$0xf]
      %v348 = vld [vmem:[%s1 + $0x90] sm:$0xf]
      %v349 = vld [vmem:[%s1 + $0x94] sm:$0xf]
      %v350 = vld [vmem:[%s1 + $0x98] sm:$0xf]
      %v351 = vld [vmem:[%s1 + $0x9c] sm:$0xf]
      %v352 = vld [vmem:[%s1 + $0xa0] sm:$0xf]
      %v353 = vld [vmem:[%s1 + $0xa4] sm:$0xf]
      %v354 = vld [vmem:[%s1 + $0xa8] sm:$0xf]
      %v355 = vld [vmem:[%s1 + $0xac] sm:$0xf]
      %v356 = vld [vmem:[%s1 + $0xb0] sm:$0xf]
      %v357 = vld [vmem:[%s1 + $0xb4] sm:$0xf]
      %v358 = vld [vmem:[%s1 + $0xb8] sm:$0xf]
      %v359 = vld [vmem:[%s1 + $0xbc] sm:$0xf]
      %v360 = vld [vmem:[%s1 + $0xc0] sm:$0xf]
      %v361 = vld [vmem:[%s1 + $0xc4] sm:$0xf]
      %v362 = vld [vmem:[%s1 + $0xc8] sm:$0xf]
      %v363 = vld [vmem:[%s1 + $0xcc] sm:$0xf]
      %v364 = vld [vmem:[%s1 + $0xd0] sm:$0xf]
      %v365 = vld [vmem:[%s1 + $0xd4] sm:$0xf]
      %v366 = vld [vmem:[%s1 + $0xd8] sm:$0xf]
      %v367 = vld [vmem:[%s1 + $0xdc] sm:$0xf]
      %v368 = vld [vmem:[%s1 + $0xe0] sm:$0xf]
      %v369 = vld [vmem:[%s1 + $0xe4] sm:$0xf]
      %v370 = vld [vmem:[%s1 + $0xe8] sm:$0xf]
      %v371 = vld [vmem:[%s1 + $0xec] sm:$0xf]
      %v372 = vld [vmem:[%s1 + $0xf0] sm:$0xf]
      %v373 = vld [vmem:[%s1 + $0xf4] sm:$0xf]
      %v374 = vld [vmem:[%s1 + $0xf8] sm:$0xf]
      %v375 = vld [vmem:[%s1 + $0xfc] sm:$0xf]
      %v376 = vld [vmem:[%s1 + $0x100] sm:$0xf]
      %v377 = vld [vmem:[%s1 + $0x104] sm:$0xf]
      %v378 = vld [vmem:[%s1 + $0x108] sm:$0xf]
      %v379 = vld [vmem:[%s1 + $0x10c] sm:$0xf]
      %v380 = vld [vmem:[%s1 + $0x110] sm:$0xf]
      %v381 = vld [vmem:[%s1 + $0x114] sm:$0xf]
      %v382 = vld [vmem:[%s1 + $0x118] sm:$0xf]
      %v383 = vld [vmem:[%s1 + $0x11c] sm:$0xf]
      %v384 = vld [vmem:[%s2] sm:$0x1]
      %v386 = vlaneseq
      %v387 = vshrl.u32 %v386, 7
      %v388 = vsub.s32 0, %v387
      %v389 = vrot.slane %v384, %v388
      %v487 = vunpack.c.l.b16 %v216
      %v488 = vunpack.c.h.b16 %v216
      %v489 = vunpack.c.l.b16 %v217
      %v490 = vunpack.c.h.b16 %v217
      %v491 = vunpack.c.l.b16 %v218
      %v492 = vunpack.c.l.b16 %v219
      %v493 = vunpack.c.h.b16 %v219
      %v494 = vunpack.c.l.b16 %v220
      %v495 = vunpack.c.h.b16 %v220
      %v496 = vunpack.c.l.b16 %v221
      %v497 = vunpack.c.l.b16 %v222
      %v498 = vunpack.c.h.b16 %v222
      %v499 = vunpack.c.l.b16 %v223
      %v500 = vunpack.c.h.b16 %v223
      %v501 = vunpack.c.l.b16 %v224
      %v502 = vunpack.c.l.b16 %v225
      %v503 = vunpack.c.h.b16 %v225
      %v504 = vunpack.c.l.b16 %v226
      %v505 = vunpack.c.h.b16 %v226
      %v506 = vunpack.c.l.b16 %v227
      %v507 = vunpack.c.l.b16 %v228
      %v508 = vunpack.c.h.b16 %v228
      %v509 = vunpack.c.l.b16 %v229
      %v510 = vunpack.c.h.b16 %v229
      %v511 = vunpack.c.l.b16 %v230
      %v512 = vunpack.c.l.b16 %v231
      %v513 = vunpack.c.h.b16 %v231
      %v514 = vunpack.c.l.b16 %v232
      %v515 = vunpack.c.h.b16 %v232
      %v516 = vunpack.c.l.b16 %v233
      %v517 = vunpack.c.l.b16 %v234
      %v518 = vunpack.c.h.b16 %v234
      %v519 = vunpack.c.l.b16 %v235
      %v520 = vunpack.c.h.b16 %v235
      %v521 = vunpack.c.l.b16 %v236
      %v522 = vunpack.c.l.b16 %v237
      %v523 = vunpack.c.h.b16 %v237
      %v524 = vunpack.c.l.b16 %v238
      %v525 = vunpack.c.h.b16 %v238
      %v526 = vunpack.c.l.b16 %v239
      %v527 = vunpack.c.l.b16 %v240
      %v528 = vunpack.c.h.b16 %v240
      %v529 = vunpack.c.l.b16 %v241
      %v530 = vunpack.c.h.b16 %v241
      %v531 = vunpack.c.l.b16 %v242
      %v532 = vunpack.c.l.b16 %v243
      %v533 = vunpack.c.h.b16 %v243
      %v534 = vunpack.c.l.b16 %v244
      %v535 = vunpack.c.h.b16 %v244
      %v536 = vunpack.c.l.b16 %v245
      %v537 = vunpack.c.l.b16 %v246
      %v538 = vunpack.c.h.b16 %v246
      %v539 = vunpack.c.l.b16 %v247
      %v540 = vunpack.c.h.b16 %v247
      %v541 = vunpack.c.l.b16 %v248
      %v542 = vunpack.c.l.b16 %v249
      %v543 = vunpack.c.h.b16 %v249
      %v544 = vunpack.c.l.b16 %v250
      %v545 = vunpack.c.h.b16 %v250
      %v546 = vunpack.c.l.b16 %v251
      %v547 = vunpack.c.l.b16 %v252
      %v548 = vunpack.c.h.b16 %v252
      %v549 = vunpack.c.l.b16 %v253
      %v550 = vunpack.c.h.b16 %v253
      %v551 = vunpack.c.l.b16 %v254
      %v552 = vunpack.c.l.b16 %v255
      %v553 = vunpack.c.h.b16 %v255
      %v554 = vunpack.c.l.b16 %v256
      %v555 = vunpack.c.h.b16 %v256
      %v556 = vunpack.c.l.b16 %v257
      %v557 = vunpack.c.l.b16 %v258
      %v558 = vunpack.c.h.b16 %v258
      %v559 = vunpack.c.l.b16 %v259
      %v560 = vunpack.c.h.b16 %v259
      %v561 = vunpack.c.l.b16 %v260
      %v562 = vunpack.c.l.b16 %v261
      %v563 = vunpack.c.h.b16 %v261
      %v564 = vunpack.c.l.b16 %v262
      %v565 = vunpack.c.h.b16 %v262
      %v566 = vunpack.c.l.b16 %v263
      %v567 = vunpack.c.l.b16 %v264
      %v568 = vunpack.c.h.b16 %v264
      %v569 = vunpack.c.l.b16 %v265
      %v570 = vunpack.c.h.b16 %v265
      %v571 = vunpack.c.l.b16 %v266
      %v572 = vunpack.c.l.b16 %v267
      %v573 = vunpack.c.h.b16 %v267
      %v574 = vunpack.c.l.b16 %v268
      %v575 = vunpack.c.h.b16 %v268
      %v576 = vunpack.c.l.b16 %v269
      %v577 = vunpack.c.l.b16 %v270
      %v578 = vunpack.c.h.b16 %v270
      %v579 = vunpack.c.l.b16 %v271
      %v580 = vunpack.c.h.b16 %v271
      %v581 = vunpack.c.l.b16 %v272
      %v582 = vunpack.c.l.b16 %v273
      %v583 = vunpack.c.h.b16 %v273
      %v584 = vunpack.c.l.b16 %v274
      %v585 = vunpack.c.h.b16 %v274
      %v586 = vunpack.c.l.b16 %v275
      %v587 = vunpack.c.l.b16 %v276
      %v588 = vunpack.c.h.b16 %v276
      %v589 = vunpack.c.l.b16 %v277
      %v590 = vunpack.c.h.b16 %v277
      %v591 = vunpack.c.l.b16 %v278
      %v592 = vunpack.c.l.b16 %v279
      %v593 = vunpack.c.h.b16 %v279
      %v594 = vunpack.c.l.b16 %v280
      %v595 = vunpack.c.h.b16 %v280
      %v596 = vunpack.c.l.b16 %v281
      %v597 = vunpack.c.l.b16 %v282
      %v598 = vunpack.c.h.b16 %v282
      %v599 = vunpack.c.l.b16 %v283
      %v600 = vunpack.c.h.b16 %v283
      %v601 = vunpack.c.l.b16 %v284
      %v602 = vunpack.c.l.b16 %v285
      %v603 = vunpack.c.h.b16 %v285
      %v604 = vunpack.c.l.b16 %v286
      %v605 = vunpack.c.h.b16 %v286
      %v606 = vunpack.c.l.b16 %v287
      %v607 = vunpack.c.l.b16 %v288
      %v608 = vunpack.c.h.b16 %v288
      %v609 = vunpack.c.l.b16 %v289
      %v610 = vunpack.c.h.b16 %v289
      %v611 = vunpack.c.l.b16 %v290
      %v612 = vunpack.c.l.b16 %v291
      %v613 = vunpack.c.h.b16 %v291
      %v614 = vunpack.c.l.b16 %v292
      %v615 = vunpack.c.h.b16 %v292
      %v616 = vunpack.c.l.b16 %v293
      %v617 = vunpack.c.l.b16 %v294
      %v618 = vunpack.c.h.b16 %v294
      %v619 = vunpack.c.l.b16 %v295
      %v620 = vunpack.c.h.b16 %v295
      %v621 = vunpack.c.l.b16 %v296
      %v622 = vunpack.c.l.b16 %v297
      %v623 = vunpack.c.h.b16 %v297
      %v624 = vunpack.c.l.b16 %v298
      %v625 = vunpack.c.h.b16 %v298
      %v626 = vunpack.c.l.b16 %v299
      %v627 = vunpack.c.l.b16 %v300
      %v628 = vunpack.c.h.b16 %v300
      %v629 = vunpack.c.l.b16 %v301
      %v630 = vunpack.c.h.b16 %v301
      %v631 = vunpack.c.l.b16 %v302
      %v632 = vunpack.c.l.b16 %v303
      %v633 = vunpack.c.h.b16 %v303
      %v634 = vunpack.c.l.b16 %v304
      %v635 = vunpack.c.h.b16 %v304
      %v636 = vunpack.c.l.b16 %v305
      %v637 = vunpack.c.l.b16 %v306
      %v638 = vunpack.c.h.b16 %v306
      %v639 = vunpack.c.l.b16 %v307
      %v640 = vunpack.c.h.b16 %v307
      %v641 = vunpack.c.l.b16 %v308
      %v642 = vunpack.c.l.b16 %v309
      %v643 = vunpack.c.h.b16 %v309
      %v644 = vunpack.c.l.b16 %v310
      %v645 = vunpack.c.h.b16 %v310
      %v646 = vunpack.c.l.b16 %v311
      %v647 = vpack.c.b16 %v492, %v487
      %v648 = vpack.c.b16 %v493, %v488
      %v649 = vpack.c.b16 %v494, %v489
      %v650 = vpack.c.b16 %v495, %v490
      %v651 = vpack.c.b16 %v496, %v491
      %v652 = vpack.c.b16 %v502, %v497
      %v653 = vpack.c.b16 %v503, %v498
      %v654 = vpack.c.b16 %v504, %v499
      %v655 = vpack.c.b16 %v505, %v500
      %v656 = vpack.c.b16 %v506, %v501
      %v657 = vpack.c.b16 %v512, %v507
      %v658 = vpack.c.b16 %v513, %v508
      %v659 = vpack.c.b16 %v514, %v509
      %v660 = vpack.c.b16 %v515, %v510
      %v661 = vpack.c.b16 %v516, %v511
      %v662 = vpack.c.b16 %v522, %v517
      %v663 = vpack.c.b16 %v523, %v518
      %v664 = vpack.c.b16 %v524, %v519
      %v665 = vpack.c.b16 %v525, %v520
      %v666 = vpack.c.b16 %v526, %v521
      %v667 = vpack.c.b16 %v532, %v527
      %v668 = vpack.c.b16 %v533, %v528
      %v669 = vpack.c.b16 %v534, %v529
      %v670 = vpack.c.b16 %v535, %v530
      %v671 = vpack.c.b16 %v536, %v531
      %v672 = vpack.c.b16 %v542, %v537
      %v673 = vpack.c.b16 %v543, %v538
      %v674 = vpack.c.b16 %v544, %v539
      %v675 = vpack.c.b16 %v545, %v540
      %v676 = vpack.c.b16 %v546, %v541
      %v677 = vpack.c.b16 %v552, %v547
      %v678 = vpack.c.b16 %v553, %v548
      %v679 = vpack.c.b16 %v554, %v549
      %v680 = vpack.c.b16 %v555, %v550
      %v681 = vpack.c.b16 %v556, %v551
      %v682 = vpack.c.b16 %v562, %v557
      %v683 = vpack.c.b16 %v563, %v558
      %v684 = vpack.c.b16 %v564, %v559
      %v685 = vpack.c.b16 %v565, %v560
      %v686 = vpack.c.b16 %v566, %v561
      %v687 = vpack.c.b16 %v572, %v567
      %v688 = vpack.c.b16 %v573, %v568
      %v689 = vpack.c.b16 %v574, %v569
      %v690 = vpack.c.b16 %v575, %v570
      %v691 = vpack.c.b16 %v576, %v571
      %v692 = vpack.c.b16 %v582, %v577
      %v693 = vpack.c.b16 %v583, %v578
      %v694 = vpack.c.b16 %v584, %v579
      %v695 = vpack.c.b16 %v585, %v580
      %v696 = vpack.c.b16 %v586, %v581
      %v697 = vpack.c.b16 %v592, %v587
      %v698 = vpack.c.b16 %v593, %v588
      %v699 = vpack.c.b16 %v594, %v589
      %v700 = vpack.c.b16 %v595, %v590
      %v701 = vpack.c.b16 %v596, %v591
      %v702 = vpack.c.b16 %v602, %v597
      %v703 = vpack.c.b16 %v603, %v598
      %v704 = vpack.c.b16 %v604, %v599
      %v705 = vpack.c.b16 %v605, %v600
      %v706 = vpack.c.b16 %v606, %v601
      %v707 = vpack.c.b16 %v612, %v607
      %v708 = vpack.c.b16 %v613, %v608
      %v709 = vpack.c.b16 %v614, %v609
      %v710 = vpack.c.b16 %v615, %v610
      %v711 = vpack.c.b16 %v616, %v611
      %v712 = vpack.c.b16 %v622, %v617
      %v713 = vpack.c.b16 %v623, %v618
      %v714 = vpack.c.b16 %v624, %v619
      %v715 = vpack.c.b16 %v625, %v620
      %v716 = vpack.c.b16 %v626, %v621
      %v717 = vpack.c.b16 %v632, %v627
      %v718 = vpack.c.b16 %v633, %v628
      %v719 = vpack.c.b16 %v634, %v629
      %v720 = vpack.c.b16 %v635, %v630
      %v721 = vpack.c.b16 %v636, %v631
      %v722 = vpack.c.b16 %v642, %v637
      %v723 = vpack.c.b16 %v643, %v638
      %v724 = vpack.c.b16 %v644, %v639
      %v725 = vpack.c.b16 %v645, %v640
      %v726 = vpack.c.b16 %v646, %v641
      %v863 = vunpack.c.l.b16 %v312
      %v864 = vunpack.c.l.b16 %v313
      %v865 = vunpack.c.l.b16 %v314
      %v866 = vunpack.c.l.b16 %v315
      %v867 = vunpack.c.l.b16 %v316
      %v868 = vunpack.c.l.b16 %v317
      %v869 = vunpack.c.l.b16 %v318
      %v870 = vunpack.c.l.b16 %v319
      %v871 = vunpack.c.l.b16 %v320
      %v872 = vunpack.c.l.b16 %v321
      %v873 = vunpack.c.l.b16 %v322
      %v874 = vunpack.c.l.b16 %v323
      %v875 = vunpack.c.l.b16 %v324
      %v876 = vunpack.c.l.b16 %v325
      %v877 = vunpack.c.l.b16 %v326
      %v878 = vunpack.c.l.b16 %v327
      %v879 = vunpack.c.l.b16 %v328
      %v880 = vunpack.c.l.b16 %v329
      %v881 = vunpack.c.l.b16 %v330
      %v882 = vunpack.c.l.b16 %v331
      %v883 = vunpack.c.l.b16 %v332
      %v884 = vunpack.c.l.b16 %v333
      %v885 = vunpack.c.l.b16 %v334
      %v886 = vunpack.c.l.b16 %v335
      %v887 = vunpack.c.l.b16 %v336
      %v888 = vunpack.c.l.b16 %v337
      %v889 = vunpack.c.l.b16 %v338
      %v890 = vunpack.c.l.b16 %v339
      %v891 = vunpack.c.l.b16 %v340
      %v892 = vunpack.c.l.b16 %v341
      %v893 = vunpack.c.l.b16 %v342
      %v894 = vunpack.c.l.b16 %v343
      %v895 = vunpack.c.l.b16 %v344
      %v896 = vunpack.c.l.b16 %v345
      %v897 = vunpack.c.l.b16 %v346
      %v898 = vunpack.c.l.b16 %v347
      %v899 = vunpack.c.l.b16 %v348
      %v900 = vunpack.c.l.b16 %v349
      %v901 = vunpack.c.l.b16 %v350
      %v902 = vunpack.c.l.b16 %v351
      %v903 = vunpack.c.l.b16 %v352
      %v904 = vunpack.c.l.b16 %v353
      %v905 = vunpack.c.l.b16 %v354
      %v906 = vunpack.c.l.b16 %v355
      %v907 = vunpack.c.l.b16 %v356
      %v908 = vunpack.c.l.b16 %v357
      %v909 = vunpack.c.l.b16 %v358
      %v910 = vunpack.c.l.b16 %v359
      %v911 = vunpack.c.l.b16 %v360
      %v912 = vunpack.c.l.b16 %v361
      %v913 = vunpack.c.l.b16 %v362
      %v914 = vunpack.c.l.b16 %v363
      %v915 = vunpack.c.l.b16 %v364
      %v916 = vunpack.c.l.b16 %v365
      %v917 = vunpack.c.l.b16 %v366
      %v918 = vunpack.c.l.b16 %v367
      %v919 = vunpack.c.l.b16 %v368
      %v920 = vunpack.c.l.b16 %v369
      %v921 = vunpack.c.l.b16 %v370
      %v922 = vunpack.c.l.b16 %v371
      %v923 = vunpack.c.l.b16 %v372
      %v924 = vunpack.c.l.b16 %v373
      %v925 = vunpack.c.l.b16 %v374
      %v926 = vunpack.c.l.b16 %v375
      %v927 = vunpack.c.l.b16 %v376
      %v928 = vunpack.c.l.b16 %v377
      %v929 = vunpack.c.l.b16 %v378
      %v930 = vunpack.c.l.b16 %v379
      %v931 = vunpack.c.l.b16 %v380
      %v932 = vunpack.c.l.b16 %v381
      %v933 = vunpack.c.l.b16 %v382
      %v934 = vunpack.c.l.b16 %v383
      %v935 = vpack.c.b16 %v864, %v863
      %v936 = vpack.c.b16 %v866, %v865
      %v937 = vpack.c.b16 %v868, %v867
      %v938 = vpack.c.b16 %v870, %v869
      %v939 = vpack.c.b16 %v872, %v871
      %v940 = vpack.c.b16 %v874, %v873
      %v941 = vpack.c.b16 %v876, %v875
      %v942 = vpack.c.b16 %v878, %v877
      %v943 = vpack.c.b16 %v880, %v879
      %v944 = vpack.c.b16 %v882, %v881
      %v945 = vpack.c.b16 %v884, %v883
      %v946 = vpack.c.b16 %v886, %v885
      %v947 = vpack.c.b16 %v888, %v887
      %v948 = vpack.c.b16 %v890, %v889
      %v949 = vpack.c.b16 %v892, %v891
      %v950 = vpack.c.b16 %v894, %v893
      %v951 = vpack.c.b16 %v896, %v895
      %v952 = vpack.c.b16 %v898, %v897
      %v953 = vpack.c.b16 %v900, %v899
      %v954 = vpack.c.b16 %v902, %v901
      %v955 = vpack.c.b16 %v904, %v903
      %v956 = vpack.c.b16 %v906, %v905
      %v957 = vpack.c.b16 %v908, %v907
      %v958 = vpack.c.b16 %v910, %v909
      %v959 = vpack.c.b16 %v912, %v911
      %v960 = vpack.c.b16 %v914, %v913
      %v961 = vpack.c.b16 %v916, %v915
      %v962 = vpack.c.b16 %v918, %v917
      %v963 = vpack.c.b16 %v920, %v919
      %v964 = vpack.c.b16 %v922, %v921
      %v965 = vpack.c.b16 %v924, %v923
      %v966 = vpack.c.b16 %v926, %v925
      %v967 = vpack.c.b16 %v928, %v927
      %v968 = vpack.c.b16 %v930, %v929
      %v969 = vpack.c.b16 %v932, %v931
      %v970 = vpack.c.b16 %v934, %v933
      %vm1007 = vcmask 523264
      %v1009 = vsel %vm1007, %v651, 0
      %v1012 = vsel %vm1007, %v656, 0
      %v1015 = vsel %vm1007, %v661, 0
      %v1018 = vsel %vm1007, %v666, 0
      %v1021 = vsel %vm1007, %v671, 0
      %v1024 = vsel %vm1007, %v676, 0
      %v1027 = vsel %vm1007, %v681, 0
      %v1030 = vsel %vm1007, %v686, 0
      %v1033 = vsel %vm1007, %v691, 0
      %v1036 = vsel %vm1007, %v696, 0
      %v1039 = vsel %vm1007, %v701, 0
      %v1042 = vsel %vm1007, %v706, 0
      %v1045 = vsel %vm1007, %v711, 0
      %v1048 = vsel %vm1007, %v716, 0
      %v1051 = vsel %vm1007, %v721, 0
      %v1054 = vsel %vm1007, %v726, 0
      %1056 = vmatprep.subr.bf16.mxu0 0
      %1057 = vmatpush1.bf16.msra.mxu0 %v942
      %1058 = vmatprep.subr.bf16.mxu0 0
      %1059 = vmatpush1.bf16.msra.mxu0 %v941
      %1060 = vmatprep.subr.bf16.mxu0 0
      %1061 = vmatpush1.bf16.msra.mxu0 %v940
      %1062 = vmatprep.subr.bf16.mxu0 0
      %1063 = vmatpush1.bf16.msra.mxu0 %v939
      %1064 = vmatprep.subr.bf16.mxu0 0
      %1065 = vmatpush1.bf16.msra.mxu0 %v938
      %1066 = vmatprep.subr.bf16.mxu0 0
      %1067 = vmatpush1.bf16.msra.mxu0 %v937
      %1068 = vmatprep.subr.bf16.mxu0 0
      %1069 = vmatpush1.bf16.msra.mxu0 %v936
      %1070 = vmatprep.subr.bf16.mxu0 0
      %1071 = vmatpush1.bf16.msra.mxu0 %v935
      %1072 = vmatprep.subr.bf16.mxu0 0
      %1073 = vmatpush2.bf16.msra.mxu0 %v950
      %1074 = vmatprep.subr.bf16.mxu0 0
      %1075 = vmatpush2.bf16.msra.mxu0 %v949
      %1076 = vmatprep.subr.bf16.mxu0 0
      %1077 = vmatpush2.bf16.msra.mxu0 %v948
      %1078 = vmatprep.subr.bf16.mxu0 0
      %1079 = vmatpush2.bf16.msra.mxu0 %v947
      %1080 = vmatprep.subr.bf16.mxu0 0
      %1081 = vmatpush2.bf16.msra.mxu0 %v946
      %1082 = vmatprep.subr.bf16.mxu0 0
      %1083 = vmatpush2.bf16.msra.mxu0 %v945
      %1084 = vmatprep.subr.bf16.mxu0 0
      %1085 = vmatpush2.bf16.msra.mxu0 %v944
      %1086 = vmatprep.subr.bf16.mxu0 0
      %1087 = vmatpush2.bf16.msra.mxu0 %v943
      %1088 = vmatprep.mubr.bf16.mxu0 %v648
      %1089 = vmatmul.mubr.bf16.gmra.mxu0 %v647
      %v1090 = vpop.f32.mrf.mxu0
      %v1091 = vadd.f32 %v389, %v1090
      %v1092 = vpop.f32.mrf.mxu0
      %v1093 = vpop.f32.mrf.mxu0
      %v1094 = vadd.f32 %v389, %v1093
      %v1095 = vpop.f32.mrf.mxu0
      %1096 = vmatprep.mubr.bf16.mxu0 %v653
      %1097 = vmatmul.mubr.bf16.gmra.mxu0 %v652
      %v1098 = vpop.f32.mrf.mxu0
      %v1099 = vadd.f32 %v389, %v1098
      %v1100 = vpop.f32.mrf.mxu0
      %v1101 = vpop.f32.mrf.mxu0
      %v1102 = vadd.f32 %v389, %v1101
      %v1103 = vpop.f32.mrf.mxu0
      %1104 = vmatprep.mubr.bf16.mxu0 %v658
      %1105 = vmatmul.mubr.bf16.gmra.mxu0 %v657
      %v1106 = vpop.f32.mrf.mxu0
      %v1107 = vadd.f32 %v389, %v1106
      %v1108 = vpop.f32.mrf.mxu0
      %v1109 = vpop.f32.mrf.mxu0
      %v1110 = vadd.f32 %v389, %v1109
      %v1111 = vpop.f32.mrf.mxu0
      %1112 = vmatprep.mubr.bf16.mxu0 %v663
      %1113 = vmatmul.mubr.bf16.gmra.mxu0 %v662
      %v1114 = vpop.f32.mrf.mxu0
      %v1115 = vadd.f32 %v389, %v1114
      %v1116 = vpop.f32.mrf.mxu0
      %v1117 = vpop.f32.mrf.mxu0
      %v1118 = vadd.f32 %v389, %v1117
      %v1119 = vpop.f32.mrf.mxu0
      %1120 = vmatprep.mubr.bf16.mxu0 %v668
      %1121 = vmatmul.mubr.bf16.gmra.mxu0 %v667
      %v1122 = vpop.f32.mrf.mxu0
      %v1123 = vadd.f32 %v389, %v1122
      %v1124 = vpop.f32.mrf.mxu0
      %v1125 = vpop.f32.mrf.mxu0
      %v1126 = vadd.f32 %v389, %v1125
      %v1127 = vpop.f32.mrf.mxu0
      %1128 = vmatprep.mubr.bf16.mxu0 %v673
      %1129 = vmatmul.mubr.bf16.gmra.mxu0 %v672
      %v1130 = vpop.f32.mrf.mxu0
      %v1131 = vadd.f32 %v389, %v1130
      %v1132 = vpop.f32.mrf.mxu0
      %v1133 = vpop.f32.mrf.mxu0
      %v1134 = vadd.f32 %v389, %v1133
      %v1135 = vpop.f32.mrf.mxu0
      %1136 = vmatprep.mubr.bf16.mxu0 %v678
      %1137 = vmatmul.mubr.bf16.gmra.mxu0 %v677
      %v1138 = vpop.f32.mrf.mxu0
      %v1139 = vadd.f32 %v389, %v1138
      %v1140 = vpop.f32.mrf.mxu0
      %v1141 = vpop.f32.mrf.mxu0
      %v1142 = vadd.f32 %v389, %v1141
      %v1143 = vpop.f32.mrf.mxu0
      %1144 = vmatprep.mubr.bf16.mxu0 %v683
      %1145 = vmatmul.mubr.bf16.gmra.mxu0 %v682
      %v1146 = vpop.f32.mrf.mxu0
      %v1147 = vadd.f32 %v389, %v1146
      %v1148 = vpop.f32.mrf.mxu0
      %v1149 = vpop.f32.mrf.mxu0
      %v1150 = vadd.f32 %v389, %v1149
      %v1151 = vpop.f32.mrf.mxu0
      %1152 = vmatprep.mubr.bf16.mxu0 %v688
      %1153 = vmatmul.mubr.bf16.gmra.mxu0 %v687
      %v1154 = vpop.f32.mrf.mxu0
      %v1155 = vadd.f32 %v389, %v1154
      %v1156 = vpop.f32.mrf.mxu0
      %v1157 = vpop.f32.mrf.mxu0
      %v1158 = vadd.f32 %v389, %v1157
      %v1159 = vpop.f32.mrf.mxu0
      %1160 = vmatprep.mubr.bf16.mxu0 %v693
      %1161 = vmatmul.mubr.bf16.gmra.mxu0 %v692
      %v1162 = vpop.f32.mrf.mxu0
      %v1163 = vadd.f32 %v389, %v1162
      %v1164 = vpop.f32.mrf.mxu0
      %v1165 = vpop.f32.mrf.mxu0
      %v1166 = vadd.f32 %v389, %v1165
      %v1167 = vpop.f32.mrf.mxu0
      %1168 = vmatprep.mubr.bf16.mxu0 %v698
      %1169 = vmatmul.mubr.bf16.gmra.mxu0 %v697
      %v1170 = vpop.f32.mrf.mxu0
      %v1171 = vadd.f32 %v389, %v1170
      %v1172 = vpop.f32.mrf.mxu0
      %v1173 = vpop.f32.mrf.mxu0
      %v1174 = vadd.f32 %v389, %v1173
      %v1175 = vpop.f32.mrf.mxu0
      %1176 = vmatprep.mubr.bf16.mxu0 %v703
      %1177 = vmatmul.mubr.bf16.gmra.mxu0 %v702
      %v1178 = vpop.f32.mrf.mxu0
      %v1179 = vadd.f32 %v389, %v1178
      %v1180 = vpop.f32.mrf.mxu0
      %v1181 = vpop.f32.mrf.mxu0
      %v1182 = vadd.f32 %v389, %v1181
      %v1183 = vpop.f32.mrf.mxu0
      %1184 = vmatprep.mubr.bf16.mxu0 %v708
      %1185 = vmatmul.mubr.bf16.gmra.mxu0 %v707
      %v1186 = vpop.f32.mrf.mxu0
      %v1187 = vadd.f32 %v389, %v1186
      %v1188 = vpop.f32.mrf.mxu0
      %v1189 = vpop.f32.mrf.mxu0
      %v1190 = vadd.f32 %v389, %v1189
      %v1191 = vpop.f32.mrf.mxu0
      %1192 = vmatprep.mubr.bf16.mxu0 %v713
      %1193 = vmatmul.mubr.bf16.gmra.mxu0 %v712
      %v1194 = vpop.f32.mrf.mxu0
      %v1195 = vadd.f32 %v389, %v1194
      %v1196 = vpop.f32.mrf.mxu0
      %v1197 = vpop.f32.mrf.mxu0
      %v1198 = vadd.f32 %v389, %v1197
      %v1199 = vpop.f32.mrf.mxu0
      %1200 = vmatprep.mubr.bf16.mxu0 %v718
      %1201 = vmatmul.mubr.bf16.gmra.mxu0 %v717
      %v1202 = vpop.f32.mrf.mxu0
      %v1203 = vadd.f32 %v389, %v1202
      %v1204 = vpop.f32.mrf.mxu0
      %v1205 = vpop.f32.mrf.mxu0
      %v1206 = vadd.f32 %v389, %v1205
      %v1207 = vpop.f32.mrf.mxu0
      %1208 = vmatprep.mubr.bf16.mxu0 %v723
      %1209 = vmatmul.mubr.bf16.gmra.mxu0 %v722
      %v1210 = vpop.f32.mrf.mxu0
      %v1211 = vadd.f32 %v389, %v1210
      %v1212 = vpop.f32.mrf.mxu0
      %v1213 = vpop.f32.mrf.mxu0
      %v1214 = vadd.f32 %v389, %v1213
      %v1215 = vpop.f32.mrf.mxu0
      %1216 = vdwg.mxu0
      %1217 = vmatprep.subr.bf16.mxu0 0
      %1218 = vmatpush1.bf16.msra.mxu0 %v958
      %1219 = vmatprep.subr.bf16.mxu0 0
      %1220 = vmatpush1.bf16.msra.mxu0 %v957
      %1221 = vmatprep.subr.bf16.mxu0 0
      %1222 = vmatpush1.bf16.msra.mxu0 %v956
      %1223 = vmatprep.subr.bf16.mxu0 0
      %1224 = vmatpush1.bf16.msra.mxu0 %v955
      %1225 = vmatprep.subr.bf16.mxu0 0
      %1226 = vmatpush1.bf16.msra.mxu0 %v954
      %1227 = vmatprep.subr.bf16.mxu0 0
      %1228 = vmatpush1.bf16.msra.mxu0 %v953
      %1229 = vmatprep.subr.bf16.mxu0 0
      %1230 = vmatpush1.bf16.msra.mxu0 %v952
      %1231 = vmatprep.subr.bf16.mxu0 0
      %1232 = vmatpush1.bf16.msra.mxu0 %v951
      %1233 = vmatprep.subr.bf16.mxu0 0
      %1234 = vmatpush2.bf16.msra.mxu0 %v966
      %1235 = vmatprep.subr.bf16.mxu0 0
      %1236 = vmatpush2.bf16.msra.mxu0 %v965
      %1237 = vmatprep.subr.bf16.mxu0 0
      %1238 = vmatpush2.bf16.msra.mxu0 %v964
      %1239 = vmatprep.subr.bf16.mxu0 0
      %1240 = vmatpush2.bf16.msra.mxu0 %v963
      %1241 = vmatprep.subr.bf16.mxu0 0
      %1242 = vmatpush2.bf16.msra.mxu0 %v962
      %1243 = vmatprep.subr.bf16.mxu0 0
      %1244 = vmatpush2.bf16.msra.mxu0 %v961
      %1245 = vmatprep.subr.bf16.mxu0 0
      %1246 = vmatpush2.bf16.msra.mxu0 %v960
      %1247 = vmatprep.subr.bf16.mxu0 0
      %1248 = vmatpush2.bf16.msra.mxu0 %v959
      %1249 = vmatprep.mubr.bf16.mxu0 %v650
      %1250 = vmatmul.mubr.bf16.gmra.mxu0 %v649
      %v1251 = vpop.f32.mrf.mxu0
      %v1252 = vadd.f32 %v1091, %v1251
      %v1253 = vpop.f32.mrf.mxu0
      %v1254 = vpop.f32.mrf.mxu0
      %v1255 = vadd.f32 %v1094, %v1254
      %v1256 = vpop.f32.mrf.mxu0
      %1257 = vmatprep.mubr.bf16.mxu0 %v655
      %1258 = vmatmul.mubr.bf16.gmra.mxu0 %v654
      %v1259 = vpop.f32.mrf.mxu0
      %v1260 = vadd.f32 %v1099, %v1259
      %v1261 = vpop.f32.mrf.mxu0
      %v1262 = vpop.f32.mrf.mxu0
      %v1263 = vadd.f32 %v1102, %v1262
      %v1264 = vpop.f32.mrf.mxu0
      %1265 = vmatprep.mubr.bf16.mxu0 %v660
      %1266 = vmatmul.mubr.bf16.gmra.mxu0 %v659
      %v1267 = vpop.f32.mrf.mxu0
      %v1268 = vadd.f32 %v1107, %v1267
      %v1269 = vpop.f32.mrf.mxu0
      %v1270 = vpop.f32.mrf.mxu0
      %v1271 = vadd.f32 %v1110, %v1270
      %v1272 = vpop.f32.mrf.mxu0
      %1273 = vmatprep.mubr.bf16.mxu0 %v665
      %1274 = vmatmul.mubr.bf16.gmra.mxu0 %v664
      %v1275 = vpop.f32.mrf.mxu0
      %v1276 = vadd.f32 %v1115, %v1275
      %v1277 = vpop.f32.mrf.mxu0
      %v1278 = vpop.f32.mrf.mxu0
      %v1279 = vadd.f32 %v1118, %v1278
      %v1280 = vpop.f32.mrf.mxu0
      %1281 = vmatprep.mubr.bf16.mxu0 %v670
      %1282 = vmatmul.mubr.bf16.gmra.mxu0 %v669
      %v1283 = vpop.f32.mrf.mxu0
      %v1284 = vadd.f32 %v1123, %v1283
      %v1285 = vpop.f32.mrf.mxu0
      %v1286 = vpop.f32.mrf.mxu0
      %v1287 = vadd.f32 %v1126, %v1286
      %v1288 = vpop.f32.mrf.mxu0
      %1289 = vmatprep.mubr.bf16.mxu0 %v675
      %1290 = vmatmul.mubr.bf16.gmra.mxu0 %v674
      %v1291 = vpop.f32.mrf.mxu0
      %v1292 = vadd.f32 %v1131, %v1291
      %v1293 = vpop.f32.mrf.mxu0
      %v1294 = vpop.f32.mrf.mxu0
      %v1295 = vadd.f32 %v1134, %v1294
      %v1296 = vpop.f32.mrf.mxu0
      %1297 = vmatprep.mubr.bf16.mxu0 %v680
      %1298 = vmatmul.mubr.bf16.gmra.mxu0 %v679
      %v1299 = vpop.f32.mrf.mxu0
      %v1300 = vadd.f32 %v1139, %v1299
      %v1301 = vpop.f32.mrf.mxu0
      %v1302 = vpop.f32.mrf.mxu0
      %v1303 = vadd.f32 %v1142, %v1302
      %v1304 = vpop.f32.mrf.mxu0
      %1305 = vmatprep.mubr.bf16.mxu0 %v685
      %1306 = vmatmul.mubr.bf16.gmra.mxu0 %v684
      %v1307 = vpop.f32.mrf.mxu0
      %v1308 = vadd.f32 %v1147, %v1307
      %v1309 = vpop.f32.mrf.mxu0
      %v1310 = vpop.f32.mrf.mxu0
      %v1311 = vadd.f32 %v1150, %v1310
      %v1312 = vpop.f32.mrf.mxu0
      %1313 = vmatprep.mubr.bf16.mxu0 %v690
      %1314 = vmatmul.mubr.bf16.gmra.mxu0 %v689
      %v1315 = vpop.f32.mrf.mxu0
      %v1316 = vadd.f32 %v1155, %v1315
      %v1317 = vpop.f32.mrf.mxu0
      %v1318 = vpop.f32.mrf.mxu0
      %v1319 = vadd.f32 %v1158, %v1318
      %v1320 = vpop.f32.mrf.mxu0
      %1321 = vmatprep.mubr.bf16.mxu0 %v695
      %1322 = vmatmul.mubr.bf16.gmra.mxu0 %v694
      %v1323 = vpop.f32.mrf.mxu0
      %v1324 = vadd.f32 %v1163, %v1323
      %v1325 = vpop.f32.mrf.mxu0
      %v1326 = vpop.f32.mrf.mxu0
      %v1327 = vadd.f32 %v1166, %v1326
      %v1328 = vpop.f32.mrf.mxu0
      %1329 = vmatprep.mubr.bf16.mxu0 %v700
      %1330 = vmatmul.mubr.bf16.gmra.mxu0 %v699
      %v1331 = vpop.f32.mrf.mxu0
      %v1332 = vadd.f32 %v1171, %v1331
      %v1333 = vpop.f32.mrf.mxu0
      %v1334 = vpop.f32.mrf.mxu0
      %v1335 = vadd.f32 %v1174, %v1334
      %v1336 = vpop.f32.mrf.mxu0
      %1337 = vmatprep.mubr.bf16.mxu0 %v705
      %1338 = vmatmul.mubr.bf16.gmra.mxu0 %v704
      %v1339 = vpop.f32.mrf.mxu0
      %v1340 = vadd.f32 %v1179, %v1339
      %v1341 = vpop.f32.mrf.mxu0
      %v1342 = vpop.f32.mrf.mxu0
      %v1343 = vadd.f32 %v1182, %v1342
      %v1344 = vpop.f32.mrf.mxu0
      %1345 = vmatprep.mubr.bf16.mxu0 %v710
      %1346 = vmatmul.mubr.bf16.gmra.mxu0 %v709
      %v1347 = vpop.f32.mrf.mxu0
      %v1348 = vadd.f32 %v1187, %v1347
      %v1349 = vpop.f32.mrf.mxu0
      %v1350 = vpop.f32.mrf.mxu0
      %v1351 = vadd.f32 %v1190, %v1350
      %v1352 = vpop.f32.mrf.mxu0
      %1353 = vmatprep.mubr.bf16.mxu0 %v715
      %1354 = vmatmul.mubr.bf16.gmra.mxu0 %v714
      %v1355 = vpop.f32.mrf.mxu0
      %v1356 = vadd.f32 %v1195, %v1355
      %v1357 = vpop.f32.mrf.mxu0
      %v1358 = vpop.f32.mrf.mxu0
      %v1359 = vadd.f32 %v1198, %v1358
      %v1360 = vpop.f32.mrf.mxu0
      %1361 = vmatprep.mubr.bf16.mxu0 %v720
      %1362 = vmatmul.mubr.bf16.gmra.mxu0 %v719
      %v1363 = vpop.f32.mrf.mxu0
      %v1364 = vadd.f32 %v1203, %v1363
      %v1365 = vpop.f32.mrf.mxu0
      %v1366 = vpop.f32.mrf.mxu0
      %v1367 = vadd.f32 %v1206, %v1366
      %v1368 = vpop.f32.mrf.mxu0
      %1369 = vmatprep.mubr.bf16.mxu0 %v725
      %1370 = vmatmul.mubr.bf16.gmra.mxu0 %v724
      %v1371 = vpop.f32.mrf.mxu0
      %v1372 = vadd.f32 %v1211, %v1371
      %v1373 = vpop.f32.mrf.mxu0
      %v1374 = vpop.f32.mrf.mxu0
      %v1375 = vadd.f32 %v1214, %v1374
      %v1376 = vpop.f32.mrf.mxu0
      %1377 = vdwg.mxu0
      %1378 = vmatprep.subr.bf16.mxu0 0
      %1379 = vmatpush1.bf16.msra.mxu0 0
      %1380 = vmatprep.subr.bf16.mxu0 0
      %1381 = vmatpush1.bf16.msra.mxu0 0
      %1382 = vmatprep.subr.bf16.mxu0 0
      %1383 = vmatpush1.bf16.msra.mxu0 0
      %1384 = vmatprep.subr.bf16.mxu0 0
      %1385 = vmatpush1.bf16.msra.mxu0 0
      %1386 = vmatprep.subr.bf16.mxu0 0
      %1387 = vmatpush1.bf16.msra.mxu0 %v970
      %1388 = vmatprep.subr.bf16.mxu0 0
      %1389 = vmatpush1.bf16.msra.mxu0 %v969
      %1390 = vmatprep.subr.bf16.mxu0 0
      %1391 = vmatpush1.bf16.msra.mxu0 %v968
      %1392 = vmatprep.subr.bf16.mxu0 0
      %1393 = vmatpush1.bf16.msra.mxu0 %v967
      %1394 = vmatprep.subr.bf16.mxu0 0
      %1395 = vmatpush2.bf16.msra.mxu0 0
      %1396 = vmatprep.subr.bf16.mxu0 0
      %1397 = vmatpush2.bf16.msra.mxu0 0
      %1398 = vmatprep.subr.bf16.mxu0 0
      %1399 = vmatpush2.bf16.msra.mxu0 0
      %1400 = vmatprep.subr.bf16.mxu0 0
      %1401 = vmatpush2.bf16.msra.mxu0 0
      %1402 = vmatprep.subr.bf16.mxu0 0
      %1403 = vmatpush2.bf16.msra.mxu0 0
      %1404 = vmatprep.subr.bf16.mxu0 0
      %1405 = vmatpush2.bf16.msra.mxu0 0
      %1406 = vmatprep.subr.bf16.mxu0 0
      %1407 = vmatpush2.bf16.msra.mxu0 0
      %1408 = vmatprep.subr.bf16.mxu0 0
      %1409 = vmatpush2.bf16.msra.mxu0 0
      %1410 = vmatprep.mubr.bf16.mxu0 0
      %1411 = vmatmul.mubr.bf16.gmra.mxu0 %v1009
      %v1412 = vpop.f32.mrf.mxu0
      %v1413 = vadd.f32 %v1252, %v1412
      %v1414 = vpop.f32.mrf.mxu0
      %v1415 = vpop.f32.mrf.mxu0
      %v1416 = vadd.f32 %v1255, %v1415
      %v1417 = vpop.f32.mrf.mxu0
      %1418 = vmatprep.mubr.bf16.mxu0 0
      %1419 = vmatmul.mubr.bf16.gmra.mxu0 %v1012
      %v1420 = vpop.f32.mrf.mxu0
      %v1421 = vadd.f32 %v1260, %v1420
      %v1422 = vpop.f32.mrf.mxu0
      %v1423 = vpop.f32.mrf.mxu0
      %v1424 = vadd.f32 %v1263, %v1423
      %v1425 = vpop.f32.mrf.mxu0
      %1426 = vmatprep.mubr.bf16.mxu0 0
      %1427 = vmatmul.mubr.bf16.gmra.mxu0 %v1015
      %v1428 = vpop.f32.mrf.mxu0
      %v1429 = vadd.f32 %v1268, %v1428
      %v1430 = vpop.f32.mrf.mxu0
      %v1431 = vpop.f32.mrf.mxu0
      %v1432 = vadd.f32 %v1271, %v1431
      %v1433 = vpop.f32.mrf.mxu0
      %1434 = vmatprep.mubr.bf16.mxu0 0
      %1435 = vmatmul.mubr.bf16.gmra.mxu0 %v1018
      %v1436 = vpop.f32.mrf.mxu0
      %v1437 = vadd.f32 %v1276, %v1436
      %v1438 = vpop.f32.mrf.mxu0
      %v1439 = vpop.f32.mrf.mxu0
      %v1440 = vadd.f32 %v1279, %v1439
      %v1441 = vpop.f32.mrf.mxu0
      %1442 = vmatprep.mubr.bf16.mxu0 0
      %1443 = vmatmul.mubr.bf16.gmra.mxu0 %v1021
      %v1444 = vpop.f32.mrf.mxu0
      %v1445 = vadd.f32 %v1284, %v1444
      %v1446 = vpop.f32.mrf.mxu0
      %v1447 = vpop.f32.mrf.mxu0
      %v1448 = vadd.f32 %v1287, %v1447
      %v1449 = vpop.f32.mrf.mxu0
      %1450 = vmatprep.mubr.bf16.mxu0 0
      %1451 = vmatmul.mubr.bf16.gmra.mxu0 %v1024
      %v1452 = vpop.f32.mrf.mxu0
      %v1453 = vadd.f32 %v1292, %v1452
      %v1454 = vpop.f32.mrf.mxu0
      %v1455 = vpop.f32.mrf.mxu0
      %v1456 = vadd.f32 %v1295, %v1455
      %v1457 = vpop.f32.mrf.mxu0
      %1458 = vmatprep.mubr.bf16.mxu0 0
      %1459 = vmatmul.mubr.bf16.gmra.mxu0 %v1027
      %v1460 = vpop.f32.mrf.mxu0
      %v1461 = vadd.f32 %v1300, %v1460
      %v1462 = vpop.f32.mrf.mxu0
      %v1463 = vpop.f32.mrf.mxu0
      %v1464 = vadd.f32 %v1303, %v1463
      %v1465 = vpop.f32.mrf.mxu0
      %1466 = vmatprep.mubr.bf16.mxu0 0
      %1467 = vmatmul.mubr.bf16.gmra.mxu0 %v1030
      %v1468 = vpop.f32.mrf.mxu0
      %v1469 = vadd.f32 %v1308, %v1468
      %v1470 = vpop.f32.mrf.mxu0
      %v1471 = vpop.f32.mrf.mxu0
      %v1472 = vadd.f32 %v1311, %v1471
      %v1473 = vpop.f32.mrf.mxu0
      %1474 = vmatprep.mubr.bf16.mxu0 0
      %1475 = vmatmul.mubr.bf16.gmra.mxu0 %v1033
      %v1476 = vpop.f32.mrf.mxu0
      %v1477 = vadd.f32 %v1316, %v1476
      %v1478 = vpop.f32.mrf.mxu0
      %v1479 = vpop.f32.mrf.mxu0
      %v1480 = vadd.f32 %v1319, %v1479
      %v1481 = vpop.f32.mrf.mxu0
      %1482 = vmatprep.mubr.bf16.mxu0 0
      %1483 = vmatmul.mubr.bf16.gmra.mxu0 %v1036
      %v1484 = vpop.f32.mrf.mxu0
      %v1485 = vadd.f32 %v1324, %v1484
      %v1486 = vpop.f32.mrf.mxu0
      %v1487 = vpop.f32.mrf.mxu0
      %v1488 = vadd.f32 %v1327, %v1487
      %v1489 = vpop.f32.mrf.mxu0
      %1490 = vmatprep.mubr.bf16.mxu0 0
      %1491 = vmatmul.mubr.bf16.gmra.mxu0 %v1039
      %v1492 = vpop.f32.mrf.mxu0
      %v1493 = vadd.f32 %v1332, %v1492
      %v1494 = vpop.f32.mrf.mxu0
      %v1495 = vpop.f32.mrf.mxu0
      %v1496 = vadd.f32 %v1335, %v1495
      %v1497 = vpop.f32.mrf.mxu0
      %1498 = vmatprep.mubr.bf16.mxu0 0
      %1499 = vmatmul.mubr.bf16.gmra.mxu0 %v1042
      %v1500 = vpop.f32.mrf.mxu0
      %v1501 = vadd.f32 %v1340, %v1500
      %v1502 = vpop.f32.mrf.mxu0
      %v1503 = vpop.f32.mrf.mxu0
      %v1504 = vadd.f32 %v1343, %v1503
      %v1505 = vpop.f32.mrf.mxu0
      %1506 = vmatprep.mubr.bf16.mxu0 0
      %1507 = vmatmul.mubr.bf16.gmra.mxu0 %v1045
      %v1508 = vpop.f32.mrf.mxu0
      %v1509 = vadd.f32 %v1348, %v1508
      %v1510 = vpop.f32.mrf.mxu0
      %v1511 = vpop.f32.mrf.mxu0
      %v1512 = vadd.f32 %v1351, %v1511
      %v1513 = vpop.f32.mrf.mxu0
      %1514 = vmatprep.mubr.bf16.mxu0 0
      %1515 = vmatmul.mubr.bf16.gmra.mxu0 %v1048
      %v1516 = vpop.f32.mrf.mxu0
      %v1517 = vadd.f32 %v1356, %v1516
      %v1518 = vpop.f32.mrf.mxu0
      %v1519 = vpop.f32.mrf.mxu0
      %v1520 = vadd.f32 %v1359, %v1519
      %v1521 = vpop.f32.mrf.mxu0
      %1522 = vmatprep.mubr.bf16.mxu0 0
      %1523 = vmatmul.mubr.bf16.gmra.mxu0 %v1051
      %v1524 = vpop.f32.mrf.mxu0
      %v1525 = vadd.f32 %v1364, %v1524
      %v1526 = vpop.f32.mrf.mxu0
      %v1527 = vpop.f32.mrf.mxu0
      %v1528 = vadd.f32 %v1367, %v1527
      %v1529 = vpop.f32.mrf.mxu0
      %1530 = vmatprep.mubr.bf16.mxu0 0
      %1531 = vmatmul.mubr.bf16.gmra.mxu0 %v1054
      %v1532 = vpop.f32.mrf.mxu0
      %v1533 = vadd.f32 %v1372, %v1532
      %v1534 = vpop.f32.mrf.mxu0
      %v1535 = vpop.f32.mrf.mxu0
      %v1536 = vadd.f32 %v1375, %v1535
      %v1537 = vpop.f32.mrf.mxu0
      %1538 = vdwg.mxu0
      %v1539 = vadd.f32 %v1413, %v1416
      %v1540 = vadd.f32 %v1539, %v1421
      %v1541 = vadd.f32 %v1540, %v1424
      %v1542 = vadd.f32 %v1541, %v1429
      %v1543 = vadd.f32 %v1542, %v1432
      %v1544 = vadd.f32 %v1543, %v1437
      %v1545 = vadd.f32 %v1544, %v1440
      %v1546 = vadd.f32 %v1545, %v1445
      %v1547 = vadd.f32 %v1546, %v1448
      %v1548 = vadd.f32 %v1547, %v1453
      %v1549 = vadd.f32 %v1548, %v1456
      %v1550 = vadd.f32 %v1549, %v1461
      %v1551 = vadd.f32 %v1550, %v1464
      %v1552 = vadd.f32 %v1551, %v1469
      %v1553 = vadd.f32 %v1552, %v1472
      %v1554 = vadd.f32 %v1553, %v1477
      %v1555 = vadd.f32 %v1554, %v1480
      %v1556 = vadd.f32 %v1555, %v1485
      %v1557 = vadd.f32 %v1556, %v1488
      %v1558 = vadd.f32 %v1557, %v1493
      %v1559 = vadd.f32 %v1558, %v1496
      %v1560 = vadd.f32 %v1559, %v1501
      %v1561 = vadd.f32 %v1560, %v1504
      %v1562 = vadd.f32 %v1561, %v1509
      %v1563 = vadd.f32 %v1562, %v1512
      %v1564 = vadd.f32 %v1563, %v1517
      %v1565 = vadd.f32 %v1564, %v1520
      %v1566 = vadd.f32 %v1565, %v1525
      %v1567 = vadd.f32 %v1566, %v1528
      %v1568 = vadd.f32 %v1567, %v1533
      %v1569 = vadd.f32 %v1568, %v1536
      %v1570 = vrot.slane %v1569, 4
      %v1571 = vadd.f32 %v1569, %v1570
      %v1572 = vrot.slane %v1571, 2
      %v1573 = vadd.f32 %v1571, %v1572
      %v1574 = vrot.slane %v1573, 1
      %v1575 = vadd.f32 %v1573, %v1574
      %v1576 = vrcp.pop 256.0
      %v1577 = vmul.f32 %v1575, %v1576
      %v1578 = vsub.f32 %v1413, %v1577
      %v1579 = vsub.f32 %v1416, %v1577
      %v1580 = vsub.f32 %v1421, %v1577
      %v1581 = vsub.f32 %v1424, %v1577
      %v1582 = vsub.f32 %v1429, %v1577
      %v1583 = vsub.f32 %v1432, %v1577
      %v1584 = vsub.f32 %v1437, %v1577
      %v1585 = vsub.f32 %v1440, %v1577
      %v1586 = vsub.f32 %v1445, %v1577
      %v1587 = vsub.f32 %v1448, %v1577
      %v1588 = vsub.f32 %v1453, %v1577
      %v1589 = vsub.f32 %v1456, %v1577
      %v1590 = vsub.f32 %v1461, %v1577
      %v1591 = vsub.f32 %v1464, %v1577
      %v1592 = vsub.f32 %v1469, %v1577
      %v1593 = vsub.f32 %v1472, %v1577
      %v1594 = vsub.f32 %v1477, %v1577
      %v1595 = vsub.f32 %v1480, %v1577
      %v1596 = vsub.f32 %v1485, %v1577
      %v1597 = vsub.f32 %v1488, %v1577
      %v1598 = vsub.f32 %v1493, %v1577
      %v1599 = vsub.f32 %v1496, %v1577
      %v1600 = vsub.f32 %v1501, %v1577
      %v1601 = vsub.f32 %v1504, %v1577
      %v1602 = vsub.f32 %v1509, %v1577
      %v1603 = vsub.f32 %v1512, %v1577
      %v1604 = vsub.f32 %v1517, %v1577
      %v1605 = vsub.f32 %v1520, %v1577
      %v1606 = vsub.f32 %v1525, %v1577
      %v1607 = vsub.f32 %v1528, %v1577
      %v1608 = vsub.f32 %v1533, %v1577
      %v1609 = vsub.f32 %v1536, %v1577
      %v1610 = vmul.f32 %v1578, %v1578
      %v1611 = vmul.f32 %v1579, %v1579
      %v1612 = vmul.f32 %v1580, %v1580
      %v1613 = vmul.f32 %v1581, %v1581
      %v1614 = vmul.f32 %v1582, %v1582
      %v1615 = vmul.f32 %v1583, %v1583
      %v1616 = vmul.f32 %v1584, %v1584
      %v1617 = vmul.f32 %v1585, %v1585
      %v1618 = vmul.f32 %v1586, %v1586
      %v1619 = vmul.f32 %v1587, %v1587
      %v1620 = vmul.f32 %v1588, %v1588
      %v1621 = vmul.f32 %v1589, %v1589
      %v1622 = vmul.f32 %v1590, %v1590
      %v1623 = vmul.f32 %v1591, %v1591
      %v1624 = vmul.f32 %v1592, %v1592
      %v1625 = vmul.f32 %v1593, %v1593
      %v1626 = vmul.f32 %v1594, %v1594
      %v1627 = vmul.f32 %v1595, %v1595
      %v1628 = vmul.f32 %v1596, %v1596
      %v1629 = vmul.f32 %v1597, %v1597
      %v1630 = vmul.f32 %v1598, %v1598
      %v1631 = vmul.f32 %v1599, %v1599
      %v1632 = vmul.f32 %v1600, %v1600
      %v1633 = vmul.f32 %v1601, %v1601
      %v1634 = vmul.f32 %v1602, %v1602
      %v1635 = vmul.f32 %v1603, %v1603
      %v1636 = vmul.f32 %v1604, %v1604
      %v1637 = vmul.f32 %v1605, %v1605
      %v1638 = vmul.f32 %v1606, %v1606
      %v1639 = vmul.f32 %v1607, %v1607
      %v1640 = vmul.f32 %v1608, %v1608
      %v1641 = vmul.f32 %v1609, %v1609
      %v1642 = vadd.f32 %v1610, %v1611
      %v1643 = vadd.f32 %v1642, %v1612
      %v1644 = vadd.f32 %v1643, %v1613
      %v1645 = vadd.f32 %v1644, %v1614
      %v1646 = vadd.f32 %v1645, %v1615
      %v1647 = vadd.f32 %v1646, %v1616
      %v1648 = vadd.f32 %v1647, %v1617
      %v1649 = vadd.f32 %v1648, %v1618
      %v1650 = vadd.f32 %v1649, %v1619
      %v1651 = vadd.f32 %v1650, %v1620
      %v1652 = vadd.f32 %v1651, %v1621
      %v1653 = vadd.f32 %v1652, %v1622
      %v1654 = vadd.f32 %v1653, %v1623
      %v1655 = vadd.f32 %v1654, %v1624
      %v1656 = vadd.f32 %v1655, %v1625
      %v1657 = vadd.f32 %v1656, %v1626
      %v1658 = vadd.f32 %v1657, %v1627
      %v1659 = vadd.f32 %v1658, %v1628
      %v1660 = vadd.f32 %v1659, %v1629
      %v1661 = vadd.f32 %v1660, %v1630
      %v1662 = vadd.f32 %v1661, %v1631
      %v1663 = vadd.f32 %v1662, %v1632
      %v1664 = vadd.f32 %v1663, %v1633
      %v1665 = vadd.f32 %v1664, %v1634
      %v1666 = vadd.f32 %v1665, %v1635
      %v1667 = vadd.f32 %v1666, %v1636
      %v1668 = vadd.f32 %v1667, %v1637
      %v1669 = vadd.f32 %v1668, %v1638
      %v1670 = vadd.f32 %v1669, %v1639
      %v1671 = vadd.f32 %v1670, %v1640
      %v1672 = vadd.f32 %v1671, %v1641
      %v1673 = vrot.slane %v1672, 4
      %v1674 = vadd.f32 %v1672, %v1673
      %v1675 = vrot.slane %v1674, 2
      %v1676 = vadd.f32 %v1674, %v1675
      %v1677 = vrot.slane %v1676, 1
      %v1678 = vadd.f32 %v1676, %v1677
      %v1679 = vmul.f32 %v1678, %v1576
      %v1680 = vadd.f32 %v1679, 1e-05
      %v1681 = vrsqrt.pop %v1680
      %v1682 = vmul.f32 %v1578, %v1681
      %v1683 = vmul.f32 %v1579, %v1681
      %v1684 = vmul.f32 %v1580, %v1681
      %v1685 = vmul.f32 %v1581, %v1681
      %v1686 = vmul.f32 %v1582, %v1681
      %v1687 = vmul.f32 %v1583, %v1681
      %v1688 = vmul.f32 %v1584, %v1681
      %v1689 = vmul.f32 %v1585, %v1681
      %v1690 = vmul.f32 %v1586, %v1681
      %v1691 = vmul.f32 %v1587, %v1681
      %v1692 = vmul.f32 %v1588, %v1681
      %v1693 = vmul.f32 %v1589, %v1681
      %v1694 = vmul.f32 %v1590, %v1681
      %v1695 = vmul.f32 %v1591, %v1681
      %v1696 = vmul.f32 %v1592, %v1681
      %v1697 = vmul.f32 %v1593, %v1681
      %v1698 = vmul.f32 %v1594, %v1681
      %v1699 = vmul.f32 %v1595, %v1681
      %v1700 = vmul.f32 %v1596, %v1681
      %v1701 = vmul.f32 %v1597, %v1681
      %v1702 = vmul.f32 %v1598, %v1681
      %v1703 = vmul.f32 %v1599, %v1681
      %v1704 = vmul.f32 %v1600, %v1681
      %v1705 = vmul.f32 %v1601, %v1681
      %v1706 = vmul.f32 %v1602, %v1681
      %v1707 = vmul.f32 %v1603, %v1681
      %v1708 = vmul.f32 %v1604, %v1681
      %v1709 = vmul.f32 %v1605, %v1681
      %v1710 = vmul.f32 %v1606, %v1681
      %v1711 = vmul.f32 %v1607, %v1681
      %v1712 = vmul.f32 %v1608, %v1681
      %v1713 = vmul.f32 %v1609, %v1681
      %v1714 = vld [vmem:[%s209] sm:$0x3]
      %v1715 = vlaneseq
      %v1716 = vshrl.u32 %v1715, 7
      %v1717 = vsub.s32 0, %v1716
      %v1718 = vrot.slane %v1714, %v1717
      %v1719 = vmul.f32 %v1718, %v1682
      %v1720 = vmul.f32 %v1718, %v1683
      %v1721 = vmul.f32 %v1718, %v1684
      %v1722 = vmul.f32 %v1718, %v1685
      %v1723 = vmul.f32 %v1718, %v1686
      %v1724 = vmul.f32 %v1718, %v1687
      %v1725 = vmul.f32 %v1718, %v1688
      %v1726 = vmul.f32 %v1718, %v1689
      %v1727 = vmul.f32 %v1718, %v1690
      %v1728 = vmul.f32 %v1718, %v1691
      %v1729 = vmul.f32 %v1718, %v1692
      %v1730 = vmul.f32 %v1718, %v1693
      %v1731 = vmul.f32 %v1718, %v1694
      %v1732 = vmul.f32 %v1718, %v1695
      %v1733 = vmul.f32 %v1718, %v1696
      %v1734 = vmul.f32 %v1718, %v1697
      %v1735 = vmul.f32 %v1718, %v1698
      %v1736 = vmul.f32 %v1718, %v1699
      %v1737 = vmul.f32 %v1718, %v1700
      %v1738 = vmul.f32 %v1718, %v1701
      %v1739 = vmul.f32 %v1718, %v1702
      %v1740 = vmul.f32 %v1718, %v1703
      %v1741 = vmul.f32 %v1718, %v1704
      %v1742 = vmul.f32 %v1718, %v1705
      %v1743 = vmul.f32 %v1718, %v1706
      %v1744 = vmul.f32 %v1718, %v1707
      %v1745 = vmul.f32 %v1718, %v1708
      %v1746 = vmul.f32 %v1718, %v1709
      %v1747 = vmul.f32 %v1718, %v1710
      %v1748 = vmul.f32 %v1718, %v1711
      %v1749 = vmul.f32 %v1718, %v1712
      %v1750 = vmul.f32 %v1718, %v1713
      %v1751 = vlaneseq
      %v1752 = vshrl.u32 %v1751, 7
      %v1753 = vsub.s32 1, %v1752
      %v1754 = vrot.slane %v1714, %v1753
      %v1755 = vadd.f32 %v1719, %v1754
      %v1756 = vadd.f32 %v1720, %v1754
      %v1757 = vadd.f32 %v1721, %v1754
      %v1758 = vadd.f32 %v1722, %v1754
      %v1759 = vadd.f32 %v1723, %v1754
      %v1760 = vadd.f32 %v1724, %v1754
      %v1761 = vadd.f32 %v1725, %v1754
      %v1762 = vadd.f32 %v1726, %v1754
      %v1763 = vadd.f32 %v1727, %v1754
      %v1764 = vadd.f32 %v1728, %v1754
      %v1765 = vadd.f32 %v1729, %v1754
      %v1766 = vadd.f32 %v1730, %v1754
      %v1767 = vadd.f32 %v1731, %v1754
      %v1768 = vadd.f32 %v1732, %v1754
      %v1769 = vadd.f32 %v1733, %v1754
      %v1770 = vadd.f32 %v1734, %v1754
      %v1771 = vadd.f32 %v1735, %v1754
      %v1772 = vadd.f32 %v1736, %v1754
      %v1773 = vadd.f32 %v1737, %v1754
      %v1774 = vadd.f32 %v1738, %v1754
      %v1775 = vadd.f32 %v1739, %v1754
      %v1776 = vadd.f32 %v1740, %v1754
      %v1777 = vadd.f32 %v1741, %v1754
      %v1778 = vadd.f32 %v1742, %v1754
      %v1779 = vadd.f32 %v1743, %v1754
      %v1780 = vadd.f32 %v1744, %v1754
      %v1781 = vadd.f32 %v1745, %v1754
      %v1782 = vadd.f32 %v1746, %v1754
      %v1783 = vadd.f32 %v1747, %v1754
      %v1784 = vadd.f32 %v1748, %v1754
      %v1785 = vadd.f32 %v1749, %v1754
      %v1786 = vadd.f32 %v1750, %v1754
      %1787 = vst [vmem:[%s214] sm:$0xff] %v1755
      %1788 = vst [vmem:[%s214 + $0x8] sm:$0xff] %v1756
      %1789 = vst [vmem:[%s214 + $0x10] sm:$0xff] %v1757
      %1790 = vst [vmem:[%s214 + $0x18] sm:$0xff] %v1758
      %1791 = vst [vmem:[%s214 + $0x20] sm:$0xff] %v1759
      %1792 = vst [vmem:[%s214 + $0x28] sm:$0xff] %v1760
      %1793 = vst [vmem:[%s214 + $0x30] sm:$0xff] %v1761
      %1794 = vst [vmem:[%s214 + $0x38] sm:$0xff] %v1762
      %1795 = vst [vmem:[%s214 + $0x40] sm:$0xff] %v1763
      %1796 = vst [vmem:[%s214 + $0x48] sm:$0xff] %v1764
      %1797 = vst [vmem:[%s214 + $0x50] sm:$0xff] %v1765
      %1798 = vst [vmem:[%s214 + $0x58] sm:$0xff] %v1766
      %1799 = vst [vmem:[%s214 + $0x60] sm:$0xff] %v1767
      %1800 = vst [vmem:[%s214 + $0x68] sm:$0xff] %v1768
      %1801 = vst [vmem:[%s214 + $0x70] sm:$0xff] %v1769
      %1802 = vst [vmem:[%s214 + $0x78] sm:$0xff] %v1770
      %1803 = vst [vmem:[%s214 + $0x80] sm:$0xff] %v1771
      %1804 = vst [vmem:[%s214 + $0x88] sm:$0xff] %v1772
      %1805 = vst [vmem:[%s214 + $0x90] sm:$0xff] %v1773
      %1806 = vst [vmem:[%s214 + $0x98] sm:$0xff] %v1774
      %1807 = vst [vmem:[%s214 + $0xa0] sm:$0xff] %v1775
      %1808 = vst [vmem:[%s214 + $0xa8] sm:$0xff] %v1776
      %1809 = vst [vmem:[%s214 + $0xb0] sm:$0xff] %v1777
      %1810 = vst [vmem:[%s214 + $0xb8] sm:$0xff] %v1778
      %1811 = vst [vmem:[%s214 + $0xc0] sm:$0xff] %v1779
      %1812 = vst [vmem:[%s214 + $0xc8] sm:$0xff] %v1780
      %1813 = vst [vmem:[%s214 + $0xd0] sm:$0xff] %v1781
      %1814 = vst [vmem:[%s214 + $0xd8] sm:$0xff] %v1782
      %1815 = vst [vmem:[%s214 + $0xe0] sm:$0xff] %v1783
      %1816 = vst [vmem:[%s214 + $0xe8] sm:$0xff] %v1784
      %1817 = vst [vmem:[%s214 + $0xf0] sm:$0xff] %v1785
      %1818 = vst [vmem:[%s214 + $0xf8] sm:$0xff] %v1786
      %p1819 = scmp.lt.s32.totalorder %s15, 1
      %s1820 = scalar_select %p1819, %s15, 1
      %s1821 = smul.addr %s1820, 32
      %s1822 = smul.addr %s1821, 8
      %s1823 = scalar_lea.vmem %s4, %s1822
      // Predicated region
      $region37: #{vgg_decoder_forward.15} parent=35 // pred_check
        %p1824 = pneg %p127
      $region38: #{vgg_decoder_forward.15} parent=35 // pred_check_branch
        %1826 = sbr.rel (%p1824) target = $region40
      $region39: #{vgg_decoder_forward.15} parent=35 // pred_region
        _
      $region40: #{vgg_decoder_forward.15} parent=35 // pred_fallthru
        _
    $region36: #{vgg_decoder_forward.15} parent=5 // pred_fallthru
      _
    %p1827 = scmp.le.s32.totalorder 2, %s10
    // Predicated region
    $region41: #{vgg_decoder_forward.15} parent=5 // pred_check
      %p1828 = pneg %p1827
    $region42: #{vgg_decoder_forward.15} parent=5 // pred_check_branch
      %1830 = sbr.rel (%p1828) target = $region44
    $region43: #{vgg_decoder_forward.15} parent=5 // pred_region
      %s1831 = ssub.s32 %s10, 2
      // Predicated region
      $region45: #{vgg_decoder_forward.15} parent=43 // pred_check
        %p1832 = pneg %p133
      $region46: #{vgg_decoder_forward.15} parent=43 // pred_check_branch
        %1834 = sbr.rel (%p1832) target = $region48
      $region47: #{vgg_decoder_forward.15} parent=43 // pred_region
        %p1835 = scmp.lt.s32.totalorder %s16, 1
        %s1836 = scalar_select %p1835, %s16, 1
        %s1837 = smul.addr %s1836, 32
        %s1838 = smul.addr %s1837, 8
        %s1839 = scalar_lea.vmem %s4, %s1838
      $region48: #{vgg_decoder_forward.15} parent=43 // pred_fallthru
        _
    $region44: #{vgg_decoder_forward.15} parent=5 // pred_fallthru
      _
  $region6: #{vgg_decoder_forward.15} parent=0 // loop_footer
    %s14 = sadd.s32 1, %s10
  $region7: #{vgg_decoder_forward.15} parent=0 // loop_footer_branch
    %9 = sbr.rel target = $region3
  $region8: #{vgg_decoder_forward.15} parent=0 // loop_exit
    _

</llo_original>
